<compile_context>
chip_gen: v5e
topology: v5e:2x2
jax: 0.10.0
libtpu: 0.0.40
codegen_flags: <defaults>
</compile_context>

<pallas_src>
import functools

import jax
import jax.numpy as jnp
from jax import lax
from jax.experimental import pallas as pl
from jax.experimental.pallas import tpu as pltpu


# ------------------------------- small utils --------------------------------
def _round_up(x, m):
    return ((x + m - 1) // m) * m


def _tpu_defaults():
    """(cout_tile, vmem_limit_bytes) chosen from the local chip generation."""
    tn, vmem = 128, 64 * 1024 * 1024
    try:
        kind = jax.devices()[0].device_kind.lower()
    except Exception:  # pragma: no cover - defensive
        kind = ""
    if "v6" in kind or "v7" in kind:
        tn = 256                      # 256-wide MXU N on v6e / v7x
    if "v7" in kind:
        vmem = 48 * 1024 * 1024       # v7x: only 64 MiB physical VMEM per TC
    return tn, vmem


_COUT_TILE, _VMEM_LIMIT = _tpu_defaults()


# ------------------------------ Pallas kernel -------------------------------
def _conv_bn_kernel(x_ref, w_ref, shift_ref, *rest,
                    stride, th, relu, has_res, fuse_k):
    """3x3 conv + folded-BN shift (+residual) (+ReLU) for one output tile.

    x_ref:     (s*s, 1, Hph, Wph, Cin)  phase-split padded image (VMEM resident)
    w_ref:     (3, 3*Cin, tn)           row-major taps, BN scale folded (bf16)
    shift_ref: (1, tn)                  BN shift (f32)
    res_ref:   (1, th, Wo, tn)          optional residual tile
    o_ref:     (1, th, Wo, tn)          output tile
    acc_ref:   (th*Wo, tn) f32          VMEM accumulator scratch
    xk_ref:    (th*Wo, 3*Cin)           K-fusion staging slab (only if fuse_k)
    """
    if has_res:
        res_ref, o_ref, *scratch = rest
    else:
        o_ref, *scratch = rest
    acc_ref = scratch[0]
    xk_ref = scratch[1] if fuse_k else None

    wo = o_ref.shape[2]
    tn = o_ref.shape[3]
    cin = x_ref.shape[-1]
    r0 = pl.multiple_of(pl.program_id(1) * th, th)   # first output row of tile

    def tap(dh, dw):
        # Phase plane holding rows/cols congruent to dh/dw (mod stride); every
        # 3x3 tap is then a contiguous (th, wo, cin) window.
        p = (dh % stride) * stride + (dw % stride)
        return x_ref[p, 0,
                     pl.ds(r0 + dh // stride, th),
                     pl.ds(dw // stride, wo), :]

    first = True
    for dh in range(3):
        if fuse_k:
            # Stage 3 horizontal taps side by side -> one K = 3*Cin matmul.
            for dw in range(3):
                xk_ref[:, pl.ds(dw * cin, cin)] = (
                    tap(dh, dw).reshape(th * wo, cin))
            upd = jnp.dot(xk_ref[...], w_ref[dh],
                          preferred_element_type=jnp.float32)
            if first:
                acc_ref[...] = upd
            else:
                acc_ref[...] += upd
            first = False
        else:
            for dw in range(3):
                upd = jnp.dot(tap(dh, dw).reshape(th * wo, cin),
                              w_ref[dh, pl.ds(dw * cin, cin), :],
                              preferred_element_type=jnp.float32)
                if first:
                    acc_ref[...] = upd
                else:
                    acc_ref[...] += upd
                first = False

    y = acc_ref[...] + shift_ref[...]                       # f32 epilogue
    if has_res:
        y = y + res_ref[...].astype(jnp.float32).reshape(th * wo, tn)
    if relu:
        y = jnp.maximum(y, 0.0)
    o_ref[...] = y.reshape(1, th, wo, tn).astype(o_ref.dtype)


# ------------------------------- host glue ----------------------------------
def _pad_and_phase(x_nhwc, stride, hph, wph):
    """Zero-pad (conv pad=1 + alignment) and split into stride^2 phase planes.

    Returned planes have shape (stride*stride, N, hph, wph, C); plane
    (dh % s) * s + (dw % s) holds rows/cols congruent to dh/dw mod s, so every
    3x3 tap reads a contiguous window inside the kernel (1x HBM traffic).
    """
    n, h, w, c = x_nhwc.shape
    if stride == 1:
        xp = jnp.pad(x_nhwc, ((0, 0), (1, hph - h - 1), (1, wph - w - 1), (0, 0)))
        return xp[None]
    assert stride == 2, stride
    xp = jnp.pad(x_nhwc,
                 ((0, 0), (1, 2 * hph - h - 1), (1, 2 * wph - w - 1), (0, 0)))
    xr = xp.reshape(n, hph, 2, wph, 2, c)
    ph = jnp.transpose(xr, (2, 4, 0, 1, 3, 5))     # (rphase, cphase, n, h, w, c)
    return ph.reshape(4, n, hph, wph, c)


def _pick_row_tile(ho, wo):
    """Largest divisor of Ho such that th*Wo (matmul M dim) is ~<= 512."""
    target = max(1, 512 // max(wo, 1))
    best = 1
    for d in range(1, ho + 1):
        if ho % d == 0 and d <= target:
            best = d
    return best


def conv3x3_bn(x_nhwc, w_rows, shift, *, stride, relu, residual=None,
               out_dtype=jnp.float32):
    """Fused 3x3 conv (pad=1, no bias) + folded BN (+residual) (+ReLU), NHWC."""
    n, h, w, cin = x_nhwc.shape
    rows, k3cin, cout = w_rows.shape
    assert rows == 3 and k3cin == 3 * cin, (w_rows.shape, cin)
    assert cin % 128 == 0 and cout % 128 == 0, (cin, cout)

    ho = (h + 2 - 3) // stride + 1
    wo = (w + 2 - 3) // stride + 1
    wo_pad = _round_up(wo, 8)                 # sublane-aligned output width
    th = _pick_row_tile(ho, wo_pad)
    tn = _COUT_TILE if cout % _COUT_TILE == 0 else 128

    if stride == 1:
        hph, wph = ho + 2, wo_pad + 2
    else:
        hph, wph = ho + 1, wo_pad + 1
    phases = _pad_and_phase(x_nhwc, stride, hph, wph)
    nphase = phases.shape[0]

    fuse_k = cin <= 128        # K = 3*Cin fills the 256-deep MXU contraction
    kernel = functools.partial(_conv_bn_kernel, stride=stride, th=th,
                               relu=relu, has_res=residual is not None,
                               fuse_k=fuse_k)

    in_specs = [
        # Whole phase-split padded image of one batch element; stays VMEM
        # resident while the row-block / cout-tile axes iterate.
        pl.BlockSpec((nphase, 1, hph, wph, cin), lambda b, r, j: (0, b, 0, 0, 0)),
        pl.BlockSpec((3, 3 * cin, tn), lambda b, r, j: (0, 0, j)),
        pl.BlockSpec((1, tn), lambda b, r, j: (0, j)),
    ]
    args = [phases, w_rows, shift]
    if residual is not None:
        if residual.shape[2] != wo_pad:
            residual = jnp.pad(
                residual,
                ((0, 0), (0, 0), (0, wo_pad - residual.shape[2]), (0, 0)))
        in_specs.append(pl.BlockSpec((1, th, wo_pad, tn),
                                     lambda b, r, j: (b, r, 0, j)))
        args.append(residual)

    scratch = [pltpu.VMEM((th * wo_pad, tn), jnp.float32)]
    if fuse_k:
        scratch.append(pltpu.VMEM((th * wo_pad, 3 * cin), x_nhwc.dtype))

    out = pl.pallas_call(
        kernel,
        out_shape=jax.ShapeDtypeStruct((n, ho, wo_pad, cout), out_dtype),
        grid_spec=pltpu.PrefetchScalarGridSpec(
            num_scalar_prefetch=0,
            grid=(n, ho // th, cout // tn),
            in_specs=in_specs,
            out_specs=pl.BlockSpec((1, th, wo_pad, tn),
                                   lambda b, r, j: (b, r, 0, j)),
            scratch_shapes=scratch,
        ),
        compiler_params=pltpu.CompilerParams(
            # No cross-grid-step reduction -> every axis can be sharded across
            # TensorCores (keeps both v7x cores busy even at batch = 1).
            dimension_semantics=("parallel", "parallel", "parallel"),
            vmem_limit_bytes=_VMEM_LIMIT),
    )(*args)

    if wo_pad != wo:
        out = out[:, :, :wo, :]
    return out


# --------------------- once-per-model parameter prep ------------------------
def fold_bn(gamma, beta, mean, var, eps=1e-5):
    scale = gamma / jnp.sqrt(var + eps)
    shift = beta - mean * scale
    return scale, shift


def prep_conv(weight, scale, shift, *, cin_pad, cout_pad, w_dtype=jnp.bfloat16):
    """Fold BN scale into conv weight, lay out row-major (3, 3*Cin, Cout), pad."""
    cout, cin, kh, kw = weight.shape
    assert (kh, kw) == (3, 3), weight.shape
    w = jnp.transpose(weight, (2, 3, 1, 0))               # (3, 3, cin, cout)
    w = w * scale[None, None, None, :]
    w = jnp.pad(w, ((0, 0), (0, 0), (0, cin_pad - cin), (0, cout_pad - cout)))
    w = w.reshape(3, 3 * cin_pad, cout_pad)
    b = jnp.pad(shift, (0, cout_pad - cout)).reshape(1, cout_pad)
    return w.astype(w_dtype), b.astype(jnp.float32)


# -------------------------------- forward -----------------------------------
def conv_block_forward(x_nchw, params, *, cout):
    """ConvBlock.forward: relu(lower_block(x) + upper_block(x)); NCHW in/out."""
    x = jnp.transpose(x_nchw, (0, 2, 3, 1))                # NHWC
    cin = x.shape[-1]
    cin_pad = _round_up(cin, 128)
    if cin_pad != cin:                                     # lane-dense channels
        x = jnp.pad(x, ((0, 0), (0, 0), (0, 0), (0, cin_pad - cin)))
    x = x.astype(jnp.bfloat16)

    # upper_block: conv3x3 s2 + BN                          -> bf16 residual
    up = conv3x3_bn(x, params["w_up"], params["b_up"], stride=2, relu=False,
                    out_dtype=jnp.bfloat16)
    # lower_block: conv3x3 s1 + BN + ReLU                   -> bf16 activation
    y1 = conv3x3_bn(x, params["w1"], params["b1"], stride=1, relu=True,
                    out_dtype=jnp.bfloat16)
    # lower_block: conv3x3 s2 + BN, fused residual add + final ReLU -> f32
    out = conv3x3_bn(y1, params["w2"], params["b2"], stride=2, relu=True,
                     residual=up, out_dtype=jnp.float32)

    out = out[..., :cout]                                  # drop channel padding
    return jnp.transpose(out, (0, 3, 1, 2))                # NHWC -> NCHW


# --------------------------- pure-JAX reference -----------------------------
def _ref_conv(x_nchw, w, stride):
    return lax.conv_general_dilated(
        x_nchw, w, window_strides=(stride, stride),
        padding=((1, 1), (1, 1)),
        dimension_numbers=("NCHW", "OIHW", "NCHW"))


def conv_block_reference(x_nchw, params):
    def bn(y, scale, shift):
        return y * scale[None, :, None, None] + shift[None, :, None, None]

    up = bn(_ref_conv(x_nchw, params["w_up"], 2), params["s_up"], params["b_up"])
    y1 = jnp.maximum(bn(_ref_conv(x_nchw, params["w1"], 1),
                        params["s1"], params["b1"]), 0.0)
    y2 = bn(_ref_conv(y1, params["w2"], 2), params["s2"], params["b2"])
    return jnp.maximum(y2 + up, 0.0)


# ----------------------------------- main ------------------------------------
if __name__ == "__main__":
    key = jax.random.PRNGKey(0)
    N, CIN, COUT, H, W = 2, 4, 8, 16, 16
    CINP = _round_up(CIN, 128)      # lane-dense activation channels
    CPAD = _round_up(COUT, 128)     # lane-dense output channels

    ks = jax.random.split(key, 8)
    x = jax.random.normal(ks[0], (N, CIN, H, W), dtype=jnp.float32)

    def bn_params(k):
        k1, k2, k3, k4 = jax.random.split(k, 4)
        gamma = jax.random.uniform(k1, (COUT,), minval=0.5, maxval=1.5)
        beta = 0.1 * jax.random.normal(k2, (COUT,))
        mean = 0.1 * jax.random.normal(k3, (COUT,))
        var = jax.random.uniform(k4, (COUT,), minval=0.5, maxval=1.5)
        return fold_bn(gamma, beta, mean, var)

    w1 = 0.1 * jax.random.normal(ks[1], (COUT, CIN, 3, 3), dtype=jnp.float32)
    w2 = 0.1 * jax.random.normal(ks[2], (COUT, COUT, 3, 3), dtype=jnp.float32)
    w_up = 0.1 * jax.random.normal(ks[3], (COUT, CIN, 3, 3), dtype=jnp.float32)
    s1, b1 = bn_params(ks[4])
    s2, b2 = bn_params(ks[5])
    s_up, b_up = bn_params(ks[6])

    raw = dict(w1=w1, s1=s1, b1=b1, w2=w2, s2=s2, b2=b2,
               w_up=w_up, s_up=s_up, b_up=b_up)

    # Hoisted, once-per-model prep (BN scale folded, row-major taps, padded).
    w1p, b1p = prep_conv(w1, s1, b1, cin_pad=CINP, cout_pad=CPAD)
    w2p, b2p = prep_conv(w2, s2, b2, cin_pad=CPAD, cout_pad=CPAD)
    wup, bup = prep_conv(w_up, s_up, b_up, cin_pad=CINP, cout_pad=CPAD)
    prepped = dict(w1=w1p, b1=b1p, w2=w2p, b2=b2p, w_up=wup, b_up=bup)

    fwd = jax.jit(functools.partial(conv_block_forward, cout=COUT))
    out = jax.block_until_ready(fwd(x, prepped))

    ref = conv_block_reference(x, raw)
    assert out.shape == (N, COUT, H // 2, W // 2), out.shape
    # bf16 activations/weights -> looser tolerances than a pure-f32 chain.
    rel = float(jnp.sqrt(jnp.sum((out - ref) ** 2) / jnp.sum(ref ** 2)))
    assert rel < 2e-2, rel
    assert jnp.allclose(out, ref, rtol=1e-1, atol=1e-1), \
        float(jnp.max(jnp.abs(out - ref)))

    print("KERNEL_OK")
</pallas_src>

<mosaic_0001>
module attributes {stable_mosaic.version = 11 : i64} {
  func.func @_conv_bn_kernel(%arg0: i32, %arg1: i32, %arg2: i32, %arg3: memref<1x1x18x18x128xbf16, #tpu.memory_space<vmem>>, %arg4: memref<3x384x128xbf16, #tpu.memory_space<vmem>>, %arg5: memref<1x128xf32, #tpu.memory_space<vmem>>, %arg6: memref<1x16x16x128xbf16, #tpu.memory_space<vmem>>, %arg7: memref<256x128xf32, #tpu.memory_space<vmem>>, %arg8: memref<256x384xbf16, #tpu.memory_space<vmem>>) attributes {dimension_semantics = [#tpu.dimension_semantics<parallel>, #tpu.dimension_semantics<parallel>, #tpu.dimension_semantics<parallel>], iteration_bounds = array<i64: 2, 1, 1>, scalar_prefetch = 0 : i64, scratch_operands = 2 : i64, tpu.core_type = #tpu.core_type<tc>, window_params = [{transform_indices = @transform_0, window_bounds = array<i64: 1, 1, 18, 18, 128>}, {transform_indices = @transform_1, window_bounds = array<i64: 3, 384, 128>}, {transform_indices = @transform_2, window_bounds = array<i64: 1, 128>}, {transform_indices = @transform_3, window_bounds = array<i64: 1, 16, 16, 128>}]} {
    %c16_i32 = arith.constant 16 : i32
    %0 = arith.muli %arg1, %c16_i32 : i32
    %1 = tpu.assume_multiple %0, 16 : i32
    %c0_i32 = arith.constant 0 : i32
    %2 = arith.addi %1, %c0_i32 : i32
    %c0 = arith.constant 0 : index
    %c0_0 = arith.constant 0 : index
    %3 = arith.index_cast %2 : i32 to index
    %c0_1 = arith.constant 0 : index
    %c0_2 = arith.constant 0 : index
    %4 = vector.load %arg3[%c0, %c0_0, %3, %c0_1, %c0_2] : memref<1x1x18x18x128xbf16, #tpu.memory_space<vmem>>, vector<1x1x16x16x128xbf16>
    %5 = vector.shape_cast %4 : vector<1x1x16x16x128xbf16> to vector<16x16x128xbf16>
    %6 = vector.shape_cast %5 : vector<16x16x128xbf16> to vector<256x128xbf16>
    %c0_3 = arith.constant 0 : index
    %c0_4 = arith.constant 0 : index
    %7 = vector.load %arg8[%c0_3, %c0_4] : memref<256x384xbf16, #tpu.memory_space<vmem>>, vector<256x128xbf16>
    tpu.vector_store %arg8[%c0_3, %c0_4], %6 {strides = array<i32>} : memref<256x384xbf16, #tpu.memory_space<vmem>>, vector<256x128xbf16>,
    %c0_i32_5 = arith.constant 0 : i32
    %8 = arith.addi %1, %c0_i32_5 : i32
    %c0_6 = arith.constant 0 : index
    %c0_7 = arith.constant 0 : index
    %9 = arith.index_cast %8 : i32 to index
    %c1 = arith.constant 1 : index
    %c0_8 = arith.constant 0 : index
    %10 = vector.load %arg3[%c0_6, %c0_7, %9, %c1, %c0_8] : memref<1x1x18x18x128xbf16, #tpu.memory_space<vmem>>, vector<1x1x16x16x128xbf16>
    %11 = vector.shape_cast %10 : vector<1x1x16x16x128xbf16> to vector<16x16x128xbf16>
    %12 = vector.shape_cast %11 : vector<16x16x128xbf16> to vector<256x128xbf16>
    %c0_9 = arith.constant 0 : index
    %c128 = arith.constant 128 : index
    %13 = vector.load %arg8[%c0_9, %c128] : memref<256x384xbf16, #tpu.memory_space<vmem>>, vector<256x128xbf16>
    tpu.vector_store %arg8[%c0_9, %c128], %12 {strides = array<i32>} : memref<256x384xbf16, #tpu.memory_space<vmem>>, vector<256x128xbf16>,
    %c0_i32_10 = arith.constant 0 : i32
    %14 = arith.addi %1, %c0_i32_10 : i32
    %c0_11 = arith.constant 0 : index
    %c0_12 = arith.constant 0 : index
    %15 = arith.index_cast %14 : i32 to index
    %c2 = arith.constant 2 : index
    %c0_13 = arith.constant 0 : index
    %16 = vector.load %arg3[%c0_11, %c0_12, %15, %c2, %c0_13] : memref<1x1x18x18x128xbf16, #tpu.memory_space<vmem>>, vector<1x1x16x16x128xbf16>
    %17 = vector.shape_cast %16 : vector<1x1x16x16x128xbf16> to vector<16x16x128xbf16>
    %18 = vector.shape_cast %17 : vector<16x16x128xbf16> to vector<256x128xbf16>
    %c0_14 = arith.constant 0 : index
    %c256 = arith.constant 256 : index
    %19 = vector.load %arg8[%c0_14, %c256] : memref<256x384xbf16, #tpu.memory_space<vmem>>, vector<256x128xbf16>
    tpu.vector_store %arg8[%c0_14, %c256], %18 {strides = array<i32>} : memref<256x384xbf16, #tpu.memory_space<vmem>>, vector<256x128xbf16>,
    %c0_15 = arith.constant 0 : index
    %c0_16 = arith.constant 0 : index
    %20 = vector.load %arg8[%c0_15, %c0_16] : memref<256x384xbf16, #tpu.memory_space<vmem>>, vector<256x384xbf16>
    %c0_17 = arith.constant 0 : index
    %c0_18 = arith.constant 0 : index
    %c0_19 = arith.constant 0 : index
    %21 = vector.load %arg4[%c0_17, %c0_18, %c0_19] : memref<3x384x128xbf16, #tpu.memory_space<vmem>>, vector<1x384x128xbf16>
    %22 = vector.shape_cast %21 : vector<1x384x128xbf16> to vector<384x128xbf16>
    %cst = arith.constant dense<0.000000e+00> : vector<256x128xf32>
    %23 = tpu.matmul %20, %22, %cst {dimension_numbers = #tpu.dot_dimension_numbers<[1], [0], [0], [1], [0, 0, 1, 1], [], []>} : vector<256x384xbf16>, vector<384x128xbf16>, vector<256x128xf32> -> vector<256x128xf32>
    %c0_20 = arith.constant 0 : index
    %c0_21 = arith.constant 0 : index
    %24 = vector.load %arg7[%c0_20, %c0_21] : memref<256x128xf32, #tpu.memory_space<vmem>>, vector<256x128xf32>
    tpu.vector_store %arg7[%c0_20, %c0_21], %23 {strides = array<i32>} : memref<256x128xf32, #tpu.memory_space<vmem>>, vector<256x128xf32>,
    %c1_i32 = arith.constant 1 : i32
    %25 = arith.addi %1, %c1_i32 : i32
    %c0_22 = arith.constant 0 : index
    %c0_23 = arith.constant 0 : index
    %26 = arith.index_cast %25 : i32 to index
    %c0_24 = arith.constant 0 : index
    %c0_25 = arith.constant 0 : index
    %27 = vector.load %arg3[%c0_22, %c0_23, %26, %c0_24, %c0_25] : memref<1x1x18x18x128xbf16, #tpu.memory_space<vmem>>, vector<1x1x16x16x128xbf16>
    %28 = vector.shape_cast %27 : vector<1x1x16x16x128xbf16> to vector<16x16x128xbf16>
    %29 = vector.shape_cast %28 : vector<16x16x128xbf16> to vector<256x128xbf16>
    %c0_26 = arith.constant 0 : index
    %c0_27 = arith.constant 0 : index
    %30 = vector.load %arg8[%c0_26, %c0_27] : memref<256x384xbf16, #tpu.memory_space<vmem>>, vector<256x128xbf16>
    tpu.vector_store %arg8[%c0_26, %c0_27], %29 {strides = array<i32>} : memref<256x384xbf16, #tpu.memory_space<vmem>>, vector<256x128xbf16>,
    %c1_i32_28 = arith.constant 1 : i32
    %31 = arith.addi %1, %c1_i32_28 : i32
    %c0_29 = arith.constant 0 : index
    %c0_30 = arith.constant 0 : index
    %32 = arith.index_cast %31 : i32 to index
    %c1_31 = arith.constant 1 : index
    %c0_32 = arith.constant 0 : index
    %33 = vector.load %arg3[%c0_29, %c0_30, %32, %c1_31, %c0_32] : memref<1x1x18x18x128xbf16, #tpu.memory_space<vmem>>, vector<1x1x16x16x128xbf16>
    %34 = vector.shape_cast %33 : vector<1x1x16x16x128xbf16> to vector<16x16x128xbf16>
    %35 = vector.shape_cast %34 : vector<16x16x128xbf16> to vector<256x128xbf16>
    %c0_33 = arith.constant 0 : index
    %c128_34 = arith.constant 128 : index
    %36 = vector.load %arg8[%c0_33, %c128_34] : memref<256x384xbf16, #tpu.memory_space<vmem>>, vector<256x128xbf16>
    tpu.vector_store %arg8[%c0_33, %c128_34], %35 {strides = array<i32>} : memref<256x384xbf16, #tpu.memory_space<vmem>>, vector<256x128xbf16>,
    %c1_i32_35 = arith.constant 1 : i32
    %37 = arith.addi %1, %c1_i32_35 : i32
    %c0_36 = arith.constant 0 : index
    %c0_37 = arith.constant 0 : index
    %38 = arith.index_cast %37 : i32 to index
    %c2_38 = arith.constant 2 : index
    %c0_39 = arith.constant 0 : index
    %39 = vector.load %arg3[%c0_36, %c0_37, %38, %c2_38, %c0_39] : memref<1x1x18x18x128xbf16, #tpu.memory_space<vmem>>, vector<1x1x16x16x128xbf16>
    %40 = vector.shape_cast %39 : vector<1x1x16x16x128xbf16> to vector<16x16x128xbf16>
    %41 = vector.shape_cast %40 : vector<16x16x128xbf16> to vector<256x128xbf16>
    %c0_40 = arith.constant 0 : index
    %c256_41 = arith.constant 256 : index
    %42 = vector.load %arg8[%c0_40, %c256_41] : memref<256x384xbf16, #tpu.memory_space<vmem>>, vector<256x128xbf16>
    tpu.vector_store %arg8[%c0_40, %c256_41], %41 {strides = array<i32>} : memref<256x384xbf16, #tpu.memory_space<vmem>>, vector<256x128xbf16>,
    %c0_42 = arith.constant 0 : index
    %c0_43 = arith.constant 0 : index
    %43 = vector.load %arg8[%c0_42, %c0_43] : memref<256x384xbf16, #tpu.memory_space<vmem>>, vector<256x384xbf16>
    %c1_44 = arith.constant 1 : index
    %c0_45 = arith.constant 0 : index
    %c0_46 = arith.constant 0 : index
    %44 = vector.load %arg4[%c1_44, %c0_45, %c0_46] : memref<3x384x128xbf16, #tpu.memory_space<vmem>>, vector<1x384x128xbf16>
    %45 = vector.shape_cast %44 : vector<1x384x128xbf16> to vector<384x128xbf16>
    %cst_47 = arith.constant dense<0.000000e+00> : vector<256x128xf32>
    %46 = tpu.matmul %43, %45, %cst_47 {dimension_numbers = #tpu.dot_dimension_numbers<[1], [0], [0], [1], [0, 0, 1, 1], [], []>} : vector<256x384xbf16>, vector<384x128xbf16>, vector<256x128xf32> -> vector<256x128xf32>
    %c0_48 = arith.constant 0 : index
    %c0_49 = arith.constant 0 : index
    %47 = vector.load %arg7[%c0_48, %c0_49] : memref<256x128xf32, #tpu.memory_space<vmem>>, vector<256x128xf32>
    %48 = arith.addf %47, %46 : vector<256x128xf32>
    %c0_50 = arith.constant 0 : index
    %c0_51 = arith.constant 0 : index
    %49 = vector.load %arg7[%c0_50, %c0_51] : memref<256x128xf32, #tpu.memory_space<vmem>>, vector<256x128xf32>
    tpu.vector_store %arg7[%c0_50, %c0_51], %48 {strides = array<i32>} : memref<256x128xf32, #tpu.memory_space<vmem>>, vector<256x128xf32>,
    %c2_i32 = arith.constant 2 : i32
    %50 = arith.addi %1, %c2_i32 : i32
    %c0_52 = arith.constant 0 : index
    %c0_53 = arith.constant 0 : index
    %51 = arith.index_cast %50 : i32 to index
    %c0_54 = arith.constant 0 : index
    %c0_55 = arith.constant 0 : index
    %52 = vector.load %arg3[%c0_52, %c0_53, %51, %c0_54, %c0_55] : memref<1x1x18x18x128xbf16, #tpu.memory_space<vmem>>, vector<1x1x16x16x128xbf16>
    %53 = vector.shape_cast %52 : vector<1x1x16x16x128xbf16> to vector<16x16x128xbf16>
    %54 = vector.shape_cast %53 : vector<16x16x128xbf16> to vector<256x128xbf16>
    %c0_56 = arith.constant 0 : index
    %c0_57 = arith.constant 0 : index
    %55 = vector.load %arg8[%c0_56, %c0_57] : memref<256x384xbf16, #tpu.memory_space<vmem>>, vector<256x128xbf16>
    tpu.vector_store %arg8[%c0_56, %c0_57], %54 {strides = array<i32>} : memref<256x384xbf16, #tpu.memory_space<vmem>>, vector<256x128xbf16>,
    %c2_i32_58 = arith.constant 2 : i32
    %56 = arith.addi %1, %c2_i32_58 : i32
    %c0_59 = arith.constant 0 : index
    %c0_60 = arith.constant 0 : index
    %57 = arith.index_cast %56 : i32 to index
    %c1_61 = arith.constant 1 : index
    %c0_62 = arith.constant 0 : index
    %58 = vector.load %arg3[%c0_59, %c0_60, %57, %c1_61, %c0_62] : memref<1x1x18x18x128xbf16, #tpu.memory_space<vmem>>, vector<1x1x16x16x128xbf16>
    %59 = vector.shape_cast %58 : vector<1x1x16x16x128xbf16> to vector<16x16x128xbf16>
    %60 = vector.shape_cast %59 : vector<16x16x128xbf16> to vector<256x128xbf16>
    %c0_63 = arith.constant 0 : index
    %c128_64 = arith.constant 128 : index
    %61 = vector.load %arg8[%c0_63, %c128_64] : memref<256x384xbf16, #tpu.memory_space<vmem>>, vector<256x128xbf16>
    tpu.vector_store %arg8[%c0_63, %c128_64], %60 {strides = array<i32>} : memref<256x384xbf16, #tpu.memory_space<vmem>>, vector<256x128xbf16>,
    %c2_i32_65 = arith.constant 2 : i32
    %62 = arith.addi %1, %c2_i32_65 : i32
    %c0_66 = arith.constant 0 : index
    %c0_67 = arith.constant 0 : index
    %63 = arith.index_cast %62 : i32 to index
    %c2_68 = arith.constant 2 : index
    %c0_69 = arith.constant 0 : index
    %64 = vector.load %arg3[%c0_66, %c0_67, %63, %c2_68, %c0_69] : memref<1x1x18x18x128xbf16, #tpu.memory_space<vmem>>, vector<1x1x16x16x128xbf16>
    %65 = vector.shape_cast %64 : vector<1x1x16x16x128xbf16> to vector<16x16x128xbf16>
    %66 = vector.shape_cast %65 : vector<16x16x128xbf16> to vector<256x128xbf16>
    %c0_70 = arith.constant 0 : index
    %c256_71 = arith.constant 256 : index
    %67 = vector.load %arg8[%c0_70, %c256_71] : memref<256x384xbf16, #tpu.memory_space<vmem>>, vector<256x128xbf16>
    tpu.vector_store %arg8[%c0_70, %c256_71], %66 {strides = array<i32>} : memref<256x384xbf16, #tpu.memory_space<vmem>>, vector<256x128xbf16>,
    %c0_72 = arith.constant 0 : index
    %c0_73 = arith.constant 0 : index
    %68 = vector.load %arg8[%c0_72, %c0_73] : memref<256x384xbf16, #tpu.memory_space<vmem>>, vector<256x384xbf16>
    %c2_74 = arith.constant 2 : index
    %c0_75 = arith.constant 0 : index
    %c0_76 = arith.constant 0 : index
    %69 = vector.load %arg4[%c2_74, %c0_75, %c0_76] : memref<3x384x128xbf16, #tpu.memory_space<vmem>>, vector<1x384x128xbf16>
    %70 = vector.shape_cast %69 : vector<1x384x128xbf16> to vector<384x128xbf16>
    %cst_77 = arith.constant dense<0.000000e+00> : vector<256x128xf32>
    %71 = tpu.matmul %68, %70, %cst_77 {dimension_numbers = #tpu.dot_dimension_numbers<[1], [0], [0], [1], [0, 0, 1, 1], [], []>} : vector<256x384xbf16>, vector<384x128xbf16>, vector<256x128xf32> -> vector<256x128xf32>
    %c0_78 = arith.constant 0 : index
    %c0_79 = arith.constant 0 : index
    %72 = vector.load %arg7[%c0_78, %c0_79] : memref<256x128xf32, #tpu.memory_space<vmem>>, vector<256x128xf32>
    %73 = arith.addf %72, %71 : vector<256x128xf32>
    %c0_80 = arith.constant 0 : index
    %c0_81 = arith.constant 0 : index
    %74 = vector.load %arg7[%c0_80, %c0_81] : memref<256x128xf32, #tpu.memory_space<vmem>>, vector<256x128xf32>
    tpu.vector_store %arg7[%c0_80, %c0_81], %73 {strides = array<i32>} : memref<256x128xf32, #tpu.memory_space<vmem>>, vector<256x128xf32>,
    %c0_82 = arith.constant 0 : index
    %c0_83 = arith.constant 0 : index
    %75 = vector.load %arg7[%c0_82, %c0_83] : memref<256x128xf32, #tpu.memory_space<vmem>>, vector<256x128xf32>
    %c0_84 = arith.constant 0 : index
    %c0_85 = arith.constant 0 : index
    %76 = vector.load %arg5[%c0_84, %c0_85] : memref<1x128xf32, #tpu.memory_space<vmem>>, vector<1x128xf32>
    %77 = vector.broadcast %76 : vector<1x128xf32> to vector<256x128xf32>
    %78 = arith.addf %75, %77 : vector<256x128xf32>
    %cst_86 = arith.constant 0.000000e+00 : f32
    %79 = vector.broadcast %cst_86 : f32 to vector<256x128xf32>
    %80 = arith.maximumf %78, %79 : vector<256x128xf32>
    %81 = vector.shape_cast %80 : vector<256x128xf32> to vector<1x16x16x128xf32>
    %82 = arith.truncf %81 : vector<1x16x16x128xf32> to vector<1x16x16x128xbf16>
    %c0_87 = arith.constant 0 : index
    %c0_88 = arith.constant 0 : index
    %c0_89 = arith.constant 0 : index
    %c0_90 = arith.constant 0 : index
    %83 = vector.load %arg6[%c0_87, %c0_88, %c0_89, %c0_90] : memref<1x16x16x128xbf16, #tpu.memory_space<vmem>>, vector<1x16x16x128xbf16>
    tpu.vector_store %arg6[%c0_87, %c0_88, %c0_89, %c0_90], %82 {strides = array<i32>} : memref<1x16x16x128xbf16, #tpu.memory_space<vmem>>, vector<1x16x16x128xbf16>,
    return
  }
  func.func @transform_0(%arg0: i32, %arg1: i32, %arg2: i32) -> (i32, i32, i32, i32, i32) {
    %c0_i32 = arith.constant 0 : i32
    %c0_i32_0 = arith.constant 0 : i32
    %c0_i32_1 = arith.constant 0 : i32
    %c0_i32_2 = arith.constant 0 : i32
    %c0_i32_3 = arith.constant 0 : i32
    return %c0_i32, %arg0, %c0_i32_0, %c0_i32_1, %c0_i32_2 : i32, i32, i32, i32, i32
  }
  func.func @transform_1(%arg0: i32, %arg1: i32, %arg2: i32) -> (i32, i32, i32) {
    %c0_i32 = arith.constant 0 : i32
    %c0_i32_0 = arith.constant 0 : i32
    %c0_i32_1 = arith.constant 0 : i32
    return %c0_i32, %c0_i32_0, %arg2 : i32, i32, i32
  }
  func.func @transform_2(%arg0: i32, %arg1: i32, %arg2: i32) -> (i32, i32) {
    %c0_i32 = arith.constant 0 : i32
    %c0_i32_0 = arith.constant 0 : i32
    return %c0_i32, %arg2 : i32, i32
  }
  func.func @transform_3(%arg0: i32, %arg1: i32, %arg2: i32) -> (i32, i32, i32, i32) {
    %c0_i32 = arith.constant 0 : i32
    %c0_i32_0 = arith.constant 0 : i32
    return %arg0, %arg1, %c0_i32, %arg2 : i32, i32, i32, i32
  }
}

module attributes {stable_mosaic.version = 11 : i64} {
  func.func @_conv_bn_kernel(%arg0: i32, %arg1: i32, %arg2: i32, %arg3: memref<4x1x9x9x128xbf16, #tpu.memory_space<vmem>>, %arg4: memref<3x384x128xbf16, #tpu.memory_space<vmem>>, %arg5: memref<1x128xf32, #tpu.memory_space<vmem>>, %arg6: memref<1x8x8x128xbf16, #tpu.memory_space<vmem>>, %arg7: memref<64x128xf32, #tpu.memory_space<vmem>>, %arg8: memref<64x384xbf16, #tpu.memory_space<vmem>>) attributes {dimension_semantics = [#tpu.dimension_semantics<parallel>, #tpu.dimension_semantics<parallel>, #tpu.dimension_semantics<parallel>], iteration_bounds = array<i64: 2, 1, 1>, scalar_prefetch = 0 : i64, scratch_operands = 2 : i64, tpu.core_type = #tpu.core_type<tc>, window_params = [{transform_indices = @transform_0, window_bounds = array<i64: 4, 1, 9, 9, 128>}, {transform_indices = @transform_1, window_bounds = array<i64: 3, 384, 128>}, {transform_indices = @transform_2, window_bounds = array<i64: 1, 128>}, {transform_indices = @transform_3, window_bounds = array<i64: 1, 8, 8, 128>}]} {
    %c8_i32 = arith.constant 8 : i32
    %0 = arith.muli %arg1, %c8_i32 : i32
    %1 = tpu.assume_multiple %0, 8 : i32
    %c0_i32 = arith.constant 0 : i32
    %2 = arith.addi %1, %c0_i32 : i32
    %c0 = arith.constant 0 : index
    %c0_0 = arith.constant 0 : index
    %3 = arith.index_cast %2 : i32 to index
    %c0_1 = arith.constant 0 : index
    %c0_2 = arith.constant 0 : index
    %4 = vector.load %arg3[%c0, %c0_0, %3, %c0_1, %c0_2] : memref<4x1x9x9x128xbf16, #tpu.memory_space<vmem>>, vector<1x1x8x8x128xbf16>
    %5 = vector.shape_cast %4 : vector<1x1x8x8x128xbf16> to vector<8x8x128xbf16>
    %6 = vector.shape_cast %5 : vector<8x8x128xbf16> to vector<64x128xbf16>
    %c0_3 = arith.constant 0 : index
    %c0_4 = arith.constant 0 : index
    %7 = vector.load %arg8[%c0_3, %c0_4] : memref<64x384xbf16, #tpu.memory_space<vmem>>, vector<64x128xbf16>
    tpu.vector_store %arg8[%c0_3, %c0_4], %6 {strides = array<i32>} : memref<64x384xbf16, #tpu.memory_space<vmem>>, vector<64x128xbf16>,
    %c0_i32_5 = arith.constant 0 : i32
    %8 = arith.addi %1, %c0_i32_5 : i32
    %c1 = arith.constant 1 : index
    %c0_6 = arith.constant 0 : index
    %9 = arith.index_cast %8 : i32 to index
    %c0_7 = arith.constant 0 : index
    %c0_8 = arith.constant 0 : index
    %10 = vector.load %arg3[%c1, %c0_6, %9, %c0_7, %c0_8] : memref<4x1x9x9x128xbf16, #tpu.memory_space<vmem>>, vector<1x1x8x8x128xbf16>
    %11 = vector.shape_cast %10 : vector<1x1x8x8x128xbf16> to vector<8x8x128xbf16>
    %12 = vector.shape_cast %11 : vector<8x8x128xbf16> to vector<64x128xbf16>
    %c0_9 = arith.constant 0 : index
    %c128 = arith.constant 128 : index
    %13 = vector.load %arg8[%c0_9, %c128] : memref<64x384xbf16, #tpu.memory_space<vmem>>, vector<64x128xbf16>
    tpu.vector_store %arg8[%c0_9, %c128], %12 {strides = array<i32>} : memref<64x384xbf16, #tpu.memory_space<vmem>>, vector<64x128xbf16>,
    %c0_i32_10 = arith.constant 0 : i32
    %14 = arith.addi %1, %c0_i32_10 : i32
    %c0_11 = arith.constant 0 : index
    %c0_12 = arith.constant 0 : index
    %15 = arith.index_cast %14 : i32 to index
    %c1_13 = arith.constant 1 : index
    %c0_14 = arith.constant 0 : index
    %16 = vector.load %arg3[%c0_11, %c0_12, %15, %c1_13, %c0_14] : memref<4x1x9x9x128xbf16, #tpu.memory_space<vmem>>, vector<1x1x8x8x128xbf16>
    %17 = vector.shape_cast %16 : vector<1x1x8x8x128xbf16> to vector<8x8x128xbf16>
    %18 = vector.shape_cast %17 : vector<8x8x128xbf16> to vector<64x128xbf16>
    %c0_15 = arith.constant 0 : index
    %c256 = arith.constant 256 : index
    %19 = vector.load %arg8[%c0_15, %c256] : memref<64x384xbf16, #tpu.memory_space<vmem>>, vector<64x128xbf16>
    tpu.vector_store %arg8[%c0_15, %c256], %18 {strides = array<i32>} : memref<64x384xbf16, #tpu.memory_space<vmem>>, vector<64x128xbf16>,
    %c0_16 = arith.constant 0 : index
    %c0_17 = arith.constant 0 : index
    %20 = vector.load %arg8[%c0_16, %c0_17] : memref<64x384xbf16, #tpu.memory_space<vmem>>, vector<64x384xbf16>
    %c0_18 = arith.constant 0 : index
    %c0_19 = arith.constant 0 : index
    %c0_20 = arith.constant 0 : index
    %21 = vector.load %arg4[%c0_18, %c0_19, %c0_20] : memref<3x384x128xbf16, #tpu.memory_space<vmem>>, vector<1x384x128xbf16>
    %22 = vector.shape_cast %21 : vector<1x384x128xbf16> to vector<384x128xbf16>
    %cst = arith.constant dense<0.000000e+00> : vector<64x128xf32>
    %23 = tpu.matmul %20, %22, %cst {dimension_numbers = #tpu.dot_dimension_numbers<[1], [0], [0], [1], [0, 0, 1, 1], [], []>} : vector<64x384xbf16>, vector<384x128xbf16>, vector<64x128xf32> -> vector<64x128xf32>
    %c0_21 = arith.constant 0 : index
    %c0_22 = arith.constant 0 : index
    %24 = vector.load %arg7[%c0_21, %c0_22] : memref<64x128xf32, #tpu.memory_space<vmem>>, vector<64x128xf32>
    tpu.vector_store %arg7[%c0_21, %c0_22], %23 {strides = array<i32>} : memref<64x128xf32, #tpu.memory_space<vmem>>, vector<64x128xf32>,
    %c0_i32_23 = arith.constant 0 : i32
    %25 = arith.addi %1, %c0_i32_23 : i32
    %c2 = arith.constant 2 : index
    %c0_24 = arith.constant 0 : index
    %26 = arith.index_cast %25 : i32 to index
    %c0_25 = arith.constant 0 : index
    %c0_26 = arith.constant 0 : index
    %27 = vector.load %arg3[%c2, %c0_24, %26, %c0_25, %c0_26] : memref<4x1x9x9x128xbf16, #tpu.memory_space<vmem>>, vector<1x1x8x8x128xbf16>
    %28 = vector.shape_cast %27 : vector<1x1x8x8x128xbf16> to vector<8x8x128xbf16>
    %29 = vector.shape_cast %28 : vector<8x8x128xbf16> to vector<64x128xbf16>
    %c0_27 = arith.constant 0 : index
    %c0_28 = arith.constant 0 : index
    %30 = vector.load %arg8[%c0_27, %c0_28] : memref<64x384xbf16, #tpu.memory_space<vmem>>, vector<64x128xbf16>
    tpu.vector_store %arg8[%c0_27, %c0_28], %29 {strides = array<i32>} : memref<64x384xbf16, #tpu.memory_space<vmem>>, vector<64x128xbf16>,
    %c0_i32_29 = arith.constant 0 : i32
    %31 = arith.addi %1, %c0_i32_29 : i32
    %c3 = arith.constant 3 : index
    %c0_30 = arith.constant 0 : index
    %32 = arith.index_cast %31 : i32 to index
    %c0_31 = arith.constant 0 : index
    %c0_32 = arith.constant 0 : index
    %33 = vector.load %arg3[%c3, %c0_30, %32, %c0_31, %c0_32] : memref<4x1x9x9x128xbf16, #tpu.memory_space<vmem>>, vector<1x1x8x8x128xbf16>
    %34 = vector.shape_cast %33 : vector<1x1x8x8x128xbf16> to vector<8x8x128xbf16>
    %35 = vector.shape_cast %34 : vector<8x8x128xbf16> to vector<64x128xbf16>
    %c0_33 = arith.constant 0 : index
    %c128_34 = arith.constant 128 : index
    %36 = vector.load %arg8[%c0_33, %c128_34] : memref<64x384xbf16, #tpu.memory_space<vmem>>, vector<64x128xbf16>
    tpu.vector_store %arg8[%c0_33, %c128_34], %35 {strides = array<i32>} : memref<64x384xbf16, #tpu.memory_space<vmem>>, vector<64x128xbf16>,
    %c0_i32_35 = arith.constant 0 : i32
    %37 = arith.addi %1, %c0_i32_35 : i32
    %c2_36 = arith.constant 2 : index
    %c0_37 = arith.constant 0 : index
    %38 = arith.index_cast %37 : i32 to index
    %c1_38 = arith.constant 1 : index
    %c0_39 = arith.constant 0 : index
    %39 = vector.load %arg3[%c2_36, %c0_37, %38, %c1_38, %c0_39] : memref<4x1x9x9x128xbf16, #tpu.memory_space<vmem>>, vector<1x1x8x8x128xbf16>
    %40 = vector.shape_cast %39 : vector<1x1x8x8x128xbf16> to vector<8x8x128xbf16>
    %41 = vector.shape_cast %40 : vector<8x8x128xbf16> to vector<64x128xbf16>
    %c0_40 = arith.constant 0 : index
    %c256_41 = arith.constant 256 : index
    %42 = vector.load %arg8[%c0_40, %c256_41] : memref<64x384xbf16, #tpu.memory_space<vmem>>, vector<64x128xbf16>
    tpu.vector_store %arg8[%c0_40, %c256_41], %41 {strides = array<i32>} : memref<64x384xbf16, #tpu.memory_space<vmem>>, vector<64x128xbf16>,
    %c0_42 = arith.constant 0 : index
    %c0_43 = arith.constant 0 : index
    %43 = vector.load %arg8[%c0_42, %c0_43] : memref<64x384xbf16, #tpu.memory_space<vmem>>, vector<64x384xbf16>
    %c1_44 = arith.constant 1 : index
    %c0_45 = arith.constant 0 : index
    %c0_46 = arith.constant 0 : index
    %44 = vector.load %arg4[%c1_44, %c0_45, %c0_46] : memref<3x384x128xbf16, #tpu.memory_space<vmem>>, vector<1x384x128xbf16>
    %45 = vector.shape_cast %44 : vector<1x384x128xbf16> to vector<384x128xbf16>
    %cst_47 = arith.constant dense<0.000000e+00> : vector<64x128xf32>
    %46 = tpu.matmul %43, %45, %cst_47 {dimension_numbers = #tpu.dot_dimension_numbers<[1], [0], [0], [1], [0, 0, 1, 1], [], []>} : vector<64x384xbf16>, vector<384x128xbf16>, vector<64x128xf32> -> vector<64x128xf32>
    %c0_48 = arith.constant 0 : index
    %c0_49 = arith.constant 0 : index
    %47 = vector.load %arg7[%c0_48, %c0_49] : memref<64x128xf32, #tpu.memory_space<vmem>>, vector<64x128xf32>
    %48 = arith.addf %47, %46 : vector<64x128xf32>
    %c0_50 = arith.constant 0 : index
    %c0_51 = arith.constant 0 : index
    %49 = vector.load %arg7[%c0_50, %c0_51] : memref<64x128xf32, #tpu.memory_space<vmem>>, vector<64x128xf32>
    tpu.vector_store %arg7[%c0_50, %c0_51], %48 {strides = array<i32>} : memref<64x128xf32, #tpu.memory_space<vmem>>, vector<64x128xf32>,
    %c1_i32 = arith.constant 1 : i32
    %50 = arith.addi %1, %c1_i32 : i32
    %c0_52 = arith.constant 0 : index
    %c0_53 = arith.constant 0 : index
    %51 = arith.index_cast %50 : i32 to index
    %c0_54 = arith.constant 0 : index
    %c0_55 = arith.constant 0 : index
    %52 = vector.load %arg3[%c0_52, %c0_53, %51, %c0_54, %c0_55] : memref<4x1x9x9x128xbf16, #tpu.memory_space<vmem>>, vector<1x1x8x8x128xbf16>
    %53 = vector.shape_cast %52 : vector<1x1x8x8x128xbf16> to vector<8x8x128xbf16>
    %54 = vector.shape_cast %53 : vector<8x8x128xbf16> to vector<64x128xbf16>
    %c0_56 = arith.constant 0 : index
    %c0_57 = arith.constant 0 : index
    %55 = vector.load %arg8[%c0_56, %c0_57] : memref<64x384xbf16, #tpu.memory_space<vmem>>, vector<64x128xbf16>
    tpu.vector_store %arg8[%c0_56, %c0_57], %54 {strides = array<i32>} : memref<64x384xbf16, #tpu.memory_space<vmem>>, vector<64x128xbf16>,
    %c1_i32_58 = arith.constant 1 : i32
    %56 = arith.addi %1, %c1_i32_58 : i32
    %c1_59 = arith.constant 1 : index
    %c0_60 = arith.constant 0 : index
    %57 = arith.index_cast %56 : i32 to index
    %c0_61 = arith.constant 0 : index
    %c0_62 = arith.constant 0 : index
    %58 = vector.load %arg3[%c1_59, %c0_60, %57, %c0_61, %c0_62] : memref<4x1x9x9x128xbf16, #tpu.memory_space<vmem>>, vector<1x1x8x8x128xbf16>
    %59 = vector.shape_cast %58 : vector<1x1x8x8x128xbf16> to vector<8x8x128xbf16>
    %60 = vector.shape_cast %59 : vector<8x8x128xbf16> to vector<64x128xbf16>
    %c0_63 = arith.constant 0 : index
    %c128_64 = arith.constant 128 : index
    %61 = vector.load %arg8[%c0_63, %c128_64] : memref<64x384xbf16, #tpu.memory_space<vmem>>, vector<64x128xbf16>
    tpu.vector_store %arg8[%c0_63, %c128_64], %60 {strides = array<i32>} : memref<64x384xbf16, #tpu.memory_space<vmem>>, vector<64x128xbf16>,
    %c1_i32_65 = arith.constant 1 : i32
    %62 = arith.addi %1, %c1_i32_65 : i32
    %c0_66 = arith.constant 0 : index
    %c0_67 = arith.constant 0 : index
    %63 = arith.index_cast %62 : i32 to index
    %c1_68 = arith.constant 1 : index
    %c0_69 = arith.constant 0 : index
    %64 = vector.load %arg3[%c0_66, %c0_67, %63, %c1_68, %c0_69] : memref<4x1x9x9x128xbf16, #tpu.memory_space<vmem>>, vector<1x1x8x8x128xbf16>
    %65 = vector.shape_cast %64 : vector<1x1x8x8x128xbf16> to vector<8x8x128xbf16>
    %66 = vector.shape_cast %65 : vector<8x8x128xbf16> to vector<64x128xbf16>
    %c0_70 = arith.constant 0 : index
    %c256_71 = arith.constant 256 : index
    %67 = vector.load %arg8[%c0_70, %c256_71] : memref<64x384xbf16, #tpu.memory_space<vmem>>, vector<64x128xbf16>
    tpu.vector_store %arg8[%c0_70, %c256_71], %66 {strides = array<i32>} : memref<64x384xbf16, #tpu.memory_space<vmem>>, vector<64x128xbf16>,
    %c0_72 = arith.constant 0 : index
    %c0_73 = arith.constant 0 : index
    %68 = vector.load %arg8[%c0_72, %c0_73] : memref<64x384xbf16, #tpu.memory_space<vmem>>, vector<64x384xbf16>
    %c2_74 = arith.constant 2 : index
    %c0_75 = arith.constant 0 : index
    %c0_76 = arith.constant 0 : index
    %69 = vector.load %arg4[%c2_74, %c0_75, %c0_76] : memref<3x384x128xbf16, #tpu.memory_space<vmem>>, vector<1x384x128xbf16>
    %70 = vector.shape_cast %69 : vector<1x384x128xbf16> to vector<384x128xbf16>
    %cst_77 = arith.constant dense<0.000000e+00> : vector<64x128xf32>
    %71 = tpu.matmul %68, %70, %cst_77 {dimension_numbers = #tpu.dot_dimension_numbers<[1], [0], [0], [1], [0, 0, 1, 1], [], []>} : vector<64x384xbf16>, vector<384x128xbf16>, vector<64x128xf32> -> vector<64x128xf32>
    %c0_78 = arith.constant 0 : index
    %c0_79 = arith.constant 0 : index
    %72 = vector.load %arg7[%c0_78, %c0_79] : memref<64x128xf32, #tpu.memory_space<vmem>>, vector<64x128xf32>
    %73 = arith.addf %72, %71 : vector<64x128xf32>
    %c0_80 = arith.constant 0 : index
    %c0_81 = arith.constant 0 : index
    %74 = vector.load %arg7[%c0_80, %c0_81] : memref<64x128xf32, #tpu.memory_space<vmem>>, vector<64x128xf32>
    tpu.vector_store %arg7[%c0_80, %c0_81], %73 {strides = array<i32>} : memref<64x128xf32, #tpu.memory_space<vmem>>, vector<64x128xf32>,
    %c0_82 = arith.constant 0 : index
    %c0_83 = arith.constant 0 : index
    %75 = vector.load %arg7[%c0_82, %c0_83] : memref<64x128xf32, #tpu.memory_space<vmem>>, vector<64x128xf32>
    %c0_84 = arith.constant 0 : index
    %c0_85 = arith.constant 0 : index
    %76 = vector.load %arg5[%c0_84, %c0_85] : memref<1x128xf32, #tpu.memory_space<vmem>>, vector<1x128xf32>
    %77 = vector.broadcast %76 : vector<1x128xf32> to vector<64x128xf32>
    %78 = arith.addf %75, %77 : vector<64x128xf32>
    %79 = vector.shape_cast %78 : vector<64x128xf32> to vector<1x8x8x128xf32>
    %80 = arith.truncf %79 : vector<1x8x8x128xf32> to vector<1x8x8x128xbf16>
    %c0_86 = arith.constant 0 : index
    %c0_87 = arith.constant 0 : index
    %c0_88 = arith.constant 0 : index
    %c0_89 = arith.constant 0 : index
    %81 = vector.load %arg6[%c0_86, %c0_87, %c0_88, %c0_89] : memref<1x8x8x128xbf16, #tpu.memory_space<vmem>>, vector<1x8x8x128xbf16>
    tpu.vector_store %arg6[%c0_86, %c0_87, %c0_88, %c0_89], %80 {strides = array<i32>} : memref<1x8x8x128xbf16, #tpu.memory_space<vmem>>, vector<1x8x8x128xbf16>,
    return
  }
  func.func @transform_0(%arg0: i32, %arg1: i32, %arg2: i32) -> (i32, i32, i32, i32, i32) {
    %c0_i32 = arith.constant 0 : i32
    %c0_i32_0 = arith.constant 0 : i32
    %c0_i32_1 = arith.constant 0 : i32
    %c0_i32_2 = arith.constant 0 : i32
    %c0_i32_3 = arith.constant 0 : i32
    return %c0_i32, %arg0, %c0_i32_0, %c0_i32_1, %c0_i32_2 : i32, i32, i32, i32, i32
  }
  func.func @transform_1(%arg0: i32, %arg1: i32, %arg2: i32) -> (i32, i32, i32) {
    %c0_i32 = arith.constant 0 : i32
    %c0_i32_0 = arith.constant 0 : i32
    %c0_i32_1 = arith.constant 0 : i32
    return %c0_i32, %c0_i32_0, %arg2 : i32, i32, i32
  }
  func.func @transform_2(%arg0: i32, %arg1: i32, %arg2: i32) -> (i32, i32) {
    %c0_i32 = arith.constant 0 : i32
    %c0_i32_0 = arith.constant 0 : i32
    return %c0_i32, %arg2 : i32, i32
  }
  func.func @transform_3(%arg0: i32, %arg1: i32, %arg2: i32) -> (i32, i32, i32, i32) {
    %c0_i32 = arith.constant 0 : i32
    %c0_i32_0 = arith.constant 0 : i32
    return %arg0, %arg1, %c0_i32, %arg2 : i32, i32, i32, i32
  }
}

module attributes {stable_mosaic.version = 11 : i64} {
  func.func @_conv_bn_kernel(%arg0: i32, %arg1: i32, %arg2: i32, %arg3: memref<4x1x9x9x128xbf16, #tpu.memory_space<vmem>>, %arg4: memref<3x384x128xbf16, #tpu.memory_space<vmem>>, %arg5: memref<1x128xf32, #tpu.memory_space<vmem>>, %arg6: memref<1x8x8x128xbf16, #tpu.memory_space<vmem>>, %arg7: memref<1x8x8x128xf32, #tpu.memory_space<vmem>>, %arg8: memref<64x128xf32, #tpu.memory_space<vmem>>, %arg9: memref<64x384xbf16, #tpu.memory_space<vmem>>) attributes {dimension_semantics = [#tpu.dimension_semantics<parallel>, #tpu.dimension_semantics<parallel>, #tpu.dimension_semantics<parallel>], iteration_bounds = array<i64: 2, 1, 1>, scalar_prefetch = 0 : i64, scratch_operands = 2 : i64, tpu.core_type = #tpu.core_type<tc>, window_params = [{transform_indices = @transform_0, window_bounds = array<i64: 4, 1, 9, 9, 128>}, {transform_indices = @transform_1, window_bounds = array<i64: 3, 384, 128>}, {transform_indices = @transform_2, window_bounds = array<i64: 1, 128>}, {transform_indices = @transform_3, window_bounds = array<i64: 1, 8, 8, 128>}, {transform_indices = @transform_4, window_bounds = array<i64: 1, 8, 8, 128>}]} {
    %c8_i32 = arith.constant 8 : i32
    %0 = arith.muli %arg1, %c8_i32 : i32
    %1 = tpu.assume_multiple %0, 8 : i32
    %c0_i32 = arith.constant 0 : i32
    %2 = arith.addi %1, %c0_i32 : i32
    %c0 = arith.constant 0 : index
    %c0_0 = arith.constant 0 : index
    %3 = arith.index_cast %2 : i32 to index
    %c0_1 = arith.constant 0 : index
    %c0_2 = arith.constant 0 : index
    %4 = vector.load %arg3[%c0, %c0_0, %3, %c0_1, %c0_2] : memref<4x1x9x9x128xbf16, #tpu.memory_space<vmem>>, vector<1x1x8x8x128xbf16>
    %5 = vector.shape_cast %4 : vector<1x1x8x8x128xbf16> to vector<8x8x128xbf16>
    %6 = vector.shape_cast %5 : vector<8x8x128xbf16> to vector<64x128xbf16>
    %c0_3 = arith.constant 0 : index
    %c0_4 = arith.constant 0 : index
    %7 = vector.load %arg9[%c0_3, %c0_4] : memref<64x384xbf16, #tpu.memory_space<vmem>>, vector<64x128xbf16>
    tpu.vector_store %arg9[%c0_3, %c0_4], %6 {strides = array<i32>} : memref<64x384xbf16, #tpu.memory_space<vmem>>, vector<64x128xbf16>,
    %c0_i32_5 = arith.constant 0 : i32
    %8 = arith.addi %1, %c0_i32_5 : i32
    %c1 = arith.constant 1 : index
    %c0_6 = arith.constant 0 : index
    %9 = arith.index_cast %8 : i32 to index
    %c0_7 = arith.constant 0 : index
    %c0_8 = arith.constant 0 : index
    %10 = vector.load %arg3[%c1, %c0_6, %9, %c0_7, %c0_8] : memref<4x1x9x9x128xbf16, #tpu.memory_space<vmem>>, vector<1x1x8x8x128xbf16>
    %11 = vector.shape_cast %10 : vector<1x1x8x8x128xbf16> to vector<8x8x128xbf16>
    %12 = vector.shape_cast %11 : vector<8x8x128xbf16> to vector<64x128xbf16>
    %c0_9 = arith.constant 0 : index
    %c128 = arith.constant 128 : index
    %13 = vector.load %arg9[%c0_9, %c128] : memref<64x384xbf16, #tpu.memory_space<vmem>>, vector<64x128xbf16>
    tpu.vector_store %arg9[%c0_9, %c128], %12 {strides = array<i32>} : memref<64x384xbf16, #tpu.memory_space<vmem>>, vector<64x128xbf16>,
    %c0_i32_10 = arith.constant 0 : i32
    %14 = arith.addi %1, %c0_i32_10 : i32
    %c0_11 = arith.constant 0 : index
    %c0_12 = arith.constant 0 : index
    %15 = arith.index_cast %14 : i32 to index
    %c1_13 = arith.constant 1 : index
    %c0_14 = arith.constant 0 : index
    %16 = vector.load %arg3[%c0_11, %c0_12, %15, %c1_13, %c0_14] : memref<4x1x9x9x128xbf16, #tpu.memory_space<vmem>>, vector<1x1x8x8x128xbf16>
    %17 = vector.shape_cast %16 : vector<1x1x8x8x128xbf16> to vector<8x8x128xbf16>
    %18 = vector.shape_cast %17 : vector<8x8x128xbf16> to vector<64x128xbf16>
    %c0_15 = arith.constant 0 : index
    %c256 = arith.constant 256 : index
    %19 = vector.load %arg9[%c0_15, %c256] : memref<64x384xbf16, #tpu.memory_space<vmem>>, vector<64x128xbf16>
    tpu.vector_store %arg9[%c0_15, %c256], %18 {strides = array<i32>} : memref<64x384xbf16, #tpu.memory_space<vmem>>, vector<64x128xbf16>,
    %c0_16 = arith.constant 0 : index
    %c0_17 = arith.constant 0 : index
    %20 = vector.load %arg9[%c0_16, %c0_17] : memref<64x384xbf16, #tpu.memory_space<vmem>>, vector<64x384xbf16>
    %c0_18 = arith.constant 0 : index
    %c0_19 = arith.constant 0 : index
    %c0_20 = arith.constant 0 : index
    %21 = vector.load %arg4[%c0_18, %c0_19, %c0_20] : memref<3x384x128xbf16, #tpu.memory_space<vmem>>, vector<1x384x128xbf16>
    %22 = vector.shape_cast %21 : vector<1x384x128xbf16> to vector<384x128xbf16>
    %cst = arith.constant dense<0.000000e+00> : vector<64x128xf32>
    %23 = tpu.matmul %20, %22, %cst {dimension_numbers = #tpu.dot_dimension_numbers<[1], [0], [0], [1], [0, 0, 1, 1], [], []>} : vector<64x384xbf16>, vector<384x128xbf16>, vector<64x128xf32> -> vector<64x128xf32>
    %c0_21 = arith.constant 0 : index
    %c0_22 = arith.constant 0 : index
    %24 = vector.load %arg8[%c0_21, %c0_22] : memref<64x128xf32, #tpu.memory_space<vmem>>, vector<64x128xf32>
    tpu.vector_store %arg8[%c0_21, %c0_22], %23 {strides = array<i32>} : memref<64x128xf32, #tpu.memory_space<vmem>>, vector<64x128xf32>,
    %c0_i32_23 = arith.constant 0 : i32
    %25 = arith.addi %1, %c0_i32_23 : i32
    %c2 = arith.constant 2 : index
    %c0_24 = arith.constant 0 : index
    %26 = arith.index_cast %25 : i32 to index
    %c0_25 = arith.constant 0 : index
    %c0_26 = arith.constant 0 : index
    %27 = vector.load %arg3[%c2, %c0_24, %26, %c0_25, %c0_26] : memref<4x1x9x9x128xbf16, #tpu.memory_space<vmem>>, vector<1x1x8x8x128xbf16>
    %28 = vector.shape_cast %27 : vector<1x1x8x8x128xbf16> to vector<8x8x128xbf16>
    %29 = vector.shape_cast %28 : vector<8x8x128xbf16> to vector<64x128xbf16>
    %c0_27 = arith.constant 0 : index
    %c0_28 = arith.constant 0 : index
    %30 = vector.load %arg9[%c0_27, %c0_28] : memref<64x384xbf16, #tpu.memory_space<vmem>>, vector<64x128xbf16>
    tpu.vector_store %arg9[%c0_27, %c0_28], %29 {strides = array<i32>} : memref<64x384xbf16, #tpu.memory_space<vmem>>, vector<64x128xbf16>,
    %c0_i32_29 = arith.constant 0 : i32
    %31 = arith.addi %1, %c0_i32_29 : i32
    %c3 = arith.constant 3 : index
    %c0_30 = arith.constant 0 : index
    %32 = arith.index_cast %31 : i32 to index
    %c0_31 = arith.constant 0 : index
    %c0_32 = arith.constant 0 : index
    %33 = vector.load %arg3[%c3, %c0_30, %32, %c0_31, %c0_32] : memref<4x1x9x9x128xbf16, #tpu.memory_space<vmem>>, vector<1x1x8x8x128xbf16>
    %34 = vector.shape_cast %33 : vector<1x1x8x8x128xbf16> to vector<8x8x128xbf16>
    %35 = vector.shape_cast %34 : vector<8x8x128xbf16> to vector<64x128xbf16>
    %c0_33 = arith.constant 0 : index
    %c128_34 = arith.constant 128 : index
    %36 = vector.load %arg9[%c0_33, %c128_34] : memref<64x384xbf16, #tpu.memory_space<vmem>>, vector<64x128xbf16>
    tpu.vector_store %arg9[%c0_33, %c128_34], %35 {strides = array<i32>} : memref<64x384xbf16, #tpu.memory_space<vmem>>, vector<64x128xbf16>,
    %c0_i32_35 = arith.constant 0 : i32
    %37 = arith.addi %1, %c0_i32_35 : i32
    %c2_36 = arith.constant 2 : index
    %c0_37 = arith.constant 0 : index
    %38 = arith.index_cast %37 : i32 to index
    %c1_38 = arith.constant 1 : index
    %c0_39 = arith.constant 0 : index
    %39 = vector.load %arg3[%c2_36, %c0_37, %38, %c1_38, %c0_39] : memref<4x1x9x9x128xbf16, #tpu.memory_space<vmem>>, vector<1x1x8x8x128xbf16>
    %40 = vector.shape_cast %39 : vector<1x1x8x8x128xbf16> to vector<8x8x128xbf16>
    %41 = vector.shape_cast %40 : vector<8x8x128xbf16> to vector<64x128xbf16>
    %c0_40 = arith.constant 0 : index
    %c256_41 = arith.constant 256 : index
    %42 = vector.load %arg9[%c0_40, %c256_41] : memref<64x384xbf16, #tpu.memory_space<vmem>>, vector<64x128xbf16>
    tpu.vector_store %arg9[%c0_40, %c256_41], %41 {strides = array<i32>} : memref<64x384xbf16, #tpu.memory_space<vmem>>, vector<64x128xbf16>,
    %c0_42 = arith.constant 0 : index
    %c0_43 = arith.constant 0 : index
    %43 = vector.load %arg9[%c0_42, %c0_43] : memref<64x384xbf16, #tpu.memory_space<vmem>>, vector<64x384xbf16>
    %c1_44 = arith.constant 1 : index
    %c0_45 = arith.constant 0 : index
    %c0_46 = arith.constant 0 : index
    %44 = vector.load %arg4[%c1_44, %c0_45, %c0_46] : memref<3x384x128xbf16, #tpu.memory_space<vmem>>, vector<1x384x128xbf16>
    %45 = vector.shape_cast %44 : vector<1x384x128xbf16> to vector<384x128xbf16>
    %cst_47 = arith.constant dense<0.000000e+00> : vector<64x128xf32>
    %46 = tpu.matmul %43, %45, %cst_47 {dimension_numbers = #tpu.dot_dimension_numbers<[1], [0], [0], [1], [0, 0, 1, 1], [], []>} : vector<64x384xbf16>, vector<384x128xbf16>, vector<64x128xf32> -> vector<64x128xf32>
    %c0_48 = arith.constant 0 : index
    %c0_49 = arith.constant 0 : index
    %47 = vector.load %arg8[%c0_48, %c0_49] : memref<64x128xf32, #tpu.memory_space<vmem>>, vector<64x128xf32>
    %48 = arith.addf %47, %46 : vector<64x128xf32>
    %c0_50 = arith.constant 0 : index
    %c0_51 = arith.constant 0 : index
    %49 = vector.load %arg8[%c0_50, %c0_51] : memref<64x128xf32, #tpu.memory_space<vmem>>, vector<64x128xf32>
    tpu.vector_store %arg8[%c0_50, %c0_51], %48 {strides = array<i32>} : memref<64x128xf32, #tpu.memory_space<vmem>>, vector<64x128xf32>,
    %c1_i32 = arith.constant 1 : i32
    %50 = arith.addi %1, %c1_i32 : i32
    %c0_52 = arith.constant 0 : index
    %c0_53 = arith.constant 0 : index
    %51 = arith.index_cast %50 : i32 to index
    %c0_54 = arith.constant 0 : index
    %c0_55 = arith.constant 0 : index
    %52 = vector.load %arg3[%c0_52, %c0_53, %51, %c0_54, %c0_55] : memref<4x1x9x9x128xbf16, #tpu.memory_space<vmem>>, vector<1x1x8x8x128xbf16>
    %53 = vector.shape_cast %52 : vector<1x1x8x8x128xbf16> to vector<8x8x128xbf16>
    %54 = vector.shape_cast %53 : vector<8x8x128xbf16> to vector<64x128xbf16>
    %c0_56 = arith.constant 0 : index
    %c0_57 = arith.constant 0 : index
    %55 = vector.load %arg9[%c0_56, %c0_57] : memref<64x384xbf16, #tpu.memory_space<vmem>>, vector<64x128xbf16>
    tpu.vector_store %arg9[%c0_56, %c0_57], %54 {strides = array<i32>} : memref<64x384xbf16, #tpu.memory_space<vmem>>, vector<64x128xbf16>,
    %c1_i32_58 = arith.constant 1 : i32
    %56 = arith.addi %1, %c1_i32_58 : i32
    %c1_59 = arith.constant 1 : index
    %c0_60 = arith.constant 0 : index
    %57 = arith.index_cast %56 : i32 to index
    %c0_61 = arith.constant 0 : index
    %c0_62 = arith.constant 0 : index
    %58 = vector.load %arg3[%c1_59, %c0_60, %57, %c0_61, %c0_62] : memref<4x1x9x9x128xbf16, #tpu.memory_space<vmem>>, vector<1x1x8x8x128xbf16>
    %59 = vector.shape_cast %58 : vector<1x1x8x8x128xbf16> to vector<8x8x128xbf16>
    %60 = vector.shape_cast %59 : vector<8x8x128xbf16> to vector<64x128xbf16>
    %c0_63 = arith.constant 0 : index
    %c128_64 = arith.constant 128 : index
    %61 = vector.load %arg9[%c0_63, %c128_64] : memref<64x384xbf16, #tpu.memory_space<vmem>>, vector<64x128xbf16>
    tpu.vector_store %arg9[%c0_63, %c128_64], %60 {strides = array<i32>} : memref<64x384xbf16, #tpu.memory_space<vmem>>, vector<64x128xbf16>,
    %c1_i32_65 = arith.constant 1 : i32
    %62 = arith.addi %1, %c1_i32_65 : i32
    %c0_66 = arith.constant 0 : index
    %c0_67 = arith.constant 0 : index
    %63 = arith.index_cast %62 : i32 to index
    %c1_68 = arith.constant 1 : index
    %c0_69 = arith.constant 0 : index
    %64 = vector.load %arg3[%c0_66, %c0_67, %63, %c1_68, %c0_69] : memref<4x1x9x9x128xbf16, #tpu.memory_space<vmem>>, vector<1x1x8x8x128xbf16>
    %65 = vector.shape_cast %64 : vector<1x1x8x8x128xbf16> to vector<8x8x128xbf16>
    %66 = vector.shape_cast %65 : vector<8x8x128xbf16> to vector<64x128xbf16>
    %c0_70 = arith.constant 0 : index
    %c256_71 = arith.constant 256 : index
    %67 = vector.load %arg9[%c0_70, %c256_71] : memref<64x384xbf16, #tpu.memory_space<vmem>>, vector<64x128xbf16>
    tpu.vector_store %arg9[%c0_70, %c256_71], %66 {strides = array<i32>} : memref<64x384xbf16, #tpu.memory_space<vmem>>, vector<64x128xbf16>,
    %c0_72 = arith.constant 0 : index
    %c0_73 = arith.constant 0 : index
    %68 = vector.load %arg9[%c0_72, %c0_73] : memref<64x384xbf16, #tpu.memory_space<vmem>>, vector<64x384xbf16>
    %c2_74 = arith.constant 2 : index
    %c0_75 = arith.constant 0 : index
    %c0_76 = arith.constant 0 : index
    %69 = vector.load %arg4[%c2_74, %c0_75, %c0_76] : memref<3x384x128xbf16, #tpu.memory_space<vmem>>, vector<1x384x128xbf16>
    %70 = vector.shape_cast %69 : vector<1x384x128xbf16> to vector<384x128xbf16>
    %cst_77 = arith.constant dense<0.000000e+00> : vector<64x128xf32>
    %71 = tpu.matmul %68, %70, %cst_77 {dimension_numbers = #tpu.dot_dimension_numbers<[1], [0], [0], [1], [0, 0, 1, 1], [], []>} : vector<64x384xbf16>, vector<384x128xbf16>, vector<64x128xf32> -> vector<64x128xf32>
    %c0_78 = arith.constant 0 : index
    %c0_79 = arith.constant 0 : index
    %72 = vector.load %arg8[%c0_78, %c0_79] : memref<64x128xf32, #tpu.memory_space<vmem>>, vector<64x128xf32>
    %73 = arith.addf %72, %71 : vector<64x128xf32>
    %c0_80 = arith.constant 0 : index
    %c0_81 = arith.constant 0 : index
    %74 = vector.load %arg8[%c0_80, %c0_81] : memref<64x128xf32, #tpu.memory_space<vmem>>, vector<64x128xf32>
    tpu.vector_store %arg8[%c0_80, %c0_81], %73 {strides = array<i32>} : memref<64x128xf32, #tpu.memory_space<vmem>>, vector<64x128xf32>,
    %c0_82 = arith.constant 0 : index
    %c0_83 = arith.constant 0 : index
    %75 = vector.load %arg8[%c0_82, %c0_83] : memref<64x128xf32, #tpu.memory_space<vmem>>, vector<64x128xf32>
    %c0_84 = arith.constant 0 : index
    %c0_85 = arith.constant 0 : index
    %76 = vector.load %arg5[%c0_84, %c0_85] : memref<1x128xf32, #tpu.memory_space<vmem>>, vector<1x128xf32>
    %77 = vector.broadcast %76 : vector<1x128xf32> to vector<64x128xf32>
    %78 = arith.addf %75, %77 : vector<64x128xf32>
    %c0_86 = arith.constant 0 : index
    %c0_87 = arith.constant 0 : index
    %c0_88 = arith.constant 0 : index
    %c0_89 = arith.constant 0 : index
    %79 = vector.load %arg6[%c0_86, %c0_87, %c0_88, %c0_89] : memref<1x8x8x128xbf16, #tpu.memory_space<vmem>>, vector<1x8x8x128xbf16>
    %80 = arith.extf %79 : vector<1x8x8x128xbf16> to vector<1x8x8x128xf32>
    %81 = vector.shape_cast %80 : vector<1x8x8x128xf32> to vector<64x128xf32>
    %82 = arith.addf %78, %81 : vector<64x128xf32>
    %cst_90 = arith.constant 0.000000e+00 : f32
    %83 = vector.broadcast %cst_90 : f32 to vector<64x128xf32>
    %84 = arith.maximumf %82, %83 : vector<64x128xf32>
    %85 = vector.shape_cast %84 : vector<64x128xf32> to vector<1x8x8x128xf32>
    %c0_91 = arith.constant 0 : index
    %c0_92 = arith.constant 0 : index
    %c0_93 = arith.constant 0 : index
    %c0_94 = arith.constant 0 : index
    %86 = vector.load %arg7[%c0_91, %c0_92, %c0_93, %c0_94] : memref<1x8x8x128xf32, #tpu.memory_space<vmem>>, vector<1x8x8x128xf32>
    tpu.vector_store %arg7[%c0_91, %c0_92, %c0_93, %c0_94], %85 {strides = array<i32>} : memref<1x8x8x128xf32, #tpu.memory_space<vmem>>, vector<1x8x8x128xf32>,
    return
  }
  func.func @transform_0(%arg0: i32, %arg1: i32, %arg2: i32) -> (i32, i32, i32, i32, i32) {
    %c0_i32 = arith.constant 0 : i32
    %c0_i32_0 = arith.constant 0 : i32
    %c0_i32_1 = arith.constant 0 : i32
    %c0_i32_2 = arith.constant 0 : i32
    %c0_i32_3 = arith.constant 0 : i32
    return %c0_i32, %arg0, %c0_i32_0, %c0_i32_1, %c0_i32_2 : i32, i32, i32, i32, i32
  }
  func.func @transform_1(%arg0: i32, %arg1: i32, %arg2: i32) -> (i32, i32, i32) {
    %c0_i32 = arith.constant 0 : i32
    %c0_i32_0 = arith.constant 0 : i32
    %c0_i32_1 = arith.constant 0 : i32
    return %c0_i32, %c0_i32_0, %arg2 : i32, i32, i32
  }
  func.func @transform_2(%arg0: i32, %arg1: i32, %arg2: i32) -> (i32, i32) {
    %c0_i32 = arith.constant 0 : i32
    %c0_i32_0 = arith.constant 0 : i32
    return %c0_i32, %arg2 : i32, i32
  }
  func.func @transform_3(%arg0: i32, %arg1: i32, %arg2: i32) -> (i32, i32, i32, i32) {
    %c0_i32 = arith.constant 0 : i32
    %c0_i32_0 = arith.constant 0 : i32
    return %arg0, %arg1, %c0_i32, %arg2 : i32, i32, i32, i32
  }
  func.func @transform_4(%arg0: i32, %arg1: i32, %arg2: i32) -> (i32, i32, i32, i32) {
    %c0_i32 = arith.constant 0 : i32
    %c0_i32_0 = arith.constant 0 : i32
    return %arg0, %arg1, %c0_i32, %arg2 : i32, i32, i32, i32
  }
}

</mosaic_0001>

<llo_original>
// kernel: conv_block_forward.3
$region0: #{conv_block_forward.3}
  #allocation0 [shape = 'u32[]', space=smem, size = 0x4, offset = 0x4, fixed_abs, tag = 'smem constant byte address 0x4 - core index']
  #allocation1 [shape = 'u32[72,128]{1,0:T(1,128)}', space=vmem, size = 0x9000, scoped, tag = 'internal scratch']
  #allocation2 [shape = 'f32[64,128]{1,0:T(8,128)}', space=vmem, size = 0x8000, scoped, tag = 'scratch operand']
  #allocation3 [shape = 'bf16[64,384]{1,0:T(8,128)(2,1)}', space=vmem, size = 0xc000, scoped, tag = 'scratch operand']
  %s0 = inlined_call_operand.vmem [shape: bf16[4,2,9,9,128], index: 0, kind: input, shape index: {}]
  %s1 = inlined_call_operand.vmem [shape: bf16[3,384,128], index: 1, kind: input, shape index: {}]
  %s2 = inlined_call_operand.vmem [shape: f32[1,128], index: 2, kind: input, shape index: {}]
  %s3 = inlined_call_operand.vmem [shape: bf16[2,8,8,128], index: 3, kind: output, shape index: {}]
  %s4 = sld [smem:[#allocation0]]
  $region86: #{conv_block_forward.3} parent=0
    _
  %s6 = ssub.s32 1, %s4
  %s7 = scalar_select 0, %s6, %s4
  $region1: #{conv_block_forward.3} parent=0
    #allocation4 [shape = 'u8[294912]{0}', space=vmem, size = 0x48000, scoped, tag = 'input window, operand 0']
    loop: start=0, step=1, limit=4
    $region2: #{conv_block_forward.3} parent=1 // loop_pre_header
      _
    $region3: #{conv_block_forward.3} parent=1 // loop_header
      %s9 = sphi 0, %s13
      %p10 = scmp.ge.s32.totalorder %s9, 4
      %s16 = sphi 0, %s35
      %s17 = sphi 0, %s31
      %s18 = sphi 0, %s27
      %s19 = sphi 0, %s16
      %s20 = sphi 0, %s17
      %s21 = sphi 0, %s18
      %s22 = sphi 0, %s19
      %s23 = sphi 0, %s20
      %s24 = sphi 0, %s21
      %s38 = sphi 0, %s40
      %s41 = sphi 0, %s38
      %s42 = sphi 0, %s41
      %s58 = sphi 0, %s42
      %s64 = sphi 0, %s66
      %s67 = sphi 0, %s64
      %s68 = sphi 0, %s67
      %s84 = sphi 0, %s68
      %s90 = sphi 0, %s92
      %s93 = sphi 0, %s90
      %s94 = sphi 0, %s93
      %s110 = sphi 0, %s94
      %s120 = sphi 0, %s122
      %s123 = sphi 0, %s120
      %s124 = sphi 0, %s123
      %s140 = sphi 0, %s124
    $region4: #{conv_block_forward.3} parent=1 // loop_header_branch
      %12 = sbr.rel (%p10) target = $region8
    $region5: #{conv_block_forward.3} parent=1 // loop_body
      %s14 = ssub.s32 %s9, 1
      %s15 = ssub.s32 %s9, 2
      %s25 = sadd.s32 1, %s18
      %p26 = scmp.ge.s32.totalorder %s25, 1
      %s27 = scalar_select %p26, 0, %s25
      %s28 = sadd.s32 1, %s17
      %s29 = scalar_select %p26, %s28, %s17
      %p30 = scmp.ge.s32.totalorder %s29, 1
      %s31 = scalar_select %p30, 0, %s29
      %s32 = sadd.s32 1, %s16
      %s33 = scalar_select %p30, %s32, %s16
      %p34 = scmp.ge.s32.totalorder %s33, 2
      %s35 = scalar_select %p34, 0, %s33
      %s36 = ssub.s32 %s16, %s35
      %p37 = scmp.eq.s32.totalorder %s36, 0
      %s39 = sadd.s32 %s38, 1
      %s40 = scalar_select %p37, %s38, %s39
      %p43 = pneg %p37
      %p44 = scmp.eq.s32.totalorder %s9, 1
      %p45 = por %p43, %p44
      %p46 = scmp.ne.s32.totalorder %s38, %s41
      %p47 = scmp.eq.s32.totalorder %s9, 0
      %p48 = por %p46, %p47
      %p49 = scmp.ne.s32.totalorder %s38, %s41
      %p50 = scmp.eq.s32.totalorder %s14, 1
      %p51 = por %p49, %p50
      %p52 = scmp.ne.s32.totalorder %s41, %s42
      %p53 = scmp.eq.s32.totalorder %s14, 0
      %p54 = por %p52, %p53
      %p55 = scmp.ne.s32.totalorder %s41, %s42
      %p56 = scmp.eq.s32.totalorder %s15, 1
      %p57 = por %p55, %p56
      %p59 = scmp.ne.s32.totalorder %s42, %s58
      %p60 = scmp.eq.s32.totalorder %s15, 0
      %p61 = por %p59, %p60
      %s62 = ssub.s32 %s18, %s27
      %p63 = scmp.eq.s32.totalorder %s62, 0
      %s65 = sadd.s32 %s64, 1
      %s66 = scalar_select %p63, %s64, %s65
      %p69 = pneg %p63
      %p70 = scmp.eq.s32.totalorder %s9, 1
      %p71 = por %p69, %p70
      %p72 = scmp.ne.s32.totalorder %s64, %s67
      %p73 = scmp.eq.s32.totalorder %s9, 0
      %p74 = por %p72, %p73
      %p75 = scmp.ne.s32.totalorder %s64, %s67
      %p76 = scmp.eq.s32.totalorder %s14, 1
      %p77 = por %p75, %p76
      %p78 = scmp.ne.s32.totalorder %s67, %s68
      %p79 = scmp.eq.s32.totalorder %s14, 0
      %p80 = por %p78, %p79
      %p81 = scmp.ne.s32.totalorder %s67, %s68
      %p82 = scmp.eq.s32.totalorder %s15, 1
      %p83 = por %p81, %p82
      %p85 = scmp.ne.s32.totalorder %s68, %s84
      %p86 = scmp.eq.s32.totalorder %s15, 0
      %p87 = por %p85, %p86
      %s88 = ssub.s32 %s18, %s27
      %p89 = scmp.eq.s32.totalorder %s88, 0
      %s91 = sadd.s32 %s90, 1
      %s92 = scalar_select %p89, %s90, %s91
      %p95 = pneg %p89
      %p96 = scmp.eq.s32.totalorder %s9, 1
      %p97 = por %p95, %p96
      %p98 = scmp.ne.s32.totalorder %s90, %s93
      %p99 = scmp.eq.s32.totalorder %s9, 0
      %p100 = por %p98, %p99
      %p101 = scmp.ne.s32.totalorder %s90, %s93
      %p102 = scmp.eq.s32.totalorder %s14, 1
      %p103 = por %p101, %p102
      %p104 = scmp.ne.s32.totalorder %s93, %s94
      %p105 = scmp.eq.s32.totalorder %s14, 0
      %p106 = por %p104, %p105
      %p107 = scmp.ne.s32.totalorder %s93, %s94
      %p108 = scmp.eq.s32.totalorder %s15, 1
      %p109 = por %p107, %p108
      %p111 = scmp.ne.s32.totalorder %s94, %s110
      %p112 = scmp.eq.s32.totalorder %s15, 0
      %p113 = por %p111, %p112
      %s114 = ssub.s32 %s16, %s35
      %s115 = ssub.s32 %s17, %s31
      %s116 = sor.u32 %s114, %s115
      %s117 = ssub.s32 %s18, %s27
      %s118 = sor.u32 %s116, %s117
      %p119 = scmp.eq.s32.totalorder %s118, 0
      %s121 = sadd.s32 %s120, 1
      %s122 = scalar_select %p119, %s120, %s121
      %p125 = pneg %p119
      %p126 = scmp.eq.s32.totalorder %s9, 1
      %p127 = por %p125, %p126
      %p128 = scmp.ne.s32.totalorder %s120, %s123
      %p129 = scmp.eq.s32.totalorder %s9, 0
      %p130 = por %p128, %p129
      %p131 = scmp.ne.s32.totalorder %s120, %s123
      %p132 = scmp.eq.s32.totalorder %s14, 1
      %p133 = por %p131, %p132
      %p134 = scmp.ne.s32.totalorder %s123, %s124
      %p135 = scmp.eq.s32.totalorder %s14, 0
      %p136 = por %p134, %p135
      %p137 = scmp.ne.s32.totalorder %s123, %s124
      %p138 = scmp.eq.s32.totalorder %s15, 1
      %p139 = por %p137, %p138
      %p141 = scmp.ne.s32.totalorder %s124, %s140
      %p142 = scmp.eq.s32.totalorder %s15, 0
      %p143 = por %p141, %p142
      %p144 = scmp.le.s32.totalorder 1, %s9
      %p145 = scmp.lt.s32.totalorder %s9, 3
      %p146 = pnand %p144, %p145
      %p147 = pneg %p146
      // Predicated region
      $region9: #{conv_block_forward.3} parent=5 // pred_check
        _
      $region10: #{conv_block_forward.3} parent=5 // pred_check_branch
        %149 = sbr.rel (%p146) target = $region12
      $region11: #{conv_block_forward.3} parent=5 // pred_region
        %s150 = ssub.s32 %s9, 1
        // Predicated region
        $region13: #{conv_block_forward.3} parent=11 // pred_check
          %p151 = pneg %p80
        $region14: #{conv_block_forward.3} parent=11 // pred_check_branch
          %153 = sbr.rel (%p151) target = $region16
        $region15: #{conv_block_forward.3} parent=11 // pred_region
          %p154 = scmp.lt.s32.totalorder %s21, 0
          %s155 = scalar_select %p154, %s21, 0
          %s156 = smul.addr %s155, 4
          %s157 = scalar_lea.vmem %s1, %s156
        $region16: #{conv_block_forward.3} parent=11 // pred_fallthru
          _
        // Predicated region
        $region17: #{conv_block_forward.3} parent=11 // pred_check
          %p158 = pneg %p106
        $region18: #{conv_block_forward.3} parent=11 // pred_check_branch
          %160 = sbr.rel (%p158) target = $region20
        $region19: #{conv_block_forward.3} parent=11 // pred_region
          %p161 = scmp.lt.s32.totalorder %s21, 0
          %s162 = scalar_select %p161, %s21, 0
          %s163 = scalar_lea.vmem %s2, %s162
        $region20: #{conv_block_forward.3} parent=11 // pred_fallthru
          _
      $region12: #{conv_block_forward.3} parent=5 // pred_fallthru
        _
      %p164 = scmp.lt.s32.totalorder %s9, 2
      // Predicated region
      $region21: #{conv_block_forward.3} parent=5 // pred_check
        %p165 = pneg %p164
      $region22: #{conv_block_forward.3} parent=5 // pred_check_branch
        %167 = sbr.rel (%p165) target = $region24
      $region23: #{conv_block_forward.3} parent=5 // pred_region
        // Predicated region
        $region25: #{conv_block_forward.3} parent=23 // pred_check
          %p168 = pneg %p48
        $region26: #{conv_block_forward.3} parent=23 // pred_check_branch
          %170 = sbr.rel (%p168) target = $region28
        $region27: #{conv_block_forward.3} parent=23 // pred_region
          %s171 = sand.u32 %s38, 1
          %s172 = sand.u32 %s38, 1
          %s173 = smul.addr %s172, 288
          %s174 = scalar_lea.vmem [#allocation4], %s173
          %s175 = smul.addr %s16, 18
          %s176 = smul.addr %s175, 4
          %s177 = scalar_lea.vmem %s0, %s176
          // Predicated region
          $region29: #{conv_block_forward.3} parent=27 // pred_check
            _
          $region30: #{conv_block_forward.3} parent=27 // pred_check_branch
            %179 = sbr.rel (0) target = $region32
          $region31: #{conv_block_forward.3} parent=27 // pred_region
            // Predicated region
            $region33: #{conv_block_forward.3} parent=31 // pred_check
              _
            $region34: #{conv_block_forward.3} parent=31 // pred_check_branch
              %181 = sbr.rel target = $region36
            $region35: #{conv_block_forward.3} parent=31 // pred_region
              // Predicated region
              $region48: #{conv_block_forward.3} parent=35 // pred_check
                _
              $region49: #{conv_block_forward.3} parent=35 // pred_check_branch
                %339 = sbr.rel (0) target = $region51
              $region50: #{conv_block_forward.3} parent=35 // pred_region
                loop: start=0, step=1, limit=1
                $region52: #{conv_block_forward.3} parent=50 // loop_pre_header
                  _
                $region53: #{conv_block_forward.3} parent=50 // loop_header
                  %s341 = sphi 0, %s345
                  %p342 = scmp.ge.s32.totalorder %s341, 1
                  %s346 = sphi %s177, %s177
                  %s347 = sphi %s174, %s174
                $region54: #{conv_block_forward.3} parent=50 // loop_header_branch
                  %344 = sbr.rel (%p342) target = $region58
                $region55: #{conv_block_forward.3} parent=50 // loop_body
                  _
                $region56: #{conv_block_forward.3} parent=50 // loop_footer
                  %s345 = sadd.s32 1, %s341
                $region57: #{conv_block_forward.3} parent=50 // loop_footer_branch
                  %340 = sbr.rel target = $region53
                $region58: #{conv_block_forward.3} parent=50 // loop_exit
                  _
                %s349 = ssub.s32 16, 1
                loop: start=0, step=1, limit=1
                $region59: #{conv_block_forward.3} parent=50 // loop_pre_header
                  _
                $region60: #{conv_block_forward.3} parent=50 // loop_header
                  %s351 = sphi 0, %s355
                  %p352 = scmp.ge.s32.totalorder %s351, 1
                  %s356 = sphi %s177, %s177
                  %s357 = sphi %s174, %s174
                $region61: #{conv_block_forward.3} parent=50 // loop_header_branch
                  %354 = sbr.rel (%p352) target = $region65
                $region62: #{conv_block_forward.3} parent=50 // loop_body
                  %v358 = vld [vmem:[%s356] sm:%s349]
                  %359 = vst [vmem:[%s357] sm:%s349] %v358
                  %v360 = vld [vmem:[%s356 + $0x4] sm:%s349]
                  %361 = vst [vmem:[%s357 + $0x4] sm:%s349] %v360
                  %v362 = vld [vmem:[%s356 + $0x8] sm:%s349]
                  %363 = vst [vmem:[%s357 + $0x8] sm:%s349] %v362
                  %v364 = vld [vmem:[%s356 + $0xc] sm:%s349]
                  %365 = vst [vmem:[%s357 + $0xc] sm:%s349] %v364
                  %v366 = vld [vmem:[%s356 + $0x10] sm:%s349]
                  %367 = vst [vmem:[%s357 + $0x10] sm:%s349] %v366
                  %v368 = vld [vmem:[%s356 + $0x14] sm:%s349]
                  %369 = vst [vmem:[%s357 + $0x14] sm:%s349] %v368
                  %v370 = vld [vmem:[%s356 + $0x18] sm:%s349]
                  %371 = vst [vmem:[%s357 + $0x18] sm:%s349] %v370
                  %v372 = vld [vmem:[%s356 + $0x1c] sm:%s349]
                  %373 = vst [vmem:[%s357 + $0x1c] sm:%s349] %v372
                  %v374 = vld [vmem:[%s356 + $0x20] sm:%s349]
                  %375 = vst [vmem:[%s357 + $0x20] sm:%s349] %v374
                  %v376 = vld [vmem:[%s356 + $0x24] sm:%s349]
                  %377 = vst [vmem:[%s357 + $0x24] sm:%s349] %v376
                  %v378 = vld [vmem:[%s356 + $0x28] sm:%s349]
                  %379 = vst [vmem:[%s357 + $0x28] sm:%s349] %v378
                  %v380 = vld [vmem:[%s356 + $0x2c] sm:%s349]
                  %381 = vst [vmem:[%s357 + $0x2c] sm:%s349] %v380
                  %v382 = vld [vmem:[%s356 + $0x30] sm:%s349]
                  %383 = vst [vmem:[%s357 + $0x30] sm:%s349] %v382
                  %v384 = vld [vmem:[%s356 + $0x34] sm:%s349]
                  %385 = vst [vmem:[%s357 + $0x34] sm:%s349] %v384
                  %v386 = vld [vmem:[%s356 + $0x38] sm:%s349]
                  %387 = vst [vmem:[%s357 + $0x38] sm:%s349] %v386
                  %v388 = vld [vmem:[%s356 + $0x3c] sm:%s349]
                  %389 = vst [vmem:[%s357 + $0x3c] sm:%s349] %v388
                  %v390 = vld [vmem:[%s356 + $0x40] sm:%s349]
                  %391 = vst [vmem:[%s357 + $0x40] sm:%s349] %v390
                  %v392 = vld [vmem:[%s356 + $0x44] sm:%s349]
                  %393 = vst [vmem:[%s357 + $0x44] sm:%s349] %v392
                  %v394 = vld [vmem:[%s356 + $0x90] sm:%s349]
                  %395 = vst [vmem:[%s357 + $0x48] sm:%s349] %v394
                  %v396 = vld [vmem:[%s356 + $0x94] sm:%s349]
                  %397 = vst [vmem:[%s357 + $0x4c] sm:%s349] %v396
                  %v398 = vld [vmem:[%s356 + $0x98] sm:%s349]
                  %399 = vst [vmem:[%s357 + $0x50] sm:%s349] %v398
                  %v400 = vld [vmem:[%s356 + $0x9c] sm:%s349]
                  %401 = vst [vmem:[%s357 + $0x54] sm:%s349] %v400
                  %v402 = vld [vmem:[%s356 + $0xa0] sm:%s349]
                  %403 = vst [vmem:[%s357 + $0x58] sm:%s349] %v402
                  %v404 = vld [vmem:[%s356 + $0xa4] sm:%s349]
                  %405 = vst [vmem:[%s357 + $0x5c] sm:%s349] %v404
                  %v406 = vld [vmem:[%s356 + $0xa8] sm:%s349]
                  %407 = vst [vmem:[%s357 + $0x60] sm:%s349] %v406
                  %v408 = vld [vmem:[%s356 + $0xac] sm:%s349]
                  %409 = vst [vmem:[%s357 + $0x64] sm:%s349] %v408
                  %v410 = vld [vmem:[%s356 + $0xb0] sm:%s349]
                  %411 = vst [vmem:[%s357 + $0x68] sm:%s349] %v410
                  %v412 = vld [vmem:[%s356 + $0xb4] sm:%s349]
                  %413 = vst [vmem:[%s357 + $0x6c] sm:%s349] %v412
                  %v414 = vld [vmem:[%s356 + $0xb8] sm:%s349]
                  %415 = vst [vmem:[%s357 + $0x70] sm:%s349] %v414
                  %v416 = vld [vmem:[%s356 + $0xbc] sm:%s349]
                  %417 = vst [vmem:[%s357 + $0x74] sm:%s349] %v416
                  %v418 = vld [vmem:[%s356 + $0xc0] sm:%s349]
                  %419 = vst [vmem:[%s357 + $0x78] sm:%s349] %v418
                  %v420 = vld [vmem:[%s356 + $0xc4] sm:%s349]
                  %421 = vst [vmem:[%s357 + $0x7c] sm:%s349] %v420
                  %v422 = vld [vmem:[%s356 + $0xc8] sm:%s349]
                  %423 = vst [vmem:[%s357 + $0x80] sm:%s349] %v422
                  %v424 = vld [vmem:[%s356 + $0xcc] sm:%s349]
                  %425 = vst [vmem:[%s357 + $0x84] sm:%s349] %v424
                  %v426 = vld [vmem:[%s356 + $0xd0] sm:%s349]
                  %427 = vst [vmem:[%s357 + $0x88] sm:%s349] %v426
                  %v428 = vld [vmem:[%s356 + $0xd4] sm:%s349]
                  %429 = vst [vmem:[%s357 + $0x8c] sm:%s349] %v428
                  %v430 = vld [vmem:[%s356 + $0x120] sm:%s349]
                  %431 = vst [vmem:[%s357 + $0x90] sm:%s349] %v430
                  %v432 = vld [vmem:[%s356 + $0x124] sm:%s349]
                  %433 = vst [vmem:[%s357 + $0x94] sm:%s349] %v432
                  %v434 = vld [vmem:[%s356 + $0x128] sm:%s349]
                  %435 = vst [vmem:[%s357 + $0x98] sm:%s349] %v434
                  %v436 = vld [vmem:[%s356 + $0x12c] sm:%s349]
                  %437 = vst [vmem:[%s357 + $0x9c] sm:%s349] %v436
                  %v438 = vld [vmem:[%s356 + $0x130] sm:%s349]
                  %439 = vst [vmem:[%s357 + $0xa0] sm:%s349] %v438
                  %v440 = vld [vmem:[%s356 + $0x134] sm:%s349]
                  %441 = vst [vmem:[%s357 + $0xa4] sm:%s349] %v440
                  %v442 = vld [vmem:[%s356 + $0x138] sm:%s349]
                  %443 = vst [vmem:[%s357 + $0xa8] sm:%s349] %v442
                  %v444 = vld [vmem:[%s356 + $0x13c] sm:%s349]
                  %445 = vst [vmem:[%s357 + $0xac] sm:%s349] %v444
                  %v446 = vld [vmem:[%s356 + $0x140] sm:%s349]
                  %447 = vst [vmem:[%s357 + $0xb0] sm:%s349] %v446
                  %v448 = vld [vmem:[%s356 + $0x144] sm:%s349]
                  %449 = vst [vmem:[%s357 + $0xb4] sm:%s349] %v448
                  %v450 = vld [vmem:[%s356 + $0x148] sm:%s349]
                  %451 = vst [vmem:[%s357 + $0xb8] sm:%s349] %v450
                  %v452 = vld [vmem:[%s356 + $0x14c] sm:%s349]
                  %453 = vst [vmem:[%s357 + $0xbc] sm:%s349] %v452
                  %v454 = vld [vmem:[%s356 + $0x150] sm:%s349]
                  %455 = vst [vmem:[%s357 + $0xc0] sm:%s349] %v454
                  %v456 = vld [vmem:[%s356 + $0x154] sm:%s349]
                  %457 = vst [vmem:[%s357 + $0xc4] sm:%s349] %v456
                  %v458 = vld [vmem:[%s356 + $0x158] sm:%s349]
                  %459 = vst [vmem:[%s357 + $0xc8] sm:%s349] %v458
                  %v460 = vld [vmem:[%s356 + $0x15c] sm:%s349]
                  %461 = vst [vmem:[%s357 + $0xcc] sm:%s349] %v460
                  %v462 = vld [vmem:[%s356 + $0x160] sm:%s349]
                  %463 = vst [vmem:[%s357 + $0xd0] sm:%s349] %v462
                  %v464 = vld [vmem:[%s356 + $0x164] sm:%s349]
                  %465 = vst [vmem:[%s357 + $0xd4] sm:%s349] %v464
                  %v466 = vld [vmem:[%s356 + $0x1b0] sm:%s349]
                  %467 = vst [vmem:[%s357 + $0xd8] sm:%s349] %v466
                  %v468 = vld [vmem:[%s356 + $0x1b4] sm:%s349]
                  %469 = vst [vmem:[%s357 + $0xdc] sm:%s349] %v468
                  %v470 = vld [vmem:[%s356 + $0x1b8] sm:%s349]
                  %471 = vst [vmem:[%s357 + $0xe0] sm:%s349] %v470
                  %v472 = vld [vmem:[%s356 + $0x1bc] sm:%s349]
                  %473 = vst [vmem:[%s357 + $0xe4] sm:%s349] %v472
                  %v474 = vld [vmem:[%s356 + $0x1c0] sm:%s349]
                  %475 = vst [vmem:[%s357 + $0xe8] sm:%s349] %v474
                  %v476 = vld [vmem:[%s356 + $0x1c4] sm:%s349]
                  %477 = vst [vmem:[%s357 + $0xec] sm:%s349] %v476
                  %v478 = vld [vmem:[%s356 + $0x1c8] sm:%s349]
                  %479 = vst [vmem:[%s357 + $0xf0] sm:%s349] %v478
                  %v480 = vld [vmem:[%s356 + $0x1cc] sm:%s349]
                  %481 = vst [vmem:[%s357 + $0xf4] sm:%s349] %v480
                  %v482 = vld [vmem:[%s356 + $0x1d0] sm:%s349]
                  %483 = vst [vmem:[%s357 + $0xf8] sm:%s349] %v482
                  %v484 = vld [vmem:[%s356 + $0x1d4] sm:%s349]
                  %485 = vst [vmem:[%s357 + $0xfc] sm:%s349] %v484
                  %v486 = vld [vmem:[%s356 + $0x1d8] sm:%s349]
                  %487 = vst [vmem:[%s357 + $0x100] sm:%s349] %v486
                  %v488 = vld [vmem:[%s356 + $0x1dc] sm:%s349]
                  %489 = vst [vmem:[%s357 + $0x104] sm:%s349] %v488
                  %v490 = vld [vmem:[%s356 + $0x1e0] sm:%s349]
                  %491 = vst [vmem:[%s357 + $0x108] sm:%s349] %v490
                  %v492 = vld [vmem:[%s356 + $0x1e4] sm:%s349]
                  %493 = vst [vmem:[%s357 + $0x10c] sm:%s349] %v492
                  %v494 = vld [vmem:[%s356 + $0x1e8] sm:%s349]
                  %495 = vst [vmem:[%s357 + $0x110] sm:%s349] %v494
                  %v496 = vld [vmem:[%s356 + $0x1ec] sm:%s349]
                  %497 = vst [vmem:[%s357 + $0x114] sm:%s349] %v496
                  %v498 = vld [vmem:[%s356 + $0x1f0] sm:%s349]
                  %499 = vst [vmem:[%s357 + $0x118] sm:%s349] %v498
                  %v500 = vld [vmem:[%s356 + $0x1f4] sm:%s349]
                  %501 = vst [vmem:[%s357 + $0x11c] sm:%s349] %v500
                $region63: #{conv_block_forward.3} parent=50 // loop_footer
                  %s355 = sadd.s32 1, %s351
                $region64: #{conv_block_forward.3} parent=50 // loop_footer_branch
                  %350 = sbr.rel target = $region60
                $region65: #{conv_block_forward.3} parent=50 // loop_exit
                  _
              $region51: #{conv_block_forward.3} parent=35 // pred_fallthru
                _
            $region36: #{conv_block_forward.3} parent=31 // pred_fallthru
              _
            // Predicated region
            $region37: #{conv_block_forward.3} parent=31 // pred_check
              _
            $region38: #{conv_block_forward.3} parent=31 // pred_check_branch
              %183 = sbr.rel (0) target = $region40
            $region39: #{conv_block_forward.3} parent=31 // pred_region
              %s185 = ssub.s32 16, 1
              loop: start=0, step=1, limit=1
              $region41: #{conv_block_forward.3} parent=39 // loop_pre_header
                _
              $region42: #{conv_block_forward.3} parent=39 // loop_header
                %s187 = sphi 0, %s191
                %p188 = scmp.ge.s32.totalorder %s187, 1
                %s192 = sphi %s177, %s177
                %s193 = sphi %s174, %s174
              $region43: #{conv_block_forward.3} parent=39 // loop_header_branch
                %190 = sbr.rel (%p188) target = $region47
              $region44: #{conv_block_forward.3} parent=39 // loop_body
                %v194 = vld [vmem:[%s192] sm:%s185]
                %195 = vst [vmem:[%s193] sm:%s185] %v194
                %v196 = vld [vmem:[%s192 + $0x4] sm:%s185]
                %197 = vst [vmem:[%s193 + $0x4] sm:%s185] %v196
                %v198 = vld [vmem:[%s192 + $0x8] sm:%s185]
                %199 = vst [vmem:[%s193 + $0x8] sm:%s185] %v198
                %v200 = vld [vmem:[%s192 + $0xc] sm:%s185]
                %201 = vst [vmem:[%s193 + $0xc] sm:%s185] %v200
                %v202 = vld [vmem:[%s192 + $0x10] sm:%s185]
                %203 = vst [vmem:[%s193 + $0x10] sm:%s185] %v202
                %v204 = vld [vmem:[%s192 + $0x14] sm:%s185]
                %205 = vst [vmem:[%s193 + $0x14] sm:%s185] %v204
                %v206 = vld [vmem:[%s192 + $0x18] sm:%s185]
                %207 = vst [vmem:[%s193 + $0x18] sm:%s185] %v206
                %v208 = vld [vmem:[%s192 + $0x1c] sm:%s185]
                %209 = vst [vmem:[%s193 + $0x1c] sm:%s185] %v208
                %v210 = vld [vmem:[%s192 + $0x20] sm:%s185]
                %211 = vst [vmem:[%s193 + $0x20] sm:%s185] %v210
                %v212 = vld [vmem:[%s192 + $0x24] sm:%s185]
                %213 = vst [vmem:[%s193 + $0x24] sm:%s185] %v212
                %v214 = vld [vmem:[%s192 + $0x28] sm:%s185]
                %215 = vst [vmem:[%s193 + $0x28] sm:%s185] %v214
                %v216 = vld [vmem:[%s192 + $0x2c] sm:%s185]
                %217 = vst [vmem:[%s193 + $0x2c] sm:%s185] %v216
                %v218 = vld [vmem:[%s192 + $0x30] sm:%s185]
                %219 = vst [vmem:[%s193 + $0x30] sm:%s185] %v218
                %v220 = vld [vmem:[%s192 + $0x34] sm:%s185]
                %221 = vst [vmem:[%s193 + $0x34] sm:%s185] %v220
                %v222 = vld [vmem:[%s192 + $0x38] sm:%s185]
                %223 = vst [vmem:[%s193 + $0x38] sm:%s185] %v222
                %v224 = vld [vmem:[%s192 + $0x3c] sm:%s185]
                %225 = vst [vmem:[%s193 + $0x3c] sm:%s185] %v224
                %v226 = vld [vmem:[%s192 + $0x40] sm:%s185]
                %227 = vst [vmem:[%s193 + $0x40] sm:%s185] %v226
                %v228 = vld [vmem:[%s192 + $0x44] sm:%s185]
                %229 = vst [vmem:[%s193 + $0x44] sm:%s185] %v228
                %v230 = vld [vmem:[%s192 + $0x90] sm:%s185]
                %231 = vst [vmem:[%s193 + $0x48] sm:%s185] %v230
                %v232 = vld [vmem:[%s192 + $0x94] sm:%s185]
                %233 = vst [vmem:[%s193 + $0x4c] sm:%s185] %v232
                %v234 = vld [vmem:[%s192 + $0x98] sm:%s185]
                %235 = vst [vmem:[%s193 + $0x50] sm:%s185] %v234
                %v236 = vld [vmem:[%s192 + $0x9c] sm:%s185]
                %237 = vst [vmem:[%s193 + $0x54] sm:%s185] %v236
                %v238 = vld [vmem:[%s192 + $0xa0] sm:%s185]
                %239 = vst [vmem:[%s193 + $0x58] sm:%s185] %v238
                %v240 = vld [vmem:[%s192 + $0xa4] sm:%s185]
                %241 = vst [vmem:[%s193 + $0x5c] sm:%s185] %v240
                %v242 = vld [vmem:[%s192 + $0xa8] sm:%s185]
                %243 = vst [vmem:[%s193 + $0x60] sm:%s185] %v242
                %v244 = vld [vmem:[%s192 + $0xac] sm:%s185]
                %245 = vst [vmem:[%s193 + $0x64] sm:%s185] %v244
                %v246 = vld [vmem:[%s192 + $0xb0] sm:%s185]
                %247 = vst [vmem:[%s193 + $0x68] sm:%s185] %v246
                %v248 = vld [vmem:[%s192 + $0xb4] sm:%s185]
                %249 = vst [vmem:[%s193 + $0x6c] sm:%s185] %v248
                %v250 = vld [vmem:[%s192 + $0xb8] sm:%s185]
                %251 = vst [vmem:[%s193 + $0x70] sm:%s185] %v250
                %v252 = vld [vmem:[%s192 + $0xbc] sm:%s185]
                %253 = vst [vmem:[%s193 + $0x74] sm:%s185] %v252
                %v254 = vld [vmem:[%s192 + $0xc0] sm:%s185]
                %255 = vst [vmem:[%s193 + $0x78] sm:%s185] %v254
                %v256 = vld [vmem:[%s192 + $0xc4] sm:%s185]
                %257 = vst [vmem:[%s193 + $0x7c] sm:%s185] %v256
                %v258 = vld [vmem:[%s192 + $0xc8] sm:%s185]
                %259 = vst [vmem:[%s193 + $0x80] sm:%s185] %v258
                %v260 = vld [vmem:[%s192 + $0xcc] sm:%s185]
                %261 = vst [vmem:[%s193 + $0x84] sm:%s185] %v260
                %v262 = vld [vmem:[%s192 + $0xd0] sm:%s185]
                %263 = vst [vmem:[%s193 + $0x88] sm:%s185] %v262
                %v264 = vld [vmem:[%s192 + $0xd4] sm:%s185]
                %265 = vst [vmem:[%s193 + $0x8c] sm:%s185] %v264
                %v266 = vld [vmem:[%s192 + $0x120] sm:%s185]
                %267 = vst [vmem:[%s193 + $0x90] sm:%s185] %v266
                %v268 = vld [vmem:[%s192 + $0x124] sm:%s185]
                %269 = vst [vmem:[%s193 + $0x94] sm:%s185] %v268
                %v270 = vld [vmem:[%s192 + $0x128] sm:%s185]
                %271 = vst [vmem:[%s193 + $0x98] sm:%s185] %v270
                %v272 = vld [vmem:[%s192 + $0x12c] sm:%s185]
                %273 = vst [vmem:[%s193 + $0x9c] sm:%s185] %v272
                %v274 = vld [vmem:[%s192 + $0x130] sm:%s185]
                %275 = vst [vmem:[%s193 + $0xa0] sm:%s185] %v274
                %v276 = vld [vmem:[%s192 + $0x134] sm:%s185]
                %277 = vst [vmem:[%s193 + $0xa4] sm:%s185] %v276
                %v278 = vld [vmem:[%s192 + $0x138] sm:%s185]
                %279 = vst [vmem:[%s193 + $0xa8] sm:%s185] %v278
                %v280 = vld [vmem:[%s192 + $0x13c] sm:%s185]
                %281 = vst [vmem:[%s193 + $0xac] sm:%s185] %v280
                %v282 = vld [vmem:[%s192 + $0x140] sm:%s185]
                %283 = vst [vmem:[%s193 + $0xb0] sm:%s185] %v282
                %v284 = vld [vmem:[%s192 + $0x144] sm:%s185]
                %285 = vst [vmem:[%s193 + $0xb4] sm:%s185] %v284
                %v286 = vld [vmem:[%s192 + $0x148] sm:%s185]
                %287 = vst [vmem:[%s193 + $0xb8] sm:%s185] %v286
                %v288 = vld [vmem:[%s192 + $0x14c] sm:%s185]
                %289 = vst [vmem:[%s193 + $0xbc] sm:%s185] %v288
                %v290 = vld [vmem:[%s192 + $0x150] sm:%s185]
                %291 = vst [vmem:[%s193 + $0xc0] sm:%s185] %v290
                %v292 = vld [vmem:[%s192 + $0x154] sm:%s185]
                %293 = vst [vmem:[%s193 + $0xc4] sm:%s185] %v292
                %v294 = vld [vmem:[%s192 + $0x158] sm:%s185]
                %295 = vst [vmem:[%s193 + $0xc8] sm:%s185] %v294
                %v296 = vld [vmem:[%s192 + $0x15c] sm:%s185]
                %297 = vst [vmem:[%s193 + $0xcc] sm:%s185] %v296
                %v298 = vld [vmem:[%s192 + $0x160] sm:%s185]
                %299 = vst [vmem:[%s193 + $0xd0] sm:%s185] %v298
                %v300 = vld [vmem:[%s192 + $0x164] sm:%s185]
                %301 = vst [vmem:[%s193 + $0xd4] sm:%s185] %v300
                %v302 = vld [vmem:[%s192 + $0x1b0] sm:%s185]
                %303 = vst [vmem:[%s193 + $0xd8] sm:%s185] %v302
                %v304 = vld [vmem:[%s192 + $0x1b4] sm:%s185]
                %305 = vst [vmem:[%s193 + $0xdc] sm:%s185] %v304
                %v306 = vld [vmem:[%s192 + $0x1b8] sm:%s185]
                %307 = vst [vmem:[%s193 + $0xe0] sm:%s185] %v306
                %v308 = vld [vmem:[%s192 + $0x1bc] sm:%s185]
                %309 = vst [vmem:[%s193 + $0xe4] sm:%s185] %v308
                %v310 = vld [vmem:[%s192 + $0x1c0] sm:%s185]
                %311 = vst [vmem:[%s193 + $0xe8] sm:%s185] %v310
                %v312 = vld [vmem:[%s192 + $0x1c4] sm:%s185]
                %313 = vst [vmem:[%s193 + $0xec] sm:%s185] %v312
                %v314 = vld [vmem:[%s192 + $0x1c8] sm:%s185]
                %315 = vst [vmem:[%s193 + $0xf0] sm:%s185] %v314
                %v316 = vld [vmem:[%s192 + $0x1cc] sm:%s185]
                %317 = vst [vmem:[%s193 + $0xf4] sm:%s185] %v316
                %v318 = vld [vmem:[%s192 + $0x1d0] sm:%s185]
                %319 = vst [vmem:[%s193 + $0xf8] sm:%s185] %v318
                %v320 = vld [vmem:[%s192 + $0x1d4] sm:%s185]
                %321 = vst [vmem:[%s193 + $0xfc] sm:%s185] %v320
                %v322 = vld [vmem:[%s192 + $0x1d8] sm:%s185]
                %323 = vst [vmem:[%s193 + $0x100] sm:%s185] %v322
                %v324 = vld [vmem:[%s192 + $0x1dc] sm:%s185]
                %325 = vst [vmem:[%s193 + $0x104] sm:%s185] %v324
                %v326 = vld [vmem:[%s192 + $0x1e0] sm:%s185]
                %327 = vst [vmem:[%s193 + $0x108] sm:%s185] %v326
                %v328 = vld [vmem:[%s192 + $0x1e4] sm:%s185]
                %329 = vst [vmem:[%s193 + $0x10c] sm:%s185] %v328
                %v330 = vld [vmem:[%s192 + $0x1e8] sm:%s185]
                %331 = vst [vmem:[%s193 + $0x110] sm:%s185] %v330
                %v332 = vld [vmem:[%s192 + $0x1ec] sm:%s185]
                %333 = vst [vmem:[%s193 + $0x114] sm:%s185] %v332
                %v334 = vld [vmem:[%s192 + $0x1f0] sm:%s185]
                %335 = vst [vmem:[%s193 + $0x118] sm:%s185] %v334
                %v336 = vld [vmem:[%s192 + $0x1f4] sm:%s185]
                %337 = vst [vmem:[%s193 + $0x11c] sm:%s185] %v336
              $region45: #{conv_block_forward.3} parent=39 // loop_footer
                %s191 = sadd.s32 1, %s187
              $region46: #{conv_block_forward.3} parent=39 // loop_footer_branch
                %186 = sbr.rel target = $region42
              $region47: #{conv_block_forward.3} parent=39 // loop_exit
                _
            $region40: #{conv_block_forward.3} parent=31 // pred_fallthru
              _
          $region32: #{conv_block_forward.3} parent=27 // pred_fallthru
            _
          %502 = vnop
        $region28: #{conv_block_forward.3} parent=23 // pred_fallthru
          _
      $region24: #{conv_block_forward.3} parent=5 // pred_fallthru
        _
      %p503 = scmp.le.s32.totalorder 1, %s9
      %p504 = scmp.lt.s32.totalorder %s9, 3
      %p505 = pnand %p503, %p504
      %p506 = pneg %p505
      // Predicated region
      $region66: #{conv_block_forward.3} parent=5 // pred_check
        _
      $region67: #{conv_block_forward.3} parent=5 // pred_check_branch
        %508 = sbr.rel (%p505) target = $region69
      $region68: #{conv_block_forward.3} parent=5 // pred_region
        %s509 = ssub.s32 %s9, 1
        %s510 = sand.u32 %s41, 1
        %s511 = sand.u32 %s41, 1
        %s512 = smul.addr %s511, 288
        %s513 = scalar_lea.vmem [#allocation4], %s512
        // Predicated region
        $region70: #{conv_block_forward.3} parent=68 // pred_check
          %p514 = pneg %p54
        $region71: #{conv_block_forward.3} parent=68 // pred_check_branch
          %516 = sbr.rel (%p514) target = $region73
        $region72: #{conv_block_forward.3} parent=68 // pred_region
          _
        $region73: #{conv_block_forward.3} parent=68 // pred_fallthru
          _
        %s517 = sand.u32 %s41, 1
        %s518 = sand.u32 %s41, 1
        %s519 = smul.addr %s518, 288
        %s520 = scalar_lea.vmem [#allocation4], %s519
        %p521 = pneg %p54
        %p522 = pneg %p51
        %p523 = scmp.lt.s32.totalorder %s21, 0
        %s524 = scalar_select %p523, %s21, 0
        %s525 = smul.addr %s524, 4
        %s526 = scalar_lea.vmem %s1, %s525
        %p527 = pneg %p80
        %p528 = pneg %p77
        %p529 = scmp.lt.s32.totalorder %s21, 0
        %s530 = scalar_select %p529, %s21, 0
        %s531 = scalar_lea.vmem %s2, %s530
        %p532 = pneg %p106
        %p533 = pneg %p103
        %p534 = pneg %p136
        %p535 = pneg %p133
        %s536 = smul.u32 8, %s20
        %p537 = scmp.lt.s32.totalorder %s19, 1
        %s538 = scalar_select %p537, %s19, 1
        %p539 = scmp.lt.s32.totalorder %s536, 7
        %s540 = scalar_select %p539, %s536, 7
        %p541 = scmp.lt.s32.totalorder %s21, 0
        %s542 = scalar_select %p541, %s21, 0
        %s543 = sadd.s32 %s542, %s540
        %s544 = smul.addr %s538, 8
        %s545 = sadd.s32 %s543, %s544
        %s546 = smul.addr %s545, 4
        %s547 = scalar_lea.vmem %s3, %s546
        %p548 = scmp.lt.s32.totalorder %s21, 0
        %s549 = scalar_select %p548, %s21, 0
        %s550 = smul.addr %s549, 4
        %s551 = scalar_lea.vmem %s1, %s550
        %p552 = scmp.lt.s32.totalorder %s21, 0
        %s553 = scalar_select %p552, %s21, 0
        %s554 = scalar_lea.vmem %s2, %s553
        %s555 = smul.u32 8, %s20
        %p556 = scmp.lt.s32.totalorder %s19, 1
        %s557 = scalar_select %p556, %s19, 1
        %p558 = scmp.lt.s32.totalorder %s555, 7
        %s559 = scalar_select %p558, %s555, 7
        %p560 = scmp.lt.s32.totalorder %s21, 0
        %s561 = scalar_select %p560, %s21, 0
        %s562 = sadd.s32 %s561, %s559
        %s563 = smul.addr %s557, 8
        %s564 = sadd.s32 %s562, %s563
        %s565 = smul.addr %s564, 4
        %s566 = scalar_lea.vmem %s3, %s565
        %s567 = smul.u32 8, %s20
        %s568 = smul.u32 %s20, 8
        %s569 = smul.u32 %s568, 2
        %s570 = smul.addr %s569, 4
        %s571 = scalar_lea.vmem %s513, %s570 [#allocation4]
        %v572 = vld [vmem:[%s571] sm:$0xf]
        %v573 = vld [vmem:[%s571 + $0x8] sm:$0xf]
        %v574 = vld [vmem:[%s571 + $0x10] sm:$0xf]
        %v575 = vld [vmem:[%s571 + $0x18] sm:$0xf]
        %v576 = vld [vmem:[%s571 + $0x20] sm:$0xf]
        %v577 = vld [vmem:[%s571 + $0x28] sm:$0xf]
        %v578 = vld [vmem:[%s571 + $0x30] sm:$0xf]
        %v579 = vld [vmem:[%s571 + $0x38] sm:$0xf]
        %580 = vst [vmem:[#allocation3] sm:$0xf] %v572
        %581 = vst [vmem:[#allocation3 + $0xc] sm:$0xf] %v573
        %582 = vst [vmem:[#allocation3 + $0x18] sm:$0xf] %v574
        %583 = vst [vmem:[#allocation3 + $0x24] sm:$0xf] %v575
        %584 = vst [vmem:[#allocation3 + $0x30] sm:$0xf] %v576
        %585 = vst [vmem:[#allocation3 + $0x3c] sm:$0xf] %v577
        %586 = vst [vmem:[#allocation3 + $0x48] sm:$0xf] %v578
        %587 = vst [vmem:[#allocation3 + $0x54] sm:$0xf] %v579
        %s588 = sadd.s32 %s569, 18
        %s589 = smul.addr %s588, 4
        %s590 = scalar_lea.vmem %s513, %s589 [#allocation4]
        %v591 = vld [vmem:[%s590] sm:$0xf]
        %v592 = vld [vmem:[%s590 + $0x8] sm:$0xf]
        %v593 = vld [vmem:[%s590 + $0x10] sm:$0xf]
        %v594 = vld [vmem:[%s590 + $0x18] sm:$0xf]
        %v595 = vld [vmem:[%s590 + $0x20] sm:$0xf]
        %v596 = vld [vmem:[%s590 + $0x28] sm:$0xf]
        %v597 = vld [vmem:[%s590 + $0x30] sm:$0xf]
        %v598 = vld [vmem:[%s590 + $0x38] sm:$0xf]
        %599 = vst [vmem:[#allocation3 + $0x4] sm:$0xf] %v591
        %600 = vst [vmem:[#allocation3 + $0x10] sm:$0xf] %v592
        %601 = vst [vmem:[#allocation3 + $0x1c] sm:$0xf] %v593
        %602 = vst [vmem:[#allocation3 + $0x28] sm:$0xf] %v594
        %603 = vst [vmem:[#allocation3 + $0x34] sm:$0xf] %v595
        %604 = vst [vmem:[#allocation3 + $0x40] sm:$0xf] %v596
        %605 = vst [vmem:[#allocation3 + $0x4c] sm:$0xf] %v597
        %606 = vst [vmem:[#allocation3 + $0x58] sm:$0xf] %v598
        %v607 = vld [vmem:[%s571] sm:$0xf]
        %v608 = vld [vmem:[%s571 + $0x4] sm:$0x1]
        %v609 = vld [vmem:[%s571 + $0x8] sm:$0xf]
        %v610 = vld [vmem:[%s571 + $0xc] sm:$0x1]
        %v611 = vld [vmem:[%s571 + $0x10] sm:$0xf]
        %v612 = vld [vmem:[%s571 + $0x14] sm:$0x1]
        %v613 = vld [vmem:[%s571 + $0x18] sm:$0xf]
        %v614 = vld [vmem:[%s571 + $0x1c] sm:$0x1]
        %v615 = vld [vmem:[%s571 + $0x20] sm:$0xf]
        %v616 = vld [vmem:[%s571 + $0x24] sm:$0x1]
        %v617 = vld [vmem:[%s571 + $0x28] sm:$0xf]
        %v618 = vld [vmem:[%s571 + $0x2c] sm:$0x1]
        %v619 = vld [vmem:[%s571 + $0x30] sm:$0xf]
        %v620 = vld [vmem:[%s571 + $0x34] sm:$0x1]
        %v621 = vld [vmem:[%s571 + $0x38] sm:$0xf]
        %v622 = vld [vmem:[%s571 + $0x3c] sm:$0x1]
        %vm623 = vsmask.f32 3328
        %vm624 = vsmask.f32 7440
        %vm625 = vmor %vm623, %vm624
        %v627 = vshrl.u32 %v607, 16
        %v629 = vrot.slane %v627, 4
        %v630 = vshll.u32 %v607, 16
        %v632 = vrot.slane %v630, 5
        %v633 = vor.u32 %v629, %v632
        %v634 = vrot.slane %v633, 4
        %v636 = vshll.u32 %v608, 16
        %v638 = vrot.slane %v636, 5
        %v639 = vsel %vm625, %v634, %v638
        %v641 = vshrl.u32 %v609, 16
        %v643 = vrot.slane %v641, 4
        %v644 = vshll.u32 %v609, 16
        %v646 = vrot.slane %v644, 5
        %v647 = vor.u32 %v643, %v646
        %v648 = vrot.slane %v647, 4
        %v650 = vshll.u32 %v610, 16
        %v652 = vrot.slane %v650, 5
        %v653 = vsel %vm625, %v648, %v652
        %v655 = vshrl.u32 %v611, 16
        %v657 = vrot.slane %v655, 4
        %v658 = vshll.u32 %v611, 16
        %v660 = vrot.slane %v658, 5
        %v661 = vor.u32 %v657, %v660
        %v662 = vrot.slane %v661, 4
        %v664 = vshll.u32 %v612, 16
        %v666 = vrot.slane %v664, 5
        %v667 = vsel %vm625, %v662, %v666
        %v669 = vshrl.u32 %v613, 16
        %v671 = vrot.slane %v669, 4
        %v672 = vshll.u32 %v613, 16
        %v674 = vrot.slane %v672, 5
        %v675 = vor.u32 %v671, %v674
        %v676 = vrot.slane %v675, 4
        %v678 = vshll.u32 %v614, 16
        %v680 = vrot.slane %v678, 5
        %v681 = vsel %vm625, %v676, %v680
        %v683 = vshrl.u32 %v615, 16
        %v685 = vrot.slane %v683, 4
        %v686 = vshll.u32 %v615, 16
        %v688 = vrot.slane %v686, 5
        %v689 = vor.u32 %v685, %v688
        %v690 = vrot.slane %v689, 4
        %v692 = vshll.u32 %v616, 16
        %v694 = vrot.slane %v692, 5
        %v695 = vsel %vm625, %v690, %v694
        %v697 = vshrl.u32 %v617, 16
        %v699 = vrot.slane %v697, 4
        %v700 = vshll.u32 %v617, 16
        %v702 = vrot.slane %v700, 5
        %v703 = vor.u32 %v699, %v702
        %v704 = vrot.slane %v703, 4
        %v706 = vshll.u32 %v618, 16
        %v708 = vrot.slane %v706, 5
        %v709 = vsel %vm625, %v704, %v708
        %v711 = vshrl.u32 %v619, 16
        %v713 = vrot.slane %v711, 4
        %v714 = vshll.u32 %v619, 16
        %v716 = vrot.slane %v714, 5
        %v717 = vor.u32 %v713, %v716
        %v718 = vrot.slane %v717, 4
        %v720 = vshll.u32 %v620, 16
        %v722 = vrot.slane %v720, 5
        %v723 = vsel %vm625, %v718, %v722
        %v725 = vshrl.u32 %v621, 16
        %v727 = vrot.slane %v725, 4
        %v728 = vshll.u32 %v621, 16
        %v730 = vrot.slane %v728, 5
        %v731 = vor.u32 %v727, %v730
        %v732 = vrot.slane %v731, 4
        %v734 = vshll.u32 %v622, 16
        %v736 = vrot.slane %v734, 5
        %v737 = vsel %vm625, %v732, %v736
        %746 = vst [vmem:[#allocation3 + $0x8] sm:$0xf] %v639
        %747 = vst [vmem:[#allocation3 + $0x14] sm:$0xf] %v653
        %748 = vst [vmem:[#allocation3 + $0x20] sm:$0xf] %v667
        %749 = vst [vmem:[#allocation3 + $0x2c] sm:$0xf] %v681
        %750 = vst [vmem:[#allocation3 + $0x38] sm:$0xf] %v695
        %751 = vst [vmem:[#allocation3 + $0x44] sm:$0xf] %v709
        %752 = vst [vmem:[#allocation3 + $0x50] sm:$0xf] %v723
        %753 = vst [vmem:[#allocation3 + $0x5c] sm:$0xf] %v737
        %v754 = vld [vmem:[#allocation3] sm:$0xff]
        %v755 = vld [vmem:[#allocation3 + $0x8] sm:$0xf]
        %v756 = vld [vmem:[#allocation3 + $0xc] sm:$0xff]
        %v757 = vld [vmem:[#allocation3 + $0x14] sm:$0xf]
        %v758 = vld [vmem:[#allocation3 + $0x18] sm:$0xff]
        %v759 = vld [vmem:[#allocation3 + $0x20] sm:$0xf]
        %v760 = vld [vmem:[#allocation3 + $0x24] sm:$0xff]
        %v761 = vld [vmem:[#allocation3 + $0x2c] sm:$0xf]
        %v762 = vld [vmem:[#allocation3 + $0x30] sm:$0xff]
        %v763 = vld [vmem:[#allocation3 + $0x38] sm:$0xf]
        %v764 = vld [vmem:[#allocation3 + $0x3c] sm:$0xff]
        %v765 = vld [vmem:[#allocation3 + $0x44] sm:$0xf]
        %v766 = vld [vmem:[#allocation3 + $0x48] sm:$0xff]
        %v767 = vld [vmem:[#allocation3 + $0x50] sm:$0xf]
        %v768 = vld [vmem:[#allocation3 + $0x54] sm:$0xff]
        %v769 = vld [vmem:[#allocation3 + $0x5c] sm:$0xf]
        %v770 = vld [vmem:[%s551] sm:$0xf]
        %v771 = vld [vmem:[%s551 + $0x4] sm:$0xf]
        %v772 = vld [vmem:[%s551 + $0x8] sm:$0xf]
        %v773 = vld [vmem:[%s551 + $0xc] sm:$0xf]
        %v774 = vld [vmem:[%s551 + $0x10] sm:$0xf]
        %v775 = vld [vmem:[%s551 + $0x14] sm:$0xf]
        %v776 = vld [vmem:[%s551 + $0x18] sm:$0xf]
        %v777 = vld [vmem:[%s551 + $0x1c] sm:$0xf]
        %v778 = vld [vmem:[%s551 + $0x20] sm:$0xf]
        %v779 = vld [vmem:[%s551 + $0x24] sm:$0xf]
        %v780 = vld [vmem:[%s551 + $0x28] sm:$0xf]
        %v781 = vld [vmem:[%s551 + $0x2c] sm:$0xf]
        %v782 = vld [vmem:[%s551 + $0x30] sm:$0xf]
        %v783 = vld [vmem:[%s551 + $0x34] sm:$0xf]
        %v784 = vld [vmem:[%s551 + $0x38] sm:$0xf]
        %v785 = vld [vmem:[%s551 + $0x3c] sm:$0xf]
        %v786 = vld [vmem:[%s551 + $0x40] sm:$0xf]
        %v787 = vld [vmem:[%s551 + $0x44] sm:$0xf]
        %v788 = vld [vmem:[%s551 + $0x48] sm:$0xf]
        %v789 = vld [vmem:[%s551 + $0x4c] sm:$0xf]
        %v790 = vld [vmem:[%s551 + $0x50] sm:$0xf]
        %v791 = vld [vmem:[%s551 + $0x54] sm:$0xf]
        %v792 = vld [vmem:[%s551 + $0x58] sm:$0xf]
        %v793 = vld [vmem:[%s551 + $0x5c] sm:$0xf]
        %v794 = vld [vmem:[%s551 + $0x60] sm:$0xf]
        %v795 = vld [vmem:[%s551 + $0x64] sm:$0xf]
        %v796 = vld [vmem:[%s551 + $0x68] sm:$0xf]
        %v797 = vld [vmem:[%s551 + $0x6c] sm:$0xf]
        %v798 = vld [vmem:[%s551 + $0x70] sm:$0xf]
        %v799 = vld [vmem:[%s551 + $0x74] sm:$0xf]
        %v800 = vld [vmem:[%s551 + $0x78] sm:$0xf]
        %v801 = vld [vmem:[%s551 + $0x7c] sm:$0xf]
        %v802 = vld [vmem:[%s551 + $0x80] sm:$0xf]
        %v803 = vld [vmem:[%s551 + $0x84] sm:$0xf]
        %v804 = vld [vmem:[%s551 + $0x88] sm:$0xf]
        %v805 = vld [vmem:[%s551 + $0x8c] sm:$0xf]
        %v806 = vld [vmem:[%s551 + $0x90] sm:$0xf]
        %v807 = vld [vmem:[%s551 + $0x94] sm:$0xf]
        %v808 = vld [vmem:[%s551 + $0x98] sm:$0xf]
        %v809 = vld [vmem:[%s551 + $0x9c] sm:$0xf]
        %v810 = vld [vmem:[%s551 + $0xa0] sm:$0xf]
        %v811 = vld [vmem:[%s551 + $0xa4] sm:$0xf]
        %v812 = vld [vmem:[%s551 + $0xa8] sm:$0xf]
        %v813 = vld [vmem:[%s551 + $0xac] sm:$0xf]
        %v814 = vld [vmem:[%s551 + $0xb0] sm:$0xf]
        %v815 = vld [vmem:[%s551 + $0xb4] sm:$0xf]
        %v816 = vld [vmem:[%s551 + $0xb8] sm:$0xf]
        %v817 = vld [vmem:[%s551 + $0xbc] sm:$0xf]
        %v834 = vunpack.c.l.b16 %v754
        %v835 = vunpack.c.h.b16 %v754
        %v836 = vunpack.c.l.b16 %v755
        %v837 = vunpack.c.l.b16 %v756
        %v838 = vunpack.c.h.b16 %v756
        %v839 = vunpack.c.l.b16 %v757
        %v840 = vunpack.c.l.b16 %v758
        %v841 = vunpack.c.h.b16 %v758
        %v842 = vunpack.c.l.b16 %v759
        %v843 = vunpack.c.l.b16 %v760
        %v844 = vunpack.c.h.b16 %v760
        %v845 = vunpack.c.l.b16 %v761
        %v846 = vunpack.c.l.b16 %v762
        %v847 = vunpack.c.h.b16 %v762
        %v848 = vunpack.c.l.b16 %v763
        %v849 = vunpack.c.l.b16 %v764
        %v850 = vunpack.c.h.b16 %v764
        %v851 = vunpack.c.l.b16 %v765
        %v852 = vunpack.c.l.b16 %v766
        %v853 = vunpack.c.h.b16 %v766
        %v854 = vunpack.c.l.b16 %v767
        %v855 = vunpack.c.l.b16 %v768
        %v856 = vunpack.c.h.b16 %v768
        %v857 = vunpack.c.l.b16 %v769
        %v858 = vpack.c.b16 %v837, %v834
        %v859 = vpack.c.b16 %v838, %v835
        %v860 = vpack.c.b16 %v839, %v836
        %v861 = vpack.c.b16 %v843, %v840
        %v862 = vpack.c.b16 %v844, %v841
        %v863 = vpack.c.b16 %v845, %v842
        %v864 = vpack.c.b16 %v849, %v846
        %v865 = vpack.c.b16 %v850, %v847
        %v866 = vpack.c.b16 %v851, %v848
        %v867 = vpack.c.b16 %v855, %v852
        %v868 = vpack.c.b16 %v856, %v853
        %v869 = vpack.c.b16 %v857, %v854
        %v930 = vunpack.c.l.b16 %v770
        %v931 = vunpack.c.l.b16 %v771
        %v932 = vunpack.c.l.b16 %v772
        %v933 = vunpack.c.l.b16 %v773
        %v934 = vunpack.c.l.b16 %v774
        %v935 = vunpack.c.l.b16 %v775
        %v936 = vunpack.c.l.b16 %v776
        %v937 = vunpack.c.l.b16 %v777
        %v938 = vunpack.c.l.b16 %v778
        %v939 = vunpack.c.l.b16 %v779
        %v940 = vunpack.c.l.b16 %v780
        %v941 = vunpack.c.l.b16 %v781
        %v942 = vunpack.c.l.b16 %v782
        %v943 = vunpack.c.l.b16 %v783
        %v944 = vunpack.c.l.b16 %v784
        %v945 = vunpack.c.l.b16 %v785
        %v946 = vunpack.c.l.b16 %v786
        %v947 = vunpack.c.l.b16 %v787
        %v948 = vunpack.c.l.b16 %v788
        %v949 = vunpack.c.l.b16 %v789
        %v950 = vunpack.c.l.b16 %v790
        %v951 = vunpack.c.l.b16 %v791
        %v952 = vunpack.c.l.b16 %v792
        %v953 = vunpack.c.l.b16 %v793
        %v954 = vunpack.c.l.b16 %v794
        %v955 = vunpack.c.l.b16 %v795
        %v956 = vunpack.c.l.b16 %v796
        %v957 = vunpack.c.l.b16 %v797
        %v958 = vunpack.c.l.b16 %v798
        %v959 = vunpack.c.l.b16 %v799
        %v960 = vunpack.c.l.b16 %v800
        %v961 = vunpack.c.l.b16 %v801
        %v962 = vunpack.c.l.b16 %v802
        %v963 = vunpack.c.l.b16 %v803
        %v964 = vunpack.c.l.b16 %v804
        %v965 = vunpack.c.l.b16 %v805
        %v966 = vunpack.c.l.b16 %v806
        %v967 = vunpack.c.l.b16 %v807
        %v968 = vunpack.c.l.b16 %v808
        %v969 = vunpack.c.l.b16 %v809
        %v970 = vunpack.c.l.b16 %v810
        %v971 = vunpack.c.l.b16 %v811
        %v972 = vunpack.c.l.b16 %v812
        %v973 = vunpack.c.l.b16 %v813
        %v974 = vunpack.c.l.b16 %v814
        %v975 = vunpack.c.l.b16 %v815
        %v976 = vunpack.c.l.b16 %v816
        %v977 = vunpack.c.l.b16 %v817
        %v978 = vpack.c.b16 %v931, %v930
        %v979 = vpack.c.b16 %v933, %v932
        %v980 = vpack.c.b16 %v935, %v934
        %v981 = vpack.c.b16 %v937, %v936
        %v982 = vpack.c.b16 %v939, %v938
        %v983 = vpack.c.b16 %v941, %v940
        %v984 = vpack.c.b16 %v943, %v942
        %v985 = vpack.c.b16 %v945, %v944
        %v986 = vpack.c.b16 %v947, %v946
        %v987 = vpack.c.b16 %v949, %v948
        %v988 = vpack.c.b16 %v951, %v950
        %v989 = vpack.c.b16 %v953, %v952
        %v990 = vpack.c.b16 %v955, %v954
        %v991 = vpack.c.b16 %v957, %v956
        %v992 = vpack.c.b16 %v959, %v958
        %v993 = vpack.c.b16 %v961, %v960
        %v994 = vpack.c.b16 %v963, %v962
        %v995 = vpack.c.b16 %v965, %v964
        %v996 = vpack.c.b16 %v967, %v966
        %v997 = vpack.c.b16 %v969, %v968
        %v998 = vpack.c.b16 %v971, %v970
        %v999 = vpack.c.b16 %v973, %v972
        %v1000 = vpack.c.b16 %v975, %v974
        %v1001 = vpack.c.b16 %v977, %v976
        %1026 = vmatpush.bf16.msra.mxu0 %v985
        %1027 = vmatpush.bf16.msra.mxu0 %v984
        %1028 = vmatpush.bf16.msra.mxu0 %v983
        %1029 = vmatpush.bf16.msra.mxu0 %v982
        %1030 = vmatpush.bf16.msra.mxu0 %v981
        %1031 = vmatpush.bf16.msra.mxu0 %v980
        %1032 = vmatpush.bf16.msra.mxu0 %v979
        %1033 = vmatpush.bf16.msra.mxu0 %v978
        %1034 = vmatmul.bf16.gmra.mxu0 %v858
        %v1035 = vpop.f32.mrf.mxu0
        %v1036 = vadd.f32 0.0, %v1035
        %v1037 = vpop.f32.mrf.mxu0
        %v1038 = vadd.f32 0.0, %v1037
        %1039 = vmatmul.bf16.gmra.mxu0 %v861
        %v1040 = vpop.f32.mrf.mxu0
        %v1041 = vadd.f32 0.0, %v1040
        %v1042 = vpop.f32.mrf.mxu0
        %v1043 = vadd.f32 0.0, %v1042
        %1044 = vmatmul.bf16.gmra.mxu0 %v864
        %v1045 = vpop.f32.mrf.mxu0
        %v1046 = vadd.f32 0.0, %v1045
        %v1047 = vpop.f32.mrf.mxu0
        %v1048 = vadd.f32 0.0, %v1047
        %1049 = vmatmul.bf16.gmra.mxu0 %v867
        %v1050 = vpop.f32.mrf.mxu0
        %v1051 = vadd.f32 0.0, %v1050
        %v1052 = vpop.f32.mrf.mxu0
        %v1053 = vadd.f32 0.0, %v1052
        %1054 = vdwg.mxu0
        %1055 = vmatpush.bf16.msra.mxu0 %v993
        %1056 = vmatpush.bf16.msra.mxu0 %v992
        %1057 = vmatpush.bf16.msra.mxu0 %v991
        %1058 = vmatpush.bf16.msra.mxu0 %v990
        %1059 = vmatpush.bf16.msra.mxu0 %v989
        %1060 = vmatpush.bf16.msra.mxu0 %v988
        %1061 = vmatpush.bf16.msra.mxu0 %v987
        %1062 = vmatpush.bf16.msra.mxu0 %v986
        %1063 = vmatmul.bf16.gmra.mxu0 %v859
        %v1064 = vpop.f32.mrf.mxu0
        %v1065 = vadd.f32 %v1036, %v1064
        %v1066 = vpop.f32.mrf.mxu0
        %v1067 = vadd.f32 %v1038, %v1066
        %1068 = vmatmul.bf16.gmra.mxu0 %v862
        %v1069 = vpop.f32.mrf.mxu0
        %v1070 = vadd.f32 %v1041, %v1069
        %v1071 = vpop.f32.mrf.mxu0
        %v1072 = vadd.f32 %v1043, %v1071
        %1073 = vmatmul.bf16.gmra.mxu0 %v865
        %v1074 = vpop.f32.mrf.mxu0
        %v1075 = vadd.f32 %v1046, %v1074
        %v1076 = vpop.f32.mrf.mxu0
        %v1077 = vadd.f32 %v1048, %v1076
        %1078 = vmatmul.bf16.gmra.mxu0 %v868
        %v1079 = vpop.f32.mrf.mxu0
        %v1080 = vadd.f32 %v1051, %v1079
        %v1081 = vpop.f32.mrf.mxu0
        %v1082 = vadd.f32 %v1053, %v1081
        %1083 = vdwg.mxu0
        %1084 = vmatpush.bf16.msra.mxu0 %v1001
        %1085 = vmatpush.bf16.msra.mxu0 %v1000
        %1086 = vmatpush.bf16.msra.mxu0 %v999
        %1087 = vmatpush.bf16.msra.mxu0 %v998
        %1088 = vmatpush.bf16.msra.mxu0 %v997
        %1089 = vmatpush.bf16.msra.mxu0 %v996
        %1090 = vmatpush.bf16.msra.mxu0 %v995
        %1091 = vmatpush.bf16.msra.mxu0 %v994
        %1092 = vmatmul.bf16.gmra.mxu0 %v860
        %v1093 = vpop.f32.mrf.mxu0
        %v1094 = vadd.f32 %v1065, %v1093
        %v1095 = vpop.f32.mrf.mxu0
        %v1096 = vadd.f32 %v1067, %v1095
        %1097 = vmatmul.bf16.gmra.mxu0 %v863
        %v1098 = vpop.f32.mrf.mxu0
        %v1099 = vadd.f32 %v1070, %v1098
        %v1100 = vpop.f32.mrf.mxu0
        %v1101 = vadd.f32 %v1072, %v1100
        %1102 = vmatmul.bf16.gmra.mxu0 %v866
        %v1103 = vpop.f32.mrf.mxu0
        %v1104 = vadd.f32 %v1075, %v1103
        %v1105 = vpop.f32.mrf.mxu0
        %v1106 = vadd.f32 %v1077, %v1105
        %1107 = vmatmul.bf16.gmra.mxu0 %v869
        %v1108 = vpop.f32.mrf.mxu0
        %v1109 = vadd.f32 %v1080, %v1108
        %v1110 = vpop.f32.mrf.mxu0
        %v1111 = vadd.f32 %v1082, %v1110
        %1112 = vdwg.mxu0
        %1113 = vst [vmem:[#allocation2] sm:$0xff] %v1094
        %1114 = vst [vmem:[#allocation2 + $0x8] sm:$0xff] %v1096
        %1115 = vst [vmem:[#allocation2 + $0x10] sm:$0xff] %v1099
        %1116 = vst [vmem:[#allocation2 + $0x18] sm:$0xff] %v1101
        %1117 = vst [vmem:[#allocation2 + $0x20] sm:$0xff] %v1104
        %1118 = vst [vmem:[#allocation2 + $0x28] sm:$0xff] %v1106
        %1119 = vst [vmem:[#allocation2 + $0x30] sm:$0xff] %v1109
        %1120 = vst [vmem:[#allocation2 + $0x38] sm:$0xff] %v1111
        %s1121 = sadd.s32 %s569, 36
        %s1122 = smul.addr %s1121, 4
        %s1123 = scalar_lea.vmem %s513, %s1122 [#allocation4]
        %v1124 = vld [vmem:[%s1123] sm:$0xf]
        %v1125 = vld [vmem:[%s1123 + $0x8] sm:$0xf]
        %v1126 = vld [vmem:[%s1123 + $0x10] sm:$0xf]
        %v1127 = vld [vmem:[%s1123 + $0x18] sm:$0xf]
        %v1128 = vld [vmem:[%s1123 + $0x20] sm:$0xf]
        %v1129 = vld [vmem:[%s1123 + $0x28] sm:$0xf]
        %v1130 = vld [vmem:[%s1123 + $0x30] sm:$0xf]
        %v1131 = vld [vmem:[%s1123 + $0x38] sm:$0xf]
        %1132 = vst [vmem:[#allocation3] sm:$0xf] %v1124
        %1133 = vst [vmem:[#allocation3 + $0xc] sm:$0xf] %v1125
        %1134 = vst [vmem:[#allocation3 + $0x18] sm:$0xf] %v1126
        %1135 = vst [vmem:[#allocation3 + $0x24] sm:$0xf] %v1127
        %1136 = vst [vmem:[#allocation3 + $0x30] sm:$0xf] %v1128
        %1137 = vst [vmem:[#allocation3 + $0x3c] sm:$0xf] %v1129
        %1138 = vst [vmem:[#allocation3 + $0x48] sm:$0xf] %v1130
        %1139 = vst [vmem:[#allocation3 + $0x54] sm:$0xf] %v1131
        %s1140 = sadd.s32 %s569, 54
        %s1141 = smul.addr %s1140, 4
        %s1142 = scalar_lea.vmem %s513, %s1141 [#allocation4]
        %v1143 = vld [vmem:[%s1142] sm:$0xf]
        %v1144 = vld [vmem:[%s1142 + $0x8] sm:$0xf]
        %v1145 = vld [vmem:[%s1142 + $0x10] sm:$0xf]
        %v1146 = vld [vmem:[%s1142 + $0x18] sm:$0xf]
        %v1147 = vld [vmem:[%s1142 + $0x20] sm:$0xf]
        %v1148 = vld [vmem:[%s1142 + $0x28] sm:$0xf]
        %v1149 = vld [vmem:[%s1142 + $0x30] sm:$0xf]
        %v1150 = vld [vmem:[%s1142 + $0x38] sm:$0xf]
        %1151 = vst [vmem:[#allocation3 + $0x4] sm:$0xf] %v1143
        %1152 = vst [vmem:[#allocation3 + $0x10] sm:$0xf] %v1144
        %1153 = vst [vmem:[#allocation3 + $0x1c] sm:$0xf] %v1145
        %1154 = vst [vmem:[#allocation3 + $0x28] sm:$0xf] %v1146
        %1155 = vst [vmem:[#allocation3 + $0x34] sm:$0xf] %v1147
        %1156 = vst [vmem:[#allocation3 + $0x40] sm:$0xf] %v1148
        %1157 = vst [vmem:[#allocation3 + $0x4c] sm:$0xf] %v1149
        %1158 = vst [vmem:[#allocation3 + $0x58] sm:$0xf] %v1150
        %v1159 = vld [vmem:[%s1123] sm:$0xf]
        %v1160 = vld [vmem:[%s1123 + $0x4] sm:$0x1]
        %v1161 = vld [vmem:[%s1123 + $0x8] sm:$0xf]
        %v1162 = vld [vmem:[%s1123 + $0xc] sm:$0x1]
        %v1163 = vld [vmem:[%s1123 + $0x10] sm:$0xf]
        %v1164 = vld [vmem:[%s1123 + $0x14] sm:$0x1]
        %v1165 = vld [vmem:[%s1123 + $0x18] sm:$0xf]
        %v1166 = vld [vmem:[%s1123 + $0x1c] sm:$0x1]
        %v1167 = vld [vmem:[%s1123 + $0x20] sm:$0xf]
        %v1168 = vld [vmem:[%s1123 + $0x24] sm:$0x1]
        %v1169 = vld [vmem:[%s1123 + $0x28] sm:$0xf]
        %v1170 = vld [vmem:[%s1123 + $0x2c] sm:$0x1]
        %v1171 = vld [vmem:[%s1123 + $0x30] sm:$0xf]
        %v1172 = vld [vmem:[%s1123 + $0x34] sm:$0x1]
        %v1173 = vld [vmem:[%s1123 + $0x38] sm:$0xf]
        %v1174 = vld [vmem:[%s1123 + $0x3c] sm:$0x1]
        %v1176 = vshrl.u32 %v1159, 16
        %v1178 = vrot.slane %v1176, 4
        %v1179 = vshll.u32 %v1159, 16
        %v1181 = vrot.slane %v1179, 5
        %v1182 = vor.u32 %v1178, %v1181
        %v1183 = vrot.slane %v1182, 4
        %v1185 = vshll.u32 %v1160, 16
        %v1187 = vrot.slane %v1185, 5
        %v1188 = vsel %vm625, %v1183, %v1187
        %v1190 = vshrl.u32 %v1161, 16
        %v1192 = vrot.slane %v1190, 4
        %v1193 = vshll.u32 %v1161, 16
        %v1195 = vrot.slane %v1193, 5
        %v1196 = vor.u32 %v1192, %v1195
        %v1197 = vrot.slane %v1196, 4
        %v1199 = vshll.u32 %v1162, 16
        %v1201 = vrot.slane %v1199, 5
        %v1202 = vsel %vm625, %v1197, %v1201
        %v1204 = vshrl.u32 %v1163, 16
        %v1206 = vrot.slane %v1204, 4
        %v1207 = vshll.u32 %v1163, 16
        %v1209 = vrot.slane %v1207, 5
        %v1210 = vor.u32 %v1206, %v1209
        %v1211 = vrot.slane %v1210, 4
        %v1213 = vshll.u32 %v1164, 16
        %v1215 = vrot.slane %v1213, 5
        %v1216 = vsel %vm625, %v1211, %v1215
        %v1218 = vshrl.u32 %v1165, 16
        %v1220 = vrot.slane %v1218, 4
        %v1221 = vshll.u32 %v1165, 16
        %v1223 = vrot.slane %v1221, 5
        %v1224 = vor.u32 %v1220, %v1223
        %v1225 = vrot.slane %v1224, 4
        %v1227 = vshll.u32 %v1166, 16
        %v1229 = vrot.slane %v1227, 5
        %v1230 = vsel %vm625, %v1225, %v1229
        %v1232 = vshrl.u32 %v1167, 16
        %v1234 = vrot.slane %v1232, 4
        %v1235 = vshll.u32 %v1167, 16
        %v1237 = vrot.slane %v1235, 5
        %v1238 = vor.u32 %v1234, %v1237
        %v1239 = vrot.slane %v1238, 4
        %v1241 = vshll.u32 %v1168, 16
        %v1243 = vrot.slane %v1241, 5
        %v1244 = vsel %vm625, %v1239, %v1243
        %v1246 = vshrl.u32 %v1169, 16
        %v1248 = vrot.slane %v1246, 4
        %v1249 = vshll.u32 %v1169, 16
        %v1251 = vrot.slane %v1249, 5
        %v1252 = vor.u32 %v1248, %v1251
        %v1253 = vrot.slane %v1252, 4
        %v1255 = vshll.u32 %v1170, 16
        %v1257 = vrot.slane %v1255, 5
        %v1258 = vsel %vm625, %v1253, %v1257
        %v1260 = vshrl.u32 %v1171, 16
        %v1262 = vrot.slane %v1260, 4
        %v1263 = vshll.u32 %v1171, 16
        %v1265 = vrot.slane %v1263, 5
        %v1266 = vor.u32 %v1262, %v1265
        %v1267 = vrot.slane %v1266, 4
        %v1269 = vshll.u32 %v1172, 16
        %v1271 = vrot.slane %v1269, 5
        %v1272 = vsel %vm625, %v1267, %v1271
        %v1274 = vshrl.u32 %v1173, 16
        %v1276 = vrot.slane %v1274, 4
        %v1277 = vshll.u32 %v1173, 16
        %v1279 = vrot.slane %v1277, 5
        %v1280 = vor.u32 %v1276, %v1279
        %v1281 = vrot.slane %v1280, 4
        %v1283 = vshll.u32 %v1174, 16
        %v1285 = vrot.slane %v1283, 5
        %v1286 = vsel %vm625, %v1281, %v1285
        %1295 = vst [vmem:[#allocation3 + $0x8] sm:$0xf] %v1188
        %1296 = vst [vmem:[#allocation3 + $0x14] sm:$0xf] %v1202
        %1297 = vst [vmem:[#allocation3 + $0x20] sm:$0xf] %v1216
        %1298 = vst [vmem:[#allocation3 + $0x2c] sm:$0xf] %v1230
        %1299 = vst [vmem:[#allocation3 + $0x38] sm:$0xf] %v1244
        %1300 = vst [vmem:[#allocation3 + $0x44] sm:$0xf] %v1258
        %1301 = vst [vmem:[#allocation3 + $0x50] sm:$0xf] %v1272
        %1302 = vst [vmem:[#allocation3 + $0x5c] sm:$0xf] %v1286
        %v1303 = vld [vmem:[#allocation3] sm:$0xff]
        %v1304 = vld [vmem:[#allocation3 + $0x8] sm:$0xf]
        %v1305 = vld [vmem:[#allocation3 + $0xc] sm:$0xff]
        %v1306 = vld [vmem:[#allocation3 + $0x14] sm:$0xf]
        %v1307 = vld [vmem:[#allocation3 + $0x18] sm:$0xff]
        %v1308 = vld [vmem:[#allocation3 + $0x20] sm:$0xf]
        %v1309 = vld [vmem:[#allocation3 + $0x24] sm:$0xff]
        %v1310 = vld [vmem:[#allocation3 + $0x2c] sm:$0xf]
        %v1311 = vld [vmem:[#allocation3 + $0x30] sm:$0xff]
        %v1312 = vld [vmem:[#allocation3 + $0x38] sm:$0xf]
        %v1313 = vld [vmem:[#allocation3 + $0x3c] sm:$0xff]
        %v1314 = vld [vmem:[#allocation3 + $0x44] sm:$0xf]
        %v1315 = vld [vmem:[#allocation3 + $0x48] sm:$0xff]
        %v1316 = vld [vmem:[#allocation3 + $0x50] sm:$0xf]
        %v1317 = vld [vmem:[#allocation3 + $0x54] sm:$0xff]
        %v1318 = vld [vmem:[#allocation3 + $0x5c] sm:$0xf]
        %s1319 = scalar_lea.vmem %s551, 192
        %v1320 = vld [vmem:[%s1319] sm:$0xf]
        %v1321 = vld [vmem:[%s1319 + $0x4] sm:$0xf]
        %v1322 = vld [vmem:[%s1319 + $0x8] sm:$0xf]
        %v1323 = vld [vmem:[%s1319 + $0xc] sm:$0xf]
        %v1324 = vld [vmem:[%s1319 + $0x10] sm:$0xf]
        %v1325 = vld [vmem:[%s1319 + $0x14] sm:$0xf]
        %v1326 = vld [vmem:[%s1319 + $0x18] sm:$0xf]
        %v1327 = vld [vmem:[%s1319 + $0x1c] sm:$0xf]
        %v1328 = vld [vmem:[%s1319 + $0x20] sm:$0xf]
        %v1329 = vld [vmem:[%s1319 + $0x24] sm:$0xf]
        %v1330 = vld [vmem:[%s1319 + $0x28] sm:$0xf]
        %v1331 = vld [vmem:[%s1319 + $0x2c] sm:$0xf]
        %v1332 = vld [vmem:[%s1319 + $0x30] sm:$0xf]
        %v1333 = vld [vmem:[%s1319 + $0x34] sm:$0xf]
        %v1334 = vld [vmem:[%s1319 + $0x38] sm:$0xf]
        %v1335 = vld [vmem:[%s1319 + $0x3c] sm:$0xf]
        %v1336 = vld [vmem:[%s1319 + $0x40] sm:$0xf]
        %v1337 = vld [vmem:[%s1319 + $0x44] sm:$0xf]
        %v1338 = vld [vmem:[%s1319 + $0x48] sm:$0xf]
        %v1339 = vld [vmem:[%s1319 + $0x4c] sm:$0xf]
        %v1340 = vld [vmem:[%s1319 + $0x50] sm:$0xf]
        %v1341 = vld [vmem:[%s1319 + $0x54] sm:$0xf]
        %v1342 = vld [vmem:[%s1319 + $0x58] sm:$0xf]
        %v1343 = vld [vmem:[%s1319 + $0x5c] sm:$0xf]
        %v1344 = vld [vmem:[%s1319 + $0x60] sm:$0xf]
        %v1345 = vld [vmem:[%s1319 + $0x64] sm:$0xf]
        %v1346 = vld [vmem:[%s1319 + $0x68] sm:$0xf]
        %v1347 = vld [vmem:[%s1319 + $0x6c] sm:$0xf]
        %v1348 = vld [vmem:[%s1319 + $0x70] sm:$0xf]
        %v1349 = vld [vmem:[%s1319 + $0x74] sm:$0xf]
        %v1350 = vld [vmem:[%s1319 + $0x78] sm:$0xf]
        %v1351 = vld [vmem:[%s1319 + $0x7c] sm:$0xf]
        %v1352 = vld [vmem:[%s1319 + $0x80] sm:$0xf]
        %v1353 = vld [vmem:[%s1319 + $0x84] sm:$0xf]
        %v1354 = vld [vmem:[%s1319 + $0x88] sm:$0xf]
        %v1355 = vld [vmem:[%s1319 + $0x8c] sm:$0xf]
        %v1356 = vld [vmem:[%s1319 + $0x90] sm:$0xf]
        %v1357 = vld [vmem:[%s1319 + $0x94] sm:$0xf]
        %v1358 = vld [vmem:[%s1319 + $0x98] sm:$0xf]
        %v1359 = vld [vmem:[%s1319 + $0x9c] sm:$0xf]
        %v1360 = vld [vmem:[%s1319 + $0xa0] sm:$0xf]
        %v1361 = vld [vmem:[%s1319 + $0xa4] sm:$0xf]
        %v1362 = vld [vmem:[%s1319 + $0xa8] sm:$0xf]
        %v1363 = vld [vmem:[%s1319 + $0xac] sm:$0xf]
        %v1364 = vld [vmem:[%s1319 + $0xb0] sm:$0xf]
        %v1365 = vld [vmem:[%s1319 + $0xb4] sm:$0xf]
        %v1366 = vld [vmem:[%s1319 + $0xb8] sm:$0xf]
        %v1367 = vld [vmem:[%s1319 + $0xbc] sm:$0xf]
        %v1384 = vunpack.c.l.b16 %v1303
        %v1385 = vunpack.c.h.b16 %v1303
        %v1386 = vunpack.c.l.b16 %v1304
        %v1387 = vunpack.c.l.b16 %v1305
        %v1388 = vunpack.c.h.b16 %v1305
        %v1389 = vunpack.c.l.b16 %v1306
        %v1390 = vunpack.c.l.b16 %v1307
        %v1391 = vunpack.c.h.b16 %v1307
        %v1392 = vunpack.c.l.b16 %v1308
        %v1393 = vunpack.c.l.b16 %v1309
        %v1394 = vunpack.c.h.b16 %v1309
        %v1395 = vunpack.c.l.b16 %v1310
        %v1396 = vunpack.c.l.b16 %v1311
        %v1397 = vunpack.c.h.b16 %v1311
        %v1398 = vunpack.c.l.b16 %v1312
        %v1399 = vunpack.c.l.b16 %v1313
        %v1400 = vunpack.c.h.b16 %v1313
        %v1401 = vunpack.c.l.b16 %v1314
        %v1402 = vunpack.c.l.b16 %v1315
        %v1403 = vunpack.c.h.b16 %v1315
        %v1404 = vunpack.c.l.b16 %v1316
        %v1405 = vunpack.c.l.b16 %v1317
        %v1406 = vunpack.c.h.b16 %v1317
        %v1407 = vunpack.c.l.b16 %v1318
        %v1408 = vpack.c.b16 %v1387, %v1384
        %v1409 = vpack.c.b16 %v1388, %v1385
        %v1410 = vpack.c.b16 %v1389, %v1386
        %v1411 = vpack.c.b16 %v1393, %v1390
        %v1412 = vpack.c.b16 %v1394, %v1391
        %v1413 = vpack.c.b16 %v1395, %v1392
        %v1414 = vpack.c.b16 %v1399, %v1396
        %v1415 = vpack.c.b16 %v1400, %v1397
        %v1416 = vpack.c.b16 %v1401, %v1398
        %v1417 = vpack.c.b16 %v1405, %v1402
        %v1418 = vpack.c.b16 %v1406, %v1403
        %v1419 = vpack.c.b16 %v1407, %v1404
        %v1480 = vunpack.c.l.b16 %v1320
        %v1481 = vunpack.c.l.b16 %v1321
        %v1482 = vunpack.c.l.b16 %v1322
        %v1483 = vunpack.c.l.b16 %v1323
        %v1484 = vunpack.c.l.b16 %v1324
        %v1485 = vunpack.c.l.b16 %v1325
        %v1486 = vunpack.c.l.b16 %v1326
        %v1487 = vunpack.c.l.b16 %v1327
        %v1488 = vunpack.c.l.b16 %v1328
        %v1489 = vunpack.c.l.b16 %v1329
        %v1490 = vunpack.c.l.b16 %v1330
        %v1491 = vunpack.c.l.b16 %v1331
        %v1492 = vunpack.c.l.b16 %v1332
        %v1493 = vunpack.c.l.b16 %v1333
        %v1494 = vunpack.c.l.b16 %v1334
        %v1495 = vunpack.c.l.b16 %v1335
        %v1496 = vunpack.c.l.b16 %v1336
        %v1497 = vunpack.c.l.b16 %v1337
        %v1498 = vunpack.c.l.b16 %v1338
        %v1499 = vunpack.c.l.b16 %v1339
        %v1500 = vunpack.c.l.b16 %v1340
        %v1501 = vunpack.c.l.b16 %v1341
        %v1502 = vunpack.c.l.b16 %v1342
        %v1503 = vunpack.c.l.b16 %v1343
        %v1504 = vunpack.c.l.b16 %v1344
        %v1505 = vunpack.c.l.b16 %v1345
        %v1506 = vunpack.c.l.b16 %v1346
        %v1507 = vunpack.c.l.b16 %v1347
        %v1508 = vunpack.c.l.b16 %v1348
        %v1509 = vunpack.c.l.b16 %v1349
        %v1510 = vunpack.c.l.b16 %v1350
        %v1511 = vunpack.c.l.b16 %v1351
        %v1512 = vunpack.c.l.b16 %v1352
        %v1513 = vunpack.c.l.b16 %v1353
        %v1514 = vunpack.c.l.b16 %v1354
        %v1515 = vunpack.c.l.b16 %v1355
        %v1516 = vunpack.c.l.b16 %v1356
        %v1517 = vunpack.c.l.b16 %v1357
        %v1518 = vunpack.c.l.b16 %v1358
        %v1519 = vunpack.c.l.b16 %v1359
        %v1520 = vunpack.c.l.b16 %v1360
        %v1521 = vunpack.c.l.b16 %v1361
        %v1522 = vunpack.c.l.b16 %v1362
        %v1523 = vunpack.c.l.b16 %v1363
        %v1524 = vunpack.c.l.b16 %v1364
        %v1525 = vunpack.c.l.b16 %v1365
        %v1526 = vunpack.c.l.b16 %v1366
        %v1527 = vunpack.c.l.b16 %v1367
        %v1528 = vpack.c.b16 %v1481, %v1480
        %v1529 = vpack.c.b16 %v1483, %v1482
        %v1530 = vpack.c.b16 %v1485, %v1484
        %v1531 = vpack.c.b16 %v1487, %v1486
        %v1532 = vpack.c.b16 %v1489, %v1488
        %v1533 = vpack.c.b16 %v1491, %v1490
        %v1534 = vpack.c.b16 %v1493, %v1492
        %v1535 = vpack.c.b16 %v1495, %v1494
        %v1536 = vpack.c.b16 %v1497, %v1496
        %v1537 = vpack.c.b16 %v1499, %v1498
        %v1538 = vpack.c.b16 %v1501, %v1500
        %v1539 = vpack.c.b16 %v1503, %v1502
        %v1540 = vpack.c.b16 %v1505, %v1504
        %v1541 = vpack.c.b16 %v1507, %v1506
        %v1542 = vpack.c.b16 %v1509, %v1508
        %v1543 = vpack.c.b16 %v1511, %v1510
        %v1544 = vpack.c.b16 %v1513, %v1512
        %v1545 = vpack.c.b16 %v1515, %v1514
        %v1546 = vpack.c.b16 %v1517, %v1516
        %v1547 = vpack.c.b16 %v1519, %v1518
        %v1548 = vpack.c.b16 %v1521, %v1520
        %v1549 = vpack.c.b16 %v1523, %v1522
        %v1550 = vpack.c.b16 %v1525, %v1524
        %v1551 = vpack.c.b16 %v1527, %v1526
        %1576 = vmatpush.bf16.msra.mxu0 %v1535
        %1577 = vmatpush.bf16.msra.mxu0 %v1534
        %1578 = vmatpush.bf16.msra.mxu0 %v1533
        %1579 = vmatpush.bf16.msra.mxu0 %v1532
        %1580 = vmatpush.bf16.msra.mxu0 %v1531
        %1581 = vmatpush.bf16.msra.mxu0 %v1530
        %1582 = vmatpush.bf16.msra.mxu0 %v1529
        %1583 = vmatpush.bf16.msra.mxu0 %v1528
        %1584 = vmatmul.bf16.gmra.mxu0 %v1408
        %v1585 = vpop.f32.mrf.mxu0
        %v1586 = vadd.f32 0.0, %v1585
        %v1587 = vpop.f32.mrf.mxu0
        %v1588 = vadd.f32 0.0, %v1587
        %1589 = vmatmul.bf16.gmra.mxu0 %v1411
        %v1590 = vpop.f32.mrf.mxu0
        %v1591 = vadd.f32 0.0, %v1590
        %v1592 = vpop.f32.mrf.mxu0
        %v1593 = vadd.f32 0.0, %v1592
        %1594 = vmatmul.bf16.gmra.mxu0 %v1414
        %v1595 = vpop.f32.mrf.mxu0
        %v1596 = vadd.f32 0.0, %v1595
        %v1597 = vpop.f32.mrf.mxu0
        %v1598 = vadd.f32 0.0, %v1597
        %1599 = vmatmul.bf16.gmra.mxu0 %v1417
        %v1600 = vpop.f32.mrf.mxu0
        %v1601 = vadd.f32 0.0, %v1600
        %v1602 = vpop.f32.mrf.mxu0
        %v1603 = vadd.f32 0.0, %v1602
        %1604 = vdwg.mxu0
        %1605 = vmatpush.bf16.msra.mxu0 %v1543
        %1606 = vmatpush.bf16.msra.mxu0 %v1542
        %1607 = vmatpush.bf16.msra.mxu0 %v1541
        %1608 = vmatpush.bf16.msra.mxu0 %v1540
        %1609 = vmatpush.bf16.msra.mxu0 %v1539
        %1610 = vmatpush.bf16.msra.mxu0 %v1538
        %1611 = vmatpush.bf16.msra.mxu0 %v1537
        %1612 = vmatpush.bf16.msra.mxu0 %v1536
        %1613 = vmatmul.bf16.gmra.mxu0 %v1409
        %v1614 = vpop.f32.mrf.mxu0
        %v1615 = vadd.f32 %v1586, %v1614
        %v1616 = vpop.f32.mrf.mxu0
        %v1617 = vadd.f32 %v1588, %v1616
        %1618 = vmatmul.bf16.gmra.mxu0 %v1412
        %v1619 = vpop.f32.mrf.mxu0
        %v1620 = vadd.f32 %v1591, %v1619
        %v1621 = vpop.f32.mrf.mxu0
        %v1622 = vadd.f32 %v1593, %v1621
        %1623 = vmatmul.bf16.gmra.mxu0 %v1415
        %v1624 = vpop.f32.mrf.mxu0
        %v1625 = vadd.f32 %v1596, %v1624
        %v1626 = vpop.f32.mrf.mxu0
        %v1627 = vadd.f32 %v1598, %v1626
        %1628 = vmatmul.bf16.gmra.mxu0 %v1418
        %v1629 = vpop.f32.mrf.mxu0
        %v1630 = vadd.f32 %v1601, %v1629
        %v1631 = vpop.f32.mrf.mxu0
        %v1632 = vadd.f32 %v1603, %v1631
        %1633 = vdwg.mxu0
        %1634 = vmatpush.bf16.msra.mxu0 %v1551
        %1635 = vmatpush.bf16.msra.mxu0 %v1550
        %1636 = vmatpush.bf16.msra.mxu0 %v1549
        %1637 = vmatpush.bf16.msra.mxu0 %v1548
        %1638 = vmatpush.bf16.msra.mxu0 %v1547
        %1639 = vmatpush.bf16.msra.mxu0 %v1546
        %1640 = vmatpush.bf16.msra.mxu0 %v1545
        %1641 = vmatpush.bf16.msra.mxu0 %v1544
        %1642 = vmatmul.bf16.gmra.mxu0 %v1410
        %v1643 = vpop.f32.mrf.mxu0
        %v1644 = vadd.f32 %v1615, %v1643
        %v1645 = vpop.f32.mrf.mxu0
        %v1646 = vadd.f32 %v1617, %v1645
        %1647 = vmatmul.bf16.gmra.mxu0 %v1413
        %v1648 = vpop.f32.mrf.mxu0
        %v1649 = vadd.f32 %v1620, %v1648
        %v1650 = vpop.f32.mrf.mxu0
        %v1651 = vadd.f32 %v1622, %v1650
        %1652 = vmatmul.bf16.gmra.mxu0 %v1416
        %v1653 = vpop.f32.mrf.mxu0
        %v1654 = vadd.f32 %v1625, %v1653
        %v1655 = vpop.f32.mrf.mxu0
        %v1656 = vadd.f32 %v1627, %v1655
        %1657 = vmatmul.bf16.gmra.mxu0 %v1419
        %v1658 = vpop.f32.mrf.mxu0
        %v1659 = vadd.f32 %v1630, %v1658
        %v1660 = vpop.f32.mrf.mxu0
        %v1661 = vadd.f32 %v1632, %v1660
        %1662 = vdwg.mxu0
        %v1663 = vld [vmem:[#allocation2] sm:$0xff]
        %v1664 = vld [vmem:[#allocation2 + $0x8] sm:$0xff]
        %v1665 = vld [vmem:[#allocation2 + $0x10] sm:$0xff]
        %v1666 = vld [vmem:[#allocation2 + $0x18] sm:$0xff]
        %v1667 = vld [vmem:[#allocation2 + $0x20] sm:$0xff]
        %v1668 = vld [vmem:[#allocation2 + $0x28] sm:$0xff]
        %v1669 = vld [vmem:[#allocation2 + $0x30] sm:$0xff]
        %v1670 = vld [vmem:[#allocation2 + $0x38] sm:$0xff]
        %v1671 = vadd.f32 %v1663, %v1644
        %v1672 = vadd.f32 %v1664, %v1646
        %v1673 = vadd.f32 %v1665, %v1649
        %v1674 = vadd.f32 %v1666, %v1651
        %v1675 = vadd.f32 %v1667, %v1654
        %v1676 = vadd.f32 %v1668, %v1656
        %v1677 = vadd.f32 %v1669, %v1659
        %v1678 = vadd.f32 %v1670, %v1661
        %1679 = vst [vmem:[#allocation2] sm:$0xff] %v1671
        %1680 = vst [vmem:[#allocation2 + $0x8] sm:$0xff] %v1672
        %1681 = vst [vmem:[#allocation2 + $0x10] sm:$0xff] %v1673
        %1682 = vst [vmem:[#allocation2 + $0x18] sm:$0xff] %v1674
        %1683 = vst [vmem:[#allocation2 + $0x20] sm:$0xff] %v1675
        %1684 = vst [vmem:[#allocation2 + $0x28] sm:$0xff] %v1676
        %1685 = vst [vmem:[#allocation2 + $0x30] sm:$0xff] %v1677
        %1686 = vst [vmem:[#allocation2 + $0x38] sm:$0xff] %v1678
        %s1687 = sadd.s32 %s568, 1
        %s1688 = smul.u32 %s1687, 2
        %s1689 = smul.addr %s1688, 4
        %s1690 = scalar_lea.vmem %s513, %s1689 [#allocation4]
        %v1691 = vld [vmem:[%s1690] sm:$0xf]
        %v1692 = vld [vmem:[%s1690 + $0x8] sm:$0xf]
        %v1693 = vld [vmem:[%s1690 + $0x10] sm:$0xf]
        %v1694 = vld [vmem:[%s1690 + $0x18] sm:$0xf]
        %v1695 = vld [vmem:[%s1690 + $0x20] sm:$0xf]
        %v1696 = vld [vmem:[%s1690 + $0x28] sm:$0xf]
        %v1697 = vld [vmem:[%s1690 + $0x30] sm:$0xf]
        %v1698 = vld [vmem:[%s1690 + $0x38] sm:$0xf]
        %1699 = vst [vmem:[#allocation3] sm:$0xf] %v1691
        %1700 = vst [vmem:[#allocation3 + $0xc] sm:$0xf] %v1692
        %1701 = vst [vmem:[#allocation3 + $0x18] sm:$0xf] %v1693
        %1702 = vst [vmem:[#allocation3 + $0x24] sm:$0xf] %v1694
        %1703 = vst [vmem:[#allocation3 + $0x30] sm:$0xf] %v1695
        %1704 = vst [vmem:[#allocation3 + $0x3c] sm:$0xf] %v1696
        %1705 = vst [vmem:[#allocation3 + $0x48] sm:$0xf] %v1697
        %1706 = vst [vmem:[#allocation3 + $0x54] sm:$0xf] %v1698
        %s1707 = sadd.s32 %s1688, 18
        %s1708 = smul.addr %s1707, 4
        %s1709 = scalar_lea.vmem %s513, %s1708 [#allocation4]
        %v1710 = vld [vmem:[%s1709] sm:$0xf]
        %v1711 = vld [vmem:[%s1709 + $0x8] sm:$0xf]
        %v1712 = vld [vmem:[%s1709 + $0x10] sm:$0xf]
        %v1713 = vld [vmem:[%s1709 + $0x18] sm:$0xf]
        %v1714 = vld [vmem:[%s1709 + $0x20] sm:$0xf]
        %v1715 = vld [vmem:[%s1709 + $0x28] sm:$0xf]
        %v1716 = vld [vmem:[%s1709 + $0x30] sm:$0xf]
        %v1717 = vld [vmem:[%s1709 + $0x38] sm:$0xf]
        %1718 = vst [vmem:[#allocation3 + $0x4] sm:$0xf] %v1710
        %1719 = vst [vmem:[#allocation3 + $0x10] sm:$0xf] %v1711
        %1720 = vst [vmem:[#allocation3 + $0x1c] sm:$0xf] %v1712
        %1721 = vst [vmem:[#allocation3 + $0x28] sm:$0xf] %v1713
        %1722 = vst [vmem:[#allocation3 + $0x34] sm:$0xf] %v1714
        %1723 = vst [vmem:[#allocation3 + $0x40] sm:$0xf] %v1715
        %1724 = vst [vmem:[#allocation3 + $0x4c] sm:$0xf] %v1716
        %1725 = vst [vmem:[#allocation3 + $0x58] sm:$0xf] %v1717
        %v1726 = vld [vmem:[%s1690] sm:$0xf]
        %v1727 = vld [vmem:[%s1690 + $0x4] sm:$0x1]
        %v1728 = vld [vmem:[%s1690 + $0x8] sm:$0xf]
        %v1729 = vld [vmem:[%s1690 + $0xc] sm:$0x1]
        %v1730 = vld [vmem:[%s1690 + $0x10] sm:$0xf]
        %v1731 = vld [vmem:[%s1690 + $0x14] sm:$0x1]
        %v1732 = vld [vmem:[%s1690 + $0x18] sm:$0xf]
        %v1733 = vld [vmem:[%s1690 + $0x1c] sm:$0x1]
        %v1734 = vld [vmem:[%s1690 + $0x20] sm:$0xf]
        %v1735 = vld [vmem:[%s1690 + $0x24] sm:$0x1]
        %v1736 = vld [vmem:[%s1690 + $0x28] sm:$0xf]
        %v1737 = vld [vmem:[%s1690 + $0x2c] sm:$0x1]
        %v1738 = vld [vmem:[%s1690 + $0x30] sm:$0xf]
        %v1739 = vld [vmem:[%s1690 + $0x34] sm:$0x1]
        %v1740 = vld [vmem:[%s1690 + $0x38] sm:$0xf]
        %v1741 = vld [vmem:[%s1690 + $0x3c] sm:$0x1]
        %v1743 = vshrl.u32 %v1726, 16
        %v1745 = vrot.slane %v1743, 4
        %v1746 = vshll.u32 %v1726, 16
        %v1748 = vrot.slane %v1746, 5
        %v1749 = vor.u32 %v1745, %v1748
        %v1750 = vrot.slane %v1749, 4
        %v1752 = vshll.u32 %v1727, 16
        %v1754 = vrot.slane %v1752, 5
        %v1755 = vsel %vm625, %v1750, %v1754
        %v1757 = vshrl.u32 %v1728, 16
        %v1759 = vrot.slane %v1757, 4
        %v1760 = vshll.u32 %v1728, 16
        %v1762 = vrot.slane %v1760, 5
        %v1763 = vor.u32 %v1759, %v1762
        %v1764 = vrot.slane %v1763, 4
        %v1766 = vshll.u32 %v1729, 16
        %v1768 = vrot.slane %v1766, 5
        %v1769 = vsel %vm625, %v1764, %v1768
        %v1771 = vshrl.u32 %v1730, 16
        %v1773 = vrot.slane %v1771, 4
        %v1774 = vshll.u32 %v1730, 16
        %v1776 = vrot.slane %v1774, 5
        %v1777 = vor.u32 %v1773, %v1776
        %v1778 = vrot.slane %v1777, 4
        %v1780 = vshll.u32 %v1731, 16
        %v1782 = vrot.slane %v1780, 5
        %v1783 = vsel %vm625, %v1778, %v1782
        %v1785 = vshrl.u32 %v1732, 16
        %v1787 = vrot.slane %v1785, 4
        %v1788 = vshll.u32 %v1732, 16
        %v1790 = vrot.slane %v1788, 5
        %v1791 = vor.u32 %v1787, %v1790
        %v1792 = vrot.slane %v1791, 4
        %v1794 = vshll.u32 %v1733, 16
        %v1796 = vrot.slane %v1794, 5
        %v1797 = vsel %vm625, %v1792, %v1796
        %v1799 = vshrl.u32 %v1734, 16
        %v1801 = vrot.slane %v1799, 4
        %v1802 = vshll.u32 %v1734, 16
        %v1804 = vrot.slane %v1802, 5
        %v1805 = vor.u32 %v1801, %v1804
        %v1806 = vrot.slane %v1805, 4
        %v1808 = vshll.u32 %v1735, 16
        %v1810 = vrot.slane %v1808, 5
        %v1811 = vsel %vm625, %v1806, %v1810
        %v1813 = vshrl.u32 %v1736, 16
        %v1815 = vrot.slane %v1813, 4
        %v1816 = vshll.u32 %v1736, 16
        %v1818 = vrot.slane %v1816, 5
        %v1819 = vor.u32 %v1815, %v1818
        %v1820 = vrot.slane %v1819, 4
        %v1822 = vshll.u32 %v1737, 16
        %v1824 = vrot.slane %v1822, 5
        %v1825 = vsel %vm625, %v1820, %v1824
        %v1827 = vshrl.u32 %v1738, 16
        %v1829 = vrot.slane %v1827, 4
        %v1830 = vshll.u32 %v1738, 16
        %v1832 = vrot.slane %v1830, 5
        %v1833 = vor.u32 %v1829, %v1832
        %v1834 = vrot.slane %v1833, 4
        %v1836 = vshll.u32 %v1739, 16
        %v1838 = vrot.slane %v1836, 5
        %v1839 = vsel %vm625, %v1834, %v1838
        %v1841 = vshrl.u32 %v1740, 16
        %v1843 = vrot.slane %v1841, 4
        %v1844 = vshll.u32 %v1740, 16
        %v1846 = vrot.slane %v1844, 5
        %v1847 = vor.u32 %v1843, %v1846
        %v1848 = vrot.slane %v1847, 4
        %v1850 = vshll.u32 %v1741, 16
        %v1852 = vrot.slane %v1850, 5
        %v1853 = vsel %vm625, %v1848, %v1852
        %1862 = vst [vmem:[#allocation3 + $0x8] sm:$0xf] %v1755
        %1863 = vst [vmem:[#allocation3 + $0x14] sm:$0xf] %v1769
        %1864 = vst [vmem:[#allocation3 + $0x20] sm:$0xf] %v1783
        %1865 = vst [vmem:[#allocation3 + $0x2c] sm:$0xf] %v1797
        %1866 = vst [vmem:[#allocation3 + $0x38] sm:$0xf] %v1811
        %1867 = vst [vmem:[#allocation3 + $0x44] sm:$0xf] %v1825
        %1868 = vst [vmem:[#allocation3 + $0x50] sm:$0xf] %v1839
        %1869 = vst [vmem:[#allocation3 + $0x5c] sm:$0xf] %v1853
        %v1870 = vld [vmem:[#allocation3] sm:$0xff]
        %v1871 = vld [vmem:[#allocation3 + $0x8] sm:$0xf]
        %v1872 = vld [vmem:[#allocation3 + $0xc] sm:$0xff]
        %v1873 = vld [vmem:[#allocation3 + $0x14] sm:$0xf]
        %v1874 = vld [vmem:[#allocation3 + $0x18] sm:$0xff]
        %v1875 = vld [vmem:[#allocation3 + $0x20] sm:$0xf]
        %v1876 = vld [vmem:[#allocation3 + $0x24] sm:$0xff]
        %v1877 = vld [vmem:[#allocation3 + $0x2c] sm:$0xf]
        %v1878 = vld [vmem:[#allocation3 + $0x30] sm:$0xff]
        %v1879 = vld [vmem:[#allocation3 + $0x38] sm:$0xf]
        %v1880 = vld [vmem:[#allocation3 + $0x3c] sm:$0xff]
        %v1881 = vld [vmem:[#allocation3 + $0x44] sm:$0xf]
        %v1882 = vld [vmem:[#allocation3 + $0x48] sm:$0xff]
        %v1883 = vld [vmem:[#allocation3 + $0x50] sm:$0xf]
        %v1884 = vld [vmem:[#allocation3 + $0x54] sm:$0xff]
        %v1885 = vld [vmem:[#allocation3 + $0x5c] sm:$0xf]
        %s1886 = scalar_lea.vmem %s551, 384
        %v1887 = vld [vmem:[%s1886] sm:$0xf]
        %v1888 = vld [vmem:[%s1886 + $0x4] sm:$0xf]
        %v1889 = vld [vmem:[%s1886 + $0x8] sm:$0xf]
        %v1890 = vld [vmem:[%s1886 + $0xc] sm:$0xf]
        %v1891 = vld [vmem:[%s1886 + $0x10] sm:$0xf]
        %v1892 = vld [vmem:[%s1886 + $0x14] sm:$0xf]
        %v1893 = vld [vmem:[%s1886 + $0x18] sm:$0xf]
        %v1894 = vld [vmem:[%s1886 + $0x1c] sm:$0xf]
        %v1895 = vld [vmem:[%s1886 + $0x20] sm:$0xf]
        %v1896 = vld [vmem:[%s1886 + $0x24] sm:$0xf]
        %v1897 = vld [vmem:[%s1886 + $0x28] sm:$0xf]
        %v1898 = vld [vmem:[%s1886 + $0x2c] sm:$0xf]
        %v1899 = vld [vmem:[%s1886 + $0x30] sm:$0xf]
        %v1900 = vld [vmem:[%s1886 + $0x34] sm:$0xf]
        %v1901 = vld [vmem:[%s1886 + $0x38] sm:$0xf]
        %v1902 = vld [vmem:[%s1886 + $0x3c] sm:$0xf]
        %v1903 = vld [vmem:[%s1886 + $0x40] sm:$0xf]
        %v1904 = vld [vmem:[%s1886 + $0x44] sm:$0xf]
        %v1905 = vld [vmem:[%s1886 + $0x48] sm:$0xf]
        %v1906 = vld [vmem:[%s1886 + $0x4c] sm:$0xf]
        %v1907 = vld [vmem:[%s1886 + $0x50] sm:$0xf]
        %v1908 = vld [vmem:[%s1886 + $0x54] sm:$0xf]
        %v1909 = vld [vmem:[%s1886 + $0x58] sm:$0xf]
        %v1910 = vld [vmem:[%s1886 + $0x5c] sm:$0xf]
        %v1911 = vld [vmem:[%s1886 + $0x60] sm:$0xf]
        %v1912 = vld [vmem:[%s1886 + $0x64] sm:$0xf]
        %v1913 = vld [vmem:[%s1886 + $0x68] sm:$0xf]
        %v1914 = vld [vmem:[%s1886 + $0x6c] sm:$0xf]
        %v1915 = vld [vmem:[%s1886 + $0x70] sm:$0xf]
        %v1916 = vld [vmem:[%s1886 + $0x74] sm:$0xf]
        %v1917 = vld [vmem:[%s1886 + $0x78] sm:$0xf]
        %v1918 = vld [vmem:[%s1886 + $0x7c] sm:$0xf]
        %v1919 = vld [vmem:[%s1886 + $0x80] sm:$0xf]
        %v1920 = vld [vmem:[%s1886 + $0x84] sm:$0xf]
        %v1921 = vld [vmem:[%s1886 + $0x88] sm:$0xf]
        %v1922 = vld [vmem:[%s1886 + $0x8c] sm:$0xf]
        %v1923 = vld [vmem:[%s1886 + $0x90] sm:$0xf]
        %v1924 = vld [vmem:[%s1886 + $0x94] sm:$0xf]
        %v1925 = vld [vmem:[%s1886 + $0x98] sm:$0xf]
        %v1926 = vld [vmem:[%s1886 + $0x9c] sm:$0xf]
        %v1927 = vld [vmem:[%s1886 + $0xa0] sm:$0xf]
        %v1928 = vld [vmem:[%s1886 + $0xa4] sm:$0xf]
        %v1929 = vld [vmem:[%s1886 + $0xa8] sm:$0xf]
        %v1930 = vld [vmem:[%s1886 + $0xac] sm:$0xf]
        %v1931 = vld [vmem:[%s1886 + $0xb0] sm:$0xf]
        %v1932 = vld [vmem:[%s1886 + $0xb4] sm:$0xf]
        %v1933 = vld [vmem:[%s1886 + $0xb8] sm:$0xf]
        %v1934 = vld [vmem:[%s1886 + $0xbc] sm:$0xf]
        %v1951 = vunpack.c.l.b16 %v1870
        %v1952 = vunpack.c.h.b16 %v1870
        %v1953 = vunpack.c.l.b16 %v1871
        %v1954 = vunpack.c.l.b16 %v1872
        %v1955 = vunpack.c.h.b16 %v1872
        %v1956 = vunpack.c.l.b16 %v1873
        %v1957 = vunpack.c.l.b16 %v1874
        %v1958 = vunpack.c.h.b16 %v1874
        %v1959 = vunpack.c.l.b16 %v1875
        %v1960 = vunpack.c.l.b16 %v1876
        %v1961 = vunpack.c.h.b16 %v1876
        %v1962 = vunpack.c.l.b16 %v1877
        %v1963 = vunpack.c.l.b16 %v1878
        %v1964 = vunpack.c.h.b16 %v1878
        %v1965 = vunpack.c.l.b16 %v1879
        %v1966 = vunpack.c.l.b16 %v1880
        %v1967 = vunpack.c.h.b16 %v1880
        %v1968 = vunpack.c.l.b16 %v1881
        %v1969 = vunpack.c.l.b16 %v1882
        %v1970 = vunpack.c.h.b16 %v1882
        %v1971 = vunpack.c.l.b16 %v1883
        %v1972 = vunpack.c.l.b16 %v1884
        %v1973 = vunpack.c.h.b16 %v1884
        %v1974 = vunpack.c.l.b16 %v1885
        %v1975 = vpack.c.b16 %v1954, %v1951
        %v1976 = vpack.c.b16 %v1955, %v1952
        %v1977 = vpack.c.b16 %v1956, %v1953
        %v1978 = vpack.c.b16 %v1960, %v1957
        %v1979 = vpack.c.b16 %v1961, %v1958
        %v1980 = vpack.c.b16 %v1962, %v1959
        %v1981 = vpack.c.b16 %v1966, %v1963
        %v1982 = vpack.c.b16 %v1967, %v1964
        %v1983 = vpack.c.b16 %v1968, %v1965
        %v1984 = vpack.c.b16 %v1972, %v1969
        %v1985 = vpack.c.b16 %v1973, %v1970
        %v1986 = vpack.c.b16 %v1974, %v1971
        %v2047 = vunpack.c.l.b16 %v1887
        %v2048 = vunpack.c.l.b16 %v1888
        %v2049 = vunpack.c.l.b16 %v1889
        %v2050 = vunpack.c.l.b16 %v1890
        %v2051 = vunpack.c.l.b16 %v1891
        %v2052 = vunpack.c.l.b16 %v1892
        %v2053 = vunpack.c.l.b16 %v1893
        %v2054 = vunpack.c.l.b16 %v1894
        %v2055 = vunpack.c.l.b16 %v1895
        %v2056 = vunpack.c.l.b16 %v1896
        %v2057 = vunpack.c.l.b16 %v1897
        %v2058 = vunpack.c.l.b16 %v1898
        %v2059 = vunpack.c.l.b16 %v1899
        %v2060 = vunpack.c.l.b16 %v1900
        %v2061 = vunpack.c.l.b16 %v1901
        %v2062 = vunpack.c.l.b16 %v1902
        %v2063 = vunpack.c.l.b16 %v1903
        %v2064 = vunpack.c.l.b16 %v1904
        %v2065 = vunpack.c.l.b16 %v1905
        %v2066 = vunpack.c.l.b16 %v1906
        %v2067 = vunpack.c.l.b16 %v1907
        %v2068 = vunpack.c.l.b16 %v1908
        %v2069 = vunpack.c.l.b16 %v1909
        %v2070 = vunpack.c.l.b16 %v1910
        %v2071 = vunpack.c.l.b16 %v1911
        %v2072 = vunpack.c.l.b16 %v1912
        %v2073 = vunpack.c.l.b16 %v1913
        %v2074 = vunpack.c.l.b16 %v1914
        %v2075 = vunpack.c.l.b16 %v1915
        %v2076 = vunpack.c.l.b16 %v1916
        %v2077 = vunpack.c.l.b16 %v1917
        %v2078 = vunpack.c.l.b16 %v1918
        %v2079 = vunpack.c.l.b16 %v1919
        %v2080 = vunpack.c.l.b16 %v1920
        %v2081 = vunpack.c.l.b16 %v1921
        %v2082 = vunpack.c.l.b16 %v1922
        %v2083 = vunpack.c.l.b16 %v1923
        %v2084 = vunpack.c.l.b16 %v1924
        %v2085 = vunpack.c.l.b16 %v1925
        %v2086 = vunpack.c.l.b16 %v1926
        %v2087 = vunpack.c.l.b16 %v1927
        %v2088 = vunpack.c.l.b16 %v1928
        %v2089 = vunpack.c.l.b16 %v1929
        %v2090 = vunpack.c.l.b16 %v1930
        %v2091 = vunpack.c.l.b16 %v1931
        %v2092 = vunpack.c.l.b16 %v1932
        %v2093 = vunpack.c.l.b16 %v1933
        %v2094 = vunpack.c.l.b16 %v1934
        %v2095 = vpack.c.b16 %v2048, %v2047
        %v2096 = vpack.c.b16 %v2050, %v2049
        %v2097 = vpack.c.b16 %v2052, %v2051
        %v2098 = vpack.c.b16 %v2054, %v2053
        %v2099 = vpack.c.b16 %v2056, %v2055
        %v2100 = vpack.c.b16 %v2058, %v2057
        %v2101 = vpack.c.b16 %v2060, %v2059
        %v2102 = vpack.c.b16 %v2062, %v2061
        %v2103 = vpack.c.b16 %v2064, %v2063
        %v2104 = vpack.c.b16 %v2066, %v2065
        %v2105 = vpack.c.b16 %v2068, %v2067
        %v2106 = vpack.c.b16 %v2070, %v2069
        %v2107 = vpack.c.b16 %v2072, %v2071
        %v2108 = vpack.c.b16 %v2074, %v2073
        %v2109 = vpack.c.b16 %v2076, %v2075
        %v2110 = vpack.c.b16 %v2078, %v2077
        %v2111 = vpack.c.b16 %v2080, %v2079
        %v2112 = vpack.c.b16 %v2082, %v2081
        %v2113 = vpack.c.b16 %v2084, %v2083
        %v2114 = vpack.c.b16 %v2086, %v2085
        %v2115 = vpack.c.b16 %v2088, %v2087
        %v2116 = vpack.c.b16 %v2090, %v2089
        %v2117 = vpack.c.b16 %v2092, %v2091
        %v2118 = vpack.c.b16 %v2094, %v2093
        %2143 = vmatpush.bf16.msra.mxu0 %v2102
        %2144 = vmatpush.bf16.msra.mxu0 %v2101
        %2145 = vmatpush.bf16.msra.mxu0 %v2100
        %2146 = vmatpush.bf16.msra.mxu0 %v2099
        %2147 = vmatpush.bf16.msra.mxu0 %v2098
        %2148 = vmatpush.bf16.msra.mxu0 %v2097
        %2149 = vmatpush.bf16.msra.mxu0 %v2096
        %2150 = vmatpush.bf16.msra.mxu0 %v2095
        %2151 = vmatmul.bf16.gmra.mxu0 %v1975
        %v2152 = vpop.f32.mrf.mxu0
        %v2153 = vadd.f32 0.0, %v2152
        %v2154 = vpop.f32.mrf.mxu0
        %v2155 = vadd.f32 0.0, %v2154
        %2156 = vmatmul.bf16.gmra.mxu0 %v1978
        %v2157 = vpop.f32.mrf.mxu0
        %v2158 = vadd.f32 0.0, %v2157
        %v2159 = vpop.f32.mrf.mxu0
        %v2160 = vadd.f32 0.0, %v2159
        %2161 = vmatmul.bf16.gmra.mxu0 %v1981
        %v2162 = vpop.f32.mrf.mxu0
        %v2163 = vadd.f32 0.0, %v2162
        %v2164 = vpop.f32.mrf.mxu0
        %v2165 = vadd.f32 0.0, %v2164
        %2166 = vmatmul.bf16.gmra.mxu0 %v1984
        %v2167 = vpop.f32.mrf.mxu0
        %v2168 = vadd.f32 0.0, %v2167
        %v2169 = vpop.f32.mrf.mxu0
        %v2170 = vadd.f32 0.0, %v2169
        %2171 = vdwg.mxu0
        %2172 = vmatpush.bf16.msra.mxu0 %v2110
        %2173 = vmatpush.bf16.msra.mxu0 %v2109
        %2174 = vmatpush.bf16.msra.mxu0 %v2108
        %2175 = vmatpush.bf16.msra.mxu0 %v2107
        %2176 = vmatpush.bf16.msra.mxu0 %v2106
        %2177 = vmatpush.bf16.msra.mxu0 %v2105
        %2178 = vmatpush.bf16.msra.mxu0 %v2104
        %2179 = vmatpush.bf16.msra.mxu0 %v2103
        %2180 = vmatmul.bf16.gmra.mxu0 %v1976
        %v2181 = vpop.f32.mrf.mxu0
        %v2182 = vadd.f32 %v2153, %v2181
        %v2183 = vpop.f32.mrf.mxu0
        %v2184 = vadd.f32 %v2155, %v2183
        %2185 = vmatmul.bf16.gmra.mxu0 %v1979
        %v2186 = vpop.f32.mrf.mxu0
        %v2187 = vadd.f32 %v2158, %v2186
        %v2188 = vpop.f32.mrf.mxu0
        %v2189 = vadd.f32 %v2160, %v2188
        %2190 = vmatmul.bf16.gmra.mxu0 %v1982
        %v2191 = vpop.f32.mrf.mxu0
        %v2192 = vadd.f32 %v2163, %v2191
        %v2193 = vpop.f32.mrf.mxu0
        %v2194 = vadd.f32 %v2165, %v2193
        %2195 = vmatmul.bf16.gmra.mxu0 %v1985
        %v2196 = vpop.f32.mrf.mxu0
        %v2197 = vadd.f32 %v2168, %v2196
        %v2198 = vpop.f32.mrf.mxu0
        %v2199 = vadd.f32 %v2170, %v2198
        %2200 = vdwg.mxu0
        %2201 = vmatpush.bf16.msra.mxu0 %v2118
        %2202 = vmatpush.bf16.msra.mxu0 %v2117
        %2203 = vmatpush.bf16.msra.mxu0 %v2116
        %2204 = vmatpush.bf16.msra.mxu0 %v2115
        %2205 = vmatpush.bf16.msra.mxu0 %v2114
        %2206 = vmatpush.bf16.msra.mxu0 %v2113
        %2207 = vmatpush.bf16.msra.mxu0 %v2112
        %2208 = vmatpush.bf16.msra.mxu0 %v2111
        %2209 = vmatmul.bf16.gmra.mxu0 %v1977
        %v2210 = vpop.f32.mrf.mxu0
        %v2211 = vadd.f32 %v2182, %v2210
        %v2212 = vpop.f32.mrf.mxu0
        %v2213 = vadd.f32 %v2184, %v2212
        %2214 = vmatmul.bf16.gmra.mxu0 %v1980
        %v2215 = vpop.f32.mrf.mxu0
        %v2216 = vadd.f32 %v2187, %v2215
        %v2217 = vpop.f32.mrf.mxu0
        %v2218 = vadd.f32 %v2189, %v2217
        %2219 = vmatmul.bf16.gmra.mxu0 %v1983
        %v2220 = vpop.f32.mrf.mxu0
        %v2221 = vadd.f32 %v2192, %v2220
        %v2222 = vpop.f32.mrf.mxu0
        %v2223 = vadd.f32 %v2194, %v2222
        %2224 = vmatmul.bf16.gmra.mxu0 %v1986
        %v2225 = vpop.f32.mrf.mxu0
        %v2226 = vadd.f32 %v2197, %v2225
        %v2227 = vpop.f32.mrf.mxu0
        %v2228 = vadd.f32 %v2199, %v2227
        %2229 = vdwg.mxu0
        %v2230 = vld [vmem:[#allocation2] sm:$0xff]
        %v2231 = vld [vmem:[#allocation2 + $0x8] sm:$0xff]
        %v2232 = vld [vmem:[#allocation2 + $0x10] sm:$0xff]
        %v2233 = vld [vmem:[#allocation2 + $0x18] sm:$0xff]
        %v2234 = vld [vmem:[#allocation2 + $0x20] sm:$0xff]
        %v2235 = vld [vmem:[#allocation2 + $0x28] sm:$0xff]
        %v2236 = vld [vmem:[#allocation2 + $0x30] sm:$0xff]
        %v2237 = vld [vmem:[#allocation2 + $0x38] sm:$0xff]
        %v2238 = vadd.f32 %v2230, %v2211
        %v2239 = vadd.f32 %v2231, %v2213
        %v2240 = vadd.f32 %v2232, %v2216
        %v2241 = vadd.f32 %v2233, %v2218
        %v2242 = vadd.f32 %v2234, %v2221
        %v2243 = vadd.f32 %v2235, %v2223
        %v2244 = vadd.f32 %v2236, %v2226
        %v2245 = vadd.f32 %v2237, %v2228
        %2246 = vst [vmem:[#allocation2] sm:$0xff] %v2238
        %2247 = vst [vmem:[#allocation2 + $0x8] sm:$0xff] %v2239
        %2248 = vst [vmem:[#allocation2 + $0x10] sm:$0xff] %v2240
        %2249 = vst [vmem:[#allocation2 + $0x18] sm:$0xff] %v2241
        %2250 = vst [vmem:[#allocation2 + $0x20] sm:$0xff] %v2242
        %2251 = vst [vmem:[#allocation2 + $0x28] sm:$0xff] %v2243
        %2252 = vst [vmem:[#allocation2 + $0x30] sm:$0xff] %v2244
        %2253 = vst [vmem:[#allocation2 + $0x38] sm:$0xff] %v2245
        %v2254 = vld [vmem:[#allocation2] sm:$0xff]
        %v2255 = vld [vmem:[#allocation2 + $0x8] sm:$0xff]
        %v2256 = vld [vmem:[#allocation2 + $0x10] sm:$0xff]
        %v2257 = vld [vmem:[#allocation2 + $0x18] sm:$0xff]
        %v2258 = vld [vmem:[#allocation2 + $0x20] sm:$0xff]
        %v2259 = vld [vmem:[#allocation2 + $0x28] sm:$0xff]
        %v2260 = vld [vmem:[#allocation2 + $0x30] sm:$0xff]
        %v2261 = vld [vmem:[#allocation2 + $0x38] sm:$0xff]
        %v2262 = vld [vmem:[%s554] sm:$0x1]
        %v2264 = vperm.slane %v2262, 0
        %v2266 = vadd.f32 %v2254, %v2264
        %v2267 = vadd.f32 %v2255, %v2264
        %v2268 = vadd.f32 %v2256, %v2264
        %v2269 = vadd.f32 %v2257, %v2264
        %v2270 = vadd.f32 %v2258, %v2264
        %v2271 = vadd.f32 %v2259, %v2264
        %v2272 = vadd.f32 %v2260, %v2264
        %v2273 = vadd.f32 %v2261, %v2264
        %v2274 = vpack.c.bf16 %v2266, %v2266
        %v2275 = vpack.c.bf16 %v2267, %v2267
        %v2276 = vpack.c.bf16 %v2268, %v2268
        %v2277 = vpack.c.bf16 %v2269, %v2269
        %v2278 = vpack.c.bf16 %v2270, %v2270
        %v2279 = vpack.c.bf16 %v2271, %v2271
        %v2280 = vpack.c.bf16 %v2272, %v2272
        %v2281 = vpack.c.bf16 %v2273, %v2273
        %2282 = vst [vmem:[%s566] sm:$0xf] %v2274
        %2283 = vst [vmem:[%s566 + $0x4] sm:$0xf] %v2275
        %2284 = vst [vmem:[%s566 + $0x8] sm:$0xf] %v2276
        %2285 = vst [vmem:[%s566 + $0xc] sm:$0xf] %v2277
        %2286 = vst [vmem:[%s566 + $0x10] sm:$0xf] %v2278
        %2287 = vst [vmem:[%s566 + $0x14] sm:$0xf] %v2279
        %2288 = vst [vmem:[%s566 + $0x18] sm:$0xf] %v2280
        %2289 = vst [vmem:[%s566 + $0x1c] sm:$0xf] %v2281
        %s2290 = smul.u32 8, %s20
        %p2291 = scmp.lt.s32.totalorder %s19, 1
        %s2292 = scalar_select %p2291, %s19, 1
        %p2293 = scmp.lt.s32.totalorder %s2290, 7
        %s2294 = scalar_select %p2293, %s2290, 7
        %p2295 = scmp.lt.s32.totalorder %s21, 0
        %s2296 = scalar_select %p2295, %s21, 0
        %s2297 = sadd.s32 %s2296, %s2294
        %s2298 = smul.addr %s2292, 8
        %s2299 = sadd.s32 %s2297, %s2298
        %s2300 = smul.addr %s2299, 4
        %s2301 = scalar_lea.vmem %s3, %s2300
        // Predicated region
        $region74: #{conv_block_forward.3} parent=68 // pred_check
          %p2302 = pneg %p133
        $region75: #{conv_block_forward.3} parent=68 // pred_check_branch
          %2304 = sbr.rel (%p2302) target = $region77
        $region76: #{conv_block_forward.3} parent=68 // pred_region
          %s2305 = smul.u32 8, %s20
        $region77: #{conv_block_forward.3} parent=68 // pred_fallthru
          _
      $region69: #{conv_block_forward.3} parent=5 // pred_fallthru
        _
      %p2306 = scmp.le.s32.totalorder 2, %s9
      // Predicated region
      $region78: #{conv_block_forward.3} parent=5 // pred_check
        %p2307 = pneg %p2306
      $region79: #{conv_block_forward.3} parent=5 // pred_check_branch
        %2309 = sbr.rel (%p2307) target = $region81
      $region80: #{conv_block_forward.3} parent=5 // pred_region
        %s2310 = ssub.s32 %s9, 2
        // Predicated region
        $region82: #{conv_block_forward.3} parent=80 // pred_check
          %p2311 = pneg %p139
        $region83: #{conv_block_forward.3} parent=80 // pred_check_branch
          %2313 = sbr.rel (%p2311) target = $region85
        $region84: #{conv_block_forward.3} parent=80 // pred_region
          %s2314 = smul.u32 8, %s23
          %p2315 = scmp.lt.s32.totalorder %s22, 1
          %s2316 = scalar_select %p2315, %s22, 1
          %p2317 = scmp.lt.s32.totalorder %s2314, 7
          %s2318 = scalar_select %p2317, %s2314, 7
          %p2319 = scmp.lt.s32.totalorder %s24, 0
          %s2320 = scalar_select %p2319, %s24, 0
          %s2321 = sadd.s32 %s2320, %s2318
          %s2322 = smul.addr %s2316, 8
          %s2323 = sadd.s32 %s2321, %s2322
          %s2324 = smul.addr %s2323, 4
          %s2325 = scalar_lea.vmem %s3, %s2324
        $region85: #{conv_block_forward.3} parent=80 // pred_fallthru
          _
      $region81: #{conv_block_forward.3} parent=5 // pred_fallthru
        _
    $region6: #{conv_block_forward.3} parent=1 // loop_footer
      %s13 = sadd.s32 1, %s9
    $region7: #{conv_block_forward.3} parent=1 // loop_footer_branch
      %8 = sbr.rel target = $region3
    $region8: #{conv_block_forward.3} parent=1 // loop_exit
      _

// kernel: conv_block_forward.5
$region0: #{conv_block_forward.5}
  #allocation0 [shape = 'u32[]', space=smem, size = 0x4, offset = 0x4, fixed_abs, tag = 'smem constant byte address 0x4 - core index']
  #allocation1 [shape = 'u32[72,128]{1,0:T(1,128)}', space=vmem, size = 0x9000, scoped, tag = 'internal scratch']
  #allocation2 [shape = 'f32[64,128]{1,0:T(8,128)}', space=vmem, size = 0x8000, scoped, tag = 'scratch operand']
  #allocation3 [shape = 'bf16[64,384]{1,0:T(8,128)(2,1)}', space=vmem, size = 0xc000, scoped, tag = 'scratch operand']
  %s0 = inlined_call_operand.vmem [shape: bf16[4,2,9,9,128], index: 0, kind: input, shape index: {}]
  %s1 = inlined_call_operand.vmem [shape: bf16[3,384,128], index: 1, kind: input, shape index: {}]
  %s2 = inlined_call_operand.vmem [shape: f32[1,128], index: 2, kind: input, shape index: {}]
  %s3 = inlined_call_operand.vmem [shape: bf16[2,8,8,128], index: 3, kind: input, shape index: {}]
  %s4 = inlined_call_operand.vmem [shape: f32[2,8,8,128], index: 4, kind: output, shape index: {}]
  %s5 = sld [smem:[#allocation0]]
  $region90: #{conv_block_forward.5} parent=0
    _
  %s7 = ssub.s32 1, %s5
  %s8 = scalar_select 0, %s7, %s5
  $region1: #{conv_block_forward.5} parent=0
    #allocation4 [shape = 'u8[294912]{0}', space=vmem, size = 0x48000, scoped, tag = 'input window, operand 0']
    loop: start=0, step=1, limit=4
    $region2: #{conv_block_forward.5} parent=1 // loop_pre_header
      _
    $region3: #{conv_block_forward.5} parent=1 // loop_header
      %s10 = sphi 0, %s14
      %p11 = scmp.ge.s32.totalorder %s10, 4
      %s17 = sphi 0, %s36
      %s18 = sphi 0, %s32
      %s19 = sphi 0, %s28
      %s20 = sphi 0, %s17
      %s21 = sphi 0, %s18
      %s22 = sphi 0, %s19
      %s23 = sphi 0, %s20
      %s24 = sphi 0, %s21
      %s25 = sphi 0, %s22
      %s39 = sphi 0, %s41
      %s42 = sphi 0, %s39
      %s43 = sphi 0, %s42
      %s59 = sphi 0, %s43
      %s65 = sphi 0, %s67
      %s68 = sphi 0, %s65
      %s69 = sphi 0, %s68
      %s85 = sphi 0, %s69
      %s91 = sphi 0, %s93
      %s94 = sphi 0, %s91
      %s95 = sphi 0, %s94
      %s111 = sphi 0, %s95
      %s121 = sphi 0, %s123
      %s124 = sphi 0, %s121
      %s125 = sphi 0, %s124
      %s141 = sphi 0, %s125
      %s151 = sphi 0, %s153
      %s154 = sphi 0, %s151
      %s155 = sphi 0, %s154
      %s171 = sphi 0, %s155
    $region4: #{conv_block_forward.5} parent=1 // loop_header_branch
      %13 = sbr.rel (%p11) target = $region8
    $region5: #{conv_block_forward.5} parent=1 // loop_body
      %s15 = ssub.s32 %s10, 1
      %s16 = ssub.s32 %s10, 2
      %s26 = sadd.s32 1, %s19
      %p27 = scmp.ge.s32.totalorder %s26, 1
      %s28 = scalar_select %p27, 0, %s26
      %s29 = sadd.s32 1, %s18
      %s30 = scalar_select %p27, %s29, %s18
      %p31 = scmp.ge.s32.totalorder %s30, 1
      %s32 = scalar_select %p31, 0, %s30
      %s33 = sadd.s32 1, %s17
      %s34 = scalar_select %p31, %s33, %s17
      %p35 = scmp.ge.s32.totalorder %s34, 2
      %s36 = scalar_select %p35, 0, %s34
      %s37 = ssub.s32 %s17, %s36
      %p38 = scmp.eq.s32.totalorder %s37, 0
      %s40 = sadd.s32 %s39, 1
      %s41 = scalar_select %p38, %s39, %s40
      %p44 = pneg %p38
      %p45 = scmp.eq.s32.totalorder %s10, 1
      %p46 = por %p44, %p45
      %p47 = scmp.ne.s32.totalorder %s39, %s42
      %p48 = scmp.eq.s32.totalorder %s10, 0
      %p49 = por %p47, %p48
      %p50 = scmp.ne.s32.totalorder %s39, %s42
      %p51 = scmp.eq.s32.totalorder %s15, 1
      %p52 = por %p50, %p51
      %p53 = scmp.ne.s32.totalorder %s42, %s43
      %p54 = scmp.eq.s32.totalorder %s15, 0
      %p55 = por %p53, %p54
      %p56 = scmp.ne.s32.totalorder %s42, %s43
      %p57 = scmp.eq.s32.totalorder %s16, 1
      %p58 = por %p56, %p57
      %p60 = scmp.ne.s32.totalorder %s43, %s59
      %p61 = scmp.eq.s32.totalorder %s16, 0
      %p62 = por %p60, %p61
      %s63 = ssub.s32 %s19, %s28
      %p64 = scmp.eq.s32.totalorder %s63, 0
      %s66 = sadd.s32 %s65, 1
      %s67 = scalar_select %p64, %s65, %s66
      %p70 = pneg %p64
      %p71 = scmp.eq.s32.totalorder %s10, 1
      %p72 = por %p70, %p71
      %p73 = scmp.ne.s32.totalorder %s65, %s68
      %p74 = scmp.eq.s32.totalorder %s10, 0
      %p75 = por %p73, %p74
      %p76 = scmp.ne.s32.totalorder %s65, %s68
      %p77 = scmp.eq.s32.totalorder %s15, 1
      %p78 = por %p76, %p77
      %p79 = scmp.ne.s32.totalorder %s68, %s69
      %p80 = scmp.eq.s32.totalorder %s15, 0
      %p81 = por %p79, %p80
      %p82 = scmp.ne.s32.totalorder %s68, %s69
      %p83 = scmp.eq.s32.totalorder %s16, 1
      %p84 = por %p82, %p83
      %p86 = scmp.ne.s32.totalorder %s69, %s85
      %p87 = scmp.eq.s32.totalorder %s16, 0
      %p88 = por %p86, %p87
      %s89 = ssub.s32 %s19, %s28
      %p90 = scmp.eq.s32.totalorder %s89, 0
      %s92 = sadd.s32 %s91, 1
      %s93 = scalar_select %p90, %s91, %s92
      %p96 = pneg %p90
      %p97 = scmp.eq.s32.totalorder %s10, 1
      %p98 = por %p96, %p97
      %p99 = scmp.ne.s32.totalorder %s91, %s94
      %p100 = scmp.eq.s32.totalorder %s10, 0
      %p101 = por %p99, %p100
      %p102 = scmp.ne.s32.totalorder %s91, %s94
      %p103 = scmp.eq.s32.totalorder %s15, 1
      %p104 = por %p102, %p103
      %p105 = scmp.ne.s32.totalorder %s94, %s95
      %p106 = scmp.eq.s32.totalorder %s15, 0
      %p107 = por %p105, %p106
      %p108 = scmp.ne.s32.totalorder %s94, %s95
      %p109 = scmp.eq.s32.totalorder %s16, 1
      %p110 = por %p108, %p109
      %p112 = scmp.ne.s32.totalorder %s95, %s111
      %p113 = scmp.eq.s32.totalorder %s16, 0
      %p114 = por %p112, %p113
      %s115 = ssub.s32 %s17, %s36
      %s116 = ssub.s32 %s18, %s32
      %s117 = sor.u32 %s115, %s116
      %s118 = ssub.s32 %s19, %s28
      %s119 = sor.u32 %s117, %s118
      %p120 = scmp.eq.s32.totalorder %s119, 0
      %s122 = sadd.s32 %s121, 1
      %s123 = scalar_select %p120, %s121, %s122
      %p126 = pneg %p120
      %p127 = scmp.eq.s32.totalorder %s10, 1
      %p128 = por %p126, %p127
      %p129 = scmp.ne.s32.totalorder %s121, %s124
      %p130 = scmp.eq.s32.totalorder %s10, 0
      %p131 = por %p129, %p130
      %p132 = scmp.ne.s32.totalorder %s121, %s124
      %p133 = scmp.eq.s32.totalorder %s15, 1
      %p134 = por %p132, %p133
      %p135 = scmp.ne.s32.totalorder %s124, %s125
      %p136 = scmp.eq.s32.totalorder %s15, 0
      %p137 = por %p135, %p136
      %p138 = scmp.ne.s32.totalorder %s124, %s125
      %p139 = scmp.eq.s32.totalorder %s16, 1
      %p140 = por %p138, %p139
      %p142 = scmp.ne.s32.totalorder %s125, %s141
      %p143 = scmp.eq.s32.totalorder %s16, 0
      %p144 = por %p142, %p143
      %s145 = ssub.s32 %s17, %s36
      %s146 = ssub.s32 %s18, %s32
      %s147 = sor.u32 %s145, %s146
      %s148 = ssub.s32 %s19, %s28
      %s149 = sor.u32 %s147, %s148
      %p150 = scmp.eq.s32.totalorder %s149, 0
      %s152 = sadd.s32 %s151, 1
      %s153 = scalar_select %p150, %s151, %s152
      %p156 = pneg %p150
      %p157 = scmp.eq.s32.totalorder %s10, 1
      %p158 = por %p156, %p157
      %p159 = scmp.ne.s32.totalorder %s151, %s154
      %p160 = scmp.eq.s32.totalorder %s10, 0
      %p161 = por %p159, %p160
      %p162 = scmp.ne.s32.totalorder %s151, %s154
      %p163 = scmp.eq.s32.totalorder %s15, 1
      %p164 = por %p162, %p163
      %p165 = scmp.ne.s32.totalorder %s154, %s155
      %p166 = scmp.eq.s32.totalorder %s15, 0
      %p167 = por %p165, %p166
      %p168 = scmp.ne.s32.totalorder %s154, %s155
      %p169 = scmp.eq.s32.totalorder %s16, 1
      %p170 = por %p168, %p169
      %p172 = scmp.ne.s32.totalorder %s155, %s171
      %p173 = scmp.eq.s32.totalorder %s16, 0
      %p174 = por %p172, %p173
      %p175 = scmp.le.s32.totalorder 1, %s10
      %p176 = scmp.lt.s32.totalorder %s10, 3
      %p177 = pnand %p175, %p176
      %p178 = pneg %p177
      // Predicated region
      $region9: #{conv_block_forward.5} parent=5 // pred_check
        _
      $region10: #{conv_block_forward.5} parent=5 // pred_check_branch
        %180 = sbr.rel (%p177) target = $region12
      $region11: #{conv_block_forward.5} parent=5 // pred_region
        %s181 = ssub.s32 %s10, 1
        // Predicated region
        $region13: #{conv_block_forward.5} parent=11 // pred_check
          %p182 = pneg %p81
        $region14: #{conv_block_forward.5} parent=11 // pred_check_branch
          %184 = sbr.rel (%p182) target = $region16
        $region15: #{conv_block_forward.5} parent=11 // pred_region
          %p185 = scmp.lt.s32.totalorder %s22, 0
          %s186 = scalar_select %p185, %s22, 0
          %s187 = smul.addr %s186, 4
          %s188 = scalar_lea.vmem %s1, %s187
        $region16: #{conv_block_forward.5} parent=11 // pred_fallthru
          _
        // Predicated region
        $region17: #{conv_block_forward.5} parent=11 // pred_check
          %p189 = pneg %p107
        $region18: #{conv_block_forward.5} parent=11 // pred_check_branch
          %191 = sbr.rel (%p189) target = $region20
        $region19: #{conv_block_forward.5} parent=11 // pred_region
          %p192 = scmp.lt.s32.totalorder %s22, 0
          %s193 = scalar_select %p192, %s22, 0
          %s194 = scalar_lea.vmem %s2, %s193
        $region20: #{conv_block_forward.5} parent=11 // pred_fallthru
          _
      $region12: #{conv_block_forward.5} parent=5 // pred_fallthru
        _
      %p195 = scmp.lt.s32.totalorder %s10, 2
      // Predicated region
      $region21: #{conv_block_forward.5} parent=5 // pred_check
        %p196 = pneg %p195
      $region22: #{conv_block_forward.5} parent=5 // pred_check_branch
        %198 = sbr.rel (%p196) target = $region24
      $region23: #{conv_block_forward.5} parent=5 // pred_region
        // Predicated region
        $region25: #{conv_block_forward.5} parent=23 // pred_check
          %p199 = pneg %p49
        $region26: #{conv_block_forward.5} parent=23 // pred_check_branch
          %201 = sbr.rel (%p199) target = $region28
        $region27: #{conv_block_forward.5} parent=23 // pred_region
          %s202 = sand.u32 %s39, 1
          %s203 = sand.u32 %s39, 1
          %s204 = smul.addr %s203, 288
          %s205 = scalar_lea.vmem [#allocation4], %s204
          %s206 = smul.addr %s17, 18
          %s207 = smul.addr %s206, 4
          %s208 = scalar_lea.vmem %s0, %s207
          // Predicated region
          $region29: #{conv_block_forward.5} parent=27 // pred_check
            _
          $region30: #{conv_block_forward.5} parent=27 // pred_check_branch
            %210 = sbr.rel (0) target = $region32
          $region31: #{conv_block_forward.5} parent=27 // pred_region
            // Predicated region
            $region33: #{conv_block_forward.5} parent=31 // pred_check
              _
            $region34: #{conv_block_forward.5} parent=31 // pred_check_branch
              %212 = sbr.rel target = $region36
            $region35: #{conv_block_forward.5} parent=31 // pred_region
              // Predicated region
              $region48: #{conv_block_forward.5} parent=35 // pred_check
                _
              $region49: #{conv_block_forward.5} parent=35 // pred_check_branch
                %370 = sbr.rel (0) target = $region51
              $region50: #{conv_block_forward.5} parent=35 // pred_region
                loop: start=0, step=1, limit=1
                $region52: #{conv_block_forward.5} parent=50 // loop_pre_header
                  _
                $region53: #{conv_block_forward.5} parent=50 // loop_header
                  %s372 = sphi 0, %s376
                  %p373 = scmp.ge.s32.totalorder %s372, 1
                  %s377 = sphi %s208, %s208
                  %s378 = sphi %s205, %s205
                $region54: #{conv_block_forward.5} parent=50 // loop_header_branch
                  %375 = sbr.rel (%p373) target = $region58
                $region55: #{conv_block_forward.5} parent=50 // loop_body
                  _
                $region56: #{conv_block_forward.5} parent=50 // loop_footer
                  %s376 = sadd.s32 1, %s372
                $region57: #{conv_block_forward.5} parent=50 // loop_footer_branch
                  %371 = sbr.rel target = $region53
                $region58: #{conv_block_forward.5} parent=50 // loop_exit
                  _
                %s380 = ssub.s32 16, 1
                loop: start=0, step=1, limit=1
                $region59: #{conv_block_forward.5} parent=50 // loop_pre_header
                  _
                $region60: #{conv_block_forward.5} parent=50 // loop_header
                  %s382 = sphi 0, %s386
                  %p383 = scmp.ge.s32.totalorder %s382, 1
                  %s387 = sphi %s208, %s208
                  %s388 = sphi %s205, %s205
                $region61: #{conv_block_forward.5} parent=50 // loop_header_branch
                  %385 = sbr.rel (%p383) target = $region65
                $region62: #{conv_block_forward.5} parent=50 // loop_body
                  %v389 = vld [vmem:[%s387] sm:%s380]
                  %390 = vst [vmem:[%s388] sm:%s380] %v389
                  %v391 = vld [vmem:[%s387 + $0x4] sm:%s380]
                  %392 = vst [vmem:[%s388 + $0x4] sm:%s380] %v391
                  %v393 = vld [vmem:[%s387 + $0x8] sm:%s380]
                  %394 = vst [vmem:[%s388 + $0x8] sm:%s380] %v393
                  %v395 = vld [vmem:[%s387 + $0xc] sm:%s380]
                  %396 = vst [vmem:[%s388 + $0xc] sm:%s380] %v395
                  %v397 = vld [vmem:[%s387 + $0x10] sm:%s380]
                  %398 = vst [vmem:[%s388 + $0x10] sm:%s380] %v397
                  %v399 = vld [vmem:[%s387 + $0x14] sm:%s380]
                  %400 = vst [vmem:[%s388 + $0x14] sm:%s380] %v399
                  %v401 = vld [vmem:[%s387 + $0x18] sm:%s380]
                  %402 = vst [vmem:[%s388 + $0x18] sm:%s380] %v401
                  %v403 = vld [vmem:[%s387 + $0x1c] sm:%s380]
                  %404 = vst [vmem:[%s388 + $0x1c] sm:%s380] %v403
                  %v405 = vld [vmem:[%s387 + $0x20] sm:%s380]
                  %406 = vst [vmem:[%s388 + $0x20] sm:%s380] %v405
                  %v407 = vld [vmem:[%s387 + $0x24] sm:%s380]
                  %408 = vst [vmem:[%s388 + $0x24] sm:%s380] %v407
                  %v409 = vld [vmem:[%s387 + $0x28] sm:%s380]
                  %410 = vst [vmem:[%s388 + $0x28] sm:%s380] %v409
                  %v411 = vld [vmem:[%s387 + $0x2c] sm:%s380]
                  %412 = vst [vmem:[%s388 + $0x2c] sm:%s380] %v411
                  %v413 = vld [vmem:[%s387 + $0x30] sm:%s380]
                  %414 = vst [vmem:[%s388 + $0x30] sm:%s380] %v413
                  %v415 = vld [vmem:[%s387 + $0x34] sm:%s380]
                  %416 = vst [vmem:[%s388 + $0x34] sm:%s380] %v415
                  %v417 = vld [vmem:[%s387 + $0x38] sm:%s380]
                  %418 = vst [vmem:[%s388 + $0x38] sm:%s380] %v417
                  %v419 = vld [vmem:[%s387 + $0x3c] sm:%s380]
                  %420 = vst [vmem:[%s388 + $0x3c] sm:%s380] %v419
                  %v421 = vld [vmem:[%s387 + $0x40] sm:%s380]
                  %422 = vst [vmem:[%s388 + $0x40] sm:%s380] %v421
                  %v423 = vld [vmem:[%s387 + $0x44] sm:%s380]
                  %424 = vst [vmem:[%s388 + $0x44] sm:%s380] %v423
                  %v425 = vld [vmem:[%s387 + $0x90] sm:%s380]
                  %426 = vst [vmem:[%s388 + $0x48] sm:%s380] %v425
                  %v427 = vld [vmem:[%s387 + $0x94] sm:%s380]
                  %428 = vst [vmem:[%s388 + $0x4c] sm:%s380] %v427
                  %v429 = vld [vmem:[%s387 + $0x98] sm:%s380]
                  %430 = vst [vmem:[%s388 + $0x50] sm:%s380] %v429
                  %v431 = vld [vmem:[%s387 + $0x9c] sm:%s380]
                  %432 = vst [vmem:[%s388 + $0x54] sm:%s380] %v431
                  %v433 = vld [vmem:[%s387 + $0xa0] sm:%s380]
                  %434 = vst [vmem:[%s388 + $0x58] sm:%s380] %v433
                  %v435 = vld [vmem:[%s387 + $0xa4] sm:%s380]
                  %436 = vst [vmem:[%s388 + $0x5c] sm:%s380] %v435
                  %v437 = vld [vmem:[%s387 + $0xa8] sm:%s380]
                  %438 = vst [vmem:[%s388 + $0x60] sm:%s380] %v437
                  %v439 = vld [vmem:[%s387 + $0xac] sm:%s380]
                  %440 = vst [vmem:[%s388 + $0x64] sm:%s380] %v439
                  %v441 = vld [vmem:[%s387 + $0xb0] sm:%s380]
                  %442 = vst [vmem:[%s388 + $0x68] sm:%s380] %v441
                  %v443 = vld [vmem:[%s387 + $0xb4] sm:%s380]
                  %444 = vst [vmem:[%s388 + $0x6c] sm:%s380] %v443
                  %v445 = vld [vmem:[%s387 + $0xb8] sm:%s380]
                  %446 = vst [vmem:[%s388 + $0x70] sm:%s380] %v445
                  %v447 = vld [vmem:[%s387 + $0xbc] sm:%s380]
                  %448 = vst [vmem:[%s388 + $0x74] sm:%s380] %v447
                  %v449 = vld [vmem:[%s387 + $0xc0] sm:%s380]
                  %450 = vst [vmem:[%s388 + $0x78] sm:%s380] %v449
                  %v451 = vld [vmem:[%s387 + $0xc4] sm:%s380]
                  %452 = vst [vmem:[%s388 + $0x7c] sm:%s380] %v451
                  %v453 = vld [vmem:[%s387 + $0xc8] sm:%s380]
                  %454 = vst [vmem:[%s388 + $0x80] sm:%s380] %v453
                  %v455 = vld [vmem:[%s387 + $0xcc] sm:%s380]
                  %456 = vst [vmem:[%s388 + $0x84] sm:%s380] %v455
                  %v457 = vld [vmem:[%s387 + $0xd0] sm:%s380]
                  %458 = vst [vmem:[%s388 + $0x88] sm:%s380] %v457
                  %v459 = vld [vmem:[%s387 + $0xd4] sm:%s380]
                  %460 = vst [vmem:[%s388 + $0x8c] sm:%s380] %v459
                  %v461 = vld [vmem:[%s387 + $0x120] sm:%s380]
                  %462 = vst [vmem:[%s388 + $0x90] sm:%s380] %v461
                  %v463 = vld [vmem:[%s387 + $0x124] sm:%s380]
                  %464 = vst [vmem:[%s388 + $0x94] sm:%s380] %v463
                  %v465 = vld [vmem:[%s387 + $0x128] sm:%s380]
                  %466 = vst [vmem:[%s388 + $0x98] sm:%s380] %v465
                  %v467 = vld [vmem:[%s387 + $0x12c] sm:%s380]
                  %468 = vst [vmem:[%s388 + $0x9c] sm:%s380] %v467
                  %v469 = vld [vmem:[%s387 + $0x130] sm:%s380]
                  %470 = vst [vmem:[%s388 + $0xa0] sm:%s380] %v469
                  %v471 = vld [vmem:[%s387 + $0x134] sm:%s380]
                  %472 = vst [vmem:[%s388 + $0xa4] sm:%s380] %v471
                  %v473 = vld [vmem:[%s387 + $0x138] sm:%s380]
                  %474 = vst [vmem:[%s388 + $0xa8] sm:%s380] %v473
                  %v475 = vld [vmem:[%s387 + $0x13c] sm:%s380]
                  %476 = vst [vmem:[%s388 + $0xac] sm:%s380] %v475
                  %v477 = vld [vmem:[%s387 + $0x140] sm:%s380]
                  %478 = vst [vmem:[%s388 + $0xb0] sm:%s380] %v477
                  %v479 = vld [vmem:[%s387 + $0x144] sm:%s380]
                  %480 = vst [vmem:[%s388 + $0xb4] sm:%s380] %v479
                  %v481 = vld [vmem:[%s387 + $0x148] sm:%s380]
                  %482 = vst [vmem:[%s388 + $0xb8] sm:%s380] %v481
                  %v483 = vld [vmem:[%s387 + $0x14c] sm:%s380]
                  %484 = vst [vmem:[%s388 + $0xbc] sm:%s380] %v483
                  %v485 = vld [vmem:[%s387 + $0x150] sm:%s380]
                  %486 = vst [vmem:[%s388 + $0xc0] sm:%s380] %v485
                  %v487 = vld [vmem:[%s387 + $0x154] sm:%s380]
                  %488 = vst [vmem:[%s388 + $0xc4] sm:%s380] %v487
                  %v489 = vld [vmem:[%s387 + $0x158] sm:%s380]
                  %490 = vst [vmem:[%s388 + $0xc8] sm:%s380] %v489
                  %v491 = vld [vmem:[%s387 + $0x15c] sm:%s380]
                  %492 = vst [vmem:[%s388 + $0xcc] sm:%s380] %v491
                  %v493 = vld [vmem:[%s387 + $0x160] sm:%s380]
                  %494 = vst [vmem:[%s388 + $0xd0] sm:%s380] %v493
                  %v495 = vld [vmem:[%s387 + $0x164] sm:%s380]
                  %496 = vst [vmem:[%s388 + $0xd4] sm:%s380] %v495
                  %v497 = vld [vmem:[%s387 + $0x1b0] sm:%s380]
                  %498 = vst [vmem:[%s388 + $0xd8] sm:%s380] %v497
                  %v499 = vld [vmem:[%s387 + $0x1b4] sm:%s380]
                  %500 = vst [vmem:[%s388 + $0xdc] sm:%s380] %v499
                  %v501 = vld [vmem:[%s387 + $0x1b8] sm:%s380]
                  %502 = vst [vmem:[%s388 + $0xe0] sm:%s380] %v501
                  %v503 = vld [vmem:[%s387 + $0x1bc] sm:%s380]
                  %504 = vst [vmem:[%s388 + $0xe4] sm:%s380] %v503
                  %v505 = vld [vmem:[%s387 + $0x1c0] sm:%s380]
                  %506 = vst [vmem:[%s388 + $0xe8] sm:%s380] %v505
                  %v507 = vld [vmem:[%s387 + $0x1c4] sm:%s380]
                  %508 = vst [vmem:[%s388 + $0xec] sm:%s380] %v507
                  %v509 = vld [vmem:[%s387 + $0x1c8] sm:%s380]
                  %510 = vst [vmem:[%s388 + $0xf0] sm:%s380] %v509
                  %v511 = vld [vmem:[%s387 + $0x1cc] sm:%s380]
                  %512 = vst [vmem:[%s388 + $0xf4] sm:%s380] %v511
                  %v513 = vld [vmem:[%s387 + $0x1d0] sm:%s380]
                  %514 = vst [vmem:[%s388 + $0xf8] sm:%s380] %v513
                  %v515 = vld [vmem:[%s387 + $0x1d4] sm:%s380]
                  %516 = vst [vmem:[%s388 + $0xfc] sm:%s380] %v515
                  %v517 = vld [vmem:[%s387 + $0x1d8] sm:%s380]
                  %518 = vst [vmem:[%s388 + $0x100] sm:%s380] %v517
                  %v519 = vld [vmem:[%s387 + $0x1dc] sm:%s380]
                  %520 = vst [vmem:[%s388 + $0x104] sm:%s380] %v519
                  %v521 = vld [vmem:[%s387 + $0x1e0] sm:%s380]
                  %522 = vst [vmem:[%s388 + $0x108] sm:%s380] %v521
                  %v523 = vld [vmem:[%s387 + $0x1e4] sm:%s380]
                  %524 = vst [vmem:[%s388 + $0x10c] sm:%s380] %v523
                  %v525 = vld [vmem:[%s387 + $0x1e8] sm:%s380]
                  %526 = vst [vmem:[%s388 + $0x110] sm:%s380] %v525
                  %v527 = vld [vmem:[%s387 + $0x1ec] sm:%s380]
                  %528 = vst [vmem:[%s388 + $0x114] sm:%s380] %v527
                  %v529 = vld [vmem:[%s387 + $0x1f0] sm:%s380]
                  %530 = vst [vmem:[%s388 + $0x118] sm:%s380] %v529
                  %v531 = vld [vmem:[%s387 + $0x1f4] sm:%s380]
                  %532 = vst [vmem:[%s388 + $0x11c] sm:%s380] %v531
                $region63: #{conv_block_forward.5} parent=50 // loop_footer
                  %s386 = sadd.s32 1, %s382
                $region64: #{conv_block_forward.5} parent=50 // loop_footer_branch
                  %381 = sbr.rel target = $region60
                $region65: #{conv_block_forward.5} parent=50 // loop_exit
                  _
              $region51: #{conv_block_forward.5} parent=35 // pred_fallthru
                _
            $region36: #{conv_block_forward.5} parent=31 // pred_fallthru
              _
            // Predicated region
            $region37: #{conv_block_forward.5} parent=31 // pred_check
              _
            $region38: #{conv_block_forward.5} parent=31 // pred_check_branch
              %214 = sbr.rel (0) target = $region40
            $region39: #{conv_block_forward.5} parent=31 // pred_region
              %s216 = ssub.s32 16, 1
              loop: start=0, step=1, limit=1
              $region41: #{conv_block_forward.5} parent=39 // loop_pre_header
                _
              $region42: #{conv_block_forward.5} parent=39 // loop_header
                %s218 = sphi 0, %s222
                %p219 = scmp.ge.s32.totalorder %s218, 1
                %s223 = sphi %s208, %s208
                %s224 = sphi %s205, %s205
              $region43: #{conv_block_forward.5} parent=39 // loop_header_branch
                %221 = sbr.rel (%p219) target = $region47
              $region44: #{conv_block_forward.5} parent=39 // loop_body
                %v225 = vld [vmem:[%s223] sm:%s216]
                %226 = vst [vmem:[%s224] sm:%s216] %v225
                %v227 = vld [vmem:[%s223 + $0x4] sm:%s216]
                %228 = vst [vmem:[%s224 + $0x4] sm:%s216] %v227
                %v229 = vld [vmem:[%s223 + $0x8] sm:%s216]
                %230 = vst [vmem:[%s224 + $0x8] sm:%s216] %v229
                %v231 = vld [vmem:[%s223 + $0xc] sm:%s216]
                %232 = vst [vmem:[%s224 + $0xc] sm:%s216] %v231
                %v233 = vld [vmem:[%s223 + $0x10] sm:%s216]
                %234 = vst [vmem:[%s224 + $0x10] sm:%s216] %v233
                %v235 = vld [vmem:[%s223 + $0x14] sm:%s216]
                %236 = vst [vmem:[%s224 + $0x14] sm:%s216] %v235
                %v237 = vld [vmem:[%s223 + $0x18] sm:%s216]
                %238 = vst [vmem:[%s224 + $0x18] sm:%s216] %v237
                %v239 = vld [vmem:[%s223 + $0x1c] sm:%s216]
                %240 = vst [vmem:[%s224 + $0x1c] sm:%s216] %v239
                %v241 = vld [vmem:[%s223 + $0x20] sm:%s216]
                %242 = vst [vmem:[%s224 + $0x20] sm:%s216] %v241
                %v243 = vld [vmem:[%s223 + $0x24] sm:%s216]
                %244 = vst [vmem:[%s224 + $0x24] sm:%s216] %v243
                %v245 = vld [vmem:[%s223 + $0x28] sm:%s216]
                %246 = vst [vmem:[%s224 + $0x28] sm:%s216] %v245
                %v247 = vld [vmem:[%s223 + $0x2c] sm:%s216]
                %248 = vst [vmem:[%s224 + $0x2c] sm:%s216] %v247
                %v249 = vld [vmem:[%s223 + $0x30] sm:%s216]
                %250 = vst [vmem:[%s224 + $0x30] sm:%s216] %v249
                %v251 = vld [vmem:[%s223 + $0x34] sm:%s216]
                %252 = vst [vmem:[%s224 + $0x34] sm:%s216] %v251
                %v253 = vld [vmem:[%s223 + $0x38] sm:%s216]
                %254 = vst [vmem:[%s224 + $0x38] sm:%s216] %v253
                %v255 = vld [vmem:[%s223 + $0x3c] sm:%s216]
                %256 = vst [vmem:[%s224 + $0x3c] sm:%s216] %v255
                %v257 = vld [vmem:[%s223 + $0x40] sm:%s216]
                %258 = vst [vmem:[%s224 + $0x40] sm:%s216] %v257
                %v259 = vld [vmem:[%s223 + $0x44] sm:%s216]
                %260 = vst [vmem:[%s224 + $0x44] sm:%s216] %v259
                %v261 = vld [vmem:[%s223 + $0x90] sm:%s216]
                %262 = vst [vmem:[%s224 + $0x48] sm:%s216] %v261
                %v263 = vld [vmem:[%s223 + $0x94] sm:%s216]
                %264 = vst [vmem:[%s224 + $0x4c] sm:%s216] %v263
                %v265 = vld [vmem:[%s223 + $0x98] sm:%s216]
                %266 = vst [vmem:[%s224 + $0x50] sm:%s216] %v265
                %v267 = vld [vmem:[%s223 + $0x9c] sm:%s216]
                %268 = vst [vmem:[%s224 + $0x54] sm:%s216] %v267
                %v269 = vld [vmem:[%s223 + $0xa0] sm:%s216]
                %270 = vst [vmem:[%s224 + $0x58] sm:%s216] %v269
                %v271 = vld [vmem:[%s223 + $0xa4] sm:%s216]
                %272 = vst [vmem:[%s224 + $0x5c] sm:%s216] %v271
                %v273 = vld [vmem:[%s223 + $0xa8] sm:%s216]
                %274 = vst [vmem:[%s224 + $0x60] sm:%s216] %v273
                %v275 = vld [vmem:[%s223 + $0xac] sm:%s216]
                %276 = vst [vmem:[%s224 + $0x64] sm:%s216] %v275
                %v277 = vld [vmem:[%s223 + $0xb0] sm:%s216]
                %278 = vst [vmem:[%s224 + $0x68] sm:%s216] %v277
                %v279 = vld [vmem:[%s223 + $0xb4] sm:%s216]
                %280 = vst [vmem:[%s224 + $0x6c] sm:%s216] %v279
                %v281 = vld [vmem:[%s223 + $0xb8] sm:%s216]
                %282 = vst [vmem:[%s224 + $0x70] sm:%s216] %v281
                %v283 = vld [vmem:[%s223 + $0xbc] sm:%s216]
                %284 = vst [vmem:[%s224 + $0x74] sm:%s216] %v283
                %v285 = vld [vmem:[%s223 + $0xc0] sm:%s216]
                %286 = vst [vmem:[%s224 + $0x78] sm:%s216] %v285
                %v287 = vld [vmem:[%s223 + $0xc4] sm:%s216]
                %288 = vst [vmem:[%s224 + $0x7c] sm:%s216] %v287
                %v289 = vld [vmem:[%s223 + $0xc8] sm:%s216]
                %290 = vst [vmem:[%s224 + $0x80] sm:%s216] %v289
                %v291 = vld [vmem:[%s223 + $0xcc] sm:%s216]
                %292 = vst [vmem:[%s224 + $0x84] sm:%s216] %v291
                %v293 = vld [vmem:[%s223 + $0xd0] sm:%s216]
                %294 = vst [vmem:[%s224 + $0x88] sm:%s216] %v293
                %v295 = vld [vmem:[%s223 + $0xd4] sm:%s216]
                %296 = vst [vmem:[%s224 + $0x8c] sm:%s216] %v295
                %v297 = vld [vmem:[%s223 + $0x120] sm:%s216]
                %298 = vst [vmem:[%s224 + $0x90] sm:%s216] %v297
                %v299 = vld [vmem:[%s223 + $0x124] sm:%s216]
                %300 = vst [vmem:[%s224 + $0x94] sm:%s216] %v299
                %v301 = vld [vmem:[%s223 + $0x128] sm:%s216]
                %302 = vst [vmem:[%s224 + $0x98] sm:%s216] %v301
                %v303 = vld [vmem:[%s223 + $0x12c] sm:%s216]
                %304 = vst [vmem:[%s224 + $0x9c] sm:%s216] %v303
                %v305 = vld [vmem:[%s223 + $0x130] sm:%s216]
                %306 = vst [vmem:[%s224 + $0xa0] sm:%s216] %v305
                %v307 = vld [vmem:[%s223 + $0x134] sm:%s216]
                %308 = vst [vmem:[%s224 + $0xa4] sm:%s216] %v307
                %v309 = vld [vmem:[%s223 + $0x138] sm:%s216]
                %310 = vst [vmem:[%s224 + $0xa8] sm:%s216] %v309
                %v311 = vld [vmem:[%s223 + $0x13c] sm:%s216]
                %312 = vst [vmem:[%s224 + $0xac] sm:%s216] %v311
                %v313 = vld [vmem:[%s223 + $0x140] sm:%s216]
                %314 = vst [vmem:[%s224 + $0xb0] sm:%s216] %v313
                %v315 = vld [vmem:[%s223 + $0x144] sm:%s216]
                %316 = vst [vmem:[%s224 + $0xb4] sm:%s216] %v315
                %v317 = vld [vmem:[%s223 + $0x148] sm:%s216]
                %318 = vst [vmem:[%s224 + $0xb8] sm:%s216] %v317
                %v319 = vld [vmem:[%s223 + $0x14c] sm:%s216]
                %320 = vst [vmem:[%s224 + $0xbc] sm:%s216] %v319
                %v321 = vld [vmem:[%s223 + $0x150] sm:%s216]
                %322 = vst [vmem:[%s224 + $0xc0] sm:%s216] %v321
                %v323 = vld [vmem:[%s223 + $0x154] sm:%s216]
                %324 = vst [vmem:[%s224 + $0xc4] sm:%s216] %v323
                %v325 = vld [vmem:[%s223 + $0x158] sm:%s216]
                %326 = vst [vmem:[%s224 + $0xc8] sm:%s216] %v325
                %v327 = vld [vmem:[%s223 + $0x15c] sm:%s216]
                %328 = vst [vmem:[%s224 + $0xcc] sm:%s216] %v327
                %v329 = vld [vmem:[%s223 + $0x160] sm:%s216]
                %330 = vst [vmem:[%s224 + $0xd0] sm:%s216] %v329
                %v331 = vld [vmem:[%s223 + $0x164] sm:%s216]
                %332 = vst [vmem:[%s224 + $0xd4] sm:%s216] %v331
                %v333 = vld [vmem:[%s223 + $0x1b0] sm:%s216]
                %334 = vst [vmem:[%s224 + $0xd8] sm:%s216] %v333
                %v335 = vld [vmem:[%s223 + $0x1b4] sm:%s216]
                %336 = vst [vmem:[%s224 + $0xdc] sm:%s216] %v335
                %v337 = vld [vmem:[%s223 + $0x1b8] sm:%s216]
                %338 = vst [vmem:[%s224 + $0xe0] sm:%s216] %v337
                %v339 = vld [vmem:[%s223 + $0x1bc] sm:%s216]
                %340 = vst [vmem:[%s224 + $0xe4] sm:%s216] %v339
                %v341 = vld [vmem:[%s223 + $0x1c0] sm:%s216]
                %342 = vst [vmem:[%s224 + $0xe8] sm:%s216] %v341
                %v343 = vld [vmem:[%s223 + $0x1c4] sm:%s216]
                %344 = vst [vmem:[%s224 + $0xec] sm:%s216] %v343
                %v345 = vld [vmem:[%s223 + $0x1c8] sm:%s216]
                %346 = vst [vmem:[%s224 + $0xf0] sm:%s216] %v345
                %v347 = vld [vmem:[%s223 + $0x1cc] sm:%s216]
                %348 = vst [vmem:[%s224 + $0xf4] sm:%s216] %v347
                %v349 = vld [vmem:[%s223 + $0x1d0] sm:%s216]
                %350 = vst [vmem:[%s224 + $0xf8] sm:%s216] %v349
                %v351 = vld [vmem:[%s223 + $0x1d4] sm:%s216]
                %352 = vst [vmem:[%s224 + $0xfc] sm:%s216] %v351
                %v353 = vld [vmem:[%s223 + $0x1d8] sm:%s216]
                %354 = vst [vmem:[%s224 + $0x100] sm:%s216] %v353
                %v355 = vld [vmem:[%s223 + $0x1dc] sm:%s216]
                %356 = vst [vmem:[%s224 + $0x104] sm:%s216] %v355
                %v357 = vld [vmem:[%s223 + $0x1e0] sm:%s216]
                %358 = vst [vmem:[%s224 + $0x108] sm:%s216] %v357
                %v359 = vld [vmem:[%s223 + $0x1e4] sm:%s216]
                %360 = vst [vmem:[%s224 + $0x10c] sm:%s216] %v359
                %v361 = vld [vmem:[%s223 + $0x1e8] sm:%s216]
                %362 = vst [vmem:[%s224 + $0x110] sm:%s216] %v361
                %v363 = vld [vmem:[%s223 + $0x1ec] sm:%s216]
                %364 = vst [vmem:[%s224 + $0x114] sm:%s216] %v363
                %v365 = vld [vmem:[%s223 + $0x1f0] sm:%s216]
                %366 = vst [vmem:[%s224 + $0x118] sm:%s216] %v365
                %v367 = vld [vmem:[%s223 + $0x1f4] sm:%s216]
                %368 = vst [vmem:[%s224 + $0x11c] sm:%s216] %v367
              $region45: #{conv_block_forward.5} parent=39 // loop_footer
                %s222 = sadd.s32 1, %s218
              $region46: #{conv_block_forward.5} parent=39 // loop_footer_branch
                %217 = sbr.rel target = $region42
              $region47: #{conv_block_forward.5} parent=39 // loop_exit
                _
            $region40: #{conv_block_forward.5} parent=31 // pred_fallthru
              _
          $region32: #{conv_block_forward.5} parent=27 // pred_fallthru
            _
          %533 = vnop
        $region28: #{conv_block_forward.5} parent=23 // pred_fallthru
          _
        // Predicated region
        $region66: #{conv_block_forward.5} parent=23 // pred_check
          %p534 = pneg %p131
        $region67: #{conv_block_forward.5} parent=23 // pred_check_branch
          %536 = sbr.rel (%p534) target = $region69
        $region68: #{conv_block_forward.5} parent=23 // pred_region
          %s537 = smul.u32 8, %s18
          %p538 = scmp.lt.s32.totalorder %s17, 1
          %s539 = scalar_select %p538, %s17, 1
          %p540 = scmp.lt.s32.totalorder %s537, 7
          %s541 = scalar_select %p540, %s537, 7
          %p542 = scmp.lt.s32.totalorder %s19, 0
          %s543 = scalar_select %p542, %s19, 0
          %s544 = sadd.s32 %s543, %s541
          %s545 = smul.addr %s539, 8
          %s546 = sadd.s32 %s544, %s545
          %s547 = smul.addr %s546, 4
          %s548 = scalar_lea.vmem %s3, %s547
          %s549 = smul.u32 8, %s18
        $region69: #{conv_block_forward.5} parent=23 // pred_fallthru
          _
      $region24: #{conv_block_forward.5} parent=5 // pred_fallthru
        _
      %p550 = scmp.le.s32.totalorder 1, %s10
      %p551 = scmp.lt.s32.totalorder %s10, 3
      %p552 = pnand %p550, %p551
      %p553 = pneg %p552
      // Predicated region
      $region70: #{conv_block_forward.5} parent=5 // pred_check
        _
      $region71: #{conv_block_forward.5} parent=5 // pred_check_branch
        %555 = sbr.rel (%p552) target = $region73
      $region72: #{conv_block_forward.5} parent=5 // pred_region
        %s556 = ssub.s32 %s10, 1
        %s557 = sand.u32 %s42, 1
        %s558 = sand.u32 %s42, 1
        %s559 = smul.addr %s558, 288
        %s560 = scalar_lea.vmem [#allocation4], %s559
        // Predicated region
        $region74: #{conv_block_forward.5} parent=72 // pred_check
          %p561 = pneg %p55
        $region75: #{conv_block_forward.5} parent=72 // pred_check_branch
          %563 = sbr.rel (%p561) target = $region77
        $region76: #{conv_block_forward.5} parent=72 // pred_region
          _
        $region77: #{conv_block_forward.5} parent=72 // pred_fallthru
          _
        %s564 = sand.u32 %s42, 1
        %s565 = sand.u32 %s42, 1
        %s566 = smul.addr %s565, 288
        %s567 = scalar_lea.vmem [#allocation4], %s566
        %p568 = pneg %p55
        %p569 = pneg %p52
        %p570 = scmp.lt.s32.totalorder %s22, 0
        %s571 = scalar_select %p570, %s22, 0
        %s572 = smul.addr %s571, 4
        %s573 = scalar_lea.vmem %s1, %s572
        %p574 = pneg %p81
        %p575 = pneg %p78
        %p576 = scmp.lt.s32.totalorder %s22, 0
        %s577 = scalar_select %p576, %s22, 0
        %s578 = scalar_lea.vmem %s2, %s577
        %p579 = pneg %p107
        %p580 = pneg %p104
        %s581 = smul.u32 8, %s21
        %p582 = scmp.lt.s32.totalorder %s20, 1
        %s583 = scalar_select %p582, %s20, 1
        %p584 = scmp.lt.s32.totalorder %s581, 7
        %s585 = scalar_select %p584, %s581, 7
        %p586 = scmp.lt.s32.totalorder %s22, 0
        %s587 = scalar_select %p586, %s22, 0
        %s588 = sadd.s32 %s587, %s585
        %s589 = smul.addr %s583, 8
        %s590 = sadd.s32 %s588, %s589
        %s591 = smul.addr %s590, 4
        %s592 = scalar_lea.vmem %s3, %s591
        %p593 = pneg %p137
        %p594 = pneg %p134
        %p595 = pneg %p167
        %p596 = pneg %p164
        %s597 = smul.u32 8, %s21
        %p598 = scmp.lt.s32.totalorder %s20, 1
        %s599 = scalar_select %p598, %s20, 1
        %p600 = scmp.lt.s32.totalorder %s597, 7
        %s601 = scalar_select %p600, %s597, 7
        %p602 = scmp.lt.s32.totalorder %s22, 0
        %s603 = scalar_select %p602, %s22, 0
        %s604 = sadd.s32 %s603, %s601
        %s605 = smul.addr %s599, 8
        %s606 = sadd.s32 %s604, %s605
        %s607 = smul.addr %s606, 8
        %s608 = scalar_lea.vmem %s4, %s607
        %p609 = scmp.lt.s32.totalorder %s22, 0
        %s610 = scalar_select %p609, %s22, 0
        %s611 = smul.addr %s610, 4
        %s612 = scalar_lea.vmem %s1, %s611
        %p613 = scmp.lt.s32.totalorder %s22, 0
        %s614 = scalar_select %p613, %s22, 0
        %s615 = scalar_lea.vmem %s2, %s614
        %s616 = smul.u32 8, %s21
        %p617 = scmp.lt.s32.totalorder %s20, 1
        %s618 = scalar_select %p617, %s20, 1
        %p619 = scmp.lt.s32.totalorder %s616, 7
        %s620 = scalar_select %p619, %s616, 7
        %p621 = scmp.lt.s32.totalorder %s22, 0
        %s622 = scalar_select %p621, %s22, 0
        %s623 = sadd.s32 %s622, %s620
        %s624 = smul.addr %s618, 8
        %s625 = sadd.s32 %s623, %s624
        %s626 = smul.addr %s625, 4
        %s627 = scalar_lea.vmem %s3, %s626
        %s628 = smul.u32 8, %s21
        %s629 = smul.u32 8, %s21
        %p630 = scmp.lt.s32.totalorder %s20, 1
        %s631 = scalar_select %p630, %s20, 1
        %p632 = scmp.lt.s32.totalorder %s629, 7
        %s633 = scalar_select %p632, %s629, 7
        %p634 = scmp.lt.s32.totalorder %s22, 0
        %s635 = scalar_select %p634, %s22, 0
        %s636 = sadd.s32 %s635, %s633
        %s637 = smul.addr %s631, 8
        %s638 = sadd.s32 %s636, %s637
        %s639 = smul.addr %s638, 8
        %s640 = scalar_lea.vmem %s4, %s639
        %s641 = smul.u32 8, %s21
        %s642 = smul.u32 %s21, 8
        %s643 = smul.u32 %s642, 2
        %s644 = smul.addr %s643, 4
        %s645 = scalar_lea.vmem %s560, %s644 [#allocation4]
        %v646 = vld [vmem:[%s645] sm:$0xf]
        %v647 = vld [vmem:[%s645 + $0x8] sm:$0xf]
        %v648 = vld [vmem:[%s645 + $0x10] sm:$0xf]
        %v649 = vld [vmem:[%s645 + $0x18] sm:$0xf]
        %v650 = vld [vmem:[%s645 + $0x20] sm:$0xf]
        %v651 = vld [vmem:[%s645 + $0x28] sm:$0xf]
        %v652 = vld [vmem:[%s645 + $0x30] sm:$0xf]
        %v653 = vld [vmem:[%s645 + $0x38] sm:$0xf]
        %654 = vst [vmem:[#allocation3] sm:$0xf] %v646
        %655 = vst [vmem:[#allocation3 + $0xc] sm:$0xf] %v647
        %656 = vst [vmem:[#allocation3 + $0x18] sm:$0xf] %v648
        %657 = vst [vmem:[#allocation3 + $0x24] sm:$0xf] %v649
        %658 = vst [vmem:[#allocation3 + $0x30] sm:$0xf] %v650
        %659 = vst [vmem:[#allocation3 + $0x3c] sm:$0xf] %v651
        %660 = vst [vmem:[#allocation3 + $0x48] sm:$0xf] %v652
        %661 = vst [vmem:[#allocation3 + $0x54] sm:$0xf] %v653
        %s662 = sadd.s32 %s643, 18
        %s663 = smul.addr %s662, 4
        %s664 = scalar_lea.vmem %s560, %s663 [#allocation4]
        %v665 = vld [vmem:[%s664] sm:$0xf]
        %v666 = vld [vmem:[%s664 + $0x8] sm:$0xf]
        %v667 = vld [vmem:[%s664 + $0x10] sm:$0xf]
        %v668 = vld [vmem:[%s664 + $0x18] sm:$0xf]
        %v669 = vld [vmem:[%s664 + $0x20] sm:$0xf]
        %v670 = vld [vmem:[%s664 + $0x28] sm:$0xf]
        %v671 = vld [vmem:[%s664 + $0x30] sm:$0xf]
        %v672 = vld [vmem:[%s664 + $0x38] sm:$0xf]
        %673 = vst [vmem:[#allocation3 + $0x4] sm:$0xf] %v665
        %674 = vst [vmem:[#allocation3 + $0x10] sm:$0xf] %v666
        %675 = vst [vmem:[#allocation3 + $0x1c] sm:$0xf] %v667
        %676 = vst [vmem:[#allocation3 + $0x28] sm:$0xf] %v668
        %677 = vst [vmem:[#allocation3 + $0x34] sm:$0xf] %v669
        %678 = vst [vmem:[#allocation3 + $0x40] sm:$0xf] %v670
        %679 = vst [vmem:[#allocation3 + $0x4c] sm:$0xf] %v671
        %680 = vst [vmem:[#allocation3 + $0x58] sm:$0xf] %v672
        %v681 = vld [vmem:[%s645] sm:$0xf]
        %v682 = vld [vmem:[%s645 + $0x4] sm:$0x1]
        %v683 = vld [vmem:[%s645 + $0x8] sm:$0xf]
        %v684 = vld [vmem:[%s645 + $0xc] sm:$0x1]
        %v685 = vld [vmem:[%s645 + $0x10] sm:$0xf]
        %v686 = vld [vmem:[%s645 + $0x14] sm:$0x1]
        %v687 = vld [vmem:[%s645 + $0x18] sm:$0xf]
        %v688 = vld [vmem:[%s645 + $0x1c] sm:$0x1]
        %v689 = vld [vmem:[%s645 + $0x20] sm:$0xf]
        %v690 = vld [vmem:[%s645 + $0x24] sm:$0x1]
        %v691 = vld [vmem:[%s645 + $0x28] sm:$0xf]
        %v692 = vld [vmem:[%s645 + $0x2c] sm:$0x1]
        %v693 = vld [vmem:[%s645 + $0x30] sm:$0xf]
        %v694 = vld [vmem:[%s645 + $0x34] sm:$0x1]
        %v695 = vld [vmem:[%s645 + $0x38] sm:$0xf]
        %v696 = vld [vmem:[%s645 + $0x3c] sm:$0x1]
        %vm697 = vsmask.f32 3328
        %vm698 = vsmask.f32 7440
        %vm699 = vmor %vm697, %vm698
        %v701 = vshrl.u32 %v681, 16
        %v703 = vrot.slane %v701, 4
        %v704 = vshll.u32 %v681, 16
        %v706 = vrot.slane %v704, 5
        %v707 = vor.u32 %v703, %v706
        %v708 = vrot.slane %v707, 4
        %v710 = vshll.u32 %v682, 16
        %v712 = vrot.slane %v710, 5
        %v713 = vsel %vm699, %v708, %v712
        %v715 = vshrl.u32 %v683, 16
        %v717 = vrot.slane %v715, 4
        %v718 = vshll.u32 %v683, 16
        %v720 = vrot.slane %v718, 5
        %v721 = vor.u32 %v717, %v720
        %v722 = vrot.slane %v721, 4
        %v724 = vshll.u32 %v684, 16
        %v726 = vrot.slane %v724, 5
        %v727 = vsel %vm699, %v722, %v726
        %v729 = vshrl.u32 %v685, 16
        %v731 = vrot.slane %v729, 4
        %v732 = vshll.u32 %v685, 16
        %v734 = vrot.slane %v732, 5
        %v735 = vor.u32 %v731, %v734
        %v736 = vrot.slane %v735, 4
        %v738 = vshll.u32 %v686, 16
        %v740 = vrot.slane %v738, 5
        %v741 = vsel %vm699, %v736, %v740
        %v743 = vshrl.u32 %v687, 16
        %v745 = vrot.slane %v743, 4
        %v746 = vshll.u32 %v687, 16
        %v748 = vrot.slane %v746, 5
        %v749 = vor.u32 %v745, %v748
        %v750 = vrot.slane %v749, 4
        %v752 = vshll.u32 %v688, 16
        %v754 = vrot.slane %v752, 5
        %v755 = vsel %vm699, %v750, %v754
        %v757 = vshrl.u32 %v689, 16
        %v759 = vrot.slane %v757, 4
        %v760 = vshll.u32 %v689, 16
        %v762 = vrot.slane %v760, 5
        %v763 = vor.u32 %v759, %v762
        %v764 = vrot.slane %v763, 4
        %v766 = vshll.u32 %v690, 16
        %v768 = vrot.slane %v766, 5
        %v769 = vsel %vm699, %v764, %v768
        %v771 = vshrl.u32 %v691, 16
        %v773 = vrot.slane %v771, 4
        %v774 = vshll.u32 %v691, 16
        %v776 = vrot.slane %v774, 5
        %v777 = vor.u32 %v773, %v776
        %v778 = vrot.slane %v777, 4
        %v780 = vshll.u32 %v692, 16
        %v782 = vrot.slane %v780, 5
        %v783 = vsel %vm699, %v778, %v782
        %v785 = vshrl.u32 %v693, 16
        %v787 = vrot.slane %v785, 4
        %v788 = vshll.u32 %v693, 16
        %v790 = vrot.slane %v788, 5
        %v791 = vor.u32 %v787, %v790
        %v792 = vrot.slane %v791, 4
        %v794 = vshll.u32 %v694, 16
        %v796 = vrot.slane %v794, 5
        %v797 = vsel %vm699, %v792, %v796
        %v799 = vshrl.u32 %v695, 16
        %v801 = vrot.slane %v799, 4
        %v802 = vshll.u32 %v695, 16
        %v804 = vrot.slane %v802, 5
        %v805 = vor.u32 %v801, %v804
        %v806 = vrot.slane %v805, 4
        %v808 = vshll.u32 %v696, 16
        %v810 = vrot.slane %v808, 5
        %v811 = vsel %vm699, %v806, %v810
        %820 = vst [vmem:[#allocation3 + $0x8] sm:$0xf] %v713
        %821 = vst [vmem:[#allocation3 + $0x14] sm:$0xf] %v727
        %822 = vst [vmem:[#allocation3 + $0x20] sm:$0xf] %v741
        %823 = vst [vmem:[#allocation3 + $0x2c] sm:$0xf] %v755
        %824 = vst [vmem:[#allocation3 + $0x38] sm:$0xf] %v769
        %825 = vst [vmem:[#allocation3 + $0x44] sm:$0xf] %v783
        %826 = vst [vmem:[#allocation3 + $0x50] sm:$0xf] %v797
        %827 = vst [vmem:[#allocation3 + $0x5c] sm:$0xf] %v811
        %v828 = vld [vmem:[#allocation3] sm:$0xff]
        %v829 = vld [vmem:[#allocation3 + $0x8] sm:$0xf]
        %v830 = vld [vmem:[#allocation3 + $0xc] sm:$0xff]
        %v831 = vld [vmem:[#allocation3 + $0x14] sm:$0xf]
        %v832 = vld [vmem:[#allocation3 + $0x18] sm:$0xff]
        %v833 = vld [vmem:[#allocation3 + $0x20] sm:$0xf]
        %v834 = vld [vmem:[#allocation3 + $0x24] sm:$0xff]
        %v835 = vld [vmem:[#allocation3 + $0x2c] sm:$0xf]
        %v836 = vld [vmem:[#allocation3 + $0x30] sm:$0xff]
        %v837 = vld [vmem:[#allocation3 + $0x38] sm:$0xf]
        %v838 = vld [vmem:[#allocation3 + $0x3c] sm:$0xff]
        %v839 = vld [vmem:[#allocation3 + $0x44] sm:$0xf]
        %v840 = vld [vmem:[#allocation3 + $0x48] sm:$0xff]
        %v841 = vld [vmem:[#allocation3 + $0x50] sm:$0xf]
        %v842 = vld [vmem:[#allocation3 + $0x54] sm:$0xff]
        %v843 = vld [vmem:[#allocation3 + $0x5c] sm:$0xf]
        %v844 = vld [vmem:[%s612] sm:$0xf]
        %v845 = vld [vmem:[%s612 + $0x4] sm:$0xf]
        %v846 = vld [vmem:[%s612 + $0x8] sm:$0xf]
        %v847 = vld [vmem:[%s612 + $0xc] sm:$0xf]
        %v848 = vld [vmem:[%s612 + $0x10] sm:$0xf]
        %v849 = vld [vmem:[%s612 + $0x14] sm:$0xf]
        %v850 = vld [vmem:[%s612 + $0x18] sm:$0xf]
        %v851 = vld [vmem:[%s612 + $0x1c] sm:$0xf]
        %v852 = vld [vmem:[%s612 + $0x20] sm:$0xf]
        %v853 = vld [vmem:[%s612 + $0x24] sm:$0xf]
        %v854 = vld [vmem:[%s612 + $0x28] sm:$0xf]
        %v855 = vld [vmem:[%s612 + $0x2c] sm:$0xf]
        %v856 = vld [vmem:[%s612 + $0x30] sm:$0xf]
        %v857 = vld [vmem:[%s612 + $0x34] sm:$0xf]
        %v858 = vld [vmem:[%s612 + $0x38] sm:$0xf]
        %v859 = vld [vmem:[%s612 + $0x3c] sm:$0xf]
        %v860 = vld [vmem:[%s612 + $0x40] sm:$0xf]
        %v861 = vld [vmem:[%s612 + $0x44] sm:$0xf]
        %v862 = vld [vmem:[%s612 + $0x48] sm:$0xf]
        %v863 = vld [vmem:[%s612 + $0x4c] sm:$0xf]
        %v864 = vld [vmem:[%s612 + $0x50] sm:$0xf]
        %v865 = vld [vmem:[%s612 + $0x54] sm:$0xf]
        %v866 = vld [vmem:[%s612 + $0x58] sm:$0xf]
        %v867 = vld [vmem:[%s612 + $0x5c] sm:$0xf]
        %v868 = vld [vmem:[%s612 + $0x60] sm:$0xf]
        %v869 = vld [vmem:[%s612 + $0x64] sm:$0xf]
        %v870 = vld [vmem:[%s612 + $0x68] sm:$0xf]
        %v871 = vld [vmem:[%s612 + $0x6c] sm:$0xf]
        %v872 = vld [vmem:[%s612 + $0x70] sm:$0xf]
        %v873 = vld [vmem:[%s612 + $0x74] sm:$0xf]
        %v874 = vld [vmem:[%s612 + $0x78] sm:$0xf]
        %v875 = vld [vmem:[%s612 + $0x7c] sm:$0xf]
        %v876 = vld [vmem:[%s612 + $0x80] sm:$0xf]
        %v877 = vld [vmem:[%s612 + $0x84] sm:$0xf]
        %v878 = vld [vmem:[%s612 + $0x88] sm:$0xf]
        %v879 = vld [vmem:[%s612 + $0x8c] sm:$0xf]
        %v880 = vld [vmem:[%s612 + $0x90] sm:$0xf]
        %v881 = vld [vmem:[%s612 + $0x94] sm:$0xf]
        %v882 = vld [vmem:[%s612 + $0x98] sm:$0xf]
        %v883 = vld [vmem:[%s612 + $0x9c] sm:$0xf]
        %v884 = vld [vmem:[%s612 + $0xa0] sm:$0xf]
        %v885 = vld [vmem:[%s612 + $0xa4] sm:$0xf]
        %v886 = vld [vmem:[%s612 + $0xa8] sm:$0xf]
        %v887 = vld [vmem:[%s612 + $0xac] sm:$0xf]
        %v888 = vld [vmem:[%s612 + $0xb0] sm:$0xf]
        %v889 = vld [vmem:[%s612 + $0xb4] sm:$0xf]
        %v890 = vld [vmem:[%s612 + $0xb8] sm:$0xf]
        %v891 = vld [vmem:[%s612 + $0xbc] sm:$0xf]
        %v908 = vunpack.c.l.b16 %v828
        %v909 = vunpack.c.h.b16 %v828
        %v910 = vunpack.c.l.b16 %v829
        %v911 = vunpack.c.l.b16 %v830
        %v912 = vunpack.c.h.b16 %v830
        %v913 = vunpack.c.l.b16 %v831
        %v914 = vunpack.c.l.b16 %v832
        %v915 = vunpack.c.h.b16 %v832
        %v916 = vunpack.c.l.b16 %v833
        %v917 = vunpack.c.l.b16 %v834
        %v918 = vunpack.c.h.b16 %v834
        %v919 = vunpack.c.l.b16 %v835
        %v920 = vunpack.c.l.b16 %v836
        %v921 = vunpack.c.h.b16 %v836
        %v922 = vunpack.c.l.b16 %v837
        %v923 = vunpack.c.l.b16 %v838
        %v924 = vunpack.c.h.b16 %v838
        %v925 = vunpack.c.l.b16 %v839
        %v926 = vunpack.c.l.b16 %v840
        %v927 = vunpack.c.h.b16 %v840
        %v928 = vunpack.c.l.b16 %v841
        %v929 = vunpack.c.l.b16 %v842
        %v930 = vunpack.c.h.b16 %v842
        %v931 = vunpack.c.l.b16 %v843
        %v932 = vpack.c.b16 %v911, %v908
        %v933 = vpack.c.b16 %v912, %v909
        %v934 = vpack.c.b16 %v913, %v910
        %v935 = vpack.c.b16 %v917, %v914
        %v936 = vpack.c.b16 %v918, %v915
        %v937 = vpack.c.b16 %v919, %v916
        %v938 = vpack.c.b16 %v923, %v920
        %v939 = vpack.c.b16 %v924, %v921
        %v940 = vpack.c.b16 %v925, %v922
        %v941 = vpack.c.b16 %v929, %v926
        %v942 = vpack.c.b16 %v930, %v927
        %v943 = vpack.c.b16 %v931, %v928
        %v1004 = vunpack.c.l.b16 %v844
        %v1005 = vunpack.c.l.b16 %v845
        %v1006 = vunpack.c.l.b16 %v846
        %v1007 = vunpack.c.l.b16 %v847
        %v1008 = vunpack.c.l.b16 %v848
        %v1009 = vunpack.c.l.b16 %v849
        %v1010 = vunpack.c.l.b16 %v850
        %v1011 = vunpack.c.l.b16 %v851
        %v1012 = vunpack.c.l.b16 %v852
        %v1013 = vunpack.c.l.b16 %v853
        %v1014 = vunpack.c.l.b16 %v854
        %v1015 = vunpack.c.l.b16 %v855
        %v1016 = vunpack.c.l.b16 %v856
        %v1017 = vunpack.c.l.b16 %v857
        %v1018 = vunpack.c.l.b16 %v858
        %v1019 = vunpack.c.l.b16 %v859
        %v1020 = vunpack.c.l.b16 %v860
        %v1021 = vunpack.c.l.b16 %v861
        %v1022 = vunpack.c.l.b16 %v862
        %v1023 = vunpack.c.l.b16 %v863
        %v1024 = vunpack.c.l.b16 %v864
        %v1025 = vunpack.c.l.b16 %v865
        %v1026 = vunpack.c.l.b16 %v866
        %v1027 = vunpack.c.l.b16 %v867
        %v1028 = vunpack.c.l.b16 %v868
        %v1029 = vunpack.c.l.b16 %v869
        %v1030 = vunpack.c.l.b16 %v870
        %v1031 = vunpack.c.l.b16 %v871
        %v1032 = vunpack.c.l.b16 %v872
        %v1033 = vunpack.c.l.b16 %v873
        %v1034 = vunpack.c.l.b16 %v874
        %v1035 = vunpack.c.l.b16 %v875
        %v1036 = vunpack.c.l.b16 %v876
        %v1037 = vunpack.c.l.b16 %v877
        %v1038 = vunpack.c.l.b16 %v878
        %v1039 = vunpack.c.l.b16 %v879
        %v1040 = vunpack.c.l.b16 %v880
        %v1041 = vunpack.c.l.b16 %v881
        %v1042 = vunpack.c.l.b16 %v882
        %v1043 = vunpack.c.l.b16 %v883
        %v1044 = vunpack.c.l.b16 %v884
        %v1045 = vunpack.c.l.b16 %v885
        %v1046 = vunpack.c.l.b16 %v886
        %v1047 = vunpack.c.l.b16 %v887
        %v1048 = vunpack.c.l.b16 %v888
        %v1049 = vunpack.c.l.b16 %v889
        %v1050 = vunpack.c.l.b16 %v890
        %v1051 = vunpack.c.l.b16 %v891
        %v1052 = vpack.c.b16 %v1005, %v1004
        %v1053 = vpack.c.b16 %v1007, %v1006
        %v1054 = vpack.c.b16 %v1009, %v1008
        %v1055 = vpack.c.b16 %v1011, %v1010
        %v1056 = vpack.c.b16 %v1013, %v1012
        %v1057 = vpack.c.b16 %v1015, %v1014
        %v1058 = vpack.c.b16 %v1017, %v1016
        %v1059 = vpack.c.b16 %v1019, %v1018
        %v1060 = vpack.c.b16 %v1021, %v1020
        %v1061 = vpack.c.b16 %v1023, %v1022
        %v1062 = vpack.c.b16 %v1025, %v1024
        %v1063 = vpack.c.b16 %v1027, %v1026
        %v1064 = vpack.c.b16 %v1029, %v1028
        %v1065 = vpack.c.b16 %v1031, %v1030
        %v1066 = vpack.c.b16 %v1033, %v1032
        %v1067 = vpack.c.b16 %v1035, %v1034
        %v1068 = vpack.c.b16 %v1037, %v1036
        %v1069 = vpack.c.b16 %v1039, %v1038
        %v1070 = vpack.c.b16 %v1041, %v1040
        %v1071 = vpack.c.b16 %v1043, %v1042
        %v1072 = vpack.c.b16 %v1045, %v1044
        %v1073 = vpack.c.b16 %v1047, %v1046
        %v1074 = vpack.c.b16 %v1049, %v1048
        %v1075 = vpack.c.b16 %v1051, %v1050
        %1100 = vmatpush.bf16.msra.mxu0 %v1059
        %1101 = vmatpush.bf16.msra.mxu0 %v1058
        %1102 = vmatpush.bf16.msra.mxu0 %v1057
        %1103 = vmatpush.bf16.msra.mxu0 %v1056
        %1104 = vmatpush.bf16.msra.mxu0 %v1055
        %1105 = vmatpush.bf16.msra.mxu0 %v1054
        %1106 = vmatpush.bf16.msra.mxu0 %v1053
        %1107 = vmatpush.bf16.msra.mxu0 %v1052
        %1108 = vmatmul.bf16.gmra.mxu0 %v932
        %v1109 = vpop.f32.mrf.mxu0
        %v1110 = vadd.f32 0.0, %v1109
        %v1111 = vpop.f32.mrf.mxu0
        %v1112 = vadd.f32 0.0, %v1111
        %1113 = vmatmul.bf16.gmra.mxu0 %v935
        %v1114 = vpop.f32.mrf.mxu0
        %v1115 = vadd.f32 0.0, %v1114
        %v1116 = vpop.f32.mrf.mxu0
        %v1117 = vadd.f32 0.0, %v1116
        %1118 = vmatmul.bf16.gmra.mxu0 %v938
        %v1119 = vpop.f32.mrf.mxu0
        %v1120 = vadd.f32 0.0, %v1119
        %v1121 = vpop.f32.mrf.mxu0
        %v1122 = vadd.f32 0.0, %v1121
        %1123 = vmatmul.bf16.gmra.mxu0 %v941
        %v1124 = vpop.f32.mrf.mxu0
        %v1125 = vadd.f32 0.0, %v1124
        %v1126 = vpop.f32.mrf.mxu0
        %v1127 = vadd.f32 0.0, %v1126
        %1128 = vdwg.mxu0
        %1129 = vmatpush.bf16.msra.mxu0 %v1067
        %1130 = vmatpush.bf16.msra.mxu0 %v1066
        %1131 = vmatpush.bf16.msra.mxu0 %v1065
        %1132 = vmatpush.bf16.msra.mxu0 %v1064
        %1133 = vmatpush.bf16.msra.mxu0 %v1063
        %1134 = vmatpush.bf16.msra.mxu0 %v1062
        %1135 = vmatpush.bf16.msra.mxu0 %v1061
        %1136 = vmatpush.bf16.msra.mxu0 %v1060
        %1137 = vmatmul.bf16.gmra.mxu0 %v933
        %v1138 = vpop.f32.mrf.mxu0
        %v1139 = vadd.f32 %v1110, %v1138
        %v1140 = vpop.f32.mrf.mxu0
        %v1141 = vadd.f32 %v1112, %v1140
        %1142 = vmatmul.bf16.gmra.mxu0 %v936
        %v1143 = vpop.f32.mrf.mxu0
        %v1144 = vadd.f32 %v1115, %v1143
        %v1145 = vpop.f32.mrf.mxu0
        %v1146 = vadd.f32 %v1117, %v1145
        %1147 = vmatmul.bf16.gmra.mxu0 %v939
        %v1148 = vpop.f32.mrf.mxu0
        %v1149 = vadd.f32 %v1120, %v1148
        %v1150 = vpop.f32.mrf.mxu0
        %v1151 = vadd.f32 %v1122, %v1150
        %1152 = vmatmul.bf16.gmra.mxu0 %v942
        %v1153 = vpop.f32.mrf.mxu0
        %v1154 = vadd.f32 %v1125, %v1153
        %v1155 = vpop.f32.mrf.mxu0
        %v1156 = vadd.f32 %v1127, %v1155
        %1157 = vdwg.mxu0
        %1158 = vmatpush.bf16.msra.mxu0 %v1075
        %1159 = vmatpush.bf16.msra.mxu0 %v1074
        %1160 = vmatpush.bf16.msra.mxu0 %v1073
        %1161 = vmatpush.bf16.msra.mxu0 %v1072
        %1162 = vmatpush.bf16.msra.mxu0 %v1071
        %1163 = vmatpush.bf16.msra.mxu0 %v1070
        %1164 = vmatpush.bf16.msra.mxu0 %v1069
        %1165 = vmatpush.bf16.msra.mxu0 %v1068
        %1166 = vmatmul.bf16.gmra.mxu0 %v934
        %v1167 = vpop.f32.mrf.mxu0
        %v1168 = vadd.f32 %v1139, %v1167
        %v1169 = vpop.f32.mrf.mxu0
        %v1170 = vadd.f32 %v1141, %v1169
        %1171 = vmatmul.bf16.gmra.mxu0 %v937
        %v1172 = vpop.f32.mrf.mxu0
        %v1173 = vadd.f32 %v1144, %v1172
        %v1174 = vpop.f32.mrf.mxu0
        %v1175 = vadd.f32 %v1146, %v1174
        %1176 = vmatmul.bf16.gmra.mxu0 %v940
        %v1177 = vpop.f32.mrf.mxu0
        %v1178 = vadd.f32 %v1149, %v1177
        %v1179 = vpop.f32.mrf.mxu0
        %v1180 = vadd.f32 %v1151, %v1179
        %1181 = vmatmul.bf16.gmra.mxu0 %v943
        %v1182 = vpop.f32.mrf.mxu0
        %v1183 = vadd.f32 %v1154, %v1182
        %v1184 = vpop.f32.mrf.mxu0
        %v1185 = vadd.f32 %v1156, %v1184
        %1186 = vdwg.mxu0
        %1187 = vst [vmem:[#allocation2] sm:$0xff] %v1168
        %1188 = vst [vmem:[#allocation2 + $0x8] sm:$0xff] %v1170
        %1189 = vst [vmem:[#allocation2 + $0x10] sm:$0xff] %v1173
        %1190 = vst [vmem:[#allocation2 + $0x18] sm:$0xff] %v1175
        %1191 = vst [vmem:[#allocation2 + $0x20] sm:$0xff] %v1178
        %1192 = vst [vmem:[#allocation2 + $0x28] sm:$0xff] %v1180
        %1193 = vst [vmem:[#allocation2 + $0x30] sm:$0xff] %v1183
        %1194 = vst [vmem:[#allocation2 + $0x38] sm:$0xff] %v1185
        %s1195 = sadd.s32 %s643, 36
        %s1196 = smul.addr %s1195, 4
        %s1197 = scalar_lea.vmem %s560, %s1196 [#allocation4]
        %v1198 = vld [vmem:[%s1197] sm:$0xf]
        %v1199 = vld [vmem:[%s1197 + $0x8] sm:$0xf]
        %v1200 = vld [vmem:[%s1197 + $0x10] sm:$0xf]
        %v1201 = vld [vmem:[%s1197 + $0x18] sm:$0xf]
        %v1202 = vld [vmem:[%s1197 + $0x20] sm:$0xf]
        %v1203 = vld [vmem:[%s1197 + $0x28] sm:$0xf]
        %v1204 = vld [vmem:[%s1197 + $0x30] sm:$0xf]
        %v1205 = vld [vmem:[%s1197 + $0x38] sm:$0xf]
        %1206 = vst [vmem:[#allocation3] sm:$0xf] %v1198
        %1207 = vst [vmem:[#allocation3 + $0xc] sm:$0xf] %v1199
        %1208 = vst [vmem:[#allocation3 + $0x18] sm:$0xf] %v1200
        %1209 = vst [vmem:[#allocation3 + $0x24] sm:$0xf] %v1201
        %1210 = vst [vmem:[#allocation3 + $0x30] sm:$0xf] %v1202
        %1211 = vst [vmem:[#allocation3 + $0x3c] sm:$0xf] %v1203
        %1212 = vst [vmem:[#allocation3 + $0x48] sm:$0xf] %v1204
        %1213 = vst [vmem:[#allocation3 + $0x54] sm:$0xf] %v1205
        %s1214 = sadd.s32 %s643, 54
        %s1215 = smul.addr %s1214, 4
        %s1216 = scalar_lea.vmem %s560, %s1215 [#allocation4]
        %v1217 = vld [vmem:[%s1216] sm:$0xf]
        %v1218 = vld [vmem:[%s1216 + $0x8] sm:$0xf]
        %v1219 = vld [vmem:[%s1216 + $0x10] sm:$0xf]
        %v1220 = vld [vmem:[%s1216 + $0x18] sm:$0xf]
        %v1221 = vld [vmem:[%s1216 + $0x20] sm:$0xf]
        %v1222 = vld [vmem:[%s1216 + $0x28] sm:$0xf]
        %v1223 = vld [vmem:[%s1216 + $0x30] sm:$0xf]
        %v1224 = vld [vmem:[%s1216 + $0x38] sm:$0xf]
        %1225 = vst [vmem:[#allocation3 + $0x4] sm:$0xf] %v1217
        %1226 = vst [vmem:[#allocation3 + $0x10] sm:$0xf] %v1218
        %1227 = vst [vmem:[#allocation3 + $0x1c] sm:$0xf] %v1219
        %1228 = vst [vmem:[#allocation3 + $0x28] sm:$0xf] %v1220
        %1229 = vst [vmem:[#allocation3 + $0x34] sm:$0xf] %v1221
        %1230 = vst [vmem:[#allocation3 + $0x40] sm:$0xf] %v1222
        %1231 = vst [vmem:[#allocation3 + $0x4c] sm:$0xf] %v1223
        %1232 = vst [vmem:[#allocation3 + $0x58] sm:$0xf] %v1224
        %v1233 = vld [vmem:[%s1197] sm:$0xf]
        %v1234 = vld [vmem:[%s1197 + $0x4] sm:$0x1]
        %v1235 = vld [vmem:[%s1197 + $0x8] sm:$0xf]
        %v1236 = vld [vmem:[%s1197 + $0xc] sm:$0x1]
        %v1237 = vld [vmem:[%s1197 + $0x10] sm:$0xf]
        %v1238 = vld [vmem:[%s1197 + $0x14] sm:$0x1]
        %v1239 = vld [vmem:[%s1197 + $0x18] sm:$0xf]
        %v1240 = vld [vmem:[%s1197 + $0x1c] sm:$0x1]
        %v1241 = vld [vmem:[%s1197 + $0x20] sm:$0xf]
        %v1242 = vld [vmem:[%s1197 + $0x24] sm:$0x1]
        %v1243 = vld [vmem:[%s1197 + $0x28] sm:$0xf]
        %v1244 = vld [vmem:[%s1197 + $0x2c] sm:$0x1]
        %v1245 = vld [vmem:[%s1197 + $0x30] sm:$0xf]
        %v1246 = vld [vmem:[%s1197 + $0x34] sm:$0x1]
        %v1247 = vld [vmem:[%s1197 + $0x38] sm:$0xf]
        %v1248 = vld [vmem:[%s1197 + $0x3c] sm:$0x1]
        %v1250 = vshrl.u32 %v1233, 16
        %v1252 = vrot.slane %v1250, 4
        %v1253 = vshll.u32 %v1233, 16
        %v1255 = vrot.slane %v1253, 5
        %v1256 = vor.u32 %v1252, %v1255
        %v1257 = vrot.slane %v1256, 4
        %v1259 = vshll.u32 %v1234, 16
        %v1261 = vrot.slane %v1259, 5
        %v1262 = vsel %vm699, %v1257, %v1261
        %v1264 = vshrl.u32 %v1235, 16
        %v1266 = vrot.slane %v1264, 4
        %v1267 = vshll.u32 %v1235, 16
        %v1269 = vrot.slane %v1267, 5
        %v1270 = vor.u32 %v1266, %v1269
        %v1271 = vrot.slane %v1270, 4
        %v1273 = vshll.u32 %v1236, 16
        %v1275 = vrot.slane %v1273, 5
        %v1276 = vsel %vm699, %v1271, %v1275
        %v1278 = vshrl.u32 %v1237, 16
        %v1280 = vrot.slane %v1278, 4
        %v1281 = vshll.u32 %v1237, 16
        %v1283 = vrot.slane %v1281, 5
        %v1284 = vor.u32 %v1280, %v1283
        %v1285 = vrot.slane %v1284, 4
        %v1287 = vshll.u32 %v1238, 16
        %v1289 = vrot.slane %v1287, 5
        %v1290 = vsel %vm699, %v1285, %v1289
        %v1292 = vshrl.u32 %v1239, 16
        %v1294 = vrot.slane %v1292, 4
        %v1295 = vshll.u32 %v1239, 16
        %v1297 = vrot.slane %v1295, 5
        %v1298 = vor.u32 %v1294, %v1297
        %v1299 = vrot.slane %v1298, 4
        %v1301 = vshll.u32 %v1240, 16
        %v1303 = vrot.slane %v1301, 5
        %v1304 = vsel %vm699, %v1299, %v1303
        %v1306 = vshrl.u32 %v1241, 16
        %v1308 = vrot.slane %v1306, 4
        %v1309 = vshll.u32 %v1241, 16
        %v1311 = vrot.slane %v1309, 5
        %v1312 = vor.u32 %v1308, %v1311
        %v1313 = vrot.slane %v1312, 4
        %v1315 = vshll.u32 %v1242, 16
        %v1317 = vrot.slane %v1315, 5
        %v1318 = vsel %vm699, %v1313, %v1317
        %v1320 = vshrl.u32 %v1243, 16
        %v1322 = vrot.slane %v1320, 4
        %v1323 = vshll.u32 %v1243, 16
        %v1325 = vrot.slane %v1323, 5
        %v1326 = vor.u32 %v1322, %v1325
        %v1327 = vrot.slane %v1326, 4
        %v1329 = vshll.u32 %v1244, 16
        %v1331 = vrot.slane %v1329, 5
        %v1332 = vsel %vm699, %v1327, %v1331
        %v1334 = vshrl.u32 %v1245, 16
        %v1336 = vrot.slane %v1334, 4
        %v1337 = vshll.u32 %v1245, 16
        %v1339 = vrot.slane %v1337, 5
        %v1340 = vor.u32 %v1336, %v1339
        %v1341 = vrot.slane %v1340, 4
        %v1343 = vshll.u32 %v1246, 16
        %v1345 = vrot.slane %v1343, 5
        %v1346 = vsel %vm699, %v1341, %v1345
        %v1348 = vshrl.u32 %v1247, 16
        %v1350 = vrot.slane %v1348, 4
        %v1351 = vshll.u32 %v1247, 16
        %v1353 = vrot.slane %v1351, 5
        %v1354 = vor.u32 %v1350, %v1353
        %v1355 = vrot.slane %v1354, 4
        %v1357 = vshll.u32 %v1248, 16
        %v1359 = vrot.slane %v1357, 5
        %v1360 = vsel %vm699, %v1355, %v1359
        %1369 = vst [vmem:[#allocation3 + $0x8] sm:$0xf] %v1262
        %1370 = vst [vmem:[#allocation3 + $0x14] sm:$0xf] %v1276
        %1371 = vst [vmem:[#allocation3 + $0x20] sm:$0xf] %v1290
        %1372 = vst [vmem:[#allocation3 + $0x2c] sm:$0xf] %v1304
        %1373 = vst [vmem:[#allocation3 + $0x38] sm:$0xf] %v1318
        %1374 = vst [vmem:[#allocation3 + $0x44] sm:$0xf] %v1332
        %1375 = vst [vmem:[#allocation3 + $0x50] sm:$0xf] %v1346
        %1376 = vst [vmem:[#allocation3 + $0x5c] sm:$0xf] %v1360
        %v1377 = vld [vmem:[#allocation3] sm:$0xff]
        %v1378 = vld [vmem:[#allocation3 + $0x8] sm:$0xf]
        %v1379 = vld [vmem:[#allocation3 + $0xc] sm:$0xff]
        %v1380 = vld [vmem:[#allocation3 + $0x14] sm:$0xf]
        %v1381 = vld [vmem:[#allocation3 + $0x18] sm:$0xff]
        %v1382 = vld [vmem:[#allocation3 + $0x20] sm:$0xf]
        %v1383 = vld [vmem:[#allocation3 + $0x24] sm:$0xff]
        %v1384 = vld [vmem:[#allocation3 + $0x2c] sm:$0xf]
        %v1385 = vld [vmem:[#allocation3 + $0x30] sm:$0xff]
        %v1386 = vld [vmem:[#allocation3 + $0x38] sm:$0xf]
        %v1387 = vld [vmem:[#allocation3 + $0x3c] sm:$0xff]
        %v1388 = vld [vmem:[#allocation3 + $0x44] sm:$0xf]
        %v1389 = vld [vmem:[#allocation3 + $0x48] sm:$0xff]
        %v1390 = vld [vmem:[#allocation3 + $0x50] sm:$0xf]
        %v1391 = vld [vmem:[#allocation3 + $0x54] sm:$0xff]
        %v1392 = vld [vmem:[#allocation3 + $0x5c] sm:$0xf]
        %s1393 = scalar_lea.vmem %s612, 192
        %v1394 = vld [vmem:[%s1393] sm:$0xf]
        %v1395 = vld [vmem:[%s1393 + $0x4] sm:$0xf]
        %v1396 = vld [vmem:[%s1393 + $0x8] sm:$0xf]
        %v1397 = vld [vmem:[%s1393 + $0xc] sm:$0xf]
        %v1398 = vld [vmem:[%s1393 + $0x10] sm:$0xf]
        %v1399 = vld [vmem:[%s1393 + $0x14] sm:$0xf]
        %v1400 = vld [vmem:[%s1393 + $0x18] sm:$0xf]
        %v1401 = vld [vmem:[%s1393 + $0x1c] sm:$0xf]
        %v1402 = vld [vmem:[%s1393 + $0x20] sm:$0xf]
        %v1403 = vld [vmem:[%s1393 + $0x24] sm:$0xf]
        %v1404 = vld [vmem:[%s1393 + $0x28] sm:$0xf]
        %v1405 = vld [vmem:[%s1393 + $0x2c] sm:$0xf]
        %v1406 = vld [vmem:[%s1393 + $0x30] sm:$0xf]
        %v1407 = vld [vmem:[%s1393 + $0x34] sm:$0xf]
        %v1408 = vld [vmem:[%s1393 + $0x38] sm:$0xf]
        %v1409 = vld [vmem:[%s1393 + $0x3c] sm:$0xf]
        %v1410 = vld [vmem:[%s1393 + $0x40] sm:$0xf]
        %v1411 = vld [vmem:[%s1393 + $0x44] sm:$0xf]
        %v1412 = vld [vmem:[%s1393 + $0x48] sm:$0xf]
        %v1413 = vld [vmem:[%s1393 + $0x4c] sm:$0xf]
        %v1414 = vld [vmem:[%s1393 + $0x50] sm:$0xf]
        %v1415 = vld [vmem:[%s1393 + $0x54] sm:$0xf]
        %v1416 = vld [vmem:[%s1393 + $0x58] sm:$0xf]
        %v1417 = vld [vmem:[%s1393 + $0x5c] sm:$0xf]
        %v1418 = vld [vmem:[%s1393 + $0x60] sm:$0xf]
        %v1419 = vld [vmem:[%s1393 + $0x64] sm:$0xf]
        %v1420 = vld [vmem:[%s1393 + $0x68] sm:$0xf]
        %v1421 = vld [vmem:[%s1393 + $0x6c] sm:$0xf]
        %v1422 = vld [vmem:[%s1393 + $0x70] sm:$0xf]
        %v1423 = vld [vmem:[%s1393 + $0x74] sm:$0xf]
        %v1424 = vld [vmem:[%s1393 + $0x78] sm:$0xf]
        %v1425 = vld [vmem:[%s1393 + $0x7c] sm:$0xf]
        %v1426 = vld [vmem:[%s1393 + $0x80] sm:$0xf]
        %v1427 = vld [vmem:[%s1393 + $0x84] sm:$0xf]
        %v1428 = vld [vmem:[%s1393 + $0x88] sm:$0xf]
        %v1429 = vld [vmem:[%s1393 + $0x8c] sm:$0xf]
        %v1430 = vld [vmem:[%s1393 + $0x90] sm:$0xf]
        %v1431 = vld [vmem:[%s1393 + $0x94] sm:$0xf]
        %v1432 = vld [vmem:[%s1393 + $0x98] sm:$0xf]
        %v1433 = vld [vmem:[%s1393 + $0x9c] sm:$0xf]
        %v1434 = vld [vmem:[%s1393 + $0xa0] sm:$0xf]
        %v1435 = vld [vmem:[%s1393 + $0xa4] sm:$0xf]
        %v1436 = vld [vmem:[%s1393 + $0xa8] sm:$0xf]
        %v1437 = vld [vmem:[%s1393 + $0xac] sm:$0xf]
        %v1438 = vld [vmem:[%s1393 + $0xb0] sm:$0xf]
        %v1439 = vld [vmem:[%s1393 + $0xb4] sm:$0xf]
        %v1440 = vld [vmem:[%s1393 + $0xb8] sm:$0xf]
        %v1441 = vld [vmem:[%s1393 + $0xbc] sm:$0xf]
        %v1458 = vunpack.c.l.b16 %v1377
        %v1459 = vunpack.c.h.b16 %v1377
        %v1460 = vunpack.c.l.b16 %v1378
        %v1461 = vunpack.c.l.b16 %v1379
        %v1462 = vunpack.c.h.b16 %v1379
        %v1463 = vunpack.c.l.b16 %v1380
        %v1464 = vunpack.c.l.b16 %v1381
        %v1465 = vunpack.c.h.b16 %v1381
        %v1466 = vunpack.c.l.b16 %v1382
        %v1467 = vunpack.c.l.b16 %v1383
        %v1468 = vunpack.c.h.b16 %v1383
        %v1469 = vunpack.c.l.b16 %v1384
        %v1470 = vunpack.c.l.b16 %v1385
        %v1471 = vunpack.c.h.b16 %v1385
        %v1472 = vunpack.c.l.b16 %v1386
        %v1473 = vunpack.c.l.b16 %v1387
        %v1474 = vunpack.c.h.b16 %v1387
        %v1475 = vunpack.c.l.b16 %v1388
        %v1476 = vunpack.c.l.b16 %v1389
        %v1477 = vunpack.c.h.b16 %v1389
        %v1478 = vunpack.c.l.b16 %v1390
        %v1479 = vunpack.c.l.b16 %v1391
        %v1480 = vunpack.c.h.b16 %v1391
        %v1481 = vunpack.c.l.b16 %v1392
        %v1482 = vpack.c.b16 %v1461, %v1458
        %v1483 = vpack.c.b16 %v1462, %v1459
        %v1484 = vpack.c.b16 %v1463, %v1460
        %v1485 = vpack.c.b16 %v1467, %v1464
        %v1486 = vpack.c.b16 %v1468, %v1465
        %v1487 = vpack.c.b16 %v1469, %v1466
        %v1488 = vpack.c.b16 %v1473, %v1470
        %v1489 = vpack.c.b16 %v1474, %v1471
        %v1490 = vpack.c.b16 %v1475, %v1472
        %v1491 = vpack.c.b16 %v1479, %v1476
        %v1492 = vpack.c.b16 %v1480, %v1477
        %v1493 = vpack.c.b16 %v1481, %v1478
        %v1554 = vunpack.c.l.b16 %v1394
        %v1555 = vunpack.c.l.b16 %v1395
        %v1556 = vunpack.c.l.b16 %v1396
        %v1557 = vunpack.c.l.b16 %v1397
        %v1558 = vunpack.c.l.b16 %v1398
        %v1559 = vunpack.c.l.b16 %v1399
        %v1560 = vunpack.c.l.b16 %v1400
        %v1561 = vunpack.c.l.b16 %v1401
        %v1562 = vunpack.c.l.b16 %v1402
        %v1563 = vunpack.c.l.b16 %v1403
        %v1564 = vunpack.c.l.b16 %v1404
        %v1565 = vunpack.c.l.b16 %v1405
        %v1566 = vunpack.c.l.b16 %v1406
        %v1567 = vunpack.c.l.b16 %v1407
        %v1568 = vunpack.c.l.b16 %v1408
        %v1569 = vunpack.c.l.b16 %v1409
        %v1570 = vunpack.c.l.b16 %v1410
        %v1571 = vunpack.c.l.b16 %v1411
        %v1572 = vunpack.c.l.b16 %v1412
        %v1573 = vunpack.c.l.b16 %v1413
        %v1574 = vunpack.c.l.b16 %v1414
        %v1575 = vunpack.c.l.b16 %v1415
        %v1576 = vunpack.c.l.b16 %v1416
        %v1577 = vunpack.c.l.b16 %v1417
        %v1578 = vunpack.c.l.b16 %v1418
        %v1579 = vunpack.c.l.b16 %v1419
        %v1580 = vunpack.c.l.b16 %v1420
        %v1581 = vunpack.c.l.b16 %v1421
        %v1582 = vunpack.c.l.b16 %v1422
        %v1583 = vunpack.c.l.b16 %v1423
        %v1584 = vunpack.c.l.b16 %v1424
        %v1585 = vunpack.c.l.b16 %v1425
        %v1586 = vunpack.c.l.b16 %v1426
        %v1587 = vunpack.c.l.b16 %v1427
        %v1588 = vunpack.c.l.b16 %v1428
        %v1589 = vunpack.c.l.b16 %v1429
        %v1590 = vunpack.c.l.b16 %v1430
        %v1591 = vunpack.c.l.b16 %v1431
        %v1592 = vunpack.c.l.b16 %v1432
        %v1593 = vunpack.c.l.b16 %v1433
        %v1594 = vunpack.c.l.b16 %v1434
        %v1595 = vunpack.c.l.b16 %v1435
        %v1596 = vunpack.c.l.b16 %v1436
        %v1597 = vunpack.c.l.b16 %v1437
        %v1598 = vunpack.c.l.b16 %v1438
        %v1599 = vunpack.c.l.b16 %v1439
        %v1600 = vunpack.c.l.b16 %v1440
        %v1601 = vunpack.c.l.b16 %v1441
        %v1602 = vpack.c.b16 %v1555, %v1554
        %v1603 = vpack.c.b16 %v1557, %v1556
        %v1604 = vpack.c.b16 %v1559, %v1558
        %v1605 = vpack.c.b16 %v1561, %v1560
        %v1606 = vpack.c.b16 %v1563, %v1562
        %v1607 = vpack.c.b16 %v1565, %v1564
        %v1608 = vpack.c.b16 %v1567, %v1566
        %v1609 = vpack.c.b16 %v1569, %v1568
        %v1610 = vpack.c.b16 %v1571, %v1570
        %v1611 = vpack.c.b16 %v1573, %v1572
        %v1612 = vpack.c.b16 %v1575, %v1574
        %v1613 = vpack.c.b16 %v1577, %v1576
        %v1614 = vpack.c.b16 %v1579, %v1578
        %v1615 = vpack.c.b16 %v1581, %v1580
        %v1616 = vpack.c.b16 %v1583, %v1582
        %v1617 = vpack.c.b16 %v1585, %v1584
        %v1618 = vpack.c.b16 %v1587, %v1586
        %v1619 = vpack.c.b16 %v1589, %v1588
        %v1620 = vpack.c.b16 %v1591, %v1590
        %v1621 = vpack.c.b16 %v1593, %v1592
        %v1622 = vpack.c.b16 %v1595, %v1594
        %v1623 = vpack.c.b16 %v1597, %v1596
        %v1624 = vpack.c.b16 %v1599, %v1598
        %v1625 = vpack.c.b16 %v1601, %v1600
        %1650 = vmatpush.bf16.msra.mxu0 %v1609
        %1651 = vmatpush.bf16.msra.mxu0 %v1608
        %1652 = vmatpush.bf16.msra.mxu0 %v1607
        %1653 = vmatpush.bf16.msra.mxu0 %v1606
        %1654 = vmatpush.bf16.msra.mxu0 %v1605
        %1655 = vmatpush.bf16.msra.mxu0 %v1604
        %1656 = vmatpush.bf16.msra.mxu0 %v1603
        %1657 = vmatpush.bf16.msra.mxu0 %v1602
        %1658 = vmatmul.bf16.gmra.mxu0 %v1482
        %v1659 = vpop.f32.mrf.mxu0
        %v1660 = vadd.f32 0.0, %v1659
        %v1661 = vpop.f32.mrf.mxu0
        %v1662 = vadd.f32 0.0, %v1661
        %1663 = vmatmul.bf16.gmra.mxu0 %v1485
        %v1664 = vpop.f32.mrf.mxu0
        %v1665 = vadd.f32 0.0, %v1664
        %v1666 = vpop.f32.mrf.mxu0
        %v1667 = vadd.f32 0.0, %v1666
        %1668 = vmatmul.bf16.gmra.mxu0 %v1488
        %v1669 = vpop.f32.mrf.mxu0
        %v1670 = vadd.f32 0.0, %v1669
        %v1671 = vpop.f32.mrf.mxu0
        %v1672 = vadd.f32 0.0, %v1671
        %1673 = vmatmul.bf16.gmra.mxu0 %v1491
        %v1674 = vpop.f32.mrf.mxu0
        %v1675 = vadd.f32 0.0, %v1674
        %v1676 = vpop.f32.mrf.mxu0
        %v1677 = vadd.f32 0.0, %v1676
        %1678 = vdwg.mxu0
        %1679 = vmatpush.bf16.msra.mxu0 %v1617
        %1680 = vmatpush.bf16.msra.mxu0 %v1616
        %1681 = vmatpush.bf16.msra.mxu0 %v1615
        %1682 = vmatpush.bf16.msra.mxu0 %v1614
        %1683 = vmatpush.bf16.msra.mxu0 %v1613
        %1684 = vmatpush.bf16.msra.mxu0 %v1612
        %1685 = vmatpush.bf16.msra.mxu0 %v1611
        %1686 = vmatpush.bf16.msra.mxu0 %v1610
        %1687 = vmatmul.bf16.gmra.mxu0 %v1483
        %v1688 = vpop.f32.mrf.mxu0
        %v1689 = vadd.f32 %v1660, %v1688
        %v1690 = vpop.f32.mrf.mxu0
        %v1691 = vadd.f32 %v1662, %v1690
        %1692 = vmatmul.bf16.gmra.mxu0 %v1486
        %v1693 = vpop.f32.mrf.mxu0
        %v1694 = vadd.f32 %v1665, %v1693
        %v1695 = vpop.f32.mrf.mxu0
        %v1696 = vadd.f32 %v1667, %v1695
        %1697 = vmatmul.bf16.gmra.mxu0 %v1489
        %v1698 = vpop.f32.mrf.mxu0
        %v1699 = vadd.f32 %v1670, %v1698
        %v1700 = vpop.f32.mrf.mxu0
        %v1701 = vadd.f32 %v1672, %v1700
        %1702 = vmatmul.bf16.gmra.mxu0 %v1492
        %v1703 = vpop.f32.mrf.mxu0
        %v1704 = vadd.f32 %v1675, %v1703
        %v1705 = vpop.f32.mrf.mxu0
        %v1706 = vadd.f32 %v1677, %v1705
        %1707 = vdwg.mxu0
        %1708 = vmatpush.bf16.msra.mxu0 %v1625
        %1709 = vmatpush.bf16.msra.mxu0 %v1624
        %1710 = vmatpush.bf16.msra.mxu0 %v1623
        %1711 = vmatpush.bf16.msra.mxu0 %v1622
        %1712 = vmatpush.bf16.msra.mxu0 %v1621
        %1713 = vmatpush.bf16.msra.mxu0 %v1620
        %1714 = vmatpush.bf16.msra.mxu0 %v1619
        %1715 = vmatpush.bf16.msra.mxu0 %v1618
        %1716 = vmatmul.bf16.gmra.mxu0 %v1484
        %v1717 = vpop.f32.mrf.mxu0
        %v1718 = vadd.f32 %v1689, %v1717
        %v1719 = vpop.f32.mrf.mxu0
        %v1720 = vadd.f32 %v1691, %v1719
        %1721 = vmatmul.bf16.gmra.mxu0 %v1487
        %v1722 = vpop.f32.mrf.mxu0
        %v1723 = vadd.f32 %v1694, %v1722
        %v1724 = vpop.f32.mrf.mxu0
        %v1725 = vadd.f32 %v1696, %v1724
        %1726 = vmatmul.bf16.gmra.mxu0 %v1490
        %v1727 = vpop.f32.mrf.mxu0
        %v1728 = vadd.f32 %v1699, %v1727
        %v1729 = vpop.f32.mrf.mxu0
        %v1730 = vadd.f32 %v1701, %v1729
        %1731 = vmatmul.bf16.gmra.mxu0 %v1493
        %v1732 = vpop.f32.mrf.mxu0
        %v1733 = vadd.f32 %v1704, %v1732
        %v1734 = vpop.f32.mrf.mxu0
        %v1735 = vadd.f32 %v1706, %v1734
        %1736 = vdwg.mxu0
        %v1737 = vld [vmem:[#allocation2] sm:$0xff]
        %v1738 = vld [vmem:[#allocation2 + $0x8] sm:$0xff]
        %v1739 = vld [vmem:[#allocation2 + $0x10] sm:$0xff]
        %v1740 = vld [vmem:[#allocation2 + $0x18] sm:$0xff]
        %v1741 = vld [vmem:[#allocation2 + $0x20] sm:$0xff]
        %v1742 = vld [vmem:[#allocation2 + $0x28] sm:$0xff]
        %v1743 = vld [vmem:[#allocation2 + $0x30] sm:$0xff]
        %v1744 = vld [vmem:[#allocation2 + $0x38] sm:$0xff]
        %v1745 = vadd.f32 %v1737, %v1718
        %v1746 = vadd.f32 %v1738, %v1720
        %v1747 = vadd.f32 %v1739, %v1723
        %v1748 = vadd.f32 %v1740, %v1725
        %v1749 = vadd.f32 %v1741, %v1728
        %v1750 = vadd.f32 %v1742, %v1730
        %v1751 = vadd.f32 %v1743, %v1733
        %v1752 = vadd.f32 %v1744, %v1735
        %1753 = vst [vmem:[#allocation2] sm:$0xff] %v1745
        %1754 = vst [vmem:[#allocation2 + $0x8] sm:$0xff] %v1746
        %1755 = vst [vmem:[#allocation2 + $0x10] sm:$0xff] %v1747
        %1756 = vst [vmem:[#allocation2 + $0x18] sm:$0xff] %v1748
        %1757 = vst [vmem:[#allocation2 + $0x20] sm:$0xff] %v1749
        %1758 = vst [vmem:[#allocation2 + $0x28] sm:$0xff] %v1750
        %1759 = vst [vmem:[#allocation2 + $0x30] sm:$0xff] %v1751
        %1760 = vst [vmem:[#allocation2 + $0x38] sm:$0xff] %v1752
        %s1761 = sadd.s32 %s642, 1
        %s1762 = smul.u32 %s1761, 2
        %s1763 = smul.addr %s1762, 4
        %s1764 = scalar_lea.vmem %s560, %s1763 [#allocation4]
        %v1765 = vld [vmem:[%s1764] sm:$0xf]
        %v1766 = vld [vmem:[%s1764 + $0x8] sm:$0xf]
        %v1767 = vld [vmem:[%s1764 + $0x10] sm:$0xf]
        %v1768 = vld [vmem:[%s1764 + $0x18] sm:$0xf]
        %v1769 = vld [vmem:[%s1764 + $0x20] sm:$0xf]
        %v1770 = vld [vmem:[%s1764 + $0x28] sm:$0xf]
        %v1771 = vld [vmem:[%s1764 + $0x30] sm:$0xf]
        %v1772 = vld [vmem:[%s1764 + $0x38] sm:$0xf]
        %1773 = vst [vmem:[#allocation3] sm:$0xf] %v1765
        %1774 = vst [vmem:[#allocation3 + $0xc] sm:$0xf] %v1766
        %1775 = vst [vmem:[#allocation3 + $0x18] sm:$0xf] %v1767
        %1776 = vst [vmem:[#allocation3 + $0x24] sm:$0xf] %v1768
        %1777 = vst [vmem:[#allocation3 + $0x30] sm:$0xf] %v1769
        %1778 = vst [vmem:[#allocation3 + $0x3c] sm:$0xf] %v1770
        %1779 = vst [vmem:[#allocation3 + $0x48] sm:$0xf] %v1771
        %1780 = vst [vmem:[#allocation3 + $0x54] sm:$0xf] %v1772
        %s1781 = sadd.s32 %s1762, 18
        %s1782 = smul.addr %s1781, 4
        %s1783 = scalar_lea.vmem %s560, %s1782 [#allocation4]
        %v1784 = vld [vmem:[%s1783] sm:$0xf]
        %v1785 = vld [vmem:[%s1783 + $0x8] sm:$0xf]
        %v1786 = vld [vmem:[%s1783 + $0x10] sm:$0xf]
        %v1787 = vld [vmem:[%s1783 + $0x18] sm:$0xf]
        %v1788 = vld [vmem:[%s1783 + $0x20] sm:$0xf]
        %v1789 = vld [vmem:[%s1783 + $0x28] sm:$0xf]
        %v1790 = vld [vmem:[%s1783 + $0x30] sm:$0xf]
        %v1791 = vld [vmem:[%s1783 + $0x38] sm:$0xf]
        %1792 = vst [vmem:[#allocation3 + $0x4] sm:$0xf] %v1784
        %1793 = vst [vmem:[#allocation3 + $0x10] sm:$0xf] %v1785
        %1794 = vst [vmem:[#allocation3 + $0x1c] sm:$0xf] %v1786
        %1795 = vst [vmem:[#allocation3 + $0x28] sm:$0xf] %v1787
        %1796 = vst [vmem:[#allocation3 + $0x34] sm:$0xf] %v1788
        %1797 = vst [vmem:[#allocation3 + $0x40] sm:$0xf] %v1789
        %1798 = vst [vmem:[#allocation3 + $0x4c] sm:$0xf] %v1790
        %1799 = vst [vmem:[#allocation3 + $0x58] sm:$0xf] %v1791
        %v1800 = vld [vmem:[%s1764] sm:$0xf]
        %v1801 = vld [vmem:[%s1764 + $0x4] sm:$0x1]
        %v1802 = vld [vmem:[%s1764 + $0x8] sm:$0xf]
        %v1803 = vld [vmem:[%s1764 + $0xc] sm:$0x1]
        %v1804 = vld [vmem:[%s1764 + $0x10] sm:$0xf]
        %v1805 = vld [vmem:[%s1764 + $0x14] sm:$0x1]
        %v1806 = vld [vmem:[%s1764 + $0x18] sm:$0xf]
        %v1807 = vld [vmem:[%s1764 + $0x1c] sm:$0x1]
        %v1808 = vld [vmem:[%s1764 + $0x20] sm:$0xf]
        %v1809 = vld [vmem:[%s1764 + $0x24] sm:$0x1]
        %v1810 = vld [vmem:[%s1764 + $0x28] sm:$0xf]
        %v1811 = vld [vmem:[%s1764 + $0x2c] sm:$0x1]
        %v1812 = vld [vmem:[%s1764 + $0x30] sm:$0xf]
        %v1813 = vld [vmem:[%s1764 + $0x34] sm:$0x1]
        %v1814 = vld [vmem:[%s1764 + $0x38] sm:$0xf]
        %v1815 = vld [vmem:[%s1764 + $0x3c] sm:$0x1]
        %v1817 = vshrl.u32 %v1800, 16
        %v1819 = vrot.slane %v1817, 4
        %v1820 = vshll.u32 %v1800, 16
        %v1822 = vrot.slane %v1820, 5
        %v1823 = vor.u32 %v1819, %v1822
        %v1824 = vrot.slane %v1823, 4
        %v1826 = vshll.u32 %v1801, 16
        %v1828 = vrot.slane %v1826, 5
        %v1829 = vsel %vm699, %v1824, %v1828
        %v1831 = vshrl.u32 %v1802, 16
        %v1833 = vrot.slane %v1831, 4
        %v1834 = vshll.u32 %v1802, 16
        %v1836 = vrot.slane %v1834, 5
        %v1837 = vor.u32 %v1833, %v1836
        %v1838 = vrot.slane %v1837, 4
        %v1840 = vshll.u32 %v1803, 16
        %v1842 = vrot.slane %v1840, 5
        %v1843 = vsel %vm699, %v1838, %v1842
        %v1845 = vshrl.u32 %v1804, 16
        %v1847 = vrot.slane %v1845, 4
        %v1848 = vshll.u32 %v1804, 16
        %v1850 = vrot.slane %v1848, 5
        %v1851 = vor.u32 %v1847, %v1850
        %v1852 = vrot.slane %v1851, 4
        %v1854 = vshll.u32 %v1805, 16
        %v1856 = vrot.slane %v1854, 5
        %v1857 = vsel %vm699, %v1852, %v1856
        %v1859 = vshrl.u32 %v1806, 16
        %v1861 = vrot.slane %v1859, 4
        %v1862 = vshll.u32 %v1806, 16
        %v1864 = vrot.slane %v1862, 5
        %v1865 = vor.u32 %v1861, %v1864
        %v1866 = vrot.slane %v1865, 4
        %v1868 = vshll.u32 %v1807, 16
        %v1870 = vrot.slane %v1868, 5
        %v1871 = vsel %vm699, %v1866, %v1870
        %v1873 = vshrl.u32 %v1808, 16
        %v1875 = vrot.slane %v1873, 4
        %v1876 = vshll.u32 %v1808, 16
        %v1878 = vrot.slane %v1876, 5
        %v1879 = vor.u32 %v1875, %v1878
        %v1880 = vrot.slane %v1879, 4
        %v1882 = vshll.u32 %v1809, 16
        %v1884 = vrot.slane %v1882, 5
        %v1885 = vsel %vm699, %v1880, %v1884
        %v1887 = vshrl.u32 %v1810, 16
        %v1889 = vrot.slane %v1887, 4
        %v1890 = vshll.u32 %v1810, 16
        %v1892 = vrot.slane %v1890, 5
        %v1893 = vor.u32 %v1889, %v1892
        %v1894 = vrot.slane %v1893, 4
        %v1896 = vshll.u32 %v1811, 16
        %v1898 = vrot.slane %v1896, 5
        %v1899 = vsel %vm699, %v1894, %v1898
        %v1901 = vshrl.u32 %v1812, 16
        %v1903 = vrot.slane %v1901, 4
        %v1904 = vshll.u32 %v1812, 16
        %v1906 = vrot.slane %v1904, 5
        %v1907 = vor.u32 %v1903, %v1906
        %v1908 = vrot.slane %v1907, 4
        %v1910 = vshll.u32 %v1813, 16
        %v1912 = vrot.slane %v1910, 5
        %v1913 = vsel %vm699, %v1908, %v1912
        %v1915 = vshrl.u32 %v1814, 16
        %v1917 = vrot.slane %v1915, 4
        %v1918 = vshll.u32 %v1814, 16
        %v1920 = vrot.slane %v1918, 5
        %v1921 = vor.u32 %v1917, %v1920
        %v1922 = vrot.slane %v1921, 4
        %v1924 = vshll.u32 %v1815, 16
        %v1926 = vrot.slane %v1924, 5
        %v1927 = vsel %vm699, %v1922, %v1926
        %1936 = vst [vmem:[#allocation3 + $0x8] sm:$0xf] %v1829
        %1937 = vst [vmem:[#allocation3 + $0x14] sm:$0xf] %v1843
        %1938 = vst [vmem:[#allocation3 + $0x20] sm:$0xf] %v1857
        %1939 = vst [vmem:[#allocation3 + $0x2c] sm:$0xf] %v1871
        %1940 = vst [vmem:[#allocation3 + $0x38] sm:$0xf] %v1885
        %1941 = vst [vmem:[#allocation3 + $0x44] sm:$0xf] %v1899
        %1942 = vst [vmem:[#allocation3 + $0x50] sm:$0xf] %v1913
        %1943 = vst [vmem:[#allocation3 + $0x5c] sm:$0xf] %v1927
        %v1944 = vld [vmem:[#allocation3] sm:$0xff]
        %v1945 = vld [vmem:[#allocation3 + $0x8] sm:$0xf]
        %v1946 = vld [vmem:[#allocation3 + $0xc] sm:$0xff]
        %v1947 = vld [vmem:[#allocation3 + $0x14] sm:$0xf]
        %v1948 = vld [vmem:[#allocation3 + $0x18] sm:$0xff]
        %v1949 = vld [vmem:[#allocation3 + $0x20] sm:$0xf]
        %v1950 = vld [vmem:[#allocation3 + $0x24] sm:$0xff]
        %v1951 = vld [vmem:[#allocation3 + $0x2c] sm:$0xf]
        %v1952 = vld [vmem:[#allocation3 + $0x30] sm:$0xff]
        %v1953 = vld [vmem:[#allocation3 + $0x38] sm:$0xf]
        %v1954 = vld [vmem:[#allocation3 + $0x3c] sm:$0xff]
        %v1955 = vld [vmem:[#allocation3 + $0x44] sm:$0xf]
        %v1956 = vld [vmem:[#allocation3 + $0x48] sm:$0xff]
        %v1957 = vld [vmem:[#allocation3 + $0x50] sm:$0xf]
        %v1958 = vld [vmem:[#allocation3 + $0x54] sm:$0xff]
        %v1959 = vld [vmem:[#allocation3 + $0x5c] sm:$0xf]
        %s1960 = scalar_lea.vmem %s612, 384
        %v1961 = vld [vmem:[%s1960] sm:$0xf]
        %v1962 = vld [vmem:[%s1960 + $0x4] sm:$0xf]
        %v1963 = vld [vmem:[%s1960 + $0x8] sm:$0xf]
        %v1964 = vld [vmem:[%s1960 + $0xc] sm:$0xf]
        %v1965 = vld [vmem:[%s1960 + $0x10] sm:$0xf]
        %v1966 = vld [vmem:[%s1960 + $0x14] sm:$0xf]
        %v1967 = vld [vmem:[%s1960 + $0x18] sm:$0xf]
        %v1968 = vld [vmem:[%s1960 + $0x1c] sm:$0xf]
        %v1969 = vld [vmem:[%s1960 + $0x20] sm:$0xf]
        %v1970 = vld [vmem:[%s1960 + $0x24] sm:$0xf]
        %v1971 = vld [vmem:[%s1960 + $0x28] sm:$0xf]
        %v1972 = vld [vmem:[%s1960 + $0x2c] sm:$0xf]
        %v1973 = vld [vmem:[%s1960 + $0x30] sm:$0xf]
        %v1974 = vld [vmem:[%s1960 + $0x34] sm:$0xf]
        %v1975 = vld [vmem:[%s1960 + $0x38] sm:$0xf]
        %v1976 = vld [vmem:[%s1960 + $0x3c] sm:$0xf]
        %v1977 = vld [vmem:[%s1960 + $0x40] sm:$0xf]
        %v1978 = vld [vmem:[%s1960 + $0x44] sm:$0xf]
        %v1979 = vld [vmem:[%s1960 + $0x48] sm:$0xf]
        %v1980 = vld [vmem:[%s1960 + $0x4c] sm:$0xf]
        %v1981 = vld [vmem:[%s1960 + $0x50] sm:$0xf]
        %v1982 = vld [vmem:[%s1960 + $0x54] sm:$0xf]
        %v1983 = vld [vmem:[%s1960 + $0x58] sm:$0xf]
        %v1984 = vld [vmem:[%s1960 + $0x5c] sm:$0xf]
        %v1985 = vld [vmem:[%s1960 + $0x60] sm:$0xf]
        %v1986 = vld [vmem:[%s1960 + $0x64] sm:$0xf]
        %v1987 = vld [vmem:[%s1960 + $0x68] sm:$0xf]
        %v1988 = vld [vmem:[%s1960 + $0x6c] sm:$0xf]
        %v1989 = vld [vmem:[%s1960 + $0x70] sm:$0xf]
        %v1990 = vld [vmem:[%s1960 + $0x74] sm:$0xf]
        %v1991 = vld [vmem:[%s1960 + $0x78] sm:$0xf]
        %v1992 = vld [vmem:[%s1960 + $0x7c] sm:$0xf]
        %v1993 = vld [vmem:[%s1960 + $0x80] sm:$0xf]
        %v1994 = vld [vmem:[%s1960 + $0x84] sm:$0xf]
        %v1995 = vld [vmem:[%s1960 + $0x88] sm:$0xf]
        %v1996 = vld [vmem:[%s1960 + $0x8c] sm:$0xf]
        %v1997 = vld [vmem:[%s1960 + $0x90] sm:$0xf]
        %v1998 = vld [vmem:[%s1960 + $0x94] sm:$0xf]
        %v1999 = vld [vmem:[%s1960 + $0x98] sm:$0xf]
        %v2000 = vld [vmem:[%s1960 + $0x9c] sm:$0xf]
        %v2001 = vld [vmem:[%s1960 + $0xa0] sm:$0xf]
        %v2002 = vld [vmem:[%s1960 + $0xa4] sm:$0xf]
        %v2003 = vld [vmem:[%s1960 + $0xa8] sm:$0xf]
        %v2004 = vld [vmem:[%s1960 + $0xac] sm:$0xf]
        %v2005 = vld [vmem:[%s1960 + $0xb0] sm:$0xf]
        %v2006 = vld [vmem:[%s1960 + $0xb4] sm:$0xf]
        %v2007 = vld [vmem:[%s1960 + $0xb8] sm:$0xf]
        %v2008 = vld [vmem:[%s1960 + $0xbc] sm:$0xf]
        %v2025 = vunpack.c.l.b16 %v1944
        %v2026 = vunpack.c.h.b16 %v1944
        %v2027 = vunpack.c.l.b16 %v1945
        %v2028 = vunpack.c.l.b16 %v1946
        %v2029 = vunpack.c.h.b16 %v1946
        %v2030 = vunpack.c.l.b16 %v1947
        %v2031 = vunpack.c.l.b16 %v1948
        %v2032 = vunpack.c.h.b16 %v1948
        %v2033 = vunpack.c.l.b16 %v1949
        %v2034 = vunpack.c.l.b16 %v1950
        %v2035 = vunpack.c.h.b16 %v1950
        %v2036 = vunpack.c.l.b16 %v1951
        %v2037 = vunpack.c.l.b16 %v1952
        %v2038 = vunpack.c.h.b16 %v1952
        %v2039 = vunpack.c.l.b16 %v1953
        %v2040 = vunpack.c.l.b16 %v1954
        %v2041 = vunpack.c.h.b16 %v1954
        %v2042 = vunpack.c.l.b16 %v1955
        %v2043 = vunpack.c.l.b16 %v1956
        %v2044 = vunpack.c.h.b16 %v1956
        %v2045 = vunpack.c.l.b16 %v1957
        %v2046 = vunpack.c.l.b16 %v1958
        %v2047 = vunpack.c.h.b16 %v1958
        %v2048 = vunpack.c.l.b16 %v1959
        %v2049 = vpack.c.b16 %v2028, %v2025
        %v2050 = vpack.c.b16 %v2029, %v2026
        %v2051 = vpack.c.b16 %v2030, %v2027
        %v2052 = vpack.c.b16 %v2034, %v2031
        %v2053 = vpack.c.b16 %v2035, %v2032
        %v2054 = vpack.c.b16 %v2036, %v2033
        %v2055 = vpack.c.b16 %v2040, %v2037
        %v2056 = vpack.c.b16 %v2041, %v2038
        %v2057 = vpack.c.b16 %v2042, %v2039
        %v2058 = vpack.c.b16 %v2046, %v2043
        %v2059 = vpack.c.b16 %v2047, %v2044
        %v2060 = vpack.c.b16 %v2048, %v2045
        %v2121 = vunpack.c.l.b16 %v1961
        %v2122 = vunpack.c.l.b16 %v1962
        %v2123 = vunpack.c.l.b16 %v1963
        %v2124 = vunpack.c.l.b16 %v1964
        %v2125 = vunpack.c.l.b16 %v1965
        %v2126 = vunpack.c.l.b16 %v1966
        %v2127 = vunpack.c.l.b16 %v1967
        %v2128 = vunpack.c.l.b16 %v1968
        %v2129 = vunpack.c.l.b16 %v1969
        %v2130 = vunpack.c.l.b16 %v1970
        %v2131 = vunpack.c.l.b16 %v1971
        %v2132 = vunpack.c.l.b16 %v1972
        %v2133 = vunpack.c.l.b16 %v1973
        %v2134 = vunpack.c.l.b16 %v1974
        %v2135 = vunpack.c.l.b16 %v1975
        %v2136 = vunpack.c.l.b16 %v1976
        %v2137 = vunpack.c.l.b16 %v1977
        %v2138 = vunpack.c.l.b16 %v1978
        %v2139 = vunpack.c.l.b16 %v1979
        %v2140 = vunpack.c.l.b16 %v1980
        %v2141 = vunpack.c.l.b16 %v1981
        %v2142 = vunpack.c.l.b16 %v1982
        %v2143 = vunpack.c.l.b16 %v1983
        %v2144 = vunpack.c.l.b16 %v1984
        %v2145 = vunpack.c.l.b16 %v1985
        %v2146 = vunpack.c.l.b16 %v1986
        %v2147 = vunpack.c.l.b16 %v1987
        %v2148 = vunpack.c.l.b16 %v1988
        %v2149 = vunpack.c.l.b16 %v1989
        %v2150 = vunpack.c.l.b16 %v1990
        %v2151 = vunpack.c.l.b16 %v1991
        %v2152 = vunpack.c.l.b16 %v1992
        %v2153 = vunpack.c.l.b16 %v1993
        %v2154 = vunpack.c.l.b16 %v1994
        %v2155 = vunpack.c.l.b16 %v1995
        %v2156 = vunpack.c.l.b16 %v1996
        %v2157 = vunpack.c.l.b16 %v1997
        %v2158 = vunpack.c.l.b16 %v1998
        %v2159 = vunpack.c.l.b16 %v1999
        %v2160 = vunpack.c.l.b16 %v2000
        %v2161 = vunpack.c.l.b16 %v2001
        %v2162 = vunpack.c.l.b16 %v2002
        %v2163 = vunpack.c.l.b16 %v2003
        %v2164 = vunpack.c.l.b16 %v2004
        %v2165 = vunpack.c.l.b16 %v2005
        %v2166 = vunpack.c.l.b16 %v2006
        %v2167 = vunpack.c.l.b16 %v2007
        %v2168 = vunpack.c.l.b16 %v2008
        %v2169 = vpack.c.b16 %v2122, %v2121
        %v2170 = vpack.c.b16 %v2124, %v2123
        %v2171 = vpack.c.b16 %v2126, %v2125
        %v2172 = vpack.c.b16 %v2128, %v2127
        %v2173 = vpack.c.b16 %v2130, %v2129
        %v2174 = vpack.c.b16 %v2132, %v2131
        %v2175 = vpack.c.b16 %v2134, %v2133
        %v2176 = vpack.c.b16 %v2136, %v2135
        %v2177 = vpack.c.b16 %v2138, %v2137
        %v2178 = vpack.c.b16 %v2140, %v2139
        %v2179 = vpack.c.b16 %v2142, %v2141
        %v2180 = vpack.c.b16 %v2144, %v2143
        %v2181 = vpack.c.b16 %v2146, %v2145
        %v2182 = vpack.c.b16 %v2148, %v2147
        %v2183 = vpack.c.b16 %v2150, %v2149
        %v2184 = vpack.c.b16 %v2152, %v2151
        %v2185 = vpack.c.b16 %v2154, %v2153
        %v2186 = vpack.c.b16 %v2156, %v2155
        %v2187 = vpack.c.b16 %v2158, %v2157
        %v2188 = vpack.c.b16 %v2160, %v2159
        %v2189 = vpack.c.b16 %v2162, %v2161
        %v2190 = vpack.c.b16 %v2164, %v2163
        %v2191 = vpack.c.b16 %v2166, %v2165
        %v2192 = vpack.c.b16 %v2168, %v2167
        %2217 = vmatpush.bf16.msra.mxu0 %v2176
        %2218 = vmatpush.bf16.msra.mxu0 %v2175
        %2219 = vmatpush.bf16.msra.mxu0 %v2174
        %2220 = vmatpush.bf16.msra.mxu0 %v2173
        %2221 = vmatpush.bf16.msra.mxu0 %v2172
        %2222 = vmatpush.bf16.msra.mxu0 %v2171
        %2223 = vmatpush.bf16.msra.mxu0 %v2170
        %2224 = vmatpush.bf16.msra.mxu0 %v2169
        %2225 = vmatmul.bf16.gmra.mxu0 %v2049
        %v2226 = vpop.f32.mrf.mxu0
        %v2227 = vadd.f32 0.0, %v2226
        %v2228 = vpop.f32.mrf.mxu0
        %v2229 = vadd.f32 0.0, %v2228
        %2230 = vmatmul.bf16.gmra.mxu0 %v2052
        %v2231 = vpop.f32.mrf.mxu0
        %v2232 = vadd.f32 0.0, %v2231
        %v2233 = vpop.f32.mrf.mxu0
        %v2234 = vadd.f32 0.0, %v2233
        %2235 = vmatmul.bf16.gmra.mxu0 %v2055
        %v2236 = vpop.f32.mrf.mxu0
        %v2237 = vadd.f32 0.0, %v2236
        %v2238 = vpop.f32.mrf.mxu0
        %v2239 = vadd.f32 0.0, %v2238
        %2240 = vmatmul.bf16.gmra.mxu0 %v2058
        %v2241 = vpop.f32.mrf.mxu0
        %v2242 = vadd.f32 0.0, %v2241
        %v2243 = vpop.f32.mrf.mxu0
        %v2244 = vadd.f32 0.0, %v2243
        %2245 = vdwg.mxu0
        %2246 = vmatpush.bf16.msra.mxu0 %v2184
        %2247 = vmatpush.bf16.msra.mxu0 %v2183
        %2248 = vmatpush.bf16.msra.mxu0 %v2182
        %2249 = vmatpush.bf16.msra.mxu0 %v2181
        %2250 = vmatpush.bf16.msra.mxu0 %v2180
        %2251 = vmatpush.bf16.msra.mxu0 %v2179
        %2252 = vmatpush.bf16.msra.mxu0 %v2178
        %2253 = vmatpush.bf16.msra.mxu0 %v2177
        %2254 = vmatmul.bf16.gmra.mxu0 %v2050
        %v2255 = vpop.f32.mrf.mxu0
        %v2256 = vadd.f32 %v2227, %v2255
        %v2257 = vpop.f32.mrf.mxu0
        %v2258 = vadd.f32 %v2229, %v2257
        %2259 = vmatmul.bf16.gmra.mxu0 %v2053
        %v2260 = vpop.f32.mrf.mxu0
        %v2261 = vadd.f32 %v2232, %v2260
        %v2262 = vpop.f32.mrf.mxu0
        %v2263 = vadd.f32 %v2234, %v2262
        %2264 = vmatmul.bf16.gmra.mxu0 %v2056
        %v2265 = vpop.f32.mrf.mxu0
        %v2266 = vadd.f32 %v2237, %v2265
        %v2267 = vpop.f32.mrf.mxu0
        %v2268 = vadd.f32 %v2239, %v2267
        %2269 = vmatmul.bf16.gmra.mxu0 %v2059
        %v2270 = vpop.f32.mrf.mxu0
        %v2271 = vadd.f32 %v2242, %v2270
        %v2272 = vpop.f32.mrf.mxu0
        %v2273 = vadd.f32 %v2244, %v2272
        %2274 = vdwg.mxu0
        %2275 = vmatpush.bf16.msra.mxu0 %v2192
        %2276 = vmatpush.bf16.msra.mxu0 %v2191
        %2277 = vmatpush.bf16.msra.mxu0 %v2190
        %2278 = vmatpush.bf16.msra.mxu0 %v2189
        %2279 = vmatpush.bf16.msra.mxu0 %v2188
        %2280 = vmatpush.bf16.msra.mxu0 %v2187
        %2281 = vmatpush.bf16.msra.mxu0 %v2186
        %2282 = vmatpush.bf16.msra.mxu0 %v2185
        %2283 = vmatmul.bf16.gmra.mxu0 %v2051
        %v2284 = vpop.f32.mrf.mxu0
        %v2285 = vadd.f32 %v2256, %v2284
        %v2286 = vpop.f32.mrf.mxu0
        %v2287 = vadd.f32 %v2258, %v2286
        %2288 = vmatmul.bf16.gmra.mxu0 %v2054
        %v2289 = vpop.f32.mrf.mxu0
        %v2290 = vadd.f32 %v2261, %v2289
        %v2291 = vpop.f32.mrf.mxu0
        %v2292 = vadd.f32 %v2263, %v2291
        %2293 = vmatmul.bf16.gmra.mxu0 %v2057
        %v2294 = vpop.f32.mrf.mxu0
        %v2295 = vadd.f32 %v2266, %v2294
        %v2296 = vpop.f32.mrf.mxu0
        %v2297 = vadd.f32 %v2268, %v2296
        %2298 = vmatmul.bf16.gmra.mxu0 %v2060
        %v2299 = vpop.f32.mrf.mxu0
        %v2300 = vadd.f32 %v2271, %v2299
        %v2301 = vpop.f32.mrf.mxu0
        %v2302 = vadd.f32 %v2273, %v2301
        %2303 = vdwg.mxu0
        %v2304 = vld [vmem:[#allocation2] sm:$0xff]
        %v2305 = vld [vmem:[#allocation2 + $0x8] sm:$0xff]
        %v2306 = vld [vmem:[#allocation2 + $0x10] sm:$0xff]
        %v2307 = vld [vmem:[#allocation2 + $0x18] sm:$0xff]
        %v2308 = vld [vmem:[#allocation2 + $0x20] sm:$0xff]
        %v2309 = vld [vmem:[#allocation2 + $0x28] sm:$0xff]
        %v2310 = vld [vmem:[#allocation2 + $0x30] sm:$0xff]
        %v2311 = vld [vmem:[#allocation2 + $0x38] sm:$0xff]
        %v2312 = vadd.f32 %v2304, %v2285
        %v2313 = vadd.f32 %v2305, %v2287
        %v2314 = vadd.f32 %v2306, %v2290
        %v2315 = vadd.f32 %v2307, %v2292
        %v2316 = vadd.f32 %v2308, %v2295
        %v2317 = vadd.f32 %v2309, %v2297
        %v2318 = vadd.f32 %v2310, %v2300
        %v2319 = vadd.f32 %v2311, %v2302
        %2320 = vst [vmem:[#allocation2] sm:$0xff] %v2312
        %2321 = vst [vmem:[#allocation2 + $0x8] sm:$0xff] %v2313
        %2322 = vst [vmem:[#allocation2 + $0x10] sm:$0xff] %v2314
        %2323 = vst [vmem:[#allocation2 + $0x18] sm:$0xff] %v2315
        %2324 = vst [vmem:[#allocation2 + $0x20] sm:$0xff] %v2316
        %2325 = vst [vmem:[#allocation2 + $0x28] sm:$0xff] %v2317
        %2326 = vst [vmem:[#allocation2 + $0x30] sm:$0xff] %v2318
        %2327 = vst [vmem:[#allocation2 + $0x38] sm:$0xff] %v2319
        %v2328 = vld [vmem:[#allocation2] sm:$0xff]
        %v2329 = vld [vmem:[#allocation2 + $0x8] sm:$0xff]
        %v2330 = vld [vmem:[#allocation2 + $0x10] sm:$0xff]
        %v2331 = vld [vmem:[#allocation2 + $0x18] sm:$0xff]
        %v2332 = vld [vmem:[#allocation2 + $0x20] sm:$0xff]
        %v2333 = vld [vmem:[#allocation2 + $0x28] sm:$0xff]
        %v2334 = vld [vmem:[#allocation2 + $0x30] sm:$0xff]
        %v2335 = vld [vmem:[#allocation2 + $0x38] sm:$0xff]
        %v2336 = vld [vmem:[%s615] sm:$0x1]
        %v2338 = vperm.slane %v2336, 0
        %v2340 = vadd.f32 %v2328, %v2338
        %v2341 = vadd.f32 %v2329, %v2338
        %v2342 = vadd.f32 %v2330, %v2338
        %v2343 = vadd.f32 %v2331, %v2338
        %v2344 = vadd.f32 %v2332, %v2338
        %v2345 = vadd.f32 %v2333, %v2338
        %v2346 = vadd.f32 %v2334, %v2338
        %v2347 = vadd.f32 %v2335, %v2338
        %v2348 = vld [vmem:[%s627] sm:$0xf]
        %v2349 = vld [vmem:[%s627 + $0x4] sm:$0xf]
        %v2350 = vld [vmem:[%s627 + $0x8] sm:$0xf]
        %v2351 = vld [vmem:[%s627 + $0xc] sm:$0xf]
        %v2352 = vld [vmem:[%s627 + $0x10] sm:$0xf]
        %v2353 = vld [vmem:[%s627 + $0x14] sm:$0xf]
        %v2354 = vld [vmem:[%s627 + $0x18] sm:$0xf]
        %v2355 = vld [vmem:[%s627 + $0x1c] sm:$0xf]
        %v2356 = vunpack.c.l.bf16 %v2348
        %v2357 = vunpack.c.l.bf16 %v2349
        %v2358 = vunpack.c.l.bf16 %v2350
        %v2359 = vunpack.c.l.bf16 %v2351
        %v2360 = vunpack.c.l.bf16 %v2352
        %v2361 = vunpack.c.l.bf16 %v2353
        %v2362 = vunpack.c.l.bf16 %v2354
        %v2363 = vunpack.c.l.bf16 %v2355
        %v2364 = vadd.f32 %v2340, %v2356
        %v2365 = vadd.f32 %v2341, %v2357
        %v2366 = vadd.f32 %v2342, %v2358
        %v2367 = vadd.f32 %v2343, %v2359
        %v2368 = vadd.f32 %v2344, %v2360
        %v2369 = vadd.f32 %v2345, %v2361
        %v2370 = vadd.f32 %v2346, %v2362
        %v2371 = vadd.f32 %v2347, %v2363
        %v2372 = vmax.f32 %v2364, 0.0
        %v2373 = vmax.f32 %v2365, 0.0
        %v2374 = vmax.f32 %v2366, 0.0
        %v2375 = vmax.f32 %v2367, 0.0
        %v2376 = vmax.f32 %v2368, 0.0
        %v2377 = vmax.f32 %v2369, 0.0
        %v2378 = vmax.f32 %v2370, 0.0
        %v2379 = vmax.f32 %v2371, 0.0
        %2380 = vst [vmem:[%s640] sm:$0xff] %v2372
        %2381 = vst [vmem:[%s640 + $0x8] sm:$0xff] %v2373
        %2382 = vst [vmem:[%s640 + $0x10] sm:$0xff] %v2374
        %2383 = vst [vmem:[%s640 + $0x18] sm:$0xff] %v2375
        %2384 = vst [vmem:[%s640 + $0x20] sm:$0xff] %v2376
        %2385 = vst [vmem:[%s640 + $0x28] sm:$0xff] %v2377
        %2386 = vst [vmem:[%s640 + $0x30] sm:$0xff] %v2378
        %2387 = vst [vmem:[%s640 + $0x38] sm:$0xff] %v2379
        %s2388 = smul.u32 8, %s21
        %p2389 = scmp.lt.s32.totalorder %s20, 1
        %s2390 = scalar_select %p2389, %s20, 1
        %p2391 = scmp.lt.s32.totalorder %s2388, 7
        %s2392 = scalar_select %p2391, %s2388, 7
        %p2393 = scmp.lt.s32.totalorder %s22, 0
        %s2394 = scalar_select %p2393, %s22, 0
        %s2395 = sadd.s32 %s2394, %s2392
        %s2396 = smul.addr %s2390, 8
        %s2397 = sadd.s32 %s2395, %s2396
        %s2398 = smul.addr %s2397, 8
        %s2399 = scalar_lea.vmem %s4, %s2398
        // Predicated region
        $region78: #{conv_block_forward.5} parent=72 // pred_check
          %p2400 = pneg %p164
        $region79: #{conv_block_forward.5} parent=72 // pred_check_branch
          %2402 = sbr.rel (%p2400) target = $region81
        $region80: #{conv_block_forward.5} parent=72 // pred_region
          %s2403 = smul.u32 8, %s21
        $region81: #{conv_block_forward.5} parent=72 // pred_fallthru
          _
      $region73: #{conv_block_forward.5} parent=5 // pred_fallthru
        _
      %p2404 = scmp.le.s32.totalorder 2, %s10
      // Predicated region
      $region82: #{conv_block_forward.5} parent=5 // pred_check
        %p2405 = pneg %p2404
      $region83: #{conv_block_forward.5} parent=5 // pred_check_branch
        %2407 = sbr.rel (%p2405) target = $region85
      $region84: #{conv_block_forward.5} parent=5 // pred_region
        %s2408 = ssub.s32 %s10, 2
        // Predicated region
        $region86: #{conv_block_forward.5} parent=84 // pred_check
          %p2409 = pneg %p170
        $region87: #{conv_block_forward.5} parent=84 // pred_check_branch
          %2411 = sbr.rel (%p2409) target = $region89
        $region88: #{conv_block_forward.5} parent=84 // pred_region
          %s2412 = smul.u32 8, %s24
          %p2413 = scmp.lt.s32.totalorder %s23, 1
          %s2414 = scalar_select %p2413, %s23, 1
          %p2415 = scmp.lt.s32.totalorder %s2412, 7
          %s2416 = scalar_select %p2415, %s2412, 7
          %p2417 = scmp.lt.s32.totalorder %s25, 0
          %s2418 = scalar_select %p2417, %s25, 0
          %s2419 = sadd.s32 %s2418, %s2416
          %s2420 = smul.addr %s2414, 8
          %s2421 = sadd.s32 %s2419, %s2420
          %s2422 = smul.addr %s2421, 8
          %s2423 = scalar_lea.vmem %s4, %s2422
        $region89: #{conv_block_forward.5} parent=84 // pred_fallthru
          _
      $region85: #{conv_block_forward.5} parent=5 // pred_fallthru
        _
    $region6: #{conv_block_forward.5} parent=1 // loop_footer
      %s14 = sadd.s32 1, %s10
    $region7: #{conv_block_forward.5} parent=1 // loop_footer_branch
      %9 = sbr.rel target = $region3
    $region8: #{conv_block_forward.5} parent=1 // loop_exit
      _

// kernel: conv_block_forward.4
$region0: #{conv_block_forward.4}
  #allocation0 [shape = 'u32[]', space=smem, size = 0x4, offset = 0x4, fixed_abs, tag = 'smem constant byte address 0x4 - core index']
  #allocation1 [shape = 'u32[72,128]{1,0:T(1,128)}', space=vmem, size = 0x9000, scoped, tag = 'internal scratch']
  #allocation2 [shape = 'f32[256,128]{1,0:T(8,128)}', space=vmem, size = 0x20000, scoped, tag = 'scratch operand']
  #allocation3 [shape = 'bf16[256,384]{1,0:T(8,128)(2,1)}', space=vmem, size = 0x30000, scoped, tag = 'scratch operand']
  %s0 = inlined_call_operand.vmem [shape: bf16[1,2,18,18,128], index: 0, kind: input, shape index: {}]
  %s1 = inlined_call_operand.vmem [shape: bf16[3,384,128], index: 1, kind: input, shape index: {}]
  %s2 = inlined_call_operand.vmem [shape: f32[1,128], index: 2, kind: input, shape index: {}]
  %s3 = inlined_call_operand.vmem [shape: bf16[2,16,16,128], index: 3, kind: output, shape index: {}]
  %s4 = sld [smem:[#allocation0]]
  $region45: #{conv_block_forward.4} parent=0
    _
  %s6 = ssub.s32 1, %s4
  %s7 = scalar_select 0, %s6, %s4
  loop: start=0, step=1, limit=4
  $region2: #{conv_block_forward.4} parent=0 // loop_pre_header
    _
  $region3: #{conv_block_forward.4} parent=0 // loop_header
    %s9 = sphi 0, %s13
    %p10 = scmp.ge.s32.totalorder %s9, 4
    %s16 = sphi 0, %s35
    %s17 = sphi 0, %s31
    %s18 = sphi 0, %s27
    %s19 = sphi 0, %s16
    %s20 = sphi 0, %s17
    %s21 = sphi 0, %s18
    %s22 = sphi 0, %s19
    %s23 = sphi 0, %s20
    %s24 = sphi 0, %s21
    %s38 = sphi 0, %s40
    %s41 = sphi 0, %s38
    %s42 = sphi 0, %s41
    %s58 = sphi 0, %s42
    %s64 = sphi 0, %s66
    %s67 = sphi 0, %s64
    %s68 = sphi 0, %s67
    %s84 = sphi 0, %s68
    %s90 = sphi 0, %s92
    %s93 = sphi 0, %s90
    %s94 = sphi 0, %s93
    %s110 = sphi 0, %s94
    %s120 = sphi 0, %s122
    %s123 = sphi 0, %s120
    %s124 = sphi 0, %s123
    %s140 = sphi 0, %s124
  $region4: #{conv_block_forward.4} parent=0 // loop_header_branch
    %12 = sbr.rel (%p10) target = $region8
  $region5: #{conv_block_forward.4} parent=0 // loop_body
    %s14 = ssub.s32 %s9, 1
    %s15 = ssub.s32 %s9, 2
    %s25 = sadd.s32 1, %s18
    %p26 = scmp.ge.s32.totalorder %s25, 1
    %s27 = scalar_select %p26, 0, %s25
    %s28 = sadd.s32 1, %s17
    %s29 = scalar_select %p26, %s28, %s17
    %p30 = scmp.ge.s32.totalorder %s29, 1
    %s31 = scalar_select %p30, 0, %s29
    %s32 = sadd.s32 1, %s16
    %s33 = scalar_select %p30, %s32, %s16
    %p34 = scmp.ge.s32.totalorder %s33, 2
    %s35 = scalar_select %p34, 0, %s33
    %s36 = ssub.s32 %s16, %s35
    %p37 = scmp.eq.s32.totalorder %s36, 0
    %s39 = sadd.s32 %s38, 1
    %s40 = scalar_select %p37, %s38, %s39
    %p43 = pneg %p37
    %p44 = scmp.eq.s32.totalorder %s9, 1
    %p45 = por %p43, %p44
    %p46 = scmp.ne.s32.totalorder %s38, %s41
    %p47 = scmp.eq.s32.totalorder %s9, 0
    %p48 = por %p46, %p47
    %p49 = scmp.ne.s32.totalorder %s38, %s41
    %p50 = scmp.eq.s32.totalorder %s14, 1
    %p51 = por %p49, %p50
    %p52 = scmp.ne.s32.totalorder %s41, %s42
    %p53 = scmp.eq.s32.totalorder %s14, 0
    %p54 = por %p52, %p53
    %p55 = scmp.ne.s32.totalorder %s41, %s42
    %p56 = scmp.eq.s32.totalorder %s15, 1
    %p57 = por %p55, %p56
    %p59 = scmp.ne.s32.totalorder %s42, %s58
    %p60 = scmp.eq.s32.totalorder %s15, 0
    %p61 = por %p59, %p60
    %s62 = ssub.s32 %s18, %s27
    %p63 = scmp.eq.s32.totalorder %s62, 0
    %s65 = sadd.s32 %s64, 1
    %s66 = scalar_select %p63, %s64, %s65
    %p69 = pneg %p63
    %p70 = scmp.eq.s32.totalorder %s9, 1
    %p71 = por %p69, %p70
    %p72 = scmp.ne.s32.totalorder %s64, %s67
    %p73 = scmp.eq.s32.totalorder %s9, 0
    %p74 = por %p72, %p73
    %p75 = scmp.ne.s32.totalorder %s64, %s67
    %p76 = scmp.eq.s32.totalorder %s14, 1
    %p77 = por %p75, %p76
    %p78 = scmp.ne.s32.totalorder %s67, %s68
    %p79 = scmp.eq.s32.totalorder %s14, 0
    %p80 = por %p78, %p79
    %p81 = scmp.ne.s32.totalorder %s67, %s68
    %p82 = scmp.eq.s32.totalorder %s15, 1
    %p83 = por %p81, %p82
    %p85 = scmp.ne.s32.totalorder %s68, %s84
    %p86 = scmp.eq.s32.totalorder %s15, 0
    %p87 = por %p85, %p86
    %s88 = ssub.s32 %s18, %s27
    %p89 = scmp.eq.s32.totalorder %s88, 0
    %s91 = sadd.s32 %s90, 1
    %s92 = scalar_select %p89, %s90, %s91
    %p95 = pneg %p89
    %p96 = scmp.eq.s32.totalorder %s9, 1
    %p97 = por %p95, %p96
    %p98 = scmp.ne.s32.totalorder %s90, %s93
    %p99 = scmp.eq.s32.totalorder %s9, 0
    %p100 = por %p98, %p99
    %p101 = scmp.ne.s32.totalorder %s90, %s93
    %p102 = scmp.eq.s32.totalorder %s14, 1
    %p103 = por %p101, %p102
    %p104 = scmp.ne.s32.totalorder %s93, %s94
    %p105 = scmp.eq.s32.totalorder %s14, 0
    %p106 = por %p104, %p105
    %p107 = scmp.ne.s32.totalorder %s93, %s94
    %p108 = scmp.eq.s32.totalorder %s15, 1
    %p109 = por %p107, %p108
    %p111 = scmp.ne.s32.totalorder %s94, %s110
    %p112 = scmp.eq.s32.totalorder %s15, 0
    %p113 = por %p111, %p112
    %s114 = ssub.s32 %s16, %s35
    %s115 = ssub.s32 %s17, %s31
    %s116 = sor.u32 %s114, %s115
    %s117 = ssub.s32 %s18, %s27
    %s118 = sor.u32 %s116, %s117
    %p119 = scmp.eq.s32.totalorder %s118, 0
    %s121 = sadd.s32 %s120, 1
    %s122 = scalar_select %p119, %s120, %s121
    %p125 = pneg %p119
    %p126 = scmp.eq.s32.totalorder %s9, 1
    %p127 = por %p125, %p126
    %p128 = scmp.ne.s32.totalorder %s120, %s123
    %p129 = scmp.eq.s32.totalorder %s9, 0
    %p130 = por %p128, %p129
    %p131 = scmp.ne.s32.totalorder %s120, %s123
    %p132 = scmp.eq.s32.totalorder %s14, 1
    %p133 = por %p131, %p132
    %p134 = scmp.ne.s32.totalorder %s123, %s124
    %p135 = scmp.eq.s32.totalorder %s14, 0
    %p136 = por %p134, %p135
    %p137 = scmp.ne.s32.totalorder %s123, %s124
    %p138 = scmp.eq.s32.totalorder %s15, 1
    %p139 = por %p137, %p138
    %p141 = scmp.ne.s32.totalorder %s124, %s140
    %p142 = scmp.eq.s32.totalorder %s15, 0
    %p143 = por %p141, %p142
    %p144 = scmp.le.s32.totalorder 1, %s9
    %p145 = scmp.lt.s32.totalorder %s9, 3
    %p146 = pnand %p144, %p145
    %p147 = pneg %p146
    // Predicated region
    $region9: #{conv_block_forward.4} parent=5 // pred_check
      _
    $region10: #{conv_block_forward.4} parent=5 // pred_check_branch
      %149 = sbr.rel (%p146) target = $region12
    $region11: #{conv_block_forward.4} parent=5 // pred_region
      %s150 = ssub.s32 %s9, 1
      // Predicated region
      $region13: #{conv_block_forward.4} parent=11 // pred_check
        %p151 = pneg %p80
      $region14: #{conv_block_forward.4} parent=11 // pred_check_branch
        %153 = sbr.rel (%p151) target = $region16
      $region15: #{conv_block_forward.4} parent=11 // pred_region
        %p154 = scmp.lt.s32.totalorder %s21, 0
        %s155 = scalar_select %p154, %s21, 0
        %s156 = smul.addr %s155, 4
        %s157 = scalar_lea.vmem %s1, %s156
      $region16: #{conv_block_forward.4} parent=11 // pred_fallthru
        _
      // Predicated region
      $region17: #{conv_block_forward.4} parent=11 // pred_check
        %p158 = pneg %p106
      $region18: #{conv_block_forward.4} parent=11 // pred_check_branch
        %160 = sbr.rel (%p158) target = $region20
      $region19: #{conv_block_forward.4} parent=11 // pred_region
        %p161 = scmp.lt.s32.totalorder %s21, 0
        %s162 = scalar_select %p161, %s21, 0
        %s163 = scalar_lea.vmem %s2, %s162
      $region20: #{conv_block_forward.4} parent=11 // pred_fallthru
        _
    $region12: #{conv_block_forward.4} parent=5 // pred_fallthru
      _
    %p164 = scmp.lt.s32.totalorder %s9, 2
    // Predicated region
    $region21: #{conv_block_forward.4} parent=5 // pred_check
      %p165 = pneg %p164
    $region22: #{conv_block_forward.4} parent=5 // pred_check_branch
      %167 = sbr.rel (%p165) target = $region24
    $region23: #{conv_block_forward.4} parent=5 // pred_region
      // Predicated region
      $region25: #{conv_block_forward.4} parent=23 // pred_check
        %p168 = pneg %p48
      $region26: #{conv_block_forward.4} parent=23 // pred_check_branch
        %170 = sbr.rel (%p168) target = $region28
      $region27: #{conv_block_forward.4} parent=23 // pred_region
        %p171 = scmp.lt.s32.totalorder %s16, 1
        %s172 = scalar_select %p171, %s16, 1
        %s173 = smul.addr %s172, 54
        %s174 = smul.addr %s173, 4
        %s175 = scalar_lea.vmem %s0, %s174
      $region28: #{conv_block_forward.4} parent=23 // pred_fallthru
        _
    $region24: #{conv_block_forward.4} parent=5 // pred_fallthru
      _
    %p176 = scmp.le.s32.totalorder 1, %s9
    %p177 = scmp.lt.s32.totalorder %s9, 3
    %p178 = pnand %p176, %p177
    %p179 = pneg %p178
    // Predicated region
    $region29: #{conv_block_forward.4} parent=5 // pred_check
      _
    $region30: #{conv_block_forward.4} parent=5 // pred_check_branch
      %181 = sbr.rel (%p178) target = $region32
    $region31: #{conv_block_forward.4} parent=5 // pred_region
      %s182 = ssub.s32 %s9, 1
      %p183 = scmp.lt.s32.totalorder %s19, 1
      %s184 = scalar_select %p183, %s19, 1
      %s185 = smul.addr %s184, 54
      %s186 = smul.addr %s185, 4
      %s187 = scalar_lea.vmem %s0, %s186
      %p188 = pneg %p54
      %p189 = pneg %p51
      %p190 = scmp.lt.s32.totalorder %s21, 0
      %s191 = scalar_select %p190, %s21, 0
      %s192 = smul.addr %s191, 4
      %s193 = scalar_lea.vmem %s1, %s192
      %p194 = pneg %p80
      %p195 = pneg %p77
      %p196 = scmp.lt.s32.totalorder %s21, 0
      %s197 = scalar_select %p196, %s21, 0
      %s198 = scalar_lea.vmem %s2, %s197
      %p199 = pneg %p106
      %p200 = pneg %p103
      %p201 = pneg %p136
      %p202 = pneg %p133
      %s203 = smul.u32 16, %s20
      %p204 = scmp.lt.s32.totalorder %s19, 1
      %s205 = scalar_select %p204, %s19, 1
      %p206 = scmp.lt.s32.totalorder %s203, 15
      %s207 = scalar_select %p206, %s203, 15
      %p208 = scmp.lt.s32.totalorder %s21, 0
      %s209 = scalar_select %p208, %s21, 0
      %s210 = smul.addr %s207, 2
      %s211 = sadd.s32 %s209, %s210
      %s212 = smul.addr %s205, 32
      %s213 = sadd.s32 %s211, %s212
      %s214 = smul.addr %s213, 4
      %s215 = scalar_lea.vmem %s3, %s214
      %p216 = scmp.lt.s32.totalorder %s19, 1
      %s217 = scalar_select %p216, %s19, 1
      %s218 = smul.addr %s217, 54
      %s219 = smul.addr %s218, 4
      %s220 = scalar_lea.vmem %s0, %s219
      %p221 = scmp.lt.s32.totalorder %s21, 0
      %s222 = scalar_select %p221, %s21, 0
      %s223 = smul.addr %s222, 4
      %s224 = scalar_lea.vmem %s1, %s223
      %p225 = scmp.lt.s32.totalorder %s21, 0
      %s226 = scalar_select %p225, %s21, 0
      %s227 = scalar_lea.vmem %s2, %s226
      %s228 = smul.u32 16, %s20
      %p229 = scmp.lt.s32.totalorder %s19, 1
      %s230 = scalar_select %p229, %s19, 1
      %p231 = scmp.lt.s32.totalorder %s228, 15
      %s232 = scalar_select %p231, %s228, 15
      %p233 = scmp.lt.s32.totalorder %s21, 0
      %s234 = scalar_select %p233, %s21, 0
      %s235 = smul.addr %s232, 2
      %s236 = sadd.s32 %s234, %s235
      %s237 = smul.addr %s230, 32
      %s238 = sadd.s32 %s236, %s237
      %s239 = smul.addr %s238, 4
      %s240 = scalar_lea.vmem %s3, %s239
      %s241 = smul.u32 16, %s20
      %s242 = smul.u32 %s20, 16
      %s243 = smul.u32 %s242, 3
      %s244 = smul.addr %s243, 4
      %s245 = scalar_lea.vmem %s220, %s244
      %v246 = vld [vmem:[%s245] sm:$0xf]
      %v247 = vld [vmem:[%s245 + $0x4] sm:$0xf]
      %v248 = vld [vmem:[%s245 + $0xc] sm:$0xf]
      %v249 = vld [vmem:[%s245 + $0x10] sm:$0xf]
      %v250 = vld [vmem:[%s245 + $0x18] sm:$0xf]
      %v251 = vld [vmem:[%s245 + $0x1c] sm:$0xf]
      %v252 = vld [vmem:[%s245 + $0x24] sm:$0xf]
      %v253 = vld [vmem:[%s245 + $0x28] sm:$0xf]
      %v254 = vld [vmem:[%s245 + $0x30] sm:$0xf]
      %v255 = vld [vmem:[%s245 + $0x34] sm:$0xf]
      %v256 = vld [vmem:[%s245 + $0x3c] sm:$0xf]
      %v257 = vld [vmem:[%s245 + $0x40] sm:$0xf]
      %v258 = vld [vmem:[%s245 + $0x48] sm:$0xf]
      %v259 = vld [vmem:[%s245 + $0x4c] sm:$0xf]
      %v260 = vld [vmem:[%s245 + $0x54] sm:$0xf]
      %v261 = vld [vmem:[%s245 + $0x58] sm:$0xf]
      %v262 = vld [vmem:[%s245 + $0x60] sm:$0xf]
      %v263 = vld [vmem:[%s245 + $0x64] sm:$0xf]
      %v264 = vld [vmem:[%s245 + $0x6c] sm:$0xf]
      %v265 = vld [vmem:[%s245 + $0x70] sm:$0xf]
      %v266 = vld [vmem:[%s245 + $0x78] sm:$0xf]
      %v267 = vld [vmem:[%s245 + $0x7c] sm:$0xf]
      %v268 = vld [vmem:[%s245 + $0x84] sm:$0xf]
      %v269 = vld [vmem:[%s245 + $0x88] sm:$0xf]
      %v270 = vld [vmem:[%s245 + $0x90] sm:$0xf]
      %v271 = vld [vmem:[%s245 + $0x94] sm:$0xf]
      %v272 = vld [vmem:[%s245 + $0x9c] sm:$0xf]
      %v273 = vld [vmem:[%s245 + $0xa0] sm:$0xf]
      %v274 = vld [vmem:[%s245 + $0xa8] sm:$0xf]
      %v275 = vld [vmem:[%s245 + $0xac] sm:$0xf]
      %v276 = vld [vmem:[%s245 + $0xb4] sm:$0xf]
      %v277 = vld [vmem:[%s245 + $0xb8] sm:$0xf]
      %278 = vst [vmem:[#allocation3] sm:$0xf] %v246
      %279 = vst [vmem:[#allocation3 + $0xc] sm:$0xf] %v247
      %280 = vst [vmem:[#allocation3 + $0x18] sm:$0xf] %v248
      %281 = vst [vmem:[#allocation3 + $0x24] sm:$0xf] %v249
      %282 = vst [vmem:[#allocation3 + $0x30] sm:$0xf] %v250
      %283 = vst [vmem:[#allocation3 + $0x3c] sm:$0xf] %v251
      %284 = vst [vmem:[#allocation3 + $0x48] sm:$0xf] %v252
      %285 = vst [vmem:[#allocation3 + $0x54] sm:$0xf] %v253
      %286 = vst [vmem:[#allocation3 + $0x60] sm:$0xf] %v254
      %287 = vst [vmem:[#allocation3 + $0x6c] sm:$0xf] %v255
      %288 = vst [vmem:[#allocation3 + $0x78] sm:$0xf] %v256
      %289 = vst [vmem:[#allocation3 + $0x84] sm:$0xf] %v257
      %290 = vst [vmem:[#allocation3 + $0x90] sm:$0xf] %v258
      %291 = vst [vmem:[#allocation3 + $0x9c] sm:$0xf] %v259
      %292 = vst [vmem:[#allocation3 + $0xa8] sm:$0xf] %v260
      %293 = vst [vmem:[#allocation3 + $0xb4] sm:$0xf] %v261
      %294 = vst [vmem:[#allocation3 + $0xc0] sm:$0xf] %v262
      %295 = vst [vmem:[#allocation3 + $0xcc] sm:$0xf] %v263
      %296 = vst [vmem:[#allocation3 + $0xd8] sm:$0xf] %v264
      %297 = vst [vmem:[#allocation3 + $0xe4] sm:$0xf] %v265
      %298 = vst [vmem:[#allocation3 + $0xf0] sm:$0xf] %v266
      %299 = vst [vmem:[#allocation3 + $0xfc] sm:$0xf] %v267
      %300 = vst [vmem:[#allocation3 + $0x108] sm:$0xf] %v268
      %301 = vst [vmem:[#allocation3 + $0x114] sm:$0xf] %v269
      %302 = vst [vmem:[#allocation3 + $0x120] sm:$0xf] %v270
      %303 = vst [vmem:[#allocation3 + $0x12c] sm:$0xf] %v271
      %304 = vst [vmem:[#allocation3 + $0x138] sm:$0xf] %v272
      %305 = vst [vmem:[#allocation3 + $0x144] sm:$0xf] %v273
      %306 = vst [vmem:[#allocation3 + $0x150] sm:$0xf] %v274
      %307 = vst [vmem:[#allocation3 + $0x15c] sm:$0xf] %v275
      %308 = vst [vmem:[#allocation3 + $0x168] sm:$0xf] %v276
      %309 = vst [vmem:[#allocation3 + $0x174] sm:$0xf] %v277
      %v310 = vld [vmem:[%s245] sm:$0xf]
      %v311 = vld [vmem:[%s245 + $0x4] sm:$0xf]
      %v312 = vld [vmem:[%s245 + $0x8] sm:$0x1]
      %v313 = vld [vmem:[%s245 + $0xc] sm:$0xf]
      %v314 = vld [vmem:[%s245 + $0x10] sm:$0xf]
      %v315 = vld [vmem:[%s245 + $0x14] sm:$0x1]
      %v316 = vld [vmem:[%s245 + $0x18] sm:$0xf]
      %v317 = vld [vmem:[%s245 + $0x1c] sm:$0xf]
      %v318 = vld [vmem:[%s245 + $0x20] sm:$0x1]
      %v319 = vld [vmem:[%s245 + $0x24] sm:$0xf]
      %v320 = vld [vmem:[%s245 + $0x28] sm:$0xf]
      %v321 = vld [vmem:[%s245 + $0x2c] sm:$0x1]
      %v322 = vld [vmem:[%s245 + $0x30] sm:$0xf]
      %v323 = vld [vmem:[%s245 + $0x34] sm:$0xf]
      %v324 = vld [vmem:[%s245 + $0x38] sm:$0x1]
      %v325 = vld [vmem:[%s245 + $0x3c] sm:$0xf]
      %v326 = vld [vmem:[%s245 + $0x40] sm:$0xf]
      %v327 = vld [vmem:[%s245 + $0x44] sm:$0x1]
      %v328 = vld [vmem:[%s245 + $0x48] sm:$0xf]
      %v329 = vld [vmem:[%s245 + $0x4c] sm:$0xf]
      %v330 = vld [vmem:[%s245 + $0x50] sm:$0x1]
      %v331 = vld [vmem:[%s245 + $0x54] sm:$0xf]
      %v332 = vld [vmem:[%s245 + $0x58] sm:$0xf]
      %v333 = vld [vmem:[%s245 + $0x5c] sm:$0x1]
      %v334 = vld [vmem:[%s245 + $0x60] sm:$0xf]
      %v335 = vld [vmem:[%s245 + $0x64] sm:$0xf]
      %v336 = vld [vmem:[%s245 + $0x68] sm:$0x1]
      %v337 = vld [vmem:[%s245 + $0x6c] sm:$0xf]
      %v338 = vld [vmem:[%s245 + $0x70] sm:$0xf]
      %v339 = vld [vmem:[%s245 + $0x74] sm:$0x1]
      %v340 = vld [vmem:[%s245 + $0x78] sm:$0xf]
      %v341 = vld [vmem:[%s245 + $0x7c] sm:$0xf]
      %v342 = vld [vmem:[%s245 + $0x80] sm:$0x1]
      %v343 = vld [vmem:[%s245 + $0x84] sm:$0xf]
      %v344 = vld [vmem:[%s245 + $0x88] sm:$0xf]
      %v345 = vld [vmem:[%s245 + $0x8c] sm:$0x1]
      %v346 = vld [vmem:[%s245 + $0x90] sm:$0xf]
      %v347 = vld [vmem:[%s245 + $0x94] sm:$0xf]
      %v348 = vld [vmem:[%s245 + $0x98] sm:$0x1]
      %v349 = vld [vmem:[%s245 + $0x9c] sm:$0xf]
      %v350 = vld [vmem:[%s245 + $0xa0] sm:$0xf]
      %v351 = vld [vmem:[%s245 + $0xa4] sm:$0x1]
      %v352 = vld [vmem:[%s245 + $0xa8] sm:$0xf]
      %v353 = vld [vmem:[%s245 + $0xac] sm:$0xf]
      %v354 = vld [vmem:[%s245 + $0xb0] sm:$0x1]
      %v355 = vld [vmem:[%s245 + $0xb4] sm:$0xf]
      %v356 = vld [vmem:[%s245 + $0xb8] sm:$0xf]
      %v357 = vld [vmem:[%s245 + $0xbc] sm:$0x1]
      %vm358 = vsmask.f32 3328
      %vm359 = vsmask.f32 7440
      %vm360 = vmor %vm358, %vm359
      %v362 = vshrl.u32 %v310, 16
      %v364 = vrot.slane %v362, 4
      %v365 = vshll.u32 %v310, 16
      %v367 = vrot.slane %v365, 5
      %v368 = vor.u32 %v364, %v367
      %v369 = vrot.slane %v368, 4
      %v371 = vshll.u32 %v311, 16
      %v373 = vrot.slane %v371, 5
      %v374 = vsel %vm360, %v369, %v373
      %v375 = vshrl.u32 %v311, 16
      %v377 = vrot.slane %v375, 4
      %v378 = vor.u32 %v377, %v373
      %v379 = vrot.slane %v378, 4
      %v381 = vshll.u32 %v312, 16
      %v383 = vrot.slane %v381, 5
      %v384 = vsel %vm360, %v379, %v383
      %v386 = vshrl.u32 %v313, 16
      %v388 = vrot.slane %v386, 4
      %v389 = vshll.u32 %v313, 16
      %v391 = vrot.slane %v389, 5
      %v392 = vor.u32 %v388, %v391
      %v393 = vrot.slane %v392, 4
      %v395 = vshll.u32 %v314, 16
      %v397 = vrot.slane %v395, 5
      %v398 = vsel %vm360, %v393, %v397
      %v399 = vshrl.u32 %v314, 16
      %v401 = vrot.slane %v399, 4
      %v402 = vor.u32 %v401, %v397
      %v403 = vrot.slane %v402, 4
      %v405 = vshll.u32 %v315, 16
      %v407 = vrot.slane %v405, 5
      %v408 = vsel %vm360, %v403, %v407
      %v410 = vshrl.u32 %v316, 16
      %v412 = vrot.slane %v410, 4
      %v413 = vshll.u32 %v316, 16
      %v415 = vrot.slane %v413, 5
      %v416 = vor.u32 %v412, %v415
      %v417 = vrot.slane %v416, 4
      %v419 = vshll.u32 %v317, 16
      %v421 = vrot.slane %v419, 5
      %v422 = vsel %vm360, %v417, %v421
      %v423 = vshrl.u32 %v317, 16
      %v425 = vrot.slane %v423, 4
      %v426 = vor.u32 %v425, %v421
      %v427 = vrot.slane %v426, 4
      %v429 = vshll.u32 %v318, 16
      %v431 = vrot.slane %v429, 5
      %v432 = vsel %vm360, %v427, %v431
      %v434 = vshrl.u32 %v319, 16
      %v436 = vrot.slane %v434, 4
      %v437 = vshll.u32 %v319, 16
      %v439 = vrot.slane %v437, 5
      %v440 = vor.u32 %v436, %v439
      %v441 = vrot.slane %v440, 4
      %v443 = vshll.u32 %v320, 16
      %v445 = vrot.slane %v443, 5
      %v446 = vsel %vm360, %v441, %v445
      %v447 = vshrl.u32 %v320, 16
      %v449 = vrot.slane %v447, 4
      %v450 = vor.u32 %v449, %v445
      %v451 = vrot.slane %v450, 4
      %v453 = vshll.u32 %v321, 16
      %v455 = vrot.slane %v453, 5
      %v456 = vsel %vm360, %v451, %v455
      %v458 = vshrl.u32 %v322, 16
      %v460 = vrot.slane %v458, 4
      %v461 = vshll.u32 %v322, 16
      %v463 = vrot.slane %v461, 5
      %v464 = vor.u32 %v460, %v463
      %v465 = vrot.slane %v464, 4
      %v467 = vshll.u32 %v323, 16
      %v469 = vrot.slane %v467, 5
      %v470 = vsel %vm360, %v465, %v469
      %v471 = vshrl.u32 %v323, 16
      %v473 = vrot.slane %v471, 4
      %v474 = vor.u32 %v473, %v469
      %v475 = vrot.slane %v474, 4
      %v477 = vshll.u32 %v324, 16
      %v479 = vrot.slane %v477, 5
      %v480 = vsel %vm360, %v475, %v479
      %v482 = vshrl.u32 %v325, 16
      %v484 = vrot.slane %v482, 4
      %v485 = vshll.u32 %v325, 16
      %v487 = vrot.slane %v485, 5
      %v488 = vor.u32 %v484, %v487
      %v489 = vrot.slane %v488, 4
      %v491 = vshll.u32 %v326, 16
      %v493 = vrot.slane %v491, 5
      %v494 = vsel %vm360, %v489, %v493
      %v495 = vshrl.u32 %v326, 16
      %v497 = vrot.slane %v495, 4
      %v498 = vor.u32 %v497, %v493
      %v499 = vrot.slane %v498, 4
      %v501 = vshll.u32 %v327, 16
      %v503 = vrot.slane %v501, 5
      %v504 = vsel %vm360, %v499, %v503
      %v506 = vshrl.u32 %v328, 16
      %v508 = vrot.slane %v506, 4
      %v509 = vshll.u32 %v328, 16
      %v511 = vrot.slane %v509, 5
      %v512 = vor.u32 %v508, %v511
      %v513 = vrot.slane %v512, 4
      %v515 = vshll.u32 %v329, 16
      %v517 = vrot.slane %v515, 5
      %v518 = vsel %vm360, %v513, %v517
      %v519 = vshrl.u32 %v329, 16
      %v521 = vrot.slane %v519, 4
      %v522 = vor.u32 %v521, %v517
      %v523 = vrot.slane %v522, 4
      %v525 = vshll.u32 %v330, 16
      %v527 = vrot.slane %v525, 5
      %v528 = vsel %vm360, %v523, %v527
      %v530 = vshrl.u32 %v331, 16
      %v532 = vrot.slane %v530, 4
      %v533 = vshll.u32 %v331, 16
      %v535 = vrot.slane %v533, 5
      %v536 = vor.u32 %v532, %v535
      %v537 = vrot.slane %v536, 4
      %v539 = vshll.u32 %v332, 16
      %v541 = vrot.slane %v539, 5
      %v542 = vsel %vm360, %v537, %v541
      %v543 = vshrl.u32 %v332, 16
      %v545 = vrot.slane %v543, 4
      %v546 = vor.u32 %v545, %v541
      %v547 = vrot.slane %v546, 4
      %v549 = vshll.u32 %v333, 16
      %v551 = vrot.slane %v549, 5
      %v552 = vsel %vm360, %v547, %v551
      %v554 = vshrl.u32 %v334, 16
      %v556 = vrot.slane %v554, 4
      %v557 = vshll.u32 %v334, 16
      %v559 = vrot.slane %v557, 5
      %v560 = vor.u32 %v556, %v559
      %v561 = vrot.slane %v560, 4
      %v563 = vshll.u32 %v335, 16
      %v565 = vrot.slane %v563, 5
      %v566 = vsel %vm360, %v561, %v565
      %v567 = vshrl.u32 %v335, 16
      %v569 = vrot.slane %v567, 4
      %v570 = vor.u32 %v569, %v565
      %v571 = vrot.slane %v570, 4
      %v573 = vshll.u32 %v336, 16
      %v575 = vrot.slane %v573, 5
      %v576 = vsel %vm360, %v571, %v575
      %v578 = vshrl.u32 %v337, 16
      %v580 = vrot.slane %v578, 4
      %v581 = vshll.u32 %v337, 16
      %v583 = vrot.slane %v581, 5
      %v584 = vor.u32 %v580, %v583
      %v585 = vrot.slane %v584, 4
      %v587 = vshll.u32 %v338, 16
      %v589 = vrot.slane %v587, 5
      %v590 = vsel %vm360, %v585, %v589
      %v591 = vshrl.u32 %v338, 16
      %v593 = vrot.slane %v591, 4
      %v594 = vor.u32 %v593, %v589
      %v595 = vrot.slane %v594, 4
      %v597 = vshll.u32 %v339, 16
      %v599 = vrot.slane %v597, 5
      %v600 = vsel %vm360, %v595, %v599
      %v602 = vshrl.u32 %v340, 16
      %v604 = vrot.slane %v602, 4
      %v605 = vshll.u32 %v340, 16
      %v607 = vrot.slane %v605, 5
      %v608 = vor.u32 %v604, %v607
      %v609 = vrot.slane %v608, 4
      %v611 = vshll.u32 %v341, 16
      %v613 = vrot.slane %v611, 5
      %v614 = vsel %vm360, %v609, %v613
      %v615 = vshrl.u32 %v341, 16
      %v617 = vrot.slane %v615, 4
      %v618 = vor.u32 %v617, %v613
      %v619 = vrot.slane %v618, 4
      %v621 = vshll.u32 %v342, 16
      %v623 = vrot.slane %v621, 5
      %v624 = vsel %vm360, %v619, %v623
      %v626 = vshrl.u32 %v343, 16
      %v628 = vrot.slane %v626, 4
      %v629 = vshll.u32 %v343, 16
      %v631 = vrot.slane %v629, 5
      %v632 = vor.u32 %v628, %v631
      %v633 = vrot.slane %v632, 4
      %v635 = vshll.u32 %v344, 16
      %v637 = vrot.slane %v635, 5
      %v638 = vsel %vm360, %v633, %v637
      %v639 = vshrl.u32 %v344, 16
      %v641 = vrot.slane %v639, 4
      %v642 = vor.u32 %v641, %v637
      %v643 = vrot.slane %v642, 4
      %v645 = vshll.u32 %v345, 16
      %v647 = vrot.slane %v645, 5
      %v648 = vsel %vm360, %v643, %v647
      %v650 = vshrl.u32 %v346, 16
      %v652 = vrot.slane %v650, 4
      %v653 = vshll.u32 %v346, 16
      %v655 = vrot.slane %v653, 5
      %v656 = vor.u32 %v652, %v655
      %v657 = vrot.slane %v656, 4
      %v659 = vshll.u32 %v347, 16
      %v661 = vrot.slane %v659, 5
      %v662 = vsel %vm360, %v657, %v661
      %v663 = vshrl.u32 %v347, 16
      %v665 = vrot.slane %v663, 4
      %v666 = vor.u32 %v665, %v661
      %v667 = vrot.slane %v666, 4
      %v669 = vshll.u32 %v348, 16
      %v671 = vrot.slane %v669, 5
      %v672 = vsel %vm360, %v667, %v671
      %v674 = vshrl.u32 %v349, 16
      %v676 = vrot.slane %v674, 4
      %v677 = vshll.u32 %v349, 16
      %v679 = vrot.slane %v677, 5
      %v680 = vor.u32 %v676, %v679
      %v681 = vrot.slane %v680, 4
      %v683 = vshll.u32 %v350, 16
      %v685 = vrot.slane %v683, 5
      %v686 = vsel %vm360, %v681, %v685
      %v687 = vshrl.u32 %v350, 16
      %v689 = vrot.slane %v687, 4
      %v690 = vor.u32 %v689, %v685
      %v691 = vrot.slane %v690, 4
      %v693 = vshll.u32 %v351, 16
      %v695 = vrot.slane %v693, 5
      %v696 = vsel %vm360, %v691, %v695
      %v698 = vshrl.u32 %v352, 16
      %v700 = vrot.slane %v698, 4
      %v701 = vshll.u32 %v352, 16
      %v703 = vrot.slane %v701, 5
      %v704 = vor.u32 %v700, %v703
      %v705 = vrot.slane %v704, 4
      %v707 = vshll.u32 %v353, 16
      %v709 = vrot.slane %v707, 5
      %v710 = vsel %vm360, %v705, %v709
      %v711 = vshrl.u32 %v353, 16
      %v713 = vrot.slane %v711, 4
      %v714 = vor.u32 %v713, %v709
      %v715 = vrot.slane %v714, 4
      %v717 = vshll.u32 %v354, 16
      %v719 = vrot.slane %v717, 5
      %v720 = vsel %vm360, %v715, %v719
      %v722 = vshrl.u32 %v355, 16
      %v724 = vrot.slane %v722, 4
      %v725 = vshll.u32 %v355, 16
      %v727 = vrot.slane %v725, 5
      %v728 = vor.u32 %v724, %v727
      %v729 = vrot.slane %v728, 4
      %v731 = vshll.u32 %v356, 16
      %v733 = vrot.slane %v731, 5
      %v734 = vsel %vm360, %v729, %v733
      %v735 = vshrl.u32 %v356, 16
      %v737 = vrot.slane %v735, 4
      %v738 = vor.u32 %v737, %v733
      %v739 = vrot.slane %v738, 4
      %v741 = vshll.u32 %v357, 16
      %v743 = vrot.slane %v741, 5
      %v744 = vsel %vm360, %v739, %v743
      %777 = vst [vmem:[#allocation3 + $0x4] sm:$0xf] %v374
      %778 = vst [vmem:[#allocation3 + $0x10] sm:$0xf] %v384
      %779 = vst [vmem:[#allocation3 + $0x1c] sm:$0xf] %v398
      %780 = vst [vmem:[#allocation3 + $0x28] sm:$0xf] %v408
      %781 = vst [vmem:[#allocation3 + $0x34] sm:$0xf] %v422
      %782 = vst [vmem:[#allocation3 + $0x40] sm:$0xf] %v432
      %783 = vst [vmem:[#allocation3 + $0x4c] sm:$0xf] %v446
      %784 = vst [vmem:[#allocation3 + $0x58] sm:$0xf] %v456
      %785 = vst [vmem:[#allocation3 + $0x64] sm:$0xf] %v470
      %786 = vst [vmem:[#allocation3 + $0x70] sm:$0xf] %v480
      %787 = vst [vmem:[#allocation3 + $0x7c] sm:$0xf] %v494
      %788 = vst [vmem:[#allocation3 + $0x88] sm:$0xf] %v504
      %789 = vst [vmem:[#allocation3 + $0x94] sm:$0xf] %v518
      %790 = vst [vmem:[#allocation3 + $0xa0] sm:$0xf] %v528
      %791 = vst [vmem:[#allocation3 + $0xac] sm:$0xf] %v542
      %792 = vst [vmem:[#allocation3 + $0xb8] sm:$0xf] %v552
      %793 = vst [vmem:[#allocation3 + $0xc4] sm:$0xf] %v566
      %794 = vst [vmem:[#allocation3 + $0xd0] sm:$0xf] %v576
      %795 = vst [vmem:[#allocation3 + $0xdc] sm:$0xf] %v590
      %796 = vst [vmem:[#allocation3 + $0xe8] sm:$0xf] %v600
      %797 = vst [vmem:[#allocation3 + $0xf4] sm:$0xf] %v614
      %798 = vst [vmem:[#allocation3 + $0x100] sm:$0xf] %v624
      %799 = vst [vmem:[#allocation3 + $0x10c] sm:$0xf] %v638
      %800 = vst [vmem:[#allocation3 + $0x118] sm:$0xf] %v648
      %801 = vst [vmem:[#allocation3 + $0x124] sm:$0xf] %v662
      %802 = vst [vmem:[#allocation3 + $0x130] sm:$0xf] %v672
      %803 = vst [vmem:[#allocation3 + $0x13c] sm:$0xf] %v686
      %804 = vst [vmem:[#allocation3 + $0x148] sm:$0xf] %v696
      %805 = vst [vmem:[#allocation3 + $0x154] sm:$0xf] %v710
      %806 = vst [vmem:[#allocation3 + $0x160] sm:$0xf] %v720
      %807 = vst [vmem:[#allocation3 + $0x16c] sm:$0xf] %v734
      %808 = vst [vmem:[#allocation3 + $0x178] sm:$0xf] %v744
      %v809 = vld [vmem:[%s245] sm:$0xe]
      %v810 = vld [vmem:[%s245 + $0x4] sm:$0xf]
      %v811 = vld [vmem:[%s245 + $0x8] sm:$0x1]
      %v812 = vld [vmem:[%s245 + $0xc] sm:$0xe]
      %v813 = vld [vmem:[%s245 + $0x10] sm:$0xf]
      %v814 = vld [vmem:[%s245 + $0x14] sm:$0x1]
      %v815 = vld [vmem:[%s245 + $0x18] sm:$0xe]
      %v816 = vld [vmem:[%s245 + $0x1c] sm:$0xf]
      %v817 = vld [vmem:[%s245 + $0x20] sm:$0x1]
      %v818 = vld [vmem:[%s245 + $0x24] sm:$0xe]
      %v819 = vld [vmem:[%s245 + $0x28] sm:$0xf]
      %v820 = vld [vmem:[%s245 + $0x2c] sm:$0x1]
      %v821 = vld [vmem:[%s245 + $0x30] sm:$0xe]
      %v822 = vld [vmem:[%s245 + $0x34] sm:$0xf]
      %v823 = vld [vmem:[%s245 + $0x38] sm:$0x1]
      %v824 = vld [vmem:[%s245 + $0x3c] sm:$0xe]
      %v825 = vld [vmem:[%s245 + $0x40] sm:$0xf]
      %v826 = vld [vmem:[%s245 + $0x44] sm:$0x1]
      %v827 = vld [vmem:[%s245 + $0x48] sm:$0xe]
      %v828 = vld [vmem:[%s245 + $0x4c] sm:$0xf]
      %v829 = vld [vmem:[%s245 + $0x50] sm:$0x1]
      %v830 = vld [vmem:[%s245 + $0x54] sm:$0xe]
      %v831 = vld [vmem:[%s245 + $0x58] sm:$0xf]
      %v832 = vld [vmem:[%s245 + $0x5c] sm:$0x1]
      %v833 = vld [vmem:[%s245 + $0x60] sm:$0xe]
      %v834 = vld [vmem:[%s245 + $0x64] sm:$0xf]
      %v835 = vld [vmem:[%s245 + $0x68] sm:$0x1]
      %v836 = vld [vmem:[%s245 + $0x6c] sm:$0xe]
      %v837 = vld [vmem:[%s245 + $0x70] sm:$0xf]
      %v838 = vld [vmem:[%s245 + $0x74] sm:$0x1]
      %v839 = vld [vmem:[%s245 + $0x78] sm:$0xe]
      %v840 = vld [vmem:[%s245 + $0x7c] sm:$0xf]
      %v841 = vld [vmem:[%s245 + $0x80] sm:$0x1]
      %v842 = vld [vmem:[%s245 + $0x84] sm:$0xe]
      %v843 = vld [vmem:[%s245 + $0x88] sm:$0xf]
      %v844 = vld [vmem:[%s245 + $0x8c] sm:$0x1]
      %v845 = vld [vmem:[%s245 + $0x90] sm:$0xe]
      %v846 = vld [vmem:[%s245 + $0x94] sm:$0xf]
      %v847 = vld [vmem:[%s245 + $0x98] sm:$0x1]
      %v848 = vld [vmem:[%s245 + $0x9c] sm:$0xe]
      %v849 = vld [vmem:[%s245 + $0xa0] sm:$0xf]
      %v850 = vld [vmem:[%s245 + $0xa4] sm:$0x1]
      %v851 = vld [vmem:[%s245 + $0xa8] sm:$0xe]
      %v852 = vld [vmem:[%s245 + $0xac] sm:$0xf]
      %v853 = vld [vmem:[%s245 + $0xb0] sm:$0x1]
      %v854 = vld [vmem:[%s245 + $0xb4] sm:$0xe]
      %v855 = vld [vmem:[%s245 + $0xb8] sm:$0xf]
      %v856 = vld [vmem:[%s245 + $0xbc] sm:$0x1]
      %vm905 = vcmask 1042432
      %vm906 = vcmask 1046532
      %vm907 = vmor %vm905, %vm906
      %v908 = vrot.slane %v809, 5
      %v909 = vrot.slane %v908, 4
      %v910 = vrot.slane %v810, 5
      %v911 = vsel %vm907, %v909, %v910
      %v912 = vrot.slane %v910, 4
      %v913 = vrot.slane %v811, 5
      %v914 = vsel %vm907, %v912, %v913
      %v915 = vrot.slane %v812, 5
      %v916 = vrot.slane %v915, 4
      %v917 = vrot.slane %v813, 5
      %v918 = vsel %vm907, %v916, %v917
      %v919 = vrot.slane %v917, 4
      %v920 = vrot.slane %v814, 5
      %v921 = vsel %vm907, %v919, %v920
      %v922 = vrot.slane %v815, 5
      %v923 = vrot.slane %v922, 4
      %v924 = vrot.slane %v816, 5
      %v925 = vsel %vm907, %v923, %v924
      %v926 = vrot.slane %v924, 4
      %v927 = vrot.slane %v817, 5
      %v928 = vsel %vm907, %v926, %v927
      %v929 = vrot.slane %v818, 5
      %v930 = vrot.slane %v929, 4
      %v931 = vrot.slane %v819, 5
      %v932 = vsel %vm907, %v930, %v931
      %v933 = vrot.slane %v931, 4
      %v934 = vrot.slane %v820, 5
      %v935 = vsel %vm907, %v933, %v934
      %v936 = vrot.slane %v821, 5
      %v937 = vrot.slane %v936, 4
      %v938 = vrot.slane %v822, 5
      %v939 = vsel %vm907, %v937, %v938
      %v940 = vrot.slane %v938, 4
      %v941 = vrot.slane %v823, 5
      %v942 = vsel %vm907, %v940, %v941
      %v943 = vrot.slane %v824, 5
      %v944 = vrot.slane %v943, 4
      %v945 = vrot.slane %v825, 5
      %v946 = vsel %vm907, %v944, %v945
      %v947 = vrot.slane %v945, 4
      %v948 = vrot.slane %v826, 5
      %v949 = vsel %vm907, %v947, %v948
      %v950 = vrot.slane %v827, 5
      %v951 = vrot.slane %v950, 4
      %v952 = vrot.slane %v828, 5
      %v953 = vsel %vm907, %v951, %v952
      %v954 = vrot.slane %v952, 4
      %v955 = vrot.slane %v829, 5
      %v956 = vsel %vm907, %v954, %v955
      %v957 = vrot.slane %v830, 5
      %v958 = vrot.slane %v957, 4
      %v959 = vrot.slane %v831, 5
      %v960 = vsel %vm907, %v958, %v959
      %v961 = vrot.slane %v959, 4
      %v962 = vrot.slane %v832, 5
      %v963 = vsel %vm907, %v961, %v962
      %v964 = vrot.slane %v833, 5
      %v965 = vrot.slane %v964, 4
      %v966 = vrot.slane %v834, 5
      %v967 = vsel %vm907, %v965, %v966
      %v968 = vrot.slane %v966, 4
      %v969 = vrot.slane %v835, 5
      %v970 = vsel %vm907, %v968, %v969
      %v971 = vrot.slane %v836, 5
      %v972 = vrot.slane %v971, 4
      %v973 = vrot.slane %v837, 5
      %v974 = vsel %vm907, %v972, %v973
      %v975 = vrot.slane %v973, 4
      %v976 = vrot.slane %v838, 5
      %v977 = vsel %vm907, %v975, %v976
      %v978 = vrot.slane %v839, 5
      %v979 = vrot.slane %v978, 4
      %v980 = vrot.slane %v840, 5
      %v981 = vsel %vm907, %v979, %v980
      %v982 = vrot.slane %v980, 4
      %v983 = vrot.slane %v841, 5
      %v984 = vsel %vm907, %v982, %v983
      %v985 = vrot.slane %v842, 5
      %v986 = vrot.slane %v985, 4
      %v987 = vrot.slane %v843, 5
      %v988 = vsel %vm907, %v986, %v987
      %v989 = vrot.slane %v987, 4
      %v990 = vrot.slane %v844, 5
      %v991 = vsel %vm907, %v989, %v990
      %v992 = vrot.slane %v845, 5
      %v993 = vrot.slane %v992, 4
      %v994 = vrot.slane %v846, 5
      %v995 = vsel %vm907, %v993, %v994
      %v996 = vrot.slane %v994, 4
      %v997 = vrot.slane %v847, 5
      %v998 = vsel %vm907, %v996, %v997
      %v999 = vrot.slane %v848, 5
      %v1000 = vrot.slane %v999, 4
      %v1001 = vrot.slane %v849, 5
      %v1002 = vsel %vm907, %v1000, %v1001
      %v1003 = vrot.slane %v1001, 4
      %v1004 = vrot.slane %v850, 5
      %v1005 = vsel %vm907, %v1003, %v1004
      %v1006 = vrot.slane %v851, 5
      %v1007 = vrot.slane %v1006, 4
      %v1008 = vrot.slane %v852, 5
      %v1009 = vsel %vm907, %v1007, %v1008
      %v1010 = vrot.slane %v1008, 4
      %v1011 = vrot.slane %v853, 5
      %v1012 = vsel %vm907, %v1010, %v1011
      %v1013 = vrot.slane %v854, 5
      %v1014 = vrot.slane %v1013, 4
      %v1015 = vrot.slane %v855, 5
      %v1016 = vsel %vm907, %v1014, %v1015
      %v1017 = vrot.slane %v1015, 4
      %v1018 = vrot.slane %v856, 5
      %v1019 = vsel %vm907, %v1017, %v1018
      %1052 = vst [vmem:[#allocation3 + $0x8] sm:$0xf] %v911
      %1053 = vst [vmem:[#allocation3 + $0x14] sm:$0xf] %v914
      %1054 = vst [vmem:[#allocation3 + $0x20] sm:$0xf] %v918
      %1055 = vst [vmem:[#allocation3 + $0x2c] sm:$0xf] %v921
      %1056 = vst [vmem:[#allocation3 + $0x38] sm:$0xf] %v925
      %1057 = vst [vmem:[#allocation3 + $0x44] sm:$0xf] %v928
      %1058 = vst [vmem:[#allocation3 + $0x50] sm:$0xf] %v932
      %1059 = vst [vmem:[#allocation3 + $0x5c] sm:$0xf] %v935
      %1060 = vst [vmem:[#allocation3 + $0x68] sm:$0xf] %v939
      %1061 = vst [vmem:[#allocation3 + $0x74] sm:$0xf] %v942
      %1062 = vst [vmem:[#allocation3 + $0x80] sm:$0xf] %v946
      %1063 = vst [vmem:[#allocation3 + $0x8c] sm:$0xf] %v949
      %1064 = vst [vmem:[#allocation3 + $0x98] sm:$0xf] %v953
      %1065 = vst [vmem:[#allocation3 + $0xa4] sm:$0xf] %v956
      %1066 = vst [vmem:[#allocation3 + $0xb0] sm:$0xf] %v960
      %1067 = vst [vmem:[#allocation3 + $0xbc] sm:$0xf] %v963
      %1068 = vst [vmem:[#allocation3 + $0xc8] sm:$0xf] %v967
      %1069 = vst [vmem:[#allocation3 + $0xd4] sm:$0xf] %v970
      %1070 = vst [vmem:[#allocation3 + $0xe0] sm:$0xf] %v974
      %1071 = vst [vmem:[#allocation3 + $0xec] sm:$0xf] %v977
      %1072 = vst [vmem:[#allocation3 + $0xf8] sm:$0xf] %v981
      %1073 = vst [vmem:[#allocation3 + $0x104] sm:$0xf] %v984
      %1074 = vst [vmem:[#allocation3 + $0x110] sm:$0xf] %v988
      %1075 = vst [vmem:[#allocation3 + $0x11c] sm:$0xf] %v991
      %1076 = vst [vmem:[#allocation3 + $0x128] sm:$0xf] %v995
      %1077 = vst [vmem:[#allocation3 + $0x134] sm:$0xf] %v998
      %1078 = vst [vmem:[#allocation3 + $0x140] sm:$0xf] %v1002
      %1079 = vst [vmem:[#allocation3 + $0x14c] sm:$0xf] %v1005
      %1080 = vst [vmem:[#allocation3 + $0x158] sm:$0xf] %v1009
      %1081 = vst [vmem:[#allocation3 + $0x164] sm:$0xf] %v1012
      %1082 = vst [vmem:[#allocation3 + $0x170] sm:$0xf] %v1016
      %1083 = vst [vmem:[#allocation3 + $0x17c] sm:$0xf] %v1019
      %v1084 = vld [vmem:[#allocation3] sm:$0xff]
      %v1085 = vld [vmem:[#allocation3 + $0x8] sm:$0xf]
      %v1086 = vld [vmem:[#allocation3 + $0xc] sm:$0xff]
      %v1087 = vld [vmem:[#allocation3 + $0x14] sm:$0xf]
      %v1088 = vld [vmem:[#allocation3 + $0x18] sm:$0xff]
      %v1089 = vld [vmem:[#allocation3 + $0x20] sm:$0xf]
      %v1090 = vld [vmem:[#allocation3 + $0x24] sm:$0xff]
      %v1091 = vld [vmem:[#allocation3 + $0x2c] sm:$0xf]
      %v1092 = vld [vmem:[#allocation3 + $0x30] sm:$0xff]
      %v1093 = vld [vmem:[#allocation3 + $0x38] sm:$0xf]
      %v1094 = vld [vmem:[#allocation3 + $0x3c] sm:$0xff]
      %v1095 = vld [vmem:[#allocation3 + $0x44] sm:$0xf]
      %v1096 = vld [vmem:[#allocation3 + $0x48] sm:$0xff]
      %v1097 = vld [vmem:[#allocation3 + $0x50] sm:$0xf]
      %v1098 = vld [vmem:[#allocation3 + $0x54] sm:$0xff]
      %v1099 = vld [vmem:[#allocation3 + $0x5c] sm:$0xf]
      %v1100 = vld [vmem:[#allocation3 + $0x60] sm:$0xff]
      %v1101 = vld [vmem:[#allocation3 + $0x68] sm:$0xf]
      %v1102 = vld [vmem:[#allocation3 + $0x6c] sm:$0xff]
      %v1103 = vld [vmem:[#allocation3 + $0x74] sm:$0xf]
      %v1104 = vld [vmem:[#allocation3 + $0x78] sm:$0xff]
      %v1105 = vld [vmem:[#allocation3 + $0x80] sm:$0xf]
      %v1106 = vld [vmem:[#allocation3 + $0x84] sm:$0xff]
      %v1107 = vld [vmem:[#allocation3 + $0x8c] sm:$0xf]
      %v1108 = vld [vmem:[#allocation3 + $0x90] sm:$0xff]
      %v1109 = vld [vmem:[#allocation3 + $0x98] sm:$0xf]
      %v1110 = vld [vmem:[#allocation3 + $0x9c] sm:$0xff]
      %v1111 = vld [vmem:[#allocation3 + $0xa4] sm:$0xf]
      %v1112 = vld [vmem:[#allocation3 + $0xa8] sm:$0xff]
      %v1113 = vld [vmem:[#allocation3 + $0xb0] sm:$0xf]
      %v1114 = vld [vmem:[#allocation3 + $0xb4] sm:$0xff]
      %v1115 = vld [vmem:[#allocation3 + $0xbc] sm:$0xf]
      %v1116 = vld [vmem:[#allocation3 + $0xc0] sm:$0xff]
      %v1117 = vld [vmem:[#allocation3 + $0xc8] sm:$0xf]
      %v1118 = vld [vmem:[#allocation3 + $0xcc] sm:$0xff]
      %v1119 = vld [vmem:[#allocation3 + $0xd4] sm:$0xf]
      %v1120 = vld [vmem:[#allocation3 + $0xd8] sm:$0xff]
      %v1121 = vld [vmem:[#allocation3 + $0xe0] sm:$0xf]
      %v1122 = vld [vmem:[#allocation3 + $0xe4] sm:$0xff]
      %v1123 = vld [vmem:[#allocation3 + $0xec] sm:$0xf]
      %v1124 = vld [vmem:[#allocation3 + $0xf0] sm:$0xff]
      %v1125 = vld [vmem:[#allocation3 + $0xf8] sm:$0xf]
      %v1126 = vld [vmem:[#allocation3 + $0xfc] sm:$0xff]
      %v1127 = vld [vmem:[#allocation3 + $0x104] sm:$0xf]
      %v1128 = vld [vmem:[#allocation3 + $0x108] sm:$0xff]
      %v1129 = vld [vmem:[#allocation3 + $0x110] sm:$0xf]
      %v1130 = vld [vmem:[#allocation3 + $0x114] sm:$0xff]
      %v1131 = vld [vmem:[#allocation3 + $0x11c] sm:$0xf]
      %v1132 = vld [vmem:[#allocation3 + $0x120] sm:$0xff]
      %v1133 = vld [vmem:[#allocation3 + $0x128] sm:$0xf]
      %v1134 = vld [vmem:[#allocation3 + $0x12c] sm:$0xff]
      %v1135 = vld [vmem:[#allocation3 + $0x134] sm:$0xf]
      %v1136 = vld [vmem:[#allocation3 + $0x138] sm:$0xff]
      %v1137 = vld [vmem:[#allocation3 + $0x140] sm:$0xf]
      %v1138 = vld [vmem:[#allocation3 + $0x144] sm:$0xff]
      %v1139 = vld [vmem:[#allocation3 + $0x14c] sm:$0xf]
      %v1140 = vld [vmem:[#allocation3 + $0x150] sm:$0xff]
      %v1141 = vld [vmem:[#allocation3 + $0x158] sm:$0xf]
      %v1142 = vld [vmem:[#allocation3 + $0x15c] sm:$0xff]
      %v1143 = vld [vmem:[#allocation3 + $0x164] sm:$0xf]
      %v1144 = vld [vmem:[#allocation3 + $0x168] sm:$0xff]
      %v1145 = vld [vmem:[#allocation3 + $0x170] sm:$0xf]
      %v1146 = vld [vmem:[#allocation3 + $0x174] sm:$0xff]
      %v1147 = vld [vmem:[#allocation3 + $0x17c] sm:$0xf]
      %v1148 = vld [vmem:[%s224] sm:$0xf]
      %v1149 = vld [vmem:[%s224 + $0x4] sm:$0xf]
      %v1150 = vld [vmem:[%s224 + $0x8] sm:$0xf]
      %v1151 = vld [vmem:[%s224 + $0xc] sm:$0xf]
      %v1152 = vld [vmem:[%s224 + $0x10] sm:$0xf]
      %v1153 = vld [vmem:[%s224 + $0x14] sm:$0xf]
      %v1154 = vld [vmem:[%s224 + $0x18] sm:$0xf]
      %v1155 = vld [vmem:[%s224 + $0x1c] sm:$0xf]
      %v1156 = vld [vmem:[%s224 + $0x20] sm:$0xf]
      %v1157 = vld [vmem:[%s224 + $0x24] sm:$0xf]
      %v1158 = vld [vmem:[%s224 + $0x28] sm:$0xf]
      %v1159 = vld [vmem:[%s224 + $0x2c] sm:$0xf]
      %v1160 = vld [vmem:[%s224 + $0x30] sm:$0xf]
      %v1161 = vld [vmem:[%s224 + $0x34] sm:$0xf]
      %v1162 = vld [vmem:[%s224 + $0x38] sm:$0xf]
      %v1163 = vld [vmem:[%s224 + $0x3c] sm:$0xf]
      %v1164 = vld [vmem:[%s224 + $0x40] sm:$0xf]
      %v1165 = vld [vmem:[%s224 + $0x44] sm:$0xf]
      %v1166 = vld [vmem:[%s224 + $0x48] sm:$0xf]
      %v1167 = vld [vmem:[%s224 + $0x4c] sm:$0xf]
      %v1168 = vld [vmem:[%s224 + $0x50] sm:$0xf]
      %v1169 = vld [vmem:[%s224 + $0x54] sm:$0xf]
      %v1170 = vld [vmem:[%s224 + $0x58] sm:$0xf]
      %v1171 = vld [vmem:[%s224 + $0x5c] sm:$0xf]
      %v1172 = vld [vmem:[%s224 + $0x60] sm:$0xf]
      %v1173 = vld [vmem:[%s224 + $0x64] sm:$0xf]
      %v1174 = vld [vmem:[%s224 + $0x68] sm:$0xf]
      %v1175 = vld [vmem:[%s224 + $0x6c] sm:$0xf]
      %v1176 = vld [vmem:[%s224 + $0x70] sm:$0xf]
      %v1177 = vld [vmem:[%s224 + $0x74] sm:$0xf]
      %v1178 = vld [vmem:[%s224 + $0x78] sm:$0xf]
      %v1179 = vld [vmem:[%s224 + $0x7c] sm:$0xf]
      %v1180 = vld [vmem:[%s224 + $0x80] sm:$0xf]
      %v1181 = vld [vmem:[%s224 + $0x84] sm:$0xf]
      %v1182 = vld [vmem:[%s224 + $0x88] sm:$0xf]
      %v1183 = vld [vmem:[%s224 + $0x8c] sm:$0xf]
      %v1184 = vld [vmem:[%s224 + $0x90] sm:$0xf]
      %v1185 = vld [vmem:[%s224 + $0x94] sm:$0xf]
      %v1186 = vld [vmem:[%s224 + $0x98] sm:$0xf]
      %v1187 = vld [vmem:[%s224 + $0x9c] sm:$0xf]
      %v1188 = vld [vmem:[%s224 + $0xa0] sm:$0xf]
      %v1189 = vld [vmem:[%s224 + $0xa4] sm:$0xf]
      %v1190 = vld [vmem:[%s224 + $0xa8] sm:$0xf]
      %v1191 = vld [vmem:[%s224 + $0xac] sm:$0xf]
      %v1192 = vld [vmem:[%s224 + $0xb0] sm:$0xf]
      %v1193 = vld [vmem:[%s224 + $0xb4] sm:$0xf]
      %v1194 = vld [vmem:[%s224 + $0xb8] sm:$0xf]
      %v1195 = vld [vmem:[%s224 + $0xbc] sm:$0xf]
      %v1260 = vunpack.c.l.b16 %v1084
      %v1261 = vunpack.c.h.b16 %v1084
      %v1262 = vunpack.c.l.b16 %v1085
      %v1263 = vunpack.c.l.b16 %v1086
      %v1264 = vunpack.c.h.b16 %v1086
      %v1265 = vunpack.c.l.b16 %v1087
      %v1266 = vunpack.c.l.b16 %v1088
      %v1267 = vunpack.c.h.b16 %v1088
      %v1268 = vunpack.c.l.b16 %v1089
      %v1269 = vunpack.c.l.b16 %v1090
      %v1270 = vunpack.c.h.b16 %v1090
      %v1271 = vunpack.c.l.b16 %v1091
      %v1272 = vunpack.c.l.b16 %v1092
      %v1273 = vunpack.c.h.b16 %v1092
      %v1274 = vunpack.c.l.b16 %v1093
      %v1275 = vunpack.c.l.b16 %v1094
      %v1276 = vunpack.c.h.b16 %v1094
      %v1277 = vunpack.c.l.b16 %v1095
      %v1278 = vunpack.c.l.b16 %v1096
      %v1279 = vunpack.c.h.b16 %v1096
      %v1280 = vunpack.c.l.b16 %v1097
      %v1281 = vunpack.c.l.b16 %v1098
      %v1282 = vunpack.c.h.b16 %v1098
      %v1283 = vunpack.c.l.b16 %v1099
      %v1284 = vunpack.c.l.b16 %v1100
      %v1285 = vunpack.c.h.b16 %v1100
      %v1286 = vunpack.c.l.b16 %v1101
      %v1287 = vunpack.c.l.b16 %v1102
      %v1288 = vunpack.c.h.b16 %v1102
      %v1289 = vunpack.c.l.b16 %v1103
      %v1290 = vunpack.c.l.b16 %v1104
      %v1291 = vunpack.c.h.b16 %v1104
      %v1292 = vunpack.c.l.b16 %v1105
      %v1293 = vunpack.c.l.b16 %v1106
      %v1294 = vunpack.c.h.b16 %v1106
      %v1295 = vunpack.c.l.b16 %v1107
      %v1296 = vunpack.c.l.b16 %v1108
      %v1297 = vunpack.c.h.b16 %v1108
      %v1298 = vunpack.c.l.b16 %v1109
      %v1299 = vunpack.c.l.b16 %v1110
      %v1300 = vunpack.c.h.b16 %v1110
      %v1301 = vunpack.c.l.b16 %v1111
      %v1302 = vunpack.c.l.b16 %v1112
      %v1303 = vunpack.c.h.b16 %v1112
      %v1304 = vunpack.c.l.b16 %v1113
      %v1305 = vunpack.c.l.b16 %v1114
      %v1306 = vunpack.c.h.b16 %v1114
      %v1307 = vunpack.c.l.b16 %v1115
      %v1308 = vunpack.c.l.b16 %v1116
      %v1309 = vunpack.c.h.b16 %v1116
      %v1310 = vunpack.c.l.b16 %v1117
      %v1311 = vunpack.c.l.b16 %v1118
      %v1312 = vunpack.c.h.b16 %v1118
      %v1313 = vunpack.c.l.b16 %v1119
      %v1314 = vunpack.c.l.b16 %v1120
      %v1315 = vunpack.c.h.b16 %v1120
      %v1316 = vunpack.c.l.b16 %v1121
      %v1317 = vunpack.c.l.b16 %v1122
      %v1318 = vunpack.c.h.b16 %v1122
      %v1319 = vunpack.c.l.b16 %v1123
      %v1320 = vunpack.c.l.b16 %v1124
      %v1321 = vunpack.c.h.b16 %v1124
      %v1322 = vunpack.c.l.b16 %v1125
      %v1323 = vunpack.c.l.b16 %v1126
      %v1324 = vunpack.c.h.b16 %v1126
      %v1325 = vunpack.c.l.b16 %v1127
      %v1326 = vunpack.c.l.b16 %v1128
      %v1327 = vunpack.c.h.b16 %v1128
      %v1328 = vunpack.c.l.b16 %v1129
      %v1329 = vunpack.c.l.b16 %v1130
      %v1330 = vunpack.c.h.b16 %v1130
      %v1331 = vunpack.c.l.b16 %v1131
      %v1332 = vunpack.c.l.b16 %v1132
      %v1333 = vunpack.c.h.b16 %v1132
      %v1334 = vunpack.c.l.b16 %v1133
      %v1335 = vunpack.c.l.b16 %v1134
      %v1336 = vunpack.c.h.b16 %v1134
      %v1337 = vunpack.c.l.b16 %v1135
      %v1338 = vunpack.c.l.b16 %v1136
      %v1339 = vunpack.c.h.b16 %v1136
      %v1340 = vunpack.c.l.b16 %v1137
      %v1341 = vunpack.c.l.b16 %v1138
      %v1342 = vunpack.c.h.b16 %v1138
      %v1343 = vunpack.c.l.b16 %v1139
      %v1344 = vunpack.c.l.b16 %v1140
      %v1345 = vunpack.c.h.b16 %v1140
      %v1346 = vunpack.c.l.b16 %v1141
      %v1347 = vunpack.c.l.b16 %v1142
      %v1348 = vunpack.c.h.b16 %v1142
      %v1349 = vunpack.c.l.b16 %v1143
      %v1350 = vunpack.c.l.b16 %v1144
      %v1351 = vunpack.c.h.b16 %v1144
      %v1352 = vunpack.c.l.b16 %v1145
      %v1353 = vunpack.c.l.b16 %v1146
      %v1354 = vunpack.c.h.b16 %v1146
      %v1355 = vunpack.c.l.b16 %v1147
      %v1356 = vpack.c.b16 %v1263, %v1260
      %v1357 = vpack.c.b16 %v1264, %v1261
      %v1358 = vpack.c.b16 %v1265, %v1262
      %v1359 = vpack.c.b16 %v1269, %v1266
      %v1360 = vpack.c.b16 %v1270, %v1267
      %v1361 = vpack.c.b16 %v1271, %v1268
      %v1362 = vpack.c.b16 %v1275, %v1272
      %v1363 = vpack.c.b16 %v1276, %v1273
      %v1364 = vpack.c.b16 %v1277, %v1274
      %v1365 = vpack.c.b16 %v1281, %v1278
      %v1366 = vpack.c.b16 %v1282, %v1279
      %v1367 = vpack.c.b16 %v1283, %v1280
      %v1368 = vpack.c.b16 %v1287, %v1284
      %v1369 = vpack.c.b16 %v1288, %v1285
      %v1370 = vpack.c.b16 %v1289, %v1286
      %v1371 = vpack.c.b16 %v1293, %v1290
      %v1372 = vpack.c.b16 %v1294, %v1291
      %v1373 = vpack.c.b16 %v1295, %v1292
      %v1374 = vpack.c.b16 %v1299, %v1296
      %v1375 = vpack.c.b16 %v1300, %v1297
      %v1376 = vpack.c.b16 %v1301, %v1298
      %v1377 = vpack.c.b16 %v1305, %v1302
      %v1378 = vpack.c.b16 %v1306, %v1303
      %v1379 = vpack.c.b16 %v1307, %v1304
      %v1380 = vpack.c.b16 %v1311, %v1308
      %v1381 = vpack.c.b16 %v1312, %v1309
      %v1382 = vpack.c.b16 %v1313, %v1310
      %v1383 = vpack.c.b16 %v1317, %v1314
      %v1384 = vpack.c.b16 %v1318, %v1315
      %v1385 = vpack.c.b16 %v1319, %v1316
      %v1386 = vpack.c.b16 %v1323, %v1320
      %v1387 = vpack.c.b16 %v1324, %v1321
      %v1388 = vpack.c.b16 %v1325, %v1322
      %v1389 = vpack.c.b16 %v1329, %v1326
      %v1390 = vpack.c.b16 %v1330, %v1327
      %v1391 = vpack.c.b16 %v1331, %v1328
      %v1392 = vpack.c.b16 %v1335, %v1332
      %v1393 = vpack.c.b16 %v1336, %v1333
      %v1394 = vpack.c.b16 %v1337, %v1334
      %v1395 = vpack.c.b16 %v1341, %v1338
      %v1396 = vpack.c.b16 %v1342, %v1339
      %v1397 = vpack.c.b16 %v1343, %v1340
      %v1398 = vpack.c.b16 %v1347, %v1344
      %v1399 = vpack.c.b16 %v1348, %v1345
      %v1400 = vpack.c.b16 %v1349, %v1346
      %v1401 = vpack.c.b16 %v1353, %v1350
      %v1402 = vpack.c.b16 %v1354, %v1351
      %v1403 = vpack.c.b16 %v1355, %v1352
      %v1500 = vunpack.c.l.b16 %v1148
      %v1501 = vunpack.c.l.b16 %v1149
      %v1502 = vunpack.c.l.b16 %v1150
      %v1503 = vunpack.c.l.b16 %v1151
      %v1504 = vunpack.c.l.b16 %v1152
      %v1505 = vunpack.c.l.b16 %v1153
      %v1506 = vunpack.c.l.b16 %v1154
      %v1507 = vunpack.c.l.b16 %v1155
      %v1508 = vunpack.c.l.b16 %v1156
      %v1509 = vunpack.c.l.b16 %v1157
      %v1510 = vunpack.c.l.b16 %v1158
      %v1511 = vunpack.c.l.b16 %v1159
      %v1512 = vunpack.c.l.b16 %v1160
      %v1513 = vunpack.c.l.b16 %v1161
      %v1514 = vunpack.c.l.b16 %v1162
      %v1515 = vunpack.c.l.b16 %v1163
      %v1516 = vunpack.c.l.b16 %v1164
      %v1517 = vunpack.c.l.b16 %v1165
      %v1518 = vunpack.c.l.b16 %v1166
      %v1519 = vunpack.c.l.b16 %v1167
      %v1520 = vunpack.c.l.b16 %v1168
      %v1521 = vunpack.c.l.b16 %v1169
      %v1522 = vunpack.c.l.b16 %v1170
      %v1523 = vunpack.c.l.b16 %v1171
      %v1524 = vunpack.c.l.b16 %v1172
      %v1525 = vunpack.c.l.b16 %v1173
      %v1526 = vunpack.c.l.b16 %v1174
      %v1527 = vunpack.c.l.b16 %v1175
      %v1528 = vunpack.c.l.b16 %v1176
      %v1529 = vunpack.c.l.b16 %v1177
      %v1530 = vunpack.c.l.b16 %v1178
      %v1531 = vunpack.c.l.b16 %v1179
      %v1532 = vunpack.c.l.b16 %v1180
      %v1533 = vunpack.c.l.b16 %v1181
      %v1534 = vunpack.c.l.b16 %v1182
      %v1535 = vunpack.c.l.b16 %v1183
      %v1536 = vunpack.c.l.b16 %v1184
      %v1537 = vunpack.c.l.b16 %v1185
      %v1538 = vunpack.c.l.b16 %v1186
      %v1539 = vunpack.c.l.b16 %v1187
      %v1540 = vunpack.c.l.b16 %v1188
      %v1541 = vunpack.c.l.b16 %v1189
      %v1542 = vunpack.c.l.b16 %v1190
      %v1543 = vunpack.c.l.b16 %v1191
      %v1544 = vunpack.c.l.b16 %v1192
      %v1545 = vunpack.c.l.b16 %v1193
      %v1546 = vunpack.c.l.b16 %v1194
      %v1547 = vunpack.c.l.b16 %v1195
      %v1548 = vpack.c.b16 %v1501, %v1500
      %v1549 = vpack.c.b16 %v1503, %v1502
      %v1550 = vpack.c.b16 %v1505, %v1504
      %v1551 = vpack.c.b16 %v1507, %v1506
      %v1552 = vpack.c.b16 %v1509, %v1508
      %v1553 = vpack.c.b16 %v1511, %v1510
      %v1554 = vpack.c.b16 %v1513, %v1512
      %v1555 = vpack.c.b16 %v1515, %v1514
      %v1556 = vpack.c.b16 %v1517, %v1516
      %v1557 = vpack.c.b16 %v1519, %v1518
      %v1558 = vpack.c.b16 %v1521, %v1520
      %v1559 = vpack.c.b16 %v1523, %v1522
      %v1560 = vpack.c.b16 %v1525, %v1524
      %v1561 = vpack.c.b16 %v1527, %v1526
      %v1562 = vpack.c.b16 %v1529, %v1528
      %v1563 = vpack.c.b16 %v1531, %v1530
      %v1564 = vpack.c.b16 %v1533, %v1532
      %v1565 = vpack.c.b16 %v1535, %v1534
      %v1566 = vpack.c.b16 %v1537, %v1536
      %v1567 = vpack.c.b16 %v1539, %v1538
      %v1568 = vpack.c.b16 %v1541, %v1540
      %v1569 = vpack.c.b16 %v1543, %v1542
      %v1570 = vpack.c.b16 %v1545, %v1544
      %v1571 = vpack.c.b16 %v1547, %v1546
      %1596 = vmatpush.bf16.msra.mxu0 %v1555
      %1597 = vmatpush.bf16.msra.mxu0 %v1554
      %1598 = vmatpush.bf16.msra.mxu0 %v1553
      %1599 = vmatpush.bf16.msra.mxu0 %v1552
      %1600 = vmatpush.bf16.msra.mxu0 %v1551
      %1601 = vmatpush.bf16.msra.mxu0 %v1550
      %1602 = vmatpush.bf16.msra.mxu0 %v1549
      %1603 = vmatpush.bf16.msra.mxu0 %v1548
      %1604 = vmatmul.bf16.gmra.mxu0 %v1356
      %v1605 = vpop.f32.mrf.mxu0
      %v1606 = vadd.f32 0.0, %v1605
      %v1607 = vpop.f32.mrf.mxu0
      %v1608 = vadd.f32 0.0, %v1607
      %1609 = vmatmul.bf16.gmra.mxu0 %v1359
      %v1610 = vpop.f32.mrf.mxu0
      %v1611 = vadd.f32 0.0, %v1610
      %v1612 = vpop.f32.mrf.mxu0
      %v1613 = vadd.f32 0.0, %v1612
      %1614 = vmatmul.bf16.gmra.mxu0 %v1362
      %v1615 = vpop.f32.mrf.mxu0
      %v1616 = vadd.f32 0.0, %v1615
      %v1617 = vpop.f32.mrf.mxu0
      %v1618 = vadd.f32 0.0, %v1617
      %1619 = vmatmul.bf16.gmra.mxu0 %v1365
      %v1620 = vpop.f32.mrf.mxu0
      %v1621 = vadd.f32 0.0, %v1620
      %v1622 = vpop.f32.mrf.mxu0
      %v1623 = vadd.f32 0.0, %v1622
      %1624 = vmatmul.bf16.gmra.mxu0 %v1368
      %v1625 = vpop.f32.mrf.mxu0
      %v1626 = vadd.f32 0.0, %v1625
      %v1627 = vpop.f32.mrf.mxu0
      %v1628 = vadd.f32 0.0, %v1627
      %1629 = vmatmul.bf16.gmra.mxu0 %v1371
      %v1630 = vpop.f32.mrf.mxu0
      %v1631 = vadd.f32 0.0, %v1630
      %v1632 = vpop.f32.mrf.mxu0
      %v1633 = vadd.f32 0.0, %v1632
      %1634 = vmatmul.bf16.gmra.mxu0 %v1374
      %v1635 = vpop.f32.mrf.mxu0
      %v1636 = vadd.f32 0.0, %v1635
      %v1637 = vpop.f32.mrf.mxu0
      %v1638 = vadd.f32 0.0, %v1637
      %1639 = vmatmul.bf16.gmra.mxu0 %v1377
      %v1640 = vpop.f32.mrf.mxu0
      %v1641 = vadd.f32 0.0, %v1640
      %v1642 = vpop.f32.mrf.mxu0
      %v1643 = vadd.f32 0.0, %v1642
      %1644 = vmatmul.bf16.gmra.mxu0 %v1380
      %v1645 = vpop.f32.mrf.mxu0
      %v1646 = vadd.f32 0.0, %v1645
      %v1647 = vpop.f32.mrf.mxu0
      %v1648 = vadd.f32 0.0, %v1647
      %1649 = vmatmul.bf16.gmra.mxu0 %v1383
      %v1650 = vpop.f32.mrf.mxu0
      %v1651 = vadd.f32 0.0, %v1650
      %v1652 = vpop.f32.mrf.mxu0
      %v1653 = vadd.f32 0.0, %v1652
      %1654 = vmatmul.bf16.gmra.mxu0 %v1386
      %v1655 = vpop.f32.mrf.mxu0
      %v1656 = vadd.f32 0.0, %v1655
      %v1657 = vpop.f32.mrf.mxu0
      %v1658 = vadd.f32 0.0, %v1657
      %1659 = vmatmul.bf16.gmra.mxu0 %v1389
      %v1660 = vpop.f32.mrf.mxu0
      %v1661 = vadd.f32 0.0, %v1660
      %v1662 = vpop.f32.mrf.mxu0
      %v1663 = vadd.f32 0.0, %v1662
      %1664 = vmatmul.bf16.gmra.mxu0 %v1392
      %v1665 = vpop.f32.mrf.mxu0
      %v1666 = vadd.f32 0.0, %v1665
      %v1667 = vpop.f32.mrf.mxu0
      %v1668 = vadd.f32 0.0, %v1667
      %1669 = vmatmul.bf16.gmra.mxu0 %v1395
      %v1670 = vpop.f32.mrf.mxu0
      %v1671 = vadd.f32 0.0, %v1670
      %v1672 = vpop.f32.mrf.mxu0
      %v1673 = vadd.f32 0.0, %v1672
      %1674 = vmatmul.bf16.gmra.mxu0 %v1398
      %v1675 = vpop.f32.mrf.mxu0
      %v1676 = vadd.f32 0.0, %v1675
      %v1677 = vpop.f32.mrf.mxu0
      %v1678 = vadd.f32 0.0, %v1677
      %1679 = vmatmul.bf16.gmra.mxu0 %v1401
      %v1680 = vpop.f32.mrf.mxu0
      %v1681 = vadd.f32 0.0, %v1680
      %v1682 = vpop.f32.mrf.mxu0
      %v1683 = vadd.f32 0.0, %v1682
      %1684 = vdwg.mxu0
      %1685 = vmatpush.bf16.msra.mxu0 %v1563
      %1686 = vmatpush.bf16.msra.mxu0 %v1562
      %1687 = vmatpush.bf16.msra.mxu0 %v1561
      %1688 = vmatpush.bf16.msra.mxu0 %v1560
      %1689 = vmatpush.bf16.msra.mxu0 %v1559
      %1690 = vmatpush.bf16.msra.mxu0 %v1558
      %1691 = vmatpush.bf16.msra.mxu0 %v1557
      %1692 = vmatpush.bf16.msra.mxu0 %v1556
      %1693 = vmatmul.bf16.gmra.mxu0 %v1357
      %v1694 = vpop.f32.mrf.mxu0
      %v1695 = vadd.f32 %v1606, %v1694
      %v1696 = vpop.f32.mrf.mxu0
      %v1697 = vadd.f32 %v1608, %v1696
      %1698 = vmatmul.bf16.gmra.mxu0 %v1360
      %v1699 = vpop.f32.mrf.mxu0
      %v1700 = vadd.f32 %v1611, %v1699
      %v1701 = vpop.f32.mrf.mxu0
      %v1702 = vadd.f32 %v1613, %v1701
      %1703 = vmatmul.bf16.gmra.mxu0 %v1363
      %v1704 = vpop.f32.mrf.mxu0
      %v1705 = vadd.f32 %v1616, %v1704
      %v1706 = vpop.f32.mrf.mxu0
      %v1707 = vadd.f32 %v1618, %v1706
      %1708 = vmatmul.bf16.gmra.mxu0 %v1366
      %v1709 = vpop.f32.mrf.mxu0
      %v1710 = vadd.f32 %v1621, %v1709
      %v1711 = vpop.f32.mrf.mxu0
      %v1712 = vadd.f32 %v1623, %v1711
      %1713 = vmatmul.bf16.gmra.mxu0 %v1369
      %v1714 = vpop.f32.mrf.mxu0
      %v1715 = vadd.f32 %v1626, %v1714
      %v1716 = vpop.f32.mrf.mxu0
      %v1717 = vadd.f32 %v1628, %v1716
      %1718 = vmatmul.bf16.gmra.mxu0 %v1372
      %v1719 = vpop.f32.mrf.mxu0
      %v1720 = vadd.f32 %v1631, %v1719
      %v1721 = vpop.f32.mrf.mxu0
      %v1722 = vadd.f32 %v1633, %v1721
      %1723 = vmatmul.bf16.gmra.mxu0 %v1375
      %v1724 = vpop.f32.mrf.mxu0
      %v1725 = vadd.f32 %v1636, %v1724
      %v1726 = vpop.f32.mrf.mxu0
      %v1727 = vadd.f32 %v1638, %v1726
      %1728 = vmatmul.bf16.gmra.mxu0 %v1378
      %v1729 = vpop.f32.mrf.mxu0
      %v1730 = vadd.f32 %v1641, %v1729
      %v1731 = vpop.f32.mrf.mxu0
      %v1732 = vadd.f32 %v1643, %v1731
      %1733 = vmatmul.bf16.gmra.mxu0 %v1381
      %v1734 = vpop.f32.mrf.mxu0
      %v1735 = vadd.f32 %v1646, %v1734
      %v1736 = vpop.f32.mrf.mxu0
      %v1737 = vadd.f32 %v1648, %v1736
      %1738 = vmatmul.bf16.gmra.mxu0 %v1384
      %v1739 = vpop.f32.mrf.mxu0
      %v1740 = vadd.f32 %v1651, %v1739
      %v1741 = vpop.f32.mrf.mxu0
      %v1742 = vadd.f32 %v1653, %v1741
      %1743 = vmatmul.bf16.gmra.mxu0 %v1387
      %v1744 = vpop.f32.mrf.mxu0
      %v1745 = vadd.f32 %v1656, %v1744
      %v1746 = vpop.f32.mrf.mxu0
      %v1747 = vadd.f32 %v1658, %v1746
      %1748 = vmatmul.bf16.gmra.mxu0 %v1390
      %v1749 = vpop.f32.mrf.mxu0
      %v1750 = vadd.f32 %v1661, %v1749
      %v1751 = vpop.f32.mrf.mxu0
      %v1752 = vadd.f32 %v1663, %v1751
      %1753 = vmatmul.bf16.gmra.mxu0 %v1393
      %v1754 = vpop.f32.mrf.mxu0
      %v1755 = vadd.f32 %v1666, %v1754
      %v1756 = vpop.f32.mrf.mxu0
      %v1757 = vadd.f32 %v1668, %v1756
      %1758 = vmatmul.bf16.gmra.mxu0 %v1396
      %v1759 = vpop.f32.mrf.mxu0
      %v1760 = vadd.f32 %v1671, %v1759
      %v1761 = vpop.f32.mrf.mxu0
      %v1762 = vadd.f32 %v1673, %v1761
      %1763 = vmatmul.bf16.gmra.mxu0 %v1399
      %v1764 = vpop.f32.mrf.mxu0
      %v1765 = vadd.f32 %v1676, %v1764
      %v1766 = vpop.f32.mrf.mxu0
      %v1767 = vadd.f32 %v1678, %v1766
      %1768 = vmatmul.bf16.gmra.mxu0 %v1402
      %v1769 = vpop.f32.mrf.mxu0
      %v1770 = vadd.f32 %v1681, %v1769
      %v1771 = vpop.f32.mrf.mxu0
      %v1772 = vadd.f32 %v1683, %v1771
      %1773 = vdwg.mxu0
      %1774 = vmatpush.bf16.msra.mxu0 %v1571
      %1775 = vmatpush.bf16.msra.mxu0 %v1570
      %1776 = vmatpush.bf16.msra.mxu0 %v1569
      %1777 = vmatpush.bf16.msra.mxu0 %v1568
      %1778 = vmatpush.bf16.msra.mxu0 %v1567
      %1779 = vmatpush.bf16.msra.mxu0 %v1566
      %1780 = vmatpush.bf16.msra.mxu0 %v1565
      %1781 = vmatpush.bf16.msra.mxu0 %v1564
      %1782 = vmatmul.bf16.gmra.mxu0 %v1358
      %v1783 = vpop.f32.mrf.mxu0
      %v1784 = vadd.f32 %v1695, %v1783
      %v1785 = vpop.f32.mrf.mxu0
      %v1786 = vadd.f32 %v1697, %v1785
      %1787 = vmatmul.bf16.gmra.mxu0 %v1361
      %v1788 = vpop.f32.mrf.mxu0
      %v1789 = vadd.f32 %v1700, %v1788
      %v1790 = vpop.f32.mrf.mxu0
      %v1791 = vadd.f32 %v1702, %v1790
      %1792 = vmatmul.bf16.gmra.mxu0 %v1364
      %v1793 = vpop.f32.mrf.mxu0
      %v1794 = vadd.f32 %v1705, %v1793
      %v1795 = vpop.f32.mrf.mxu0
      %v1796 = vadd.f32 %v1707, %v1795
      %1797 = vmatmul.bf16.gmra.mxu0 %v1367
      %v1798 = vpop.f32.mrf.mxu0
      %v1799 = vadd.f32 %v1710, %v1798
      %v1800 = vpop.f32.mrf.mxu0
      %v1801 = vadd.f32 %v1712, %v1800
      %1802 = vmatmul.bf16.gmra.mxu0 %v1370
      %v1803 = vpop.f32.mrf.mxu0
      %v1804 = vadd.f32 %v1715, %v1803
      %v1805 = vpop.f32.mrf.mxu0
      %v1806 = vadd.f32 %v1717, %v1805
      %1807 = vmatmul.bf16.gmra.mxu0 %v1373
      %v1808 = vpop.f32.mrf.mxu0
      %v1809 = vadd.f32 %v1720, %v1808
      %v1810 = vpop.f32.mrf.mxu0
      %v1811 = vadd.f32 %v1722, %v1810
      %1812 = vmatmul.bf16.gmra.mxu0 %v1376
      %v1813 = vpop.f32.mrf.mxu0
      %v1814 = vadd.f32 %v1725, %v1813
      %v1815 = vpop.f32.mrf.mxu0
      %v1816 = vadd.f32 %v1727, %v1815
      %1817 = vmatmul.bf16.gmra.mxu0 %v1379
      %v1818 = vpop.f32.mrf.mxu0
      %v1819 = vadd.f32 %v1730, %v1818
      %v1820 = vpop.f32.mrf.mxu0
      %v1821 = vadd.f32 %v1732, %v1820
      %1822 = vmatmul.bf16.gmra.mxu0 %v1382
      %v1823 = vpop.f32.mrf.mxu0
      %v1824 = vadd.f32 %v1735, %v1823
      %v1825 = vpop.f32.mrf.mxu0
      %v1826 = vadd.f32 %v1737, %v1825
      %1827 = vmatmul.bf16.gmra.mxu0 %v1385
      %v1828 = vpop.f32.mrf.mxu0
      %v1829 = vadd.f32 %v1740, %v1828
      %v1830 = vpop.f32.mrf.mxu0
      %v1831 = vadd.f32 %v1742, %v1830
      %1832 = vmatmul.bf16.gmra.mxu0 %v1388
      %v1833 = vpop.f32.mrf.mxu0
      %v1834 = vadd.f32 %v1745, %v1833
      %v1835 = vpop.f32.mrf.mxu0
      %v1836 = vadd.f32 %v1747, %v1835
      %1837 = vmatmul.bf16.gmra.mxu0 %v1391
      %v1838 = vpop.f32.mrf.mxu0
      %v1839 = vadd.f32 %v1750, %v1838
      %v1840 = vpop.f32.mrf.mxu0
      %v1841 = vadd.f32 %v1752, %v1840
      %1842 = vmatmul.bf16.gmra.mxu0 %v1394
      %v1843 = vpop.f32.mrf.mxu0
      %v1844 = vadd.f32 %v1755, %v1843
      %v1845 = vpop.f32.mrf.mxu0
      %v1846 = vadd.f32 %v1757, %v1845
      %1847 = vmatmul.bf16.gmra.mxu0 %v1397
      %v1848 = vpop.f32.mrf.mxu0
      %v1849 = vadd.f32 %v1760, %v1848
      %v1850 = vpop.f32.mrf.mxu0
      %v1851 = vadd.f32 %v1762, %v1850
      %1852 = vmatmul.bf16.gmra.mxu0 %v1400
      %v1853 = vpop.f32.mrf.mxu0
      %v1854 = vadd.f32 %v1765, %v1853
      %v1855 = vpop.f32.mrf.mxu0
      %v1856 = vadd.f32 %v1767, %v1855
      %1857 = vmatmul.bf16.gmra.mxu0 %v1403
      %v1858 = vpop.f32.mrf.mxu0
      %v1859 = vadd.f32 %v1770, %v1858
      %v1860 = vpop.f32.mrf.mxu0
      %v1861 = vadd.f32 %v1772, %v1860
      %1862 = vdwg.mxu0
      %1863 = vst [vmem:[#allocation2] sm:$0xff] %v1784
      %1864 = vst [vmem:[#allocation2 + $0x8] sm:$0xff] %v1786
      %1865 = vst [vmem:[#allocation2 + $0x10] sm:$0xff] %v1789
      %1866 = vst [vmem:[#allocation2 + $0x18] sm:$0xff] %v1791
      %1867 = vst [vmem:[#allocation2 + $0x20] sm:$0xff] %v1794
      %1868 = vst [vmem:[#allocation2 + $0x28] sm:$0xff] %v1796
      %1869 = vst [vmem:[#allocation2 + $0x30] sm:$0xff] %v1799
      %1870 = vst [vmem:[#allocation2 + $0x38] sm:$0xff] %v1801
      %1871 = vst [vmem:[#allocation2 + $0x40] sm:$0xff] %v1804
      %1872 = vst [vmem:[#allocation2 + $0x48] sm:$0xff] %v1806
      %1873 = vst [vmem:[#allocation2 + $0x50] sm:$0xff] %v1809
      %1874 = vst [vmem:[#allocation2 + $0x58] sm:$0xff] %v1811
      %1875 = vst [vmem:[#allocation2 + $0x60] sm:$0xff] %v1814
      %1876 = vst [vmem:[#allocation2 + $0x68] sm:$0xff] %v1816
      %1877 = vst [vmem:[#allocation2 + $0x70] sm:$0xff] %v1819
      %1878 = vst [vmem:[#allocation2 + $0x78] sm:$0xff] %v1821
      %1879 = vst [vmem:[#allocation2 + $0x80] sm:$0xff] %v1824
      %1880 = vst [vmem:[#allocation2 + $0x88] sm:$0xff] %v1826
      %1881 = vst [vmem:[#allocation2 + $0x90] sm:$0xff] %v1829
      %1882 = vst [vmem:[#allocation2 + $0x98] sm:$0xff] %v1831
      %1883 = vst [vmem:[#allocation2 + $0xa0] sm:$0xff] %v1834
      %1884 = vst [vmem:[#allocation2 + $0xa8] sm:$0xff] %v1836
      %1885 = vst [vmem:[#allocation2 + $0xb0] sm:$0xff] %v1839
      %1886 = vst [vmem:[#allocation2 + $0xb8] sm:$0xff] %v1841
      %1887 = vst [vmem:[#allocation2 + $0xc0] sm:$0xff] %v1844
      %1888 = vst [vmem:[#allocation2 + $0xc8] sm:$0xff] %v1846
      %1889 = vst [vmem:[#allocation2 + $0xd0] sm:$0xff] %v1849
      %1890 = vst [vmem:[#allocation2 + $0xd8] sm:$0xff] %v1851
      %1891 = vst [vmem:[#allocation2 + $0xe0] sm:$0xff] %v1854
      %1892 = vst [vmem:[#allocation2 + $0xe8] sm:$0xff] %v1856
      %1893 = vst [vmem:[#allocation2 + $0xf0] sm:$0xff] %v1859
      %1894 = vst [vmem:[#allocation2 + $0xf8] sm:$0xff] %v1861
      %s1895 = sadd.s32 %s242, 1
      %s1896 = smul.u32 %s1895, 3
      %s1897 = smul.addr %s1896, 4
      %s1898 = scalar_lea.vmem %s220, %s1897
      %v1899 = vld [vmem:[%s1898] sm:$0xf]
      %v1900 = vld [vmem:[%s1898 + $0x4] sm:$0xf]
      %v1901 = vld [vmem:[%s1898 + $0xc] sm:$0xf]
      %v1902 = vld [vmem:[%s1898 + $0x10] sm:$0xf]
      %v1903 = vld [vmem:[%s1898 + $0x18] sm:$0xf]
      %v1904 = vld [vmem:[%s1898 + $0x1c] sm:$0xf]
      %v1905 = vld [vmem:[%s1898 + $0x24] sm:$0xf]
      %v1906 = vld [vmem:[%s1898 + $0x28] sm:$0xf]
      %v1907 = vld [vmem:[%s1898 + $0x30] sm:$0xf]
      %v1908 = vld [vmem:[%s1898 + $0x34] sm:$0xf]
      %v1909 = vld [vmem:[%s1898 + $0x3c] sm:$0xf]
      %v1910 = vld [vmem:[%s1898 + $0x40] sm:$0xf]
      %v1911 = vld [vmem:[%s1898 + $0x48] sm:$0xf]
      %v1912 = vld [vmem:[%s1898 + $0x4c] sm:$0xf]
      %v1913 = vld [vmem:[%s1898 + $0x54] sm:$0xf]
      %v1914 = vld [vmem:[%s1898 + $0x58] sm:$0xf]
      %v1915 = vld [vmem:[%s1898 + $0x60] sm:$0xf]
      %v1916 = vld [vmem:[%s1898 + $0x64] sm:$0xf]
      %v1917 = vld [vmem:[%s1898 + $0x6c] sm:$0xf]
      %v1918 = vld [vmem:[%s1898 + $0x70] sm:$0xf]
      %v1919 = vld [vmem:[%s1898 + $0x78] sm:$0xf]
      %v1920 = vld [vmem:[%s1898 + $0x7c] sm:$0xf]
      %v1921 = vld [vmem:[%s1898 + $0x84] sm:$0xf]
      %v1922 = vld [vmem:[%s1898 + $0x88] sm:$0xf]
      %v1923 = vld [vmem:[%s1898 + $0x90] sm:$0xf]
      %v1924 = vld [vmem:[%s1898 + $0x94] sm:$0xf]
      %v1925 = vld [vmem:[%s1898 + $0x9c] sm:$0xf]
      %v1926 = vld [vmem:[%s1898 + $0xa0] sm:$0xf]
      %v1927 = vld [vmem:[%s1898 + $0xa8] sm:$0xf]
      %v1928 = vld [vmem:[%s1898 + $0xac] sm:$0xf]
      %v1929 = vld [vmem:[%s1898 + $0xb4] sm:$0xf]
      %v1930 = vld [vmem:[%s1898 + $0xb8] sm:$0xf]
      %1931 = vst [vmem:[#allocation3] sm:$0xf] %v1899
      %1932 = vst [vmem:[#allocation3 + $0xc] sm:$0xf] %v1900
      %1933 = vst [vmem:[#allocation3 + $0x18] sm:$0xf] %v1901
      %1934 = vst [vmem:[#allocation3 + $0x24] sm:$0xf] %v1902
      %1935 = vst [vmem:[#allocation3 + $0x30] sm:$0xf] %v1903
      %1936 = vst [vmem:[#allocation3 + $0x3c] sm:$0xf] %v1904
      %1937 = vst [vmem:[#allocation3 + $0x48] sm:$0xf] %v1905
      %1938 = vst [vmem:[#allocation3 + $0x54] sm:$0xf] %v1906
      %1939 = vst [vmem:[#allocation3 + $0x60] sm:$0xf] %v1907
      %1940 = vst [vmem:[#allocation3 + $0x6c] sm:$0xf] %v1908
      %1941 = vst [vmem:[#allocation3 + $0x78] sm:$0xf] %v1909
      %1942 = vst [vmem:[#allocation3 + $0x84] sm:$0xf] %v1910
      %1943 = vst [vmem:[#allocation3 + $0x90] sm:$0xf] %v1911
      %1944 = vst [vmem:[#allocation3 + $0x9c] sm:$0xf] %v1912
      %1945 = vst [vmem:[#allocation3 + $0xa8] sm:$0xf] %v1913
      %1946 = vst [vmem:[#allocation3 + $0xb4] sm:$0xf] %v1914
      %1947 = vst [vmem:[#allocation3 + $0xc0] sm:$0xf] %v1915
      %1948 = vst [vmem:[#allocation3 + $0xcc] sm:$0xf] %v1916
      %1949 = vst [vmem:[#allocation3 + $0xd8] sm:$0xf] %v1917
      %1950 = vst [vmem:[#allocation3 + $0xe4] sm:$0xf] %v1918
      %1951 = vst [vmem:[#allocation3 + $0xf0] sm:$0xf] %v1919
      %1952 = vst [vmem:[#allocation3 + $0xfc] sm:$0xf] %v1920
      %1953 = vst [vmem:[#allocation3 + $0x108] sm:$0xf] %v1921
      %1954 = vst [vmem:[#allocation3 + $0x114] sm:$0xf] %v1922
      %1955 = vst [vmem:[#allocation3 + $0x120] sm:$0xf] %v1923
      %1956 = vst [vmem:[#allocation3 + $0x12c] sm:$0xf] %v1924
      %1957 = vst [vmem:[#allocation3 + $0x138] sm:$0xf] %v1925
      %1958 = vst [vmem:[#allocation3 + $0x144] sm:$0xf] %v1926
      %1959 = vst [vmem:[#allocation3 + $0x150] sm:$0xf] %v1927
      %1960 = vst [vmem:[#allocation3 + $0x15c] sm:$0xf] %v1928
      %1961 = vst [vmem:[#allocation3 + $0x168] sm:$0xf] %v1929
      %1962 = vst [vmem:[#allocation3 + $0x174] sm:$0xf] %v1930
      %v1963 = vld [vmem:[%s1898] sm:$0xf]
      %v1964 = vld [vmem:[%s1898 + $0x4] sm:$0xf]
      %v1965 = vld [vmem:[%s1898 + $0x8] sm:$0x1]
      %v1966 = vld [vmem:[%s1898 + $0xc] sm:$0xf]
      %v1967 = vld [vmem:[%s1898 + $0x10] sm:$0xf]
      %v1968 = vld [vmem:[%s1898 + $0x14] sm:$0x1]
      %v1969 = vld [vmem:[%s1898 + $0x18] sm:$0xf]
      %v1970 = vld [vmem:[%s1898 + $0x1c] sm:$0xf]
      %v1971 = vld [vmem:[%s1898 + $0x20] sm:$0x1]
      %v1972 = vld [vmem:[%s1898 + $0x24] sm:$0xf]
      %v1973 = vld [vmem:[%s1898 + $0x28] sm:$0xf]
      %v1974 = vld [vmem:[%s1898 + $0x2c] sm:$0x1]
      %v1975 = vld [vmem:[%s1898 + $0x30] sm:$0xf]
      %v1976 = vld [vmem:[%s1898 + $0x34] sm:$0xf]
      %v1977 = vld [vmem:[%s1898 + $0x38] sm:$0x1]
      %v1978 = vld [vmem:[%s1898 + $0x3c] sm:$0xf]
      %v1979 = vld [vmem:[%s1898 + $0x40] sm:$0xf]
      %v1980 = vld [vmem:[%s1898 + $0x44] sm:$0x1]
      %v1981 = vld [vmem:[%s1898 + $0x48] sm:$0xf]
      %v1982 = vld [vmem:[%s1898 + $0x4c] sm:$0xf]
      %v1983 = vld [vmem:[%s1898 + $0x50] sm:$0x1]
      %v1984 = vld [vmem:[%s1898 + $0x54] sm:$0xf]
      %v1985 = vld [vmem:[%s1898 + $0x58] sm:$0xf]
      %v1986 = vld [vmem:[%s1898 + $0x5c] sm:$0x1]
      %v1987 = vld [vmem:[%s1898 + $0x60] sm:$0xf]
      %v1988 = vld [vmem:[%s1898 + $0x64] sm:$0xf]
      %v1989 = vld [vmem:[%s1898 + $0x68] sm:$0x1]
      %v1990 = vld [vmem:[%s1898 + $0x6c] sm:$0xf]
      %v1991 = vld [vmem:[%s1898 + $0x70] sm:$0xf]
      %v1992 = vld [vmem:[%s1898 + $0x74] sm:$0x1]
      %v1993 = vld [vmem:[%s1898 + $0x78] sm:$0xf]
      %v1994 = vld [vmem:[%s1898 + $0x7c] sm:$0xf]
      %v1995 = vld [vmem:[%s1898 + $0x80] sm:$0x1]
      %v1996 = vld [vmem:[%s1898 + $0x84] sm:$0xf]
      %v1997 = vld [vmem:[%s1898 + $0x88] sm:$0xf]
      %v1998 = vld [vmem:[%s1898 + $0x8c] sm:$0x1]
      %v1999 = vld [vmem:[%s1898 + $0x90] sm:$0xf]
      %v2000 = vld [vmem:[%s1898 + $0x94] sm:$0xf]
      %v2001 = vld [vmem:[%s1898 + $0x98] sm:$0x1]
      %v2002 = vld [vmem:[%s1898 + $0x9c] sm:$0xf]
      %v2003 = vld [vmem:[%s1898 + $0xa0] sm:$0xf]
      %v2004 = vld [vmem:[%s1898 + $0xa4] sm:$0x1]
      %v2005 = vld [vmem:[%s1898 + $0xa8] sm:$0xf]
      %v2006 = vld [vmem:[%s1898 + $0xac] sm:$0xf]
      %v2007 = vld [vmem:[%s1898 + $0xb0] sm:$0x1]
      %v2008 = vld [vmem:[%s1898 + $0xb4] sm:$0xf]
      %v2009 = vld [vmem:[%s1898 + $0xb8] sm:$0xf]
      %v2010 = vld [vmem:[%s1898 + $0xbc] sm:$0x1]
      %v2012 = vshrl.u32 %v1963, 16
      %v2014 = vrot.slane %v2012, 4
      %v2015 = vshll.u32 %v1963, 16
      %v2017 = vrot.slane %v2015, 5
      %v2018 = vor.u32 %v2014, %v2017
      %v2019 = vrot.slane %v2018, 4
      %v2021 = vshll.u32 %v1964, 16
      %v2023 = vrot.slane %v2021, 5
      %v2024 = vsel %vm360, %v2019, %v2023
      %v2025 = vshrl.u32 %v1964, 16
      %v2027 = vrot.slane %v2025, 4
      %v2028 = vor.u32 %v2027, %v2023
      %v2029 = vrot.slane %v2028, 4
      %v2031 = vshll.u32 %v1965, 16
      %v2033 = vrot.slane %v2031, 5
      %v2034 = vsel %vm360, %v2029, %v2033
      %v2036 = vshrl.u32 %v1966, 16
      %v2038 = vrot.slane %v2036, 4
      %v2039 = vshll.u32 %v1966, 16
      %v2041 = vrot.slane %v2039, 5
      %v2042 = vor.u32 %v2038, %v2041
      %v2043 = vrot.slane %v2042, 4
      %v2045 = vshll.u32 %v1967, 16
      %v2047 = vrot.slane %v2045, 5
      %v2048 = vsel %vm360, %v2043, %v2047
      %v2049 = vshrl.u32 %v1967, 16
      %v2051 = vrot.slane %v2049, 4
      %v2052 = vor.u32 %v2051, %v2047
      %v2053 = vrot.slane %v2052, 4
      %v2055 = vshll.u32 %v1968, 16
      %v2057 = vrot.slane %v2055, 5
      %v2058 = vsel %vm360, %v2053, %v2057
      %v2060 = vshrl.u32 %v1969, 16
      %v2062 = vrot.slane %v2060, 4
      %v2063 = vshll.u32 %v1969, 16
      %v2065 = vrot.slane %v2063, 5
      %v2066 = vor.u32 %v2062, %v2065
      %v2067 = vrot.slane %v2066, 4
      %v2069 = vshll.u32 %v1970, 16
      %v2071 = vrot.slane %v2069, 5
      %v2072 = vsel %vm360, %v2067, %v2071
      %v2073 = vshrl.u32 %v1970, 16
      %v2075 = vrot.slane %v2073, 4
      %v2076 = vor.u32 %v2075, %v2071
      %v2077 = vrot.slane %v2076, 4
      %v2079 = vshll.u32 %v1971, 16
      %v2081 = vrot.slane %v2079, 5
      %v2082 = vsel %vm360, %v2077, %v2081
      %v2084 = vshrl.u32 %v1972, 16
      %v2086 = vrot.slane %v2084, 4
      %v2087 = vshll.u32 %v1972, 16
      %v2089 = vrot.slane %v2087, 5
      %v2090 = vor.u32 %v2086, %v2089
      %v2091 = vrot.slane %v2090, 4
      %v2093 = vshll.u32 %v1973, 16
      %v2095 = vrot.slane %v2093, 5
      %v2096 = vsel %vm360, %v2091, %v2095
      %v2097 = vshrl.u32 %v1973, 16
      %v2099 = vrot.slane %v2097, 4
      %v2100 = vor.u32 %v2099, %v2095
      %v2101 = vrot.slane %v2100, 4
      %v2103 = vshll.u32 %v1974, 16
      %v2105 = vrot.slane %v2103, 5
      %v2106 = vsel %vm360, %v2101, %v2105
      %v2108 = vshrl.u32 %v1975, 16
      %v2110 = vrot.slane %v2108, 4
      %v2111 = vshll.u32 %v1975, 16
      %v2113 = vrot.slane %v2111, 5
      %v2114 = vor.u32 %v2110, %v2113
      %v2115 = vrot.slane %v2114, 4
      %v2117 = vshll.u32 %v1976, 16
      %v2119 = vrot.slane %v2117, 5
      %v2120 = vsel %vm360, %v2115, %v2119
      %v2121 = vshrl.u32 %v1976, 16
      %v2123 = vrot.slane %v2121, 4
      %v2124 = vor.u32 %v2123, %v2119
      %v2125 = vrot.slane %v2124, 4
      %v2127 = vshll.u32 %v1977, 16
      %v2129 = vrot.slane %v2127, 5
      %v2130 = vsel %vm360, %v2125, %v2129
      %v2132 = vshrl.u32 %v1978, 16
      %v2134 = vrot.slane %v2132, 4
      %v2135 = vshll.u32 %v1978, 16
      %v2137 = vrot.slane %v2135, 5
      %v2138 = vor.u32 %v2134, %v2137
      %v2139 = vrot.slane %v2138, 4
      %v2141 = vshll.u32 %v1979, 16
      %v2143 = vrot.slane %v2141, 5
      %v2144 = vsel %vm360, %v2139, %v2143
      %v2145 = vshrl.u32 %v1979, 16
      %v2147 = vrot.slane %v2145, 4
      %v2148 = vor.u32 %v2147, %v2143
      %v2149 = vrot.slane %v2148, 4
      %v2151 = vshll.u32 %v1980, 16
      %v2153 = vrot.slane %v2151, 5
      %v2154 = vsel %vm360, %v2149, %v2153
      %v2156 = vshrl.u32 %v1981, 16
      %v2158 = vrot.slane %v2156, 4
      %v2159 = vshll.u32 %v1981, 16
      %v2161 = vrot.slane %v2159, 5
      %v2162 = vor.u32 %v2158, %v2161
      %v2163 = vrot.slane %v2162, 4
      %v2165 = vshll.u32 %v1982, 16
      %v2167 = vrot.slane %v2165, 5
      %v2168 = vsel %vm360, %v2163, %v2167
      %v2169 = vshrl.u32 %v1982, 16
      %v2171 = vrot.slane %v2169, 4
      %v2172 = vor.u32 %v2171, %v2167
      %v2173 = vrot.slane %v2172, 4
      %v2175 = vshll.u32 %v1983, 16
      %v2177 = vrot.slane %v2175, 5
      %v2178 = vsel %vm360, %v2173, %v2177
      %v2180 = vshrl.u32 %v1984, 16
      %v2182 = vrot.slane %v2180, 4
      %v2183 = vshll.u32 %v1984, 16
      %v2185 = vrot.slane %v2183, 5
      %v2186 = vor.u32 %v2182, %v2185
      %v2187 = vrot.slane %v2186, 4
      %v2189 = vshll.u32 %v1985, 16
      %v2191 = vrot.slane %v2189, 5
      %v2192 = vsel %vm360, %v2187, %v2191
      %v2193 = vshrl.u32 %v1985, 16
      %v2195 = vrot.slane %v2193, 4
      %v2196 = vor.u32 %v2195, %v2191
      %v2197 = vrot.slane %v2196, 4
      %v2199 = vshll.u32 %v1986, 16
      %v2201 = vrot.slane %v2199, 5
      %v2202 = vsel %vm360, %v2197, %v2201
      %v2204 = vshrl.u32 %v1987, 16
      %v2206 = vrot.slane %v2204, 4
      %v2207 = vshll.u32 %v1987, 16
      %v2209 = vrot.slane %v2207, 5
      %v2210 = vor.u32 %v2206, %v2209
      %v2211 = vrot.slane %v2210, 4
      %v2213 = vshll.u32 %v1988, 16
      %v2215 = vrot.slane %v2213, 5
      %v2216 = vsel %vm360, %v2211, %v2215
      %v2217 = vshrl.u32 %v1988, 16
      %v2219 = vrot.slane %v2217, 4
      %v2220 = vor.u32 %v2219, %v2215
      %v2221 = vrot.slane %v2220, 4
      %v2223 = vshll.u32 %v1989, 16
      %v2225 = vrot.slane %v2223, 5
      %v2226 = vsel %vm360, %v2221, %v2225
      %v2228 = vshrl.u32 %v1990, 16
      %v2230 = vrot.slane %v2228, 4
      %v2231 = vshll.u32 %v1990, 16
      %v2233 = vrot.slane %v2231, 5
      %v2234 = vor.u32 %v2230, %v2233
      %v2235 = vrot.slane %v2234, 4
      %v2237 = vshll.u32 %v1991, 16
      %v2239 = vrot.slane %v2237, 5
      %v2240 = vsel %vm360, %v2235, %v2239
      %v2241 = vshrl.u32 %v1991, 16
      %v2243 = vrot.slane %v2241, 4
      %v2244 = vor.u32 %v2243, %v2239
      %v2245 = vrot.slane %v2244, 4
      %v2247 = vshll.u32 %v1992, 16
      %v2249 = vrot.slane %v2247, 5
      %v2250 = vsel %vm360, %v2245, %v2249
      %v2252 = vshrl.u32 %v1993, 16
      %v2254 = vrot.slane %v2252, 4
      %v2255 = vshll.u32 %v1993, 16
      %v2257 = vrot.slane %v2255, 5
      %v2258 = vor.u32 %v2254, %v2257
      %v2259 = vrot.slane %v2258, 4
      %v2261 = vshll.u32 %v1994, 16
      %v2263 = vrot.slane %v2261, 5
      %v2264 = vsel %vm360, %v2259, %v2263
      %v2265 = vshrl.u32 %v1994, 16
      %v2267 = vrot.slane %v2265, 4
      %v2268 = vor.u32 %v2267, %v2263
      %v2269 = vrot.slane %v2268, 4
      %v2271 = vshll.u32 %v1995, 16
      %v2273 = vrot.slane %v2271, 5
      %v2274 = vsel %vm360, %v2269, %v2273
      %v2276 = vshrl.u32 %v1996, 16
      %v2278 = vrot.slane %v2276, 4
      %v2279 = vshll.u32 %v1996, 16
      %v2281 = vrot.slane %v2279, 5
      %v2282 = vor.u32 %v2278, %v2281
      %v2283 = vrot.slane %v2282, 4
      %v2285 = vshll.u32 %v1997, 16
      %v2287 = vrot.slane %v2285, 5
      %v2288 = vsel %vm360, %v2283, %v2287
      %v2289 = vshrl.u32 %v1997, 16
      %v2291 = vrot.slane %v2289, 4
      %v2292 = vor.u32 %v2291, %v2287
      %v2293 = vrot.slane %v2292, 4
      %v2295 = vshll.u32 %v1998, 16
      %v2297 = vrot.slane %v2295, 5
      %v2298 = vsel %vm360, %v2293, %v2297
      %v2300 = vshrl.u32 %v1999, 16
      %v2302 = vrot.slane %v2300, 4
      %v2303 = vshll.u32 %v1999, 16
      %v2305 = vrot.slane %v2303, 5
      %v2306 = vor.u32 %v2302, %v2305
      %v2307 = vrot.slane %v2306, 4
      %v2309 = vshll.u32 %v2000, 16
      %v2311 = vrot.slane %v2309, 5
      %v2312 = vsel %vm360, %v2307, %v2311
      %v2313 = vshrl.u32 %v2000, 16
      %v2315 = vrot.slane %v2313, 4
      %v2316 = vor.u32 %v2315, %v2311
      %v2317 = vrot.slane %v2316, 4
      %v2319 = vshll.u32 %v2001, 16
      %v2321 = vrot.slane %v2319, 5
      %v2322 = vsel %vm360, %v2317, %v2321
      %v2324 = vshrl.u32 %v2002, 16
      %v2326 = vrot.slane %v2324, 4
      %v2327 = vshll.u32 %v2002, 16
      %v2329 = vrot.slane %v2327, 5
      %v2330 = vor.u32 %v2326, %v2329
      %v2331 = vrot.slane %v2330, 4
      %v2333 = vshll.u32 %v2003, 16
      %v2335 = vrot.slane %v2333, 5
      %v2336 = vsel %vm360, %v2331, %v2335
      %v2337 = vshrl.u32 %v2003, 16
      %v2339 = vrot.slane %v2337, 4
      %v2340 = vor.u32 %v2339, %v2335
      %v2341 = vrot.slane %v2340, 4
      %v2343 = vshll.u32 %v2004, 16
      %v2345 = vrot.slane %v2343, 5
      %v2346 = vsel %vm360, %v2341, %v2345
      %v2348 = vshrl.u32 %v2005, 16
      %v2350 = vrot.slane %v2348, 4
      %v2351 = vshll.u32 %v2005, 16
      %v2353 = vrot.slane %v2351, 5
      %v2354 = vor.u32 %v2350, %v2353
      %v2355 = vrot.slane %v2354, 4
      %v2357 = vshll.u32 %v2006, 16
      %v2359 = vrot.slane %v2357, 5
      %v2360 = vsel %vm360, %v2355, %v2359
      %v2361 = vshrl.u32 %v2006, 16
      %v2363 = vrot.slane %v2361, 4
      %v2364 = vor.u32 %v2363, %v2359
      %v2365 = vrot.slane %v2364, 4
      %v2367 = vshll.u32 %v2007, 16
      %v2369 = vrot.slane %v2367, 5
      %v2370 = vsel %vm360, %v2365, %v2369
      %v2372 = vshrl.u32 %v2008, 16
      %v2374 = vrot.slane %v2372, 4
      %v2375 = vshll.u32 %v2008, 16
      %v2377 = vrot.slane %v2375, 5
      %v2378 = vor.u32 %v2374, %v2377
      %v2379 = vrot.slane %v2378, 4
      %v2381 = vshll.u32 %v2009, 16
      %v2383 = vrot.slane %v2381, 5
      %v2384 = vsel %vm360, %v2379, %v2383
      %v2385 = vshrl.u32 %v2009, 16
      %v2387 = vrot.slane %v2385, 4
      %v2388 = vor.u32 %v2387, %v2383
      %v2389 = vrot.slane %v2388, 4
      %v2391 = vshll.u32 %v2010, 16
      %v2393 = vrot.slane %v2391, 5
      %v2394 = vsel %vm360, %v2389, %v2393
      %2427 = vst [vmem:[#allocation3 + $0x4] sm:$0xf] %v2024
      %2428 = vst [vmem:[#allocation3 + $0x10] sm:$0xf] %v2034
      %2429 = vst [vmem:[#allocation3 + $0x1c] sm:$0xf] %v2048
      %2430 = vst [vmem:[#allocation3 + $0x28] sm:$0xf] %v2058
      %2431 = vst [vmem:[#allocation3 + $0x34] sm:$0xf] %v2072
      %2432 = vst [vmem:[#allocation3 + $0x40] sm:$0xf] %v2082
      %2433 = vst [vmem:[#allocation3 + $0x4c] sm:$0xf] %v2096
      %2434 = vst [vmem:[#allocation3 + $0x58] sm:$0xf] %v2106
      %2435 = vst [vmem:[#allocation3 + $0x64] sm:$0xf] %v2120
      %2436 = vst [vmem:[#allocation3 + $0x70] sm:$0xf] %v2130
      %2437 = vst [vmem:[#allocation3 + $0x7c] sm:$0xf] %v2144
      %2438 = vst [vmem:[#allocation3 + $0x88] sm:$0xf] %v2154
      %2439 = vst [vmem:[#allocation3 + $0x94] sm:$0xf] %v2168
      %2440 = vst [vmem:[#allocation3 + $0xa0] sm:$0xf] %v2178
      %2441 = vst [vmem:[#allocation3 + $0xac] sm:$0xf] %v2192
      %2442 = vst [vmem:[#allocation3 + $0xb8] sm:$0xf] %v2202
      %2443 = vst [vmem:[#allocation3 + $0xc4] sm:$0xf] %v2216
      %2444 = vst [vmem:[#allocation3 + $0xd0] sm:$0xf] %v2226
      %2445 = vst [vmem:[#allocation3 + $0xdc] sm:$0xf] %v2240
      %2446 = vst [vmem:[#allocation3 + $0xe8] sm:$0xf] %v2250
      %2447 = vst [vmem:[#allocation3 + $0xf4] sm:$0xf] %v2264
      %2448 = vst [vmem:[#allocation3 + $0x100] sm:$0xf] %v2274
      %2449 = vst [vmem:[#allocation3 + $0x10c] sm:$0xf] %v2288
      %2450 = vst [vmem:[#allocation3 + $0x118] sm:$0xf] %v2298
      %2451 = vst [vmem:[#allocation3 + $0x124] sm:$0xf] %v2312
      %2452 = vst [vmem:[#allocation3 + $0x130] sm:$0xf] %v2322
      %2453 = vst [vmem:[#allocation3 + $0x13c] sm:$0xf] %v2336
      %2454 = vst [vmem:[#allocation3 + $0x148] sm:$0xf] %v2346
      %2455 = vst [vmem:[#allocation3 + $0x154] sm:$0xf] %v2360
      %2456 = vst [vmem:[#allocation3 + $0x160] sm:$0xf] %v2370
      %2457 = vst [vmem:[#allocation3 + $0x16c] sm:$0xf] %v2384
      %2458 = vst [vmem:[#allocation3 + $0x178] sm:$0xf] %v2394
      %v2459 = vld [vmem:[%s1898] sm:$0xe]
      %v2460 = vld [vmem:[%s1898 + $0x4] sm:$0xf]
      %v2461 = vld [vmem:[%s1898 + $0x8] sm:$0x1]
      %v2462 = vld [vmem:[%s1898 + $0xc] sm:$0xe]
      %v2463 = vld [vmem:[%s1898 + $0x10] sm:$0xf]
      %v2464 = vld [vmem:[%s1898 + $0x14] sm:$0x1]
      %v2465 = vld [vmem:[%s1898 + $0x18] sm:$0xe]
      %v2466 = vld [vmem:[%s1898 + $0x1c] sm:$0xf]
      %v2467 = vld [vmem:[%s1898 + $0x20] sm:$0x1]
      %v2468 = vld [vmem:[%s1898 + $0x24] sm:$0xe]
      %v2469 = vld [vmem:[%s1898 + $0x28] sm:$0xf]
      %v2470 = vld [vmem:[%s1898 + $0x2c] sm:$0x1]
      %v2471 = vld [vmem:[%s1898 + $0x30] sm:$0xe]
      %v2472 = vld [vmem:[%s1898 + $0x34] sm:$0xf]
      %v2473 = vld [vmem:[%s1898 + $0x38] sm:$0x1]
      %v2474 = vld [vmem:[%s1898 + $0x3c] sm:$0xe]
      %v2475 = vld [vmem:[%s1898 + $0x40] sm:$0xf]
      %v2476 = vld [vmem:[%s1898 + $0x44] sm:$0x1]
      %v2477 = vld [vmem:[%s1898 + $0x48] sm:$0xe]
      %v2478 = vld [vmem:[%s1898 + $0x4c] sm:$0xf]
      %v2479 = vld [vmem:[%s1898 + $0x50] sm:$0x1]
      %v2480 = vld [vmem:[%s1898 + $0x54] sm:$0xe]
      %v2481 = vld [vmem:[%s1898 + $0x58] sm:$0xf]
      %v2482 = vld [vmem:[%s1898 + $0x5c] sm:$0x1]
      %v2483 = vld [vmem:[%s1898 + $0x60] sm:$0xe]
      %v2484 = vld [vmem:[%s1898 + $0x64] sm:$0xf]
      %v2485 = vld [vmem:[%s1898 + $0x68] sm:$0x1]
      %v2486 = vld [vmem:[%s1898 + $0x6c] sm:$0xe]
      %v2487 = vld [vmem:[%s1898 + $0x70] sm:$0xf]
      %v2488 = vld [vmem:[%s1898 + $0x74] sm:$0x1]
      %v2489 = vld [vmem:[%s1898 + $0x78] sm:$0xe]
      %v2490 = vld [vmem:[%s1898 + $0x7c] sm:$0xf]
      %v2491 = vld [vmem:[%s1898 + $0x80] sm:$0x1]
      %v2492 = vld [vmem:[%s1898 + $0x84] sm:$0xe]
      %v2493 = vld [vmem:[%s1898 + $0x88] sm:$0xf]
      %v2494 = vld [vmem:[%s1898 + $0x8c] sm:$0x1]
      %v2495 = vld [vmem:[%s1898 + $0x90] sm:$0xe]
      %v2496 = vld [vmem:[%s1898 + $0x94] sm:$0xf]
      %v2497 = vld [vmem:[%s1898 + $0x98] sm:$0x1]
      %v2498 = vld [vmem:[%s1898 + $0x9c] sm:$0xe]
      %v2499 = vld [vmem:[%s1898 + $0xa0] sm:$0xf]
      %v2500 = vld [vmem:[%s1898 + $0xa4] sm:$0x1]
      %v2501 = vld [vmem:[%s1898 + $0xa8] sm:$0xe]
      %v2502 = vld [vmem:[%s1898 + $0xac] sm:$0xf]
      %v2503 = vld [vmem:[%s1898 + $0xb0] sm:$0x1]
      %v2504 = vld [vmem:[%s1898 + $0xb4] sm:$0xe]
      %v2505 = vld [vmem:[%s1898 + $0xb8] sm:$0xf]
      %v2506 = vld [vmem:[%s1898 + $0xbc] sm:$0x1]
      %v2555 = vrot.slane %v2459, 5
      %v2556 = vrot.slane %v2555, 4
      %v2557 = vrot.slane %v2460, 5
      %v2558 = vsel %vm907, %v2556, %v2557
      %v2559 = vrot.slane %v2557, 4
      %v2560 = vrot.slane %v2461, 5
      %v2561 = vsel %vm907, %v2559, %v2560
      %v2562 = vrot.slane %v2462, 5
      %v2563 = vrot.slane %v2562, 4
      %v2564 = vrot.slane %v2463, 5
      %v2565 = vsel %vm907, %v2563, %v2564
      %v2566 = vrot.slane %v2564, 4
      %v2567 = vrot.slane %v2464, 5
      %v2568 = vsel %vm907, %v2566, %v2567
      %v2569 = vrot.slane %v2465, 5
      %v2570 = vrot.slane %v2569, 4
      %v2571 = vrot.slane %v2466, 5
      %v2572 = vsel %vm907, %v2570, %v2571
      %v2573 = vrot.slane %v2571, 4
      %v2574 = vrot.slane %v2467, 5
      %v2575 = vsel %vm907, %v2573, %v2574
      %v2576 = vrot.slane %v2468, 5
      %v2577 = vrot.slane %v2576, 4
      %v2578 = vrot.slane %v2469, 5
      %v2579 = vsel %vm907, %v2577, %v2578
      %v2580 = vrot.slane %v2578, 4
      %v2581 = vrot.slane %v2470, 5
      %v2582 = vsel %vm907, %v2580, %v2581
      %v2583 = vrot.slane %v2471, 5
      %v2584 = vrot.slane %v2583, 4
      %v2585 = vrot.slane %v2472, 5
      %v2586 = vsel %vm907, %v2584, %v2585
      %v2587 = vrot.slane %v2585, 4
      %v2588 = vrot.slane %v2473, 5
      %v2589 = vsel %vm907, %v2587, %v2588
      %v2590 = vrot.slane %v2474, 5
      %v2591 = vrot.slane %v2590, 4
      %v2592 = vrot.slane %v2475, 5
      %v2593 = vsel %vm907, %v2591, %v2592
      %v2594 = vrot.slane %v2592, 4
      %v2595 = vrot.slane %v2476, 5
      %v2596 = vsel %vm907, %v2594, %v2595
      %v2597 = vrot.slane %v2477, 5
      %v2598 = vrot.slane %v2597, 4
      %v2599 = vrot.slane %v2478, 5
      %v2600 = vsel %vm907, %v2598, %v2599
      %v2601 = vrot.slane %v2599, 4
      %v2602 = vrot.slane %v2479, 5
      %v2603 = vsel %vm907, %v2601, %v2602
      %v2604 = vrot.slane %v2480, 5
      %v2605 = vrot.slane %v2604, 4
      %v2606 = vrot.slane %v2481, 5
      %v2607 = vsel %vm907, %v2605, %v2606
      %v2608 = vrot.slane %v2606, 4
      %v2609 = vrot.slane %v2482, 5
      %v2610 = vsel %vm907, %v2608, %v2609
      %v2611 = vrot.slane %v2483, 5
      %v2612 = vrot.slane %v2611, 4
      %v2613 = vrot.slane %v2484, 5
      %v2614 = vsel %vm907, %v2612, %v2613
      %v2615 = vrot.slane %v2613, 4
      %v2616 = vrot.slane %v2485, 5
      %v2617 = vsel %vm907, %v2615, %v2616
      %v2618 = vrot.slane %v2486, 5
      %v2619 = vrot.slane %v2618, 4
      %v2620 = vrot.slane %v2487, 5
      %v2621 = vsel %vm907, %v2619, %v2620
      %v2622 = vrot.slane %v2620, 4
      %v2623 = vrot.slane %v2488, 5
      %v2624 = vsel %vm907, %v2622, %v2623
      %v2625 = vrot.slane %v2489, 5
      %v2626 = vrot.slane %v2625, 4
      %v2627 = vrot.slane %v2490, 5
      %v2628 = vsel %vm907, %v2626, %v2627
      %v2629 = vrot.slane %v2627, 4
      %v2630 = vrot.slane %v2491, 5
      %v2631 = vsel %vm907, %v2629, %v2630
      %v2632 = vrot.slane %v2492, 5
      %v2633 = vrot.slane %v2632, 4
      %v2634 = vrot.slane %v2493, 5
      %v2635 = vsel %vm907, %v2633, %v2634
      %v2636 = vrot.slane %v2634, 4
      %v2637 = vrot.slane %v2494, 5
      %v2638 = vsel %vm907, %v2636, %v2637
      %v2639 = vrot.slane %v2495, 5
      %v2640 = vrot.slane %v2639, 4
      %v2641 = vrot.slane %v2496, 5
      %v2642 = vsel %vm907, %v2640, %v2641
      %v2643 = vrot.slane %v2641, 4
      %v2644 = vrot.slane %v2497, 5
      %v2645 = vsel %vm907, %v2643, %v2644
      %v2646 = vrot.slane %v2498, 5
      %v2647 = vrot.slane %v2646, 4
      %v2648 = vrot.slane %v2499, 5
      %v2649 = vsel %vm907, %v2647, %v2648
      %v2650 = vrot.slane %v2648, 4
      %v2651 = vrot.slane %v2500, 5
      %v2652 = vsel %vm907, %v2650, %v2651
      %v2653 = vrot.slane %v2501, 5
      %v2654 = vrot.slane %v2653, 4
      %v2655 = vrot.slane %v2502, 5
      %v2656 = vsel %vm907, %v2654, %v2655
      %v2657 = vrot.slane %v2655, 4
      %v2658 = vrot.slane %v2503, 5
      %v2659 = vsel %vm907, %v2657, %v2658
      %v2660 = vrot.slane %v2504, 5
      %v2661 = vrot.slane %v2660, 4
      %v2662 = vrot.slane %v2505, 5
      %v2663 = vsel %vm907, %v2661, %v2662
      %v2664 = vrot.slane %v2662, 4
      %v2665 = vrot.slane %v2506, 5
      %v2666 = vsel %vm907, %v2664, %v2665
      %2699 = vst [vmem:[#allocation3 + $0x8] sm:$0xf] %v2558
      %2700 = vst [vmem:[#allocation3 + $0x14] sm:$0xf] %v2561
      %2701 = vst [vmem:[#allocation3 + $0x20] sm:$0xf] %v2565
      %2702 = vst [vmem:[#allocation3 + $0x2c] sm:$0xf] %v2568
      %2703 = vst [vmem:[#allocation3 + $0x38] sm:$0xf] %v2572
      %2704 = vst [vmem:[#allocation3 + $0x44] sm:$0xf] %v2575
      %2705 = vst [vmem:[#allocation3 + $0x50] sm:$0xf] %v2579
      %2706 = vst [vmem:[#allocation3 + $0x5c] sm:$0xf] %v2582
      %2707 = vst [vmem:[#allocation3 + $0x68] sm:$0xf] %v2586
      %2708 = vst [vmem:[#allocation3 + $0x74] sm:$0xf] %v2589
      %2709 = vst [vmem:[#allocation3 + $0x80] sm:$0xf] %v2593
      %2710 = vst [vmem:[#allocation3 + $0x8c] sm:$0xf] %v2596
      %2711 = vst [vmem:[#allocation3 + $0x98] sm:$0xf] %v2600
      %2712 = vst [vmem:[#allocation3 + $0xa4] sm:$0xf] %v2603
      %2713 = vst [vmem:[#allocation3 + $0xb0] sm:$0xf] %v2607
      %2714 = vst [vmem:[#allocation3 + $0xbc] sm:$0xf] %v2610
      %2715 = vst [vmem:[#allocation3 + $0xc8] sm:$0xf] %v2614
      %2716 = vst [vmem:[#allocation3 + $0xd4] sm:$0xf] %v2617
      %2717 = vst [vmem:[#allocation3 + $0xe0] sm:$0xf] %v2621
      %2718 = vst [vmem:[#allocation3 + $0xec] sm:$0xf] %v2624
      %2719 = vst [vmem:[#allocation3 + $0xf8] sm:$0xf] %v2628
      %2720 = vst [vmem:[#allocation3 + $0x104] sm:$0xf] %v2631
      %2721 = vst [vmem:[#allocation3 + $0x110] sm:$0xf] %v2635
      %2722 = vst [vmem:[#allocation3 + $0x11c] sm:$0xf] %v2638
      %2723 = vst [vmem:[#allocation3 + $0x128] sm:$0xf] %v2642
      %2724 = vst [vmem:[#allocation3 + $0x134] sm:$0xf] %v2645
      %2725 = vst [vmem:[#allocation3 + $0x140] sm:$0xf] %v2649
      %2726 = vst [vmem:[#allocation3 + $0x14c] sm:$0xf] %v2652
      %2727 = vst [vmem:[#allocation3 + $0x158] sm:$0xf] %v2656
      %2728 = vst [vmem:[#allocation3 + $0x164] sm:$0xf] %v2659
      %2729 = vst [vmem:[#allocation3 + $0x170] sm:$0xf] %v2663
      %2730 = vst [vmem:[#allocation3 + $0x17c] sm:$0xf] %v2666
      %v2731 = vld [vmem:[#allocation3] sm:$0xff]
      %v2732 = vld [vmem:[#allocation3 + $0x8] sm:$0xf]
      %v2733 = vld [vmem:[#allocation3 + $0xc] sm:$0xff]
      %v2734 = vld [vmem:[#allocation3 + $0x14] sm:$0xf]
      %v2735 = vld [vmem:[#allocation3 + $0x18] sm:$0xff]
      %v2736 = vld [vmem:[#allocation3 + $0x20] sm:$0xf]
      %v2737 = vld [vmem:[#allocation3 + $0x24] sm:$0xff]
      %v2738 = vld [vmem:[#allocation3 + $0x2c] sm:$0xf]
      %v2739 = vld [vmem:[#allocation3 + $0x30] sm:$0xff]
      %v2740 = vld [vmem:[#allocation3 + $0x38] sm:$0xf]
      %v2741 = vld [vmem:[#allocation3 + $0x3c] sm:$0xff]
      %v2742 = vld [vmem:[#allocation3 + $0x44] sm:$0xf]
      %v2743 = vld [vmem:[#allocation3 + $0x48] sm:$0xff]
      %v2744 = vld [vmem:[#allocation3 + $0x50] sm:$0xf]
      %v2745 = vld [vmem:[#allocation3 + $0x54] sm:$0xff]
      %v2746 = vld [vmem:[#allocation3 + $0x5c] sm:$0xf]
      %v2747 = vld [vmem:[#allocation3 + $0x60] sm:$0xff]
      %v2748 = vld [vmem:[#allocation3 + $0x68] sm:$0xf]
      %v2749 = vld [vmem:[#allocation3 + $0x6c] sm:$0xff]
      %v2750 = vld [vmem:[#allocation3 + $0x74] sm:$0xf]
      %v2751 = vld [vmem:[#allocation3 + $0x78] sm:$0xff]
      %v2752 = vld [vmem:[#allocation3 + $0x80] sm:$0xf]
      %v2753 = vld [vmem:[#allocation3 + $0x84] sm:$0xff]
      %v2754 = vld [vmem:[#allocation3 + $0x8c] sm:$0xf]
      %v2755 = vld [vmem:[#allocation3 + $0x90] sm:$0xff]
      %v2756 = vld [vmem:[#allocation3 + $0x98] sm:$0xf]
      %v2757 = vld [vmem:[#allocation3 + $0x9c] sm:$0xff]
      %v2758 = vld [vmem:[#allocation3 + $0xa4] sm:$0xf]
      %v2759 = vld [vmem:[#allocation3 + $0xa8] sm:$0xff]
      %v2760 = vld [vmem:[#allocation3 + $0xb0] sm:$0xf]
      %v2761 = vld [vmem:[#allocation3 + $0xb4] sm:$0xff]
      %v2762 = vld [vmem:[#allocation3 + $0xbc] sm:$0xf]
      %v2763 = vld [vmem:[#allocation3 + $0xc0] sm:$0xff]
      %v2764 = vld [vmem:[#allocation3 + $0xc8] sm:$0xf]
      %v2765 = vld [vmem:[#allocation3 + $0xcc] sm:$0xff]
      %v2766 = vld [vmem:[#allocation3 + $0xd4] sm:$0xf]
      %v2767 = vld [vmem:[#allocation3 + $0xd8] sm:$0xff]
      %v2768 = vld [vmem:[#allocation3 + $0xe0] sm:$0xf]
      %v2769 = vld [vmem:[#allocation3 + $0xe4] sm:$0xff]
      %v2770 = vld [vmem:[#allocation3 + $0xec] sm:$0xf]
      %v2771 = vld [vmem:[#allocation3 + $0xf0] sm:$0xff]
      %v2772 = vld [vmem:[#allocation3 + $0xf8] sm:$0xf]
      %v2773 = vld [vmem:[#allocation3 + $0xfc] sm:$0xff]
      %v2774 = vld [vmem:[#allocation3 + $0x104] sm:$0xf]
      %v2775 = vld [vmem:[#allocation3 + $0x108] sm:$0xff]
      %v2776 = vld [vmem:[#allocation3 + $0x110] sm:$0xf]
      %v2777 = vld [vmem:[#allocation3 + $0x114] sm:$0xff]
      %v2778 = vld [vmem:[#allocation3 + $0x11c] sm:$0xf]
      %v2779 = vld [vmem:[#allocation3 + $0x120] sm:$0xff]
      %v2780 = vld [vmem:[#allocation3 + $0x128] sm:$0xf]
      %v2781 = vld [vmem:[#allocation3 + $0x12c] sm:$0xff]
      %v2782 = vld [vmem:[#allocation3 + $0x134] sm:$0xf]
      %v2783 = vld [vmem:[#allocation3 + $0x138] sm:$0xff]
      %v2784 = vld [vmem:[#allocation3 + $0x140] sm:$0xf]
      %v2785 = vld [vmem:[#allocation3 + $0x144] sm:$0xff]
      %v2786 = vld [vmem:[#allocation3 + $0x14c] sm:$0xf]
      %v2787 = vld [vmem:[#allocation3 + $0x150] sm:$0xff]
      %v2788 = vld [vmem:[#allocation3 + $0x158] sm:$0xf]
      %v2789 = vld [vmem:[#allocation3 + $0x15c] sm:$0xff]
      %v2790 = vld [vmem:[#allocation3 + $0x164] sm:$0xf]
      %v2791 = vld [vmem:[#allocation3 + $0x168] sm:$0xff]
      %v2792 = vld [vmem:[#allocation3 + $0x170] sm:$0xf]
      %v2793 = vld [vmem:[#allocation3 + $0x174] sm:$0xff]
      %v2794 = vld [vmem:[#allocation3 + $0x17c] sm:$0xf]
      %s2795 = scalar_lea.vmem %s224, 192
      %v2796 = vld [vmem:[%s2795] sm:$0xf]
      %v2797 = vld [vmem:[%s2795 + $0x4] sm:$0xf]
      %v2798 = vld [vmem:[%s2795 + $0x8] sm:$0xf]
      %v2799 = vld [vmem:[%s2795 + $0xc] sm:$0xf]
      %v2800 = vld [vmem:[%s2795 + $0x10] sm:$0xf]
      %v2801 = vld [vmem:[%s2795 + $0x14] sm:$0xf]
      %v2802 = vld [vmem:[%s2795 + $0x18] sm:$0xf]
      %v2803 = vld [vmem:[%s2795 + $0x1c] sm:$0xf]
      %v2804 = vld [vmem:[%s2795 + $0x20] sm:$0xf]
      %v2805 = vld [vmem:[%s2795 + $0x24] sm:$0xf]
      %v2806 = vld [vmem:[%s2795 + $0x28] sm:$0xf]
      %v2807 = vld [vmem:[%s2795 + $0x2c] sm:$0xf]
      %v2808 = vld [vmem:[%s2795 + $0x30] sm:$0xf]
      %v2809 = vld [vmem:[%s2795 + $0x34] sm:$0xf]
      %v2810 = vld [vmem:[%s2795 + $0x38] sm:$0xf]
      %v2811 = vld [vmem:[%s2795 + $0x3c] sm:$0xf]
      %v2812 = vld [vmem:[%s2795 + $0x40] sm:$0xf]
      %v2813 = vld [vmem:[%s2795 + $0x44] sm:$0xf]
      %v2814 = vld [vmem:[%s2795 + $0x48] sm:$0xf]
      %v2815 = vld [vmem:[%s2795 + $0x4c] sm:$0xf]
      %v2816 = vld [vmem:[%s2795 + $0x50] sm:$0xf]
      %v2817 = vld [vmem:[%s2795 + $0x54] sm:$0xf]
      %v2818 = vld [vmem:[%s2795 + $0x58] sm:$0xf]
      %v2819 = vld [vmem:[%s2795 + $0x5c] sm:$0xf]
      %v2820 = vld [vmem:[%s2795 + $0x60] sm:$0xf]
      %v2821 = vld [vmem:[%s2795 + $0x64] sm:$0xf]
      %v2822 = vld [vmem:[%s2795 + $0x68] sm:$0xf]
      %v2823 = vld [vmem:[%s2795 + $0x6c] sm:$0xf]
      %v2824 = vld [vmem:[%s2795 + $0x70] sm:$0xf]
      %v2825 = vld [vmem:[%s2795 + $0x74] sm:$0xf]
      %v2826 = vld [vmem:[%s2795 + $0x78] sm:$0xf]
      %v2827 = vld [vmem:[%s2795 + $0x7c] sm:$0xf]
      %v2828 = vld [vmem:[%s2795 + $0x80] sm:$0xf]
      %v2829 = vld [vmem:[%s2795 + $0x84] sm:$0xf]
      %v2830 = vld [vmem:[%s2795 + $0x88] sm:$0xf]
      %v2831 = vld [vmem:[%s2795 + $0x8c] sm:$0xf]
      %v2832 = vld [vmem:[%s2795 + $0x90] sm:$0xf]
      %v2833 = vld [vmem:[%s2795 + $0x94] sm:$0xf]
      %v2834 = vld [vmem:[%s2795 + $0x98] sm:$0xf]
      %v2835 = vld [vmem:[%s2795 + $0x9c] sm:$0xf]
      %v2836 = vld [vmem:[%s2795 + $0xa0] sm:$0xf]
      %v2837 = vld [vmem:[%s2795 + $0xa4] sm:$0xf]
      %v2838 = vld [vmem:[%s2795 + $0xa8] sm:$0xf]
      %v2839 = vld [vmem:[%s2795 + $0xac] sm:$0xf]
      %v2840 = vld [vmem:[%s2795 + $0xb0] sm:$0xf]
      %v2841 = vld [vmem:[%s2795 + $0xb4] sm:$0xf]
      %v2842 = vld [vmem:[%s2795 + $0xb8] sm:$0xf]
      %v2843 = vld [vmem:[%s2795 + $0xbc] sm:$0xf]
      %v2908 = vunpack.c.l.b16 %v2731
      %v2909 = vunpack.c.h.b16 %v2731
      %v2910 = vunpack.c.l.b16 %v2732
      %v2911 = vunpack.c.l.b16 %v2733
      %v2912 = vunpack.c.h.b16 %v2733
      %v2913 = vunpack.c.l.b16 %v2734
      %v2914 = vunpack.c.l.b16 %v2735
      %v2915 = vunpack.c.h.b16 %v2735
      %v2916 = vunpack.c.l.b16 %v2736
      %v2917 = vunpack.c.l.b16 %v2737
      %v2918 = vunpack.c.h.b16 %v2737
      %v2919 = vunpack.c.l.b16 %v2738
      %v2920 = vunpack.c.l.b16 %v2739
      %v2921 = vunpack.c.h.b16 %v2739
      %v2922 = vunpack.c.l.b16 %v2740
      %v2923 = vunpack.c.l.b16 %v2741
      %v2924 = vunpack.c.h.b16 %v2741
      %v2925 = vunpack.c.l.b16 %v2742
      %v2926 = vunpack.c.l.b16 %v2743
      %v2927 = vunpack.c.h.b16 %v2743
      %v2928 = vunpack.c.l.b16 %v2744
      %v2929 = vunpack.c.l.b16 %v2745
      %v2930 = vunpack.c.h.b16 %v2745
      %v2931 = vunpack.c.l.b16 %v2746
      %v2932 = vunpack.c.l.b16 %v2747
      %v2933 = vunpack.c.h.b16 %v2747
      %v2934 = vunpack.c.l.b16 %v2748
      %v2935 = vunpack.c.l.b16 %v2749
      %v2936 = vunpack.c.h.b16 %v2749
      %v2937 = vunpack.c.l.b16 %v2750
      %v2938 = vunpack.c.l.b16 %v2751
      %v2939 = vunpack.c.h.b16 %v2751
      %v2940 = vunpack.c.l.b16 %v2752
      %v2941 = vunpack.c.l.b16 %v2753
      %v2942 = vunpack.c.h.b16 %v2753
      %v2943 = vunpack.c.l.b16 %v2754
      %v2944 = vunpack.c.l.b16 %v2755
      %v2945 = vunpack.c.h.b16 %v2755
      %v2946 = vunpack.c.l.b16 %v2756
      %v2947 = vunpack.c.l.b16 %v2757
      %v2948 = vunpack.c.h.b16 %v2757
      %v2949 = vunpack.c.l.b16 %v2758
      %v2950 = vunpack.c.l.b16 %v2759
      %v2951 = vunpack.c.h.b16 %v2759
      %v2952 = vunpack.c.l.b16 %v2760
      %v2953 = vunpack.c.l.b16 %v2761
      %v2954 = vunpack.c.h.b16 %v2761
      %v2955 = vunpack.c.l.b16 %v2762
      %v2956 = vunpack.c.l.b16 %v2763
      %v2957 = vunpack.c.h.b16 %v2763
      %v2958 = vunpack.c.l.b16 %v2764
      %v2959 = vunpack.c.l.b16 %v2765
      %v2960 = vunpack.c.h.b16 %v2765
      %v2961 = vunpack.c.l.b16 %v2766
      %v2962 = vunpack.c.l.b16 %v2767
      %v2963 = vunpack.c.h.b16 %v2767
      %v2964 = vunpack.c.l.b16 %v2768
      %v2965 = vunpack.c.l.b16 %v2769
      %v2966 = vunpack.c.h.b16 %v2769
      %v2967 = vunpack.c.l.b16 %v2770
      %v2968 = vunpack.c.l.b16 %v2771
      %v2969 = vunpack.c.h.b16 %v2771
      %v2970 = vunpack.c.l.b16 %v2772
      %v2971 = vunpack.c.l.b16 %v2773
      %v2972 = vunpack.c.h.b16 %v2773
      %v2973 = vunpack.c.l.b16 %v2774
      %v2974 = vunpack.c.l.b16 %v2775
      %v2975 = vunpack.c.h.b16 %v2775
      %v2976 = vunpack.c.l.b16 %v2776
      %v2977 = vunpack.c.l.b16 %v2777
      %v2978 = vunpack.c.h.b16 %v2777
      %v2979 = vunpack.c.l.b16 %v2778
      %v2980 = vunpack.c.l.b16 %v2779
      %v2981 = vunpack.c.h.b16 %v2779
      %v2982 = vunpack.c.l.b16 %v2780
      %v2983 = vunpack.c.l.b16 %v2781
      %v2984 = vunpack.c.h.b16 %v2781
      %v2985 = vunpack.c.l.b16 %v2782
      %v2986 = vunpack.c.l.b16 %v2783
      %v2987 = vunpack.c.h.b16 %v2783
      %v2988 = vunpack.c.l.b16 %v2784
      %v2989 = vunpack.c.l.b16 %v2785
      %v2990 = vunpack.c.h.b16 %v2785
      %v2991 = vunpack.c.l.b16 %v2786
      %v2992 = vunpack.c.l.b16 %v2787
      %v2993 = vunpack.c.h.b16 %v2787
      %v2994 = vunpack.c.l.b16 %v2788
      %v2995 = vunpack.c.l.b16 %v2789
      %v2996 = vunpack.c.h.b16 %v2789
      %v2997 = vunpack.c.l.b16 %v2790
      %v2998 = vunpack.c.l.b16 %v2791
      %v2999 = vunpack.c.h.b16 %v2791
      %v3000 = vunpack.c.l.b16 %v2792
      %v3001 = vunpack.c.l.b16 %v2793
      %v3002 = vunpack.c.h.b16 %v2793
      %v3003 = vunpack.c.l.b16 %v2794
      %v3004 = vpack.c.b16 %v2911, %v2908
      %v3005 = vpack.c.b16 %v2912, %v2909
      %v3006 = vpack.c.b16 %v2913, %v2910
      %v3007 = vpack.c.b16 %v2917, %v2914
      %v3008 = vpack.c.b16 %v2918, %v2915
      %v3009 = vpack.c.b16 %v2919, %v2916
      %v3010 = vpack.c.b16 %v2923, %v2920
      %v3011 = vpack.c.b16 %v2924, %v2921
      %v3012 = vpack.c.b16 %v2925, %v2922
      %v3013 = vpack.c.b16 %v2929, %v2926
      %v3014 = vpack.c.b16 %v2930, %v2927
      %v3015 = vpack.c.b16 %v2931, %v2928
      %v3016 = vpack.c.b16 %v2935, %v2932
      %v3017 = vpack.c.b16 %v2936, %v2933
      %v3018 = vpack.c.b16 %v2937, %v2934
      %v3019 = vpack.c.b16 %v2941, %v2938
      %v3020 = vpack.c.b16 %v2942, %v2939
      %v3021 = vpack.c.b16 %v2943, %v2940
      %v3022 = vpack.c.b16 %v2947, %v2944
      %v3023 = vpack.c.b16 %v2948, %v2945
      %v3024 = vpack.c.b16 %v2949, %v2946
      %v3025 = vpack.c.b16 %v2953, %v2950
      %v3026 = vpack.c.b16 %v2954, %v2951
      %v3027 = vpack.c.b16 %v2955, %v2952
      %v3028 = vpack.c.b16 %v2959, %v2956
      %v3029 = vpack.c.b16 %v2960, %v2957
      %v3030 = vpack.c.b16 %v2961, %v2958
      %v3031 = vpack.c.b16 %v2965, %v2962
      %v3032 = vpack.c.b16 %v2966, %v2963
      %v3033 = vpack.c.b16 %v2967, %v2964
      %v3034 = vpack.c.b16 %v2971, %v2968
      %v3035 = vpack.c.b16 %v2972, %v2969
      %v3036 = vpack.c.b16 %v2973, %v2970
      %v3037 = vpack.c.b16 %v2977, %v2974
      %v3038 = vpack.c.b16 %v2978, %v2975
      %v3039 = vpack.c.b16 %v2979, %v2976
      %v3040 = vpack.c.b16 %v2983, %v2980
      %v3041 = vpack.c.b16 %v2984, %v2981
      %v3042 = vpack.c.b16 %v2985, %v2982
      %v3043 = vpack.c.b16 %v2989, %v2986
      %v3044 = vpack.c.b16 %v2990, %v2987
      %v3045 = vpack.c.b16 %v2991, %v2988
      %v3046 = vpack.c.b16 %v2995, %v2992
      %v3047 = vpack.c.b16 %v2996, %v2993
      %v3048 = vpack.c.b16 %v2997, %v2994
      %v3049 = vpack.c.b16 %v3001, %v2998
      %v3050 = vpack.c.b16 %v3002, %v2999
      %v3051 = vpack.c.b16 %v3003, %v3000
      %v3148 = vunpack.c.l.b16 %v2796
      %v3149 = vunpack.c.l.b16 %v2797
      %v3150 = vunpack.c.l.b16 %v2798
      %v3151 = vunpack.c.l.b16 %v2799
      %v3152 = vunpack.c.l.b16 %v2800
      %v3153 = vunpack.c.l.b16 %v2801
      %v3154 = vunpack.c.l.b16 %v2802
      %v3155 = vunpack.c.l.b16 %v2803
      %v3156 = vunpack.c.l.b16 %v2804
      %v3157 = vunpack.c.l.b16 %v2805
      %v3158 = vunpack.c.l.b16 %v2806
      %v3159 = vunpack.c.l.b16 %v2807
      %v3160 = vunpack.c.l.b16 %v2808
      %v3161 = vunpack.c.l.b16 %v2809
      %v3162 = vunpack.c.l.b16 %v2810
      %v3163 = vunpack.c.l.b16 %v2811
      %v3164 = vunpack.c.l.b16 %v2812
      %v3165 = vunpack.c.l.b16 %v2813
      %v3166 = vunpack.c.l.b16 %v2814
      %v3167 = vunpack.c.l.b16 %v2815
      %v3168 = vunpack.c.l.b16 %v2816
      %v3169 = vunpack.c.l.b16 %v2817
      %v3170 = vunpack.c.l.b16 %v2818
      %v3171 = vunpack.c.l.b16 %v2819
      %v3172 = vunpack.c.l.b16 %v2820
      %v3173 = vunpack.c.l.b16 %v2821
      %v3174 = vunpack.c.l.b16 %v2822
      %v3175 = vunpack.c.l.b16 %v2823
      %v3176 = vunpack.c.l.b16 %v2824
      %v3177 = vunpack.c.l.b16 %v2825
      %v3178 = vunpack.c.l.b16 %v2826
      %v3179 = vunpack.c.l.b16 %v2827
      %v3180 = vunpack.c.l.b16 %v2828
      %v3181 = vunpack.c.l.b16 %v2829
      %v3182 = vunpack.c.l.b16 %v2830
      %v3183 = vunpack.c.l.b16 %v2831
      %v3184 = vunpack.c.l.b16 %v2832
      %v3185 = vunpack.c.l.b16 %v2833
      %v3186 = vunpack.c.l.b16 %v2834
      %v3187 = vunpack.c.l.b16 %v2835
      %v3188 = vunpack.c.l.b16 %v2836
      %v3189 = vunpack.c.l.b16 %v2837
      %v3190 = vunpack.c.l.b16 %v2838
      %v3191 = vunpack.c.l.b16 %v2839
      %v3192 = vunpack.c.l.b16 %v2840
      %v3193 = vunpack.c.l.b16 %v2841
      %v3194 = vunpack.c.l.b16 %v2842
      %v3195 = vunpack.c.l.b16 %v2843
      %v3196 = vpack.c.b16 %v3149, %v3148
      %v3197 = vpack.c.b16 %v3151, %v3150
      %v3198 = vpack.c.b16 %v3153, %v3152
      %v3199 = vpack.c.b16 %v3155, %v3154
      %v3200 = vpack.c.b16 %v3157, %v3156
      %v3201 = vpack.c.b16 %v3159, %v3158
      %v3202 = vpack.c.b16 %v3161, %v3160
      %v3203 = vpack.c.b16 %v3163, %v3162
      %v3204 = vpack.c.b16 %v3165, %v3164
      %v3205 = vpack.c.b16 %v3167, %v3166
      %v3206 = vpack.c.b16 %v3169, %v3168
      %v3207 = vpack.c.b16 %v3171, %v3170
      %v3208 = vpack.c.b16 %v3173, %v3172
      %v3209 = vpack.c.b16 %v3175, %v3174
      %v3210 = vpack.c.b16 %v3177, %v3176
      %v3211 = vpack.c.b16 %v3179, %v3178
      %v3212 = vpack.c.b16 %v3181, %v3180
      %v3213 = vpack.c.b16 %v3183, %v3182
      %v3214 = vpack.c.b16 %v3185, %v3184
      %v3215 = vpack.c.b16 %v3187, %v3186
      %v3216 = vpack.c.b16 %v3189, %v3188
      %v3217 = vpack.c.b16 %v3191, %v3190
      %v3218 = vpack.c.b16 %v3193, %v3192
      %v3219 = vpack.c.b16 %v3195, %v3194
      %3244 = vmatpush.bf16.msra.mxu0 %v3203
      %3245 = vmatpush.bf16.msra.mxu0 %v3202
      %3246 = vmatpush.bf16.msra.mxu0 %v3201
      %3247 = vmatpush.bf16.msra.mxu0 %v3200
      %3248 = vmatpush.bf16.msra.mxu0 %v3199
      %3249 = vmatpush.bf16.msra.mxu0 %v3198
      %3250 = vmatpush.bf16.msra.mxu0 %v3197
      %3251 = vmatpush.bf16.msra.mxu0 %v3196
      %3252 = vmatmul.bf16.gmra.mxu0 %v3004
      %v3253 = vpop.f32.mrf.mxu0
      %v3254 = vadd.f32 0.0, %v3253
      %v3255 = vpop.f32.mrf.mxu0
      %v3256 = vadd.f32 0.0, %v3255
      %3257 = vmatmul.bf16.gmra.mxu0 %v3007
      %v3258 = vpop.f32.mrf.mxu0
      %v3259 = vadd.f32 0.0, %v3258
      %v3260 = vpop.f32.mrf.mxu0
      %v3261 = vadd.f32 0.0, %v3260
      %3262 = vmatmul.bf16.gmra.mxu0 %v3010
      %v3263 = vpop.f32.mrf.mxu0
      %v3264 = vadd.f32 0.0, %v3263
      %v3265 = vpop.f32.mrf.mxu0
      %v3266 = vadd.f32 0.0, %v3265
      %3267 = vmatmul.bf16.gmra.mxu0 %v3013
      %v3268 = vpop.f32.mrf.mxu0
      %v3269 = vadd.f32 0.0, %v3268
      %v3270 = vpop.f32.mrf.mxu0
      %v3271 = vadd.f32 0.0, %v3270
      %3272 = vmatmul.bf16.gmra.mxu0 %v3016
      %v3273 = vpop.f32.mrf.mxu0
      %v3274 = vadd.f32 0.0, %v3273
      %v3275 = vpop.f32.mrf.mxu0
      %v3276 = vadd.f32 0.0, %v3275
      %3277 = vmatmul.bf16.gmra.mxu0 %v3019
      %v3278 = vpop.f32.mrf.mxu0
      %v3279 = vadd.f32 0.0, %v3278
      %v3280 = vpop.f32.mrf.mxu0
      %v3281 = vadd.f32 0.0, %v3280
      %3282 = vmatmul.bf16.gmra.mxu0 %v3022
      %v3283 = vpop.f32.mrf.mxu0
      %v3284 = vadd.f32 0.0, %v3283
      %v3285 = vpop.f32.mrf.mxu0
      %v3286 = vadd.f32 0.0, %v3285
      %3287 = vmatmul.bf16.gmra.mxu0 %v3025
      %v3288 = vpop.f32.mrf.mxu0
      %v3289 = vadd.f32 0.0, %v3288
      %v3290 = vpop.f32.mrf.mxu0
      %v3291 = vadd.f32 0.0, %v3290
      %3292 = vmatmul.bf16.gmra.mxu0 %v3028
      %v3293 = vpop.f32.mrf.mxu0
      %v3294 = vadd.f32 0.0, %v3293
      %v3295 = vpop.f32.mrf.mxu0
      %v3296 = vadd.f32 0.0, %v3295
      %3297 = vmatmul.bf16.gmra.mxu0 %v3031
      %v3298 = vpop.f32.mrf.mxu0
      %v3299 = vadd.f32 0.0, %v3298
      %v3300 = vpop.f32.mrf.mxu0
      %v3301 = vadd.f32 0.0, %v3300
      %3302 = vmatmul.bf16.gmra.mxu0 %v3034
      %v3303 = vpop.f32.mrf.mxu0
      %v3304 = vadd.f32 0.0, %v3303
      %v3305 = vpop.f32.mrf.mxu0
      %v3306 = vadd.f32 0.0, %v3305
      %3307 = vmatmul.bf16.gmra.mxu0 %v3037
      %v3308 = vpop.f32.mrf.mxu0
      %v3309 = vadd.f32 0.0, %v3308
      %v3310 = vpop.f32.mrf.mxu0
      %v3311 = vadd.f32 0.0, %v3310
      %3312 = vmatmul.bf16.gmra.mxu0 %v3040
      %v3313 = vpop.f32.mrf.mxu0
      %v3314 = vadd.f32 0.0, %v3313
      %v3315 = vpop.f32.mrf.mxu0
      %v3316 = vadd.f32 0.0, %v3315
      %3317 = vmatmul.bf16.gmra.mxu0 %v3043
      %v3318 = vpop.f32.mrf.mxu0
      %v3319 = vadd.f32 0.0, %v3318
      %v3320 = vpop.f32.mrf.mxu0
      %v3321 = vadd.f32 0.0, %v3320
      %3322 = vmatmul.bf16.gmra.mxu0 %v3046
      %v3323 = vpop.f32.mrf.mxu0
      %v3324 = vadd.f32 0.0, %v3323
      %v3325 = vpop.f32.mrf.mxu0
      %v3326 = vadd.f32 0.0, %v3325
      %3327 = vmatmul.bf16.gmra.mxu0 %v3049
      %v3328 = vpop.f32.mrf.mxu0
      %v3329 = vadd.f32 0.0, %v3328
      %v3330 = vpop.f32.mrf.mxu0
      %v3331 = vadd.f32 0.0, %v3330
      %3332 = vdwg.mxu0
      %3333 = vmatpush.bf16.msra.mxu0 %v3211
      %3334 = vmatpush.bf16.msra.mxu0 %v3210
      %3335 = vmatpush.bf16.msra.mxu0 %v3209
      %3336 = vmatpush.bf16.msra.mxu0 %v3208
      %3337 = vmatpush.bf16.msra.mxu0 %v3207
      %3338 = vmatpush.bf16.msra.mxu0 %v3206
      %3339 = vmatpush.bf16.msra.mxu0 %v3205
      %3340 = vmatpush.bf16.msra.mxu0 %v3204
      %3341 = vmatmul.bf16.gmra.mxu0 %v3005
      %v3342 = vpop.f32.mrf.mxu0
      %v3343 = vadd.f32 %v3254, %v3342
      %v3344 = vpop.f32.mrf.mxu0
      %v3345 = vadd.f32 %v3256, %v3344
      %3346 = vmatmul.bf16.gmra.mxu0 %v3008
      %v3347 = vpop.f32.mrf.mxu0
      %v3348 = vadd.f32 %v3259, %v3347
      %v3349 = vpop.f32.mrf.mxu0
      %v3350 = vadd.f32 %v3261, %v3349
      %3351 = vmatmul.bf16.gmra.mxu0 %v3011
      %v3352 = vpop.f32.mrf.mxu0
      %v3353 = vadd.f32 %v3264, %v3352
      %v3354 = vpop.f32.mrf.mxu0
      %v3355 = vadd.f32 %v3266, %v3354
      %3356 = vmatmul.bf16.gmra.mxu0 %v3014
      %v3357 = vpop.f32.mrf.mxu0
      %v3358 = vadd.f32 %v3269, %v3357
      %v3359 = vpop.f32.mrf.mxu0
      %v3360 = vadd.f32 %v3271, %v3359
      %3361 = vmatmul.bf16.gmra.mxu0 %v3017
      %v3362 = vpop.f32.mrf.mxu0
      %v3363 = vadd.f32 %v3274, %v3362
      %v3364 = vpop.f32.mrf.mxu0
      %v3365 = vadd.f32 %v3276, %v3364
      %3366 = vmatmul.bf16.gmra.mxu0 %v3020
      %v3367 = vpop.f32.mrf.mxu0
      %v3368 = vadd.f32 %v3279, %v3367
      %v3369 = vpop.f32.mrf.mxu0
      %v3370 = vadd.f32 %v3281, %v3369
      %3371 = vmatmul.bf16.gmra.mxu0 %v3023
      %v3372 = vpop.f32.mrf.mxu0
      %v3373 = vadd.f32 %v3284, %v3372
      %v3374 = vpop.f32.mrf.mxu0
      %v3375 = vadd.f32 %v3286, %v3374
      %3376 = vmatmul.bf16.gmra.mxu0 %v3026
      %v3377 = vpop.f32.mrf.mxu0
      %v3378 = vadd.f32 %v3289, %v3377
      %v3379 = vpop.f32.mrf.mxu0
      %v3380 = vadd.f32 %v3291, %v3379
      %3381 = vmatmul.bf16.gmra.mxu0 %v3029
      %v3382 = vpop.f32.mrf.mxu0
      %v3383 = vadd.f32 %v3294, %v3382
      %v3384 = vpop.f32.mrf.mxu0
      %v3385 = vadd.f32 %v3296, %v3384
      %3386 = vmatmul.bf16.gmra.mxu0 %v3032
      %v3387 = vpop.f32.mrf.mxu0
      %v3388 = vadd.f32 %v3299, %v3387
      %v3389 = vpop.f32.mrf.mxu0
      %v3390 = vadd.f32 %v3301, %v3389
      %3391 = vmatmul.bf16.gmra.mxu0 %v3035
      %v3392 = vpop.f32.mrf.mxu0
      %v3393 = vadd.f32 %v3304, %v3392
      %v3394 = vpop.f32.mrf.mxu0
      %v3395 = vadd.f32 %v3306, %v3394
      %3396 = vmatmul.bf16.gmra.mxu0 %v3038
      %v3397 = vpop.f32.mrf.mxu0
      %v3398 = vadd.f32 %v3309, %v3397
      %v3399 = vpop.f32.mrf.mxu0
      %v3400 = vadd.f32 %v3311, %v3399
      %3401 = vmatmul.bf16.gmra.mxu0 %v3041
      %v3402 = vpop.f32.mrf.mxu0
      %v3403 = vadd.f32 %v3314, %v3402
      %v3404 = vpop.f32.mrf.mxu0
      %v3405 = vadd.f32 %v3316, %v3404
      %3406 = vmatmul.bf16.gmra.mxu0 %v3044
      %v3407 = vpop.f32.mrf.mxu0
      %v3408 = vadd.f32 %v3319, %v3407
      %v3409 = vpop.f32.mrf.mxu0
      %v3410 = vadd.f32 %v3321, %v3409
      %3411 = vmatmul.bf16.gmra.mxu0 %v3047
      %v3412 = vpop.f32.mrf.mxu0
      %v3413 = vadd.f32 %v3324, %v3412
      %v3414 = vpop.f32.mrf.mxu0
      %v3415 = vadd.f32 %v3326, %v3414
      %3416 = vmatmul.bf16.gmra.mxu0 %v3050
      %v3417 = vpop.f32.mrf.mxu0
      %v3418 = vadd.f32 %v3329, %v3417
      %v3419 = vpop.f32.mrf.mxu0
      %v3420 = vadd.f32 %v3331, %v3419
      %3421 = vdwg.mxu0
      %3422 = vmatpush.bf16.msra.mxu0 %v3219
      %3423 = vmatpush.bf16.msra.mxu0 %v3218
      %3424 = vmatpush.bf16.msra.mxu0 %v3217
      %3425 = vmatpush.bf16.msra.mxu0 %v3216
      %3426 = vmatpush.bf16.msra.mxu0 %v3215
      %3427 = vmatpush.bf16.msra.mxu0 %v3214
      %3428 = vmatpush.bf16.msra.mxu0 %v3213
      %3429 = vmatpush.bf16.msra.mxu0 %v3212
      %3430 = vmatmul.bf16.gmra.mxu0 %v3006
      %v3431 = vpop.f32.mrf.mxu0
      %v3432 = vadd.f32 %v3343, %v3431
      %v3433 = vpop.f32.mrf.mxu0
      %v3434 = vadd.f32 %v3345, %v3433
      %3435 = vmatmul.bf16.gmra.mxu0 %v3009
      %v3436 = vpop.f32.mrf.mxu0
      %v3437 = vadd.f32 %v3348, %v3436
      %v3438 = vpop.f32.mrf.mxu0
      %v3439 = vadd.f32 %v3350, %v3438
      %3440 = vmatmul.bf16.gmra.mxu0 %v3012
      %v3441 = vpop.f32.mrf.mxu0
      %v3442 = vadd.f32 %v3353, %v3441
      %v3443 = vpop.f32.mrf.mxu0
      %v3444 = vadd.f32 %v3355, %v3443
      %3445 = vmatmul.bf16.gmra.mxu0 %v3015
      %v3446 = vpop.f32.mrf.mxu0
      %v3447 = vadd.f32 %v3358, %v3446
      %v3448 = vpop.f32.mrf.mxu0
      %v3449 = vadd.f32 %v3360, %v3448
      %3450 = vmatmul.bf16.gmra.mxu0 %v3018
      %v3451 = vpop.f32.mrf.mxu0
      %v3452 = vadd.f32 %v3363, %v3451
      %v3453 = vpop.f32.mrf.mxu0
      %v3454 = vadd.f32 %v3365, %v3453
      %3455 = vmatmul.bf16.gmra.mxu0 %v3021
      %v3456 = vpop.f32.mrf.mxu0
      %v3457 = vadd.f32 %v3368, %v3456
      %v3458 = vpop.f32.mrf.mxu0
      %v3459 = vadd.f32 %v3370, %v3458
      %3460 = vmatmul.bf16.gmra.mxu0 %v3024
      %v3461 = vpop.f32.mrf.mxu0
      %v3462 = vadd.f32 %v3373, %v3461
      %v3463 = vpop.f32.mrf.mxu0
      %v3464 = vadd.f32 %v3375, %v3463
      %3465 = vmatmul.bf16.gmra.mxu0 %v3027
      %v3466 = vpop.f32.mrf.mxu0
      %v3467 = vadd.f32 %v3378, %v3466
      %v3468 = vpop.f32.mrf.mxu0
      %v3469 = vadd.f32 %v3380, %v3468
      %3470 = vmatmul.bf16.gmra.mxu0 %v3030
      %v3471 = vpop.f32.mrf.mxu0
      %v3472 = vadd.f32 %v3383, %v3471
      %v3473 = vpop.f32.mrf.mxu0
      %v3474 = vadd.f32 %v3385, %v3473
      %3475 = vmatmul.bf16.gmra.mxu0 %v3033
      %v3476 = vpop.f32.mrf.mxu0
      %v3477 = vadd.f32 %v3388, %v3476
      %v3478 = vpop.f32.mrf.mxu0
      %v3479 = vadd.f32 %v3390, %v3478
      %3480 = vmatmul.bf16.gmra.mxu0 %v3036
      %v3481 = vpop.f32.mrf.mxu0
      %v3482 = vadd.f32 %v3393, %v3481
      %v3483 = vpop.f32.mrf.mxu0
      %v3484 = vadd.f32 %v3395, %v3483
      %3485 = vmatmul.bf16.gmra.mxu0 %v3039
      %v3486 = vpop.f32.mrf.mxu0
      %v3487 = vadd.f32 %v3398, %v3486
      %v3488 = vpop.f32.mrf.mxu0
      %v3489 = vadd.f32 %v3400, %v3488
      %3490 = vmatmul.bf16.gmra.mxu0 %v3042
      %v3491 = vpop.f32.mrf.mxu0
      %v3492 = vadd.f32 %v3403, %v3491
      %v3493 = vpop.f32.mrf.mxu0
      %v3494 = vadd.f32 %v3405, %v3493
      %3495 = vmatmul.bf16.gmra.mxu0 %v3045
      %v3496 = vpop.f32.mrf.mxu0
      %v3497 = vadd.f32 %v3408, %v3496
      %v3498 = vpop.f32.mrf.mxu0
      %v3499 = vadd.f32 %v3410, %v3498
      %3500 = vmatmul.bf16.gmra.mxu0 %v3048
      %v3501 = vpop.f32.mrf.mxu0
      %v3502 = vadd.f32 %v3413, %v3501
      %v3503 = vpop.f32.mrf.mxu0
      %v3504 = vadd.f32 %v3415, %v3503
      %3505 = vmatmul.bf16.gmra.mxu0 %v3051
      %v3506 = vpop.f32.mrf.mxu0
      %v3507 = vadd.f32 %v3418, %v3506
      %v3508 = vpop.f32.mrf.mxu0
      %v3509 = vadd.f32 %v3420, %v3508
      %3510 = vdwg.mxu0
      %v3511 = vld [vmem:[#allocation2] sm:$0xff]
      %v3512 = vld [vmem:[#allocation2 + $0x8] sm:$0xff]
      %v3513 = vld [vmem:[#allocation2 + $0x10] sm:$0xff]
      %v3514 = vld [vmem:[#allocation2 + $0x18] sm:$0xff]
      %v3515 = vld [vmem:[#allocation2 + $0x20] sm:$0xff]
      %v3516 = vld [vmem:[#allocation2 + $0x28] sm:$0xff]
      %v3517 = vld [vmem:[#allocation2 + $0x30] sm:$0xff]
      %v3518 = vld [vmem:[#allocation2 + $0x38] sm:$0xff]
      %v3519 = vld [vmem:[#allocation2 + $0x40] sm:$0xff]
      %v3520 = vld [vmem:[#allocation2 + $0x48] sm:$0xff]
      %v3521 = vld [vmem:[#allocation2 + $0x50] sm:$0xff]
      %v3522 = vld [vmem:[#allocation2 + $0x58] sm:$0xff]
      %v3523 = vld [vmem:[#allocation2 + $0x60] sm:$0xff]
      %v3524 = vld [vmem:[#allocation2 + $0x68] sm:$0xff]
      %v3525 = vld [vmem:[#allocation2 + $0x70] sm:$0xff]
      %v3526 = vld [vmem:[#allocation2 + $0x78] sm:$0xff]
      %v3527 = vld [vmem:[#allocation2 + $0x80] sm:$0xff]
      %v3528 = vld [vmem:[#allocation2 + $0x88] sm:$0xff]
      %v3529 = vld [vmem:[#allocation2 + $0x90] sm:$0xff]
      %v3530 = vld [vmem:[#allocation2 + $0x98] sm:$0xff]
      %v3531 = vld [vmem:[#allocation2 + $0xa0] sm:$0xff]
      %v3532 = vld [vmem:[#allocation2 + $0xa8] sm:$0xff]
      %v3533 = vld [vmem:[#allocation2 + $0xb0] sm:$0xff]
      %v3534 = vld [vmem:[#allocation2 + $0xb8] sm:$0xff]
      %v3535 = vld [vmem:[#allocation2 + $0xc0] sm:$0xff]
      %v3536 = vld [vmem:[#allocation2 + $0xc8] sm:$0xff]
      %v3537 = vld [vmem:[#allocation2 + $0xd0] sm:$0xff]
      %v3538 = vld [vmem:[#allocation2 + $0xd8] sm:$0xff]
      %v3539 = vld [vmem:[#allocation2 + $0xe0] sm:$0xff]
      %v3540 = vld [vmem:[#allocation2 + $0xe8] sm:$0xff]
      %v3541 = vld [vmem:[#allocation2 + $0xf0] sm:$0xff]
      %v3542 = vld [vmem:[#allocation2 + $0xf8] sm:$0xff]
      %v3543 = vadd.f32 %v3511, %v3432
      %v3544 = vadd.f32 %v3512, %v3434
      %v3545 = vadd.f32 %v3513, %v3437
      %v3546 = vadd.f32 %v3514, %v3439
      %v3547 = vadd.f32 %v3515, %v3442
      %v3548 = vadd.f32 %v3516, %v3444
      %v3549 = vadd.f32 %v3517, %v3447
      %v3550 = vadd.f32 %v3518, %v3449
      %v3551 = vadd.f32 %v3519, %v3452
      %v3552 = vadd.f32 %v3520, %v3454
      %v3553 = vadd.f32 %v3521, %v3457
      %v3554 = vadd.f32 %v3522, %v3459
      %v3555 = vadd.f32 %v3523, %v3462
      %v3556 = vadd.f32 %v3524, %v3464
      %v3557 = vadd.f32 %v3525, %v3467
      %v3558 = vadd.f32 %v3526, %v3469
      %v3559 = vadd.f32 %v3527, %v3472
      %v3560 = vadd.f32 %v3528, %v3474
      %v3561 = vadd.f32 %v3529, %v3477
      %v3562 = vadd.f32 %v3530, %v3479
      %v3563 = vadd.f32 %v3531, %v3482
      %v3564 = vadd.f32 %v3532, %v3484
      %v3565 = vadd.f32 %v3533, %v3487
      %v3566 = vadd.f32 %v3534, %v3489
      %v3567 = vadd.f32 %v3535, %v3492
      %v3568 = vadd.f32 %v3536, %v3494
      %v3569 = vadd.f32 %v3537, %v3497
      %v3570 = vadd.f32 %v3538, %v3499
      %v3571 = vadd.f32 %v3539, %v3502
      %v3572 = vadd.f32 %v3540, %v3504
      %v3573 = vadd.f32 %v3541, %v3507
      %v3574 = vadd.f32 %v3542, %v3509
      %3575 = vst [vmem:[#allocation2] sm:$0xff] %v3543
      %3576 = vst [vmem:[#allocation2 + $0x8] sm:$0xff] %v3544
      %3577 = vst [vmem:[#allocation2 + $0x10] sm:$0xff] %v3545
      %3578 = vst [vmem:[#allocation2 + $0x18] sm:$0xff] %v3546
      %3579 = vst [vmem:[#allocation2 + $0x20] sm:$0xff] %v3547
      %3580 = vst [vmem:[#allocation2 + $0x28] sm:$0xff] %v3548
      %3581 = vst [vmem:[#allocation2 + $0x30] sm:$0xff] %v3549
      %3582 = vst [vmem:[#allocation2 + $0x38] sm:$0xff] %v3550
      %3583 = vst [vmem:[#allocation2 + $0x40] sm:$0xff] %v3551
      %3584 = vst [vmem:[#allocation2 + $0x48] sm:$0xff] %v3552
      %3585 = vst [vmem:[#allocation2 + $0x50] sm:$0xff] %v3553
      %3586 = vst [vmem:[#allocation2 + $0x58] sm:$0xff] %v3554
      %3587 = vst [vmem:[#allocation2 + $0x60] sm:$0xff] %v3555
      %3588 = vst [vmem:[#allocation2 + $0x68] sm:$0xff] %v3556
      %3589 = vst [vmem:[#allocation2 + $0x70] sm:$0xff] %v3557
      %3590 = vst [vmem:[#allocation2 + $0x78] sm:$0xff] %v3558
      %3591 = vst [vmem:[#allocation2 + $0x80] sm:$0xff] %v3559
      %3592 = vst [vmem:[#allocation2 + $0x88] sm:$0xff] %v3560
      %3593 = vst [vmem:[#allocation2 + $0x90] sm:$0xff] %v3561
      %3594 = vst [vmem:[#allocation2 + $0x98] sm:$0xff] %v3562
      %3595 = vst [vmem:[#allocation2 + $0xa0] sm:$0xff] %v3563
      %3596 = vst [vmem:[#allocation2 + $0xa8] sm:$0xff] %v3564
      %3597 = vst [vmem:[#allocation2 + $0xb0] sm:$0xff] %v3565
      %3598 = vst [vmem:[#allocation2 + $0xb8] sm:$0xff] %v3566
      %3599 = vst [vmem:[#allocation2 + $0xc0] sm:$0xff] %v3567
      %3600 = vst [vmem:[#allocation2 + $0xc8] sm:$0xff] %v3568
      %3601 = vst [vmem:[#allocation2 + $0xd0] sm:$0xff] %v3569
      %3602 = vst [vmem:[#allocation2 + $0xd8] sm:$0xff] %v3570
      %3603 = vst [vmem:[#allocation2 + $0xe0] sm:$0xff] %v3571
      %3604 = vst [vmem:[#allocation2 + $0xe8] sm:$0xff] %v3572
      %3605 = vst [vmem:[#allocation2 + $0xf0] sm:$0xff] %v3573
      %3606 = vst [vmem:[#allocation2 + $0xf8] sm:$0xff] %v3574
      %s3607 = sadd.s32 %s242, 2
      %s3608 = smul.u32 %s3607, 3
      %s3609 = smul.addr %s3608, 4
      %s3610 = scalar_lea.vmem %s220, %s3609
      %v3611 = vld [vmem:[%s3610] sm:$0xf]
      %v3612 = vld [vmem:[%s3610 + $0x4] sm:$0xf]
      %v3613 = vld [vmem:[%s3610 + $0xc] sm:$0xf]
      %v3614 = vld [vmem:[%s3610 + $0x10] sm:$0xf]
      %v3615 = vld [vmem:[%s3610 + $0x18] sm:$0xf]
      %v3616 = vld [vmem:[%s3610 + $0x1c] sm:$0xf]
      %v3617 = vld [vmem:[%s3610 + $0x24] sm:$0xf]
      %v3618 = vld [vmem:[%s3610 + $0x28] sm:$0xf]
      %v3619 = vld [vmem:[%s3610 + $0x30] sm:$0xf]
      %v3620 = vld [vmem:[%s3610 + $0x34] sm:$0xf]
      %v3621 = vld [vmem:[%s3610 + $0x3c] sm:$0xf]
      %v3622 = vld [vmem:[%s3610 + $0x40] sm:$0xf]
      %v3623 = vld [vmem:[%s3610 + $0x48] sm:$0xf]
      %v3624 = vld [vmem:[%s3610 + $0x4c] sm:$0xf]
      %v3625 = vld [vmem:[%s3610 + $0x54] sm:$0xf]
      %v3626 = vld [vmem:[%s3610 + $0x58] sm:$0xf]
      %v3627 = vld [vmem:[%s3610 + $0x60] sm:$0xf]
      %v3628 = vld [vmem:[%s3610 + $0x64] sm:$0xf]
      %v3629 = vld [vmem:[%s3610 + $0x6c] sm:$0xf]
      %v3630 = vld [vmem:[%s3610 + $0x70] sm:$0xf]
      %v3631 = vld [vmem:[%s3610 + $0x78] sm:$0xf]
      %v3632 = vld [vmem:[%s3610 + $0x7c] sm:$0xf]
      %v3633 = vld [vmem:[%s3610 + $0x84] sm:$0xf]
      %v3634 = vld [vmem:[%s3610 + $0x88] sm:$0xf]
      %v3635 = vld [vmem:[%s3610 + $0x90] sm:$0xf]
      %v3636 = vld [vmem:[%s3610 + $0x94] sm:$0xf]
      %v3637 = vld [vmem:[%s3610 + $0x9c] sm:$0xf]
      %v3638 = vld [vmem:[%s3610 + $0xa0] sm:$0xf]
      %v3639 = vld [vmem:[%s3610 + $0xa8] sm:$0xf]
      %v3640 = vld [vmem:[%s3610 + $0xac] sm:$0xf]
      %v3641 = vld [vmem:[%s3610 + $0xb4] sm:$0xf]
      %v3642 = vld [vmem:[%s3610 + $0xb8] sm:$0xf]
      %3643 = vst [vmem:[#allocation3] sm:$0xf] %v3611
      %3644 = vst [vmem:[#allocation3 + $0xc] sm:$0xf] %v3612
      %3645 = vst [vmem:[#allocation3 + $0x18] sm:$0xf] %v3613
      %3646 = vst [vmem:[#allocation3 + $0x24] sm:$0xf] %v3614
      %3647 = vst [vmem:[#allocation3 + $0x30] sm:$0xf] %v3615
      %3648 = vst [vmem:[#allocation3 + $0x3c] sm:$0xf] %v3616
      %3649 = vst [vmem:[#allocation3 + $0x48] sm:$0xf] %v3617
      %3650 = vst [vmem:[#allocation3 + $0x54] sm:$0xf] %v3618
      %3651 = vst [vmem:[#allocation3 + $0x60] sm:$0xf] %v3619
      %3652 = vst [vmem:[#allocation3 + $0x6c] sm:$0xf] %v3620
      %3653 = vst [vmem:[#allocation3 + $0x78] sm:$0xf] %v3621
      %3654 = vst [vmem:[#allocation3 + $0x84] sm:$0xf] %v3622
      %3655 = vst [vmem:[#allocation3 + $0x90] sm:$0xf] %v3623
      %3656 = vst [vmem:[#allocation3 + $0x9c] sm:$0xf] %v3624
      %3657 = vst [vmem:[#allocation3 + $0xa8] sm:$0xf] %v3625
      %3658 = vst [vmem:[#allocation3 + $0xb4] sm:$0xf] %v3626
      %3659 = vst [vmem:[#allocation3 + $0xc0] sm:$0xf] %v3627
      %3660 = vst [vmem:[#allocation3 + $0xcc] sm:$0xf] %v3628
      %3661 = vst [vmem:[#allocation3 + $0xd8] sm:$0xf] %v3629
      %3662 = vst [vmem:[#allocation3 + $0xe4] sm:$0xf] %v3630
      %3663 = vst [vmem:[#allocation3 + $0xf0] sm:$0xf] %v3631
      %3664 = vst [vmem:[#allocation3 + $0xfc] sm:$0xf] %v3632
      %3665 = vst [vmem:[#allocation3 + $0x108] sm:$0xf] %v3633
      %3666 = vst [vmem:[#allocation3 + $0x114] sm:$0xf] %v3634
      %3667 = vst [vmem:[#allocation3 + $0x120] sm:$0xf] %v3635
      %3668 = vst [vmem:[#allocation3 + $0x12c] sm:$0xf] %v3636
      %3669 = vst [vmem:[#allocation3 + $0x138] sm:$0xf] %v3637
      %3670 = vst [vmem:[#allocation3 + $0x144] sm:$0xf] %v3638
      %3671 = vst [vmem:[#allocation3 + $0x150] sm:$0xf] %v3639
      %3672 = vst [vmem:[#allocation3 + $0x15c] sm:$0xf] %v3640
      %3673 = vst [vmem:[#allocation3 + $0x168] sm:$0xf] %v3641
      %3674 = vst [vmem:[#allocation3 + $0x174] sm:$0xf] %v3642
      %v3675 = vld [vmem:[%s3610] sm:$0xf]
      %v3676 = vld [vmem:[%s3610 + $0x4] sm:$0xf]
      %v3677 = vld [vmem:[%s3610 + $0x8] sm:$0x1]
      %v3678 = vld [vmem:[%s3610 + $0xc] sm:$0xf]
      %v3679 = vld [vmem:[%s3610 + $0x10] sm:$0xf]
      %v3680 = vld [vmem:[%s3610 + $0x14] sm:$0x1]
      %v3681 = vld [vmem:[%s3610 + $0x18] sm:$0xf]
      %v3682 = vld [vmem:[%s3610 + $0x1c] sm:$0xf]
      %v3683 = vld [vmem:[%s3610 + $0x20] sm:$0x1]
      %v3684 = vld [vmem:[%s3610 + $0x24] sm:$0xf]
      %v3685 = vld [vmem:[%s3610 + $0x28] sm:$0xf]
      %v3686 = vld [vmem:[%s3610 + $0x2c] sm:$0x1]
      %v3687 = vld [vmem:[%s3610 + $0x30] sm:$0xf]
      %v3688 = vld [vmem:[%s3610 + $0x34] sm:$0xf]
      %v3689 = vld [vmem:[%s3610 + $0x38] sm:$0x1]
      %v3690 = vld [vmem:[%s3610 + $0x3c] sm:$0xf]
      %v3691 = vld [vmem:[%s3610 + $0x40] sm:$0xf]
      %v3692 = vld [vmem:[%s3610 + $0x44] sm:$0x1]
      %v3693 = vld [vmem:[%s3610 + $0x48] sm:$0xf]
      %v3694 = vld [vmem:[%s3610 + $0x4c] sm:$0xf]
      %v3695 = vld [vmem:[%s3610 + $0x50] sm:$0x1]
      %v3696 = vld [vmem:[%s3610 + $0x54] sm:$0xf]
      %v3697 = vld [vmem:[%s3610 + $0x58] sm:$0xf]
      %v3698 = vld [vmem:[%s3610 + $0x5c] sm:$0x1]
      %v3699 = vld [vmem:[%s3610 + $0x60] sm:$0xf]
      %v3700 = vld [vmem:[%s3610 + $0x64] sm:$0xf]
      %v3701 = vld [vmem:[%s3610 + $0x68] sm:$0x1]
      %v3702 = vld [vmem:[%s3610 + $0x6c] sm:$0xf]
      %v3703 = vld [vmem:[%s3610 + $0x70] sm:$0xf]
      %v3704 = vld [vmem:[%s3610 + $0x74] sm:$0x1]
      %v3705 = vld [vmem:[%s3610 + $0x78] sm:$0xf]
      %v3706 = vld [vmem:[%s3610 + $0x7c] sm:$0xf]
      %v3707 = vld [vmem:[%s3610 + $0x80] sm:$0x1]
      %v3708 = vld [vmem:[%s3610 + $0x84] sm:$0xf]
      %v3709 = vld [vmem:[%s3610 + $0x88] sm:$0xf]
      %v3710 = vld [vmem:[%s3610 + $0x8c] sm:$0x1]
      %v3711 = vld [vmem:[%s3610 + $0x90] sm:$0xf]
      %v3712 = vld [vmem:[%s3610 + $0x94] sm:$0xf]
      %v3713 = vld [vmem:[%s3610 + $0x98] sm:$0x1]
      %v3714 = vld [vmem:[%s3610 + $0x9c] sm:$0xf]
      %v3715 = vld [vmem:[%s3610 + $0xa0] sm:$0xf]
      %v3716 = vld [vmem:[%s3610 + $0xa4] sm:$0x1]
      %v3717 = vld [vmem:[%s3610 + $0xa8] sm:$0xf]
      %v3718 = vld [vmem:[%s3610 + $0xac] sm:$0xf]
      %v3719 = vld [vmem:[%s3610 + $0xb0] sm:$0x1]
      %v3720 = vld [vmem:[%s3610 + $0xb4] sm:$0xf]
      %v3721 = vld [vmem:[%s3610 + $0xb8] sm:$0xf]
      %v3722 = vld [vmem:[%s3610 + $0xbc] sm:$0x1]
      %v3724 = vshrl.u32 %v3675, 16
      %v3726 = vrot.slane %v3724, 4
      %v3727 = vshll.u32 %v3675, 16
      %v3729 = vrot.slane %v3727, 5
      %v3730 = vor.u32 %v3726, %v3729
      %v3731 = vrot.slane %v3730, 4
      %v3733 = vshll.u32 %v3676, 16
      %v3735 = vrot.slane %v3733, 5
      %v3736 = vsel %vm360, %v3731, %v3735
      %v3737 = vshrl.u32 %v3676, 16
      %v3739 = vrot.slane %v3737, 4
      %v3740 = vor.u32 %v3739, %v3735
      %v3741 = vrot.slane %v3740, 4
      %v3743 = vshll.u32 %v3677, 16
      %v3745 = vrot.slane %v3743, 5
      %v3746 = vsel %vm360, %v3741, %v3745
      %v3748 = vshrl.u32 %v3678, 16
      %v3750 = vrot.slane %v3748, 4
      %v3751 = vshll.u32 %v3678, 16
      %v3753 = vrot.slane %v3751, 5
      %v3754 = vor.u32 %v3750, %v3753
      %v3755 = vrot.slane %v3754, 4
      %v3757 = vshll.u32 %v3679, 16
      %v3759 = vrot.slane %v3757, 5
      %v3760 = vsel %vm360, %v3755, %v3759
      %v3761 = vshrl.u32 %v3679, 16
      %v3763 = vrot.slane %v3761, 4
      %v3764 = vor.u32 %v3763, %v3759
      %v3765 = vrot.slane %v3764, 4
      %v3767 = vshll.u32 %v3680, 16
      %v3769 = vrot.slane %v3767, 5
      %v3770 = vsel %vm360, %v3765, %v3769
      %v3772 = vshrl.u32 %v3681, 16
      %v3774 = vrot.slane %v3772, 4
      %v3775 = vshll.u32 %v3681, 16
      %v3777 = vrot.slane %v3775, 5
      %v3778 = vor.u32 %v3774, %v3777
      %v3779 = vrot.slane %v3778, 4
      %v3781 = vshll.u32 %v3682, 16
      %v3783 = vrot.slane %v3781, 5
      %v3784 = vsel %vm360, %v3779, %v3783
      %v3785 = vshrl.u32 %v3682, 16
      %v3787 = vrot.slane %v3785, 4
      %v3788 = vor.u32 %v3787, %v3783
      %v3789 = vrot.slane %v3788, 4
      %v3791 = vshll.u32 %v3683, 16
      %v3793 = vrot.slane %v3791, 5
      %v3794 = vsel %vm360, %v3789, %v3793
      %v3796 = vshrl.u32 %v3684, 16
      %v3798 = vrot.slane %v3796, 4
      %v3799 = vshll.u32 %v3684, 16
      %v3801 = vrot.slane %v3799, 5
      %v3802 = vor.u32 %v3798, %v3801
      %v3803 = vrot.slane %v3802, 4
      %v3805 = vshll.u32 %v3685, 16
      %v3807 = vrot.slane %v3805, 5
      %v3808 = vsel %vm360, %v3803, %v3807
      %v3809 = vshrl.u32 %v3685, 16
      %v3811 = vrot.slane %v3809, 4
      %v3812 = vor.u32 %v3811, %v3807
      %v3813 = vrot.slane %v3812, 4
      %v3815 = vshll.u32 %v3686, 16
      %v3817 = vrot.slane %v3815, 5
      %v3818 = vsel %vm360, %v3813, %v3817
      %v3820 = vshrl.u32 %v3687, 16
      %v3822 = vrot.slane %v3820, 4
      %v3823 = vshll.u32 %v3687, 16
      %v3825 = vrot.slane %v3823, 5
      %v3826 = vor.u32 %v3822, %v3825
      %v3827 = vrot.slane %v3826, 4
      %v3829 = vshll.u32 %v3688, 16
      %v3831 = vrot.slane %v3829, 5
      %v3832 = vsel %vm360, %v3827, %v3831
      %v3833 = vshrl.u32 %v3688, 16
      %v3835 = vrot.slane %v3833, 4
      %v3836 = vor.u32 %v3835, %v3831
      %v3837 = vrot.slane %v3836, 4
      %v3839 = vshll.u32 %v3689, 16
      %v3841 = vrot.slane %v3839, 5
      %v3842 = vsel %vm360, %v3837, %v3841
      %v3844 = vshrl.u32 %v3690, 16
      %v3846 = vrot.slane %v3844, 4
      %v3847 = vshll.u32 %v3690, 16
      %v3849 = vrot.slane %v3847, 5
      %v3850 = vor.u32 %v3846, %v3849
      %v3851 = vrot.slane %v3850, 4
      %v3853 = vshll.u32 %v3691, 16
      %v3855 = vrot.slane %v3853, 5
      %v3856 = vsel %vm360, %v3851, %v3855
      %v3857 = vshrl.u32 %v3691, 16
      %v3859 = vrot.slane %v3857, 4
      %v3860 = vor.u32 %v3859, %v3855
      %v3861 = vrot.slane %v3860, 4
      %v3863 = vshll.u32 %v3692, 16
      %v3865 = vrot.slane %v3863, 5
      %v3866 = vsel %vm360, %v3861, %v3865
      %v3868 = vshrl.u32 %v3693, 16
      %v3870 = vrot.slane %v3868, 4
      %v3871 = vshll.u32 %v3693, 16
      %v3873 = vrot.slane %v3871, 5
      %v3874 = vor.u32 %v3870, %v3873
      %v3875 = vrot.slane %v3874, 4
      %v3877 = vshll.u32 %v3694, 16
      %v3879 = vrot.slane %v3877, 5
      %v3880 = vsel %vm360, %v3875, %v3879
      %v3881 = vshrl.u32 %v3694, 16
      %v3883 = vrot.slane %v3881, 4
      %v3884 = vor.u32 %v3883, %v3879
      %v3885 = vrot.slane %v3884, 4
      %v3887 = vshll.u32 %v3695, 16
      %v3889 = vrot.slane %v3887, 5
      %v3890 = vsel %vm360, %v3885, %v3889
      %v3892 = vshrl.u32 %v3696, 16
      %v3894 = vrot.slane %v3892, 4
      %v3895 = vshll.u32 %v3696, 16
      %v3897 = vrot.slane %v3895, 5
      %v3898 = vor.u32 %v3894, %v3897
      %v3899 = vrot.slane %v3898, 4
      %v3901 = vshll.u32 %v3697, 16
      %v3903 = vrot.slane %v3901, 5
      %v3904 = vsel %vm360, %v3899, %v3903
      %v3905 = vshrl.u32 %v3697, 16
      %v3907 = vrot.slane %v3905, 4
      %v3908 = vor.u32 %v3907, %v3903
      %v3909 = vrot.slane %v3908, 4
      %v3911 = vshll.u32 %v3698, 16
      %v3913 = vrot.slane %v3911, 5
      %v3914 = vsel %vm360, %v3909, %v3913
      %v3916 = vshrl.u32 %v3699, 16
      %v3918 = vrot.slane %v3916, 4
      %v3919 = vshll.u32 %v3699, 16
      %v3921 = vrot.slane %v3919, 5
      %v3922 = vor.u32 %v3918, %v3921
      %v3923 = vrot.slane %v3922, 4
      %v3925 = vshll.u32 %v3700, 16
      %v3927 = vrot.slane %v3925, 5
      %v3928 = vsel %vm360, %v3923, %v3927
      %v3929 = vshrl.u32 %v3700, 16
      %v3931 = vrot.slane %v3929, 4
      %v3932 = vor.u32 %v3931, %v3927
      %v3933 = vrot.slane %v3932, 4
      %v3935 = vshll.u32 %v3701, 16
      %v3937 = vrot.slane %v3935, 5
      %v3938 = vsel %vm360, %v3933, %v3937
      %v3940 = vshrl.u32 %v3702, 16
      %v3942 = vrot.slane %v3940, 4
      %v3943 = vshll.u32 %v3702, 16
      %v3945 = vrot.slane %v3943, 5
      %v3946 = vor.u32 %v3942, %v3945
      %v3947 = vrot.slane %v3946, 4
      %v3949 = vshll.u32 %v3703, 16
      %v3951 = vrot.slane %v3949, 5
      %v3952 = vsel %vm360, %v3947, %v3951
      %v3953 = vshrl.u32 %v3703, 16
      %v3955 = vrot.slane %v3953, 4
      %v3956 = vor.u32 %v3955, %v3951
      %v3957 = vrot.slane %v3956, 4
      %v3959 = vshll.u32 %v3704, 16
      %v3961 = vrot.slane %v3959, 5
      %v3962 = vsel %vm360, %v3957, %v3961
      %v3964 = vshrl.u32 %v3705, 16
      %v3966 = vrot.slane %v3964, 4
      %v3967 = vshll.u32 %v3705, 16
      %v3969 = vrot.slane %v3967, 5
      %v3970 = vor.u32 %v3966, %v3969
      %v3971 = vrot.slane %v3970, 4
      %v3973 = vshll.u32 %v3706, 16
      %v3975 = vrot.slane %v3973, 5
      %v3976 = vsel %vm360, %v3971, %v3975
      %v3977 = vshrl.u32 %v3706, 16
      %v3979 = vrot.slane %v3977, 4
      %v3980 = vor.u32 %v3979, %v3975
      %v3981 = vrot.slane %v3980, 4
      %v3983 = vshll.u32 %v3707, 16
      %v3985 = vrot.slane %v3983, 5
      %v3986 = vsel %vm360, %v3981, %v3985
      %v3988 = vshrl.u32 %v3708, 16
      %v3990 = vrot.slane %v3988, 4
      %v3991 = vshll.u32 %v3708, 16
      %v3993 = vrot.slane %v3991, 5
      %v3994 = vor.u32 %v3990, %v3993
      %v3995 = vrot.slane %v3994, 4
      %v3997 = vshll.u32 %v3709, 16
      %v3999 = vrot.slane %v3997, 5
      %v4000 = vsel %vm360, %v3995, %v3999
      %v4001 = vshrl.u32 %v3709, 16
      %v4003 = vrot.slane %v4001, 4
      %v4004 = vor.u32 %v4003, %v3999
      %v4005 = vrot.slane %v4004, 4
      %v4007 = vshll.u32 %v3710, 16
      %v4009 = vrot.slane %v4007, 5
      %v4010 = vsel %vm360, %v4005, %v4009
      %v4012 = vshrl.u32 %v3711, 16
      %v4014 = vrot.slane %v4012, 4
      %v4015 = vshll.u32 %v3711, 16
      %v4017 = vrot.slane %v4015, 5
      %v4018 = vor.u32 %v4014, %v4017
      %v4019 = vrot.slane %v4018, 4
      %v4021 = vshll.u32 %v3712, 16
      %v4023 = vrot.slane %v4021, 5
      %v4024 = vsel %vm360, %v4019, %v4023
      %v4025 = vshrl.u32 %v3712, 16
      %v4027 = vrot.slane %v4025, 4
      %v4028 = vor.u32 %v4027, %v4023
      %v4029 = vrot.slane %v4028, 4
      %v4031 = vshll.u32 %v3713, 16
      %v4033 = vrot.slane %v4031, 5
      %v4034 = vsel %vm360, %v4029, %v4033
      %v4036 = vshrl.u32 %v3714, 16
      %v4038 = vrot.slane %v4036, 4
      %v4039 = vshll.u32 %v3714, 16
      %v4041 = vrot.slane %v4039, 5
      %v4042 = vor.u32 %v4038, %v4041
      %v4043 = vrot.slane %v4042, 4
      %v4045 = vshll.u32 %v3715, 16
      %v4047 = vrot.slane %v4045, 5
      %v4048 = vsel %vm360, %v4043, %v4047
      %v4049 = vshrl.u32 %v3715, 16
      %v4051 = vrot.slane %v4049, 4
      %v4052 = vor.u32 %v4051, %v4047
      %v4053 = vrot.slane %v4052, 4
      %v4055 = vshll.u32 %v3716, 16
      %v4057 = vrot.slane %v4055, 5
      %v4058 = vsel %vm360, %v4053, %v4057
      %v4060 = vshrl.u32 %v3717, 16
      %v4062 = vrot.slane %v4060, 4
      %v4063 = vshll.u32 %v3717, 16
      %v4065 = vrot.slane %v4063, 5
      %v4066 = vor.u32 %v4062, %v4065
      %v4067 = vrot.slane %v4066, 4
      %v4069 = vshll.u32 %v3718, 16
      %v4071 = vrot.slane %v4069, 5
      %v4072 = vsel %vm360, %v4067, %v4071
      %v4073 = vshrl.u32 %v3718, 16
      %v4075 = vrot.slane %v4073, 4
      %v4076 = vor.u32 %v4075, %v4071
      %v4077 = vrot.slane %v4076, 4
      %v4079 = vshll.u32 %v3719, 16
      %v4081 = vrot.slane %v4079, 5
      %v4082 = vsel %vm360, %v4077, %v4081
      %v4084 = vshrl.u32 %v3720, 16
      %v4086 = vrot.slane %v4084, 4
      %v4087 = vshll.u32 %v3720, 16
      %v4089 = vrot.slane %v4087, 5
      %v4090 = vor.u32 %v4086, %v4089
      %v4091 = vrot.slane %v4090, 4
      %v4093 = vshll.u32 %v3721, 16
      %v4095 = vrot.slane %v4093, 5
      %v4096 = vsel %vm360, %v4091, %v4095
      %v4097 = vshrl.u32 %v3721, 16
      %v4099 = vrot.slane %v4097, 4
      %v4100 = vor.u32 %v4099, %v4095
      %v4101 = vrot.slane %v4100, 4
      %v4103 = vshll.u32 %v3722, 16
      %v4105 = vrot.slane %v4103, 5
      %v4106 = vsel %vm360, %v4101, %v4105
      %4139 = vst [vmem:[#allocation3 + $0x4] sm:$0xf] %v3736
      %4140 = vst [vmem:[#allocation3 + $0x10] sm:$0xf] %v3746
      %4141 = vst [vmem:[#allocation3 + $0x1c] sm:$0xf] %v3760
      %4142 = vst [vmem:[#allocation3 + $0x28] sm:$0xf] %v3770
      %4143 = vst [vmem:[#allocation3 + $0x34] sm:$0xf] %v3784
      %4144 = vst [vmem:[#allocation3 + $0x40] sm:$0xf] %v3794
      %4145 = vst [vmem:[#allocation3 + $0x4c] sm:$0xf] %v3808
      %4146 = vst [vmem:[#allocation3 + $0x58] sm:$0xf] %v3818
      %4147 = vst [vmem:[#allocation3 + $0x64] sm:$0xf] %v3832
      %4148 = vst [vmem:[#allocation3 + $0x70] sm:$0xf] %v3842
      %4149 = vst [vmem:[#allocation3 + $0x7c] sm:$0xf] %v3856
      %4150 = vst [vmem:[#allocation3 + $0x88] sm:$0xf] %v3866
      %4151 = vst [vmem:[#allocation3 + $0x94] sm:$0xf] %v3880
      %4152 = vst [vmem:[#allocation3 + $0xa0] sm:$0xf] %v3890
      %4153 = vst [vmem:[#allocation3 + $0xac] sm:$0xf] %v3904
      %4154 = vst [vmem:[#allocation3 + $0xb8] sm:$0xf] %v3914
      %4155 = vst [vmem:[#allocation3 + $0xc4] sm:$0xf] %v3928
      %4156 = vst [vmem:[#allocation3 + $0xd0] sm:$0xf] %v3938
      %4157 = vst [vmem:[#allocation3 + $0xdc] sm:$0xf] %v3952
      %4158 = vst [vmem:[#allocation3 + $0xe8] sm:$0xf] %v3962
      %4159 = vst [vmem:[#allocation3 + $0xf4] sm:$0xf] %v3976
      %4160 = vst [vmem:[#allocation3 + $0x100] sm:$0xf] %v3986
      %4161 = vst [vmem:[#allocation3 + $0x10c] sm:$0xf] %v4000
      %4162 = vst [vmem:[#allocation3 + $0x118] sm:$0xf] %v4010
      %4163 = vst [vmem:[#allocation3 + $0x124] sm:$0xf] %v4024
      %4164 = vst [vmem:[#allocation3 + $0x130] sm:$0xf] %v4034
      %4165 = vst [vmem:[#allocation3 + $0x13c] sm:$0xf] %v4048
      %4166 = vst [vmem:[#allocation3 + $0x148] sm:$0xf] %v4058
      %4167 = vst [vmem:[#allocation3 + $0x154] sm:$0xf] %v4072
      %4168 = vst [vmem:[#allocation3 + $0x160] sm:$0xf] %v4082
      %4169 = vst [vmem:[#allocation3 + $0x16c] sm:$0xf] %v4096
      %4170 = vst [vmem:[#allocation3 + $0x178] sm:$0xf] %v4106
      %v4171 = vld [vmem:[%s3610] sm:$0xe]
      %v4172 = vld [vmem:[%s3610 + $0x4] sm:$0xf]
      %v4173 = vld [vmem:[%s3610 + $0x8] sm:$0x1]
      %v4174 = vld [vmem:[%s3610 + $0xc] sm:$0xe]
      %v4175 = vld [vmem:[%s3610 + $0x10] sm:$0xf]
      %v4176 = vld [vmem:[%s3610 + $0x14] sm:$0x1]
      %v4177 = vld [vmem:[%s3610 + $0x18] sm:$0xe]
      %v4178 = vld [vmem:[%s3610 + $0x1c] sm:$0xf]
      %v4179 = vld [vmem:[%s3610 + $0x20] sm:$0x1]
      %v4180 = vld [vmem:[%s3610 + $0x24] sm:$0xe]
      %v4181 = vld [vmem:[%s3610 + $0x28] sm:$0xf]
      %v4182 = vld [vmem:[%s3610 + $0x2c] sm:$0x1]
      %v4183 = vld [vmem:[%s3610 + $0x30] sm:$0xe]
      %v4184 = vld [vmem:[%s3610 + $0x34] sm:$0xf]
      %v4185 = vld [vmem:[%s3610 + $0x38] sm:$0x1]
      %v4186 = vld [vmem:[%s3610 + $0x3c] sm:$0xe]
      %v4187 = vld [vmem:[%s3610 + $0x40] sm:$0xf]
      %v4188 = vld [vmem:[%s3610 + $0x44] sm:$0x1]
      %v4189 = vld [vmem:[%s3610 + $0x48] sm:$0xe]
      %v4190 = vld [vmem:[%s3610 + $0x4c] sm:$0xf]
      %v4191 = vld [vmem:[%s3610 + $0x50] sm:$0x1]
      %v4192 = vld [vmem:[%s3610 + $0x54] sm:$0xe]
      %v4193 = vld [vmem:[%s3610 + $0x58] sm:$0xf]
      %v4194 = vld [vmem:[%s3610 + $0x5c] sm:$0x1]
      %v4195 = vld [vmem:[%s3610 + $0x60] sm:$0xe]
      %v4196 = vld [vmem:[%s3610 + $0x64] sm:$0xf]
      %v4197 = vld [vmem:[%s3610 + $0x68] sm:$0x1]
      %v4198 = vld [vmem:[%s3610 + $0x6c] sm:$0xe]
      %v4199 = vld [vmem:[%s3610 + $0x70] sm:$0xf]
      %v4200 = vld [vmem:[%s3610 + $0x74] sm:$0x1]
      %v4201 = vld [vmem:[%s3610 + $0x78] sm:$0xe]
      %v4202 = vld [vmem:[%s3610 + $0x7c] sm:$0xf]
      %v4203 = vld [vmem:[%s3610 + $0x80] sm:$0x1]
      %v4204 = vld [vmem:[%s3610 + $0x84] sm:$0xe]
      %v4205 = vld [vmem:[%s3610 + $0x88] sm:$0xf]
      %v4206 = vld [vmem:[%s3610 + $0x8c] sm:$0x1]
      %v4207 = vld [vmem:[%s3610 + $0x90] sm:$0xe]
      %v4208 = vld [vmem:[%s3610 + $0x94] sm:$0xf]
      %v4209 = vld [vmem:[%s3610 + $0x98] sm:$0x1]
      %v4210 = vld [vmem:[%s3610 + $0x9c] sm:$0xe]
      %v4211 = vld [vmem:[%s3610 + $0xa0] sm:$0xf]
      %v4212 = vld [vmem:[%s3610 + $0xa4] sm:$0x1]
      %v4213 = vld [vmem:[%s3610 + $0xa8] sm:$0xe]
      %v4214 = vld [vmem:[%s3610 + $0xac] sm:$0xf]
      %v4215 = vld [vmem:[%s3610 + $0xb0] sm:$0x1]
      %v4216 = vld [vmem:[%s3610 + $0xb4] sm:$0xe]
      %v4217 = vld [vmem:[%s3610 + $0xb8] sm:$0xf]
      %v4218 = vld [vmem:[%s3610 + $0xbc] sm:$0x1]
      %v4267 = vrot.slane %v4171, 5
      %v4268 = vrot.slane %v4267, 4
      %v4269 = vrot.slane %v4172, 5
      %v4270 = vsel %vm907, %v4268, %v4269
      %v4271 = vrot.slane %v4269, 4
      %v4272 = vrot.slane %v4173, 5
      %v4273 = vsel %vm907, %v4271, %v4272
      %v4274 = vrot.slane %v4174, 5
      %v4275 = vrot.slane %v4274, 4
      %v4276 = vrot.slane %v4175, 5
      %v4277 = vsel %vm907, %v4275, %v4276
      %v4278 = vrot.slane %v4276, 4
      %v4279 = vrot.slane %v4176, 5
      %v4280 = vsel %vm907, %v4278, %v4279
      %v4281 = vrot.slane %v4177, 5
      %v4282 = vrot.slane %v4281, 4
      %v4283 = vrot.slane %v4178, 5
      %v4284 = vsel %vm907, %v4282, %v4283
      %v4285 = vrot.slane %v4283, 4
      %v4286 = vrot.slane %v4179, 5
      %v4287 = vsel %vm907, %v4285, %v4286
      %v4288 = vrot.slane %v4180, 5
      %v4289 = vrot.slane %v4288, 4
      %v4290 = vrot.slane %v4181, 5
      %v4291 = vsel %vm907, %v4289, %v4290
      %v4292 = vrot.slane %v4290, 4
      %v4293 = vrot.slane %v4182, 5
      %v4294 = vsel %vm907, %v4292, %v4293
      %v4295 = vrot.slane %v4183, 5
      %v4296 = vrot.slane %v4295, 4
      %v4297 = vrot.slane %v4184, 5
      %v4298 = vsel %vm907, %v4296, %v4297
      %v4299 = vrot.slane %v4297, 4
      %v4300 = vrot.slane %v4185, 5
      %v4301 = vsel %vm907, %v4299, %v4300
      %v4302 = vrot.slane %v4186, 5
      %v4303 = vrot.slane %v4302, 4
      %v4304 = vrot.slane %v4187, 5
      %v4305 = vsel %vm907, %v4303, %v4304
      %v4306 = vrot.slane %v4304, 4
      %v4307 = vrot.slane %v4188, 5
      %v4308 = vsel %vm907, %v4306, %v4307
      %v4309 = vrot.slane %v4189, 5
      %v4310 = vrot.slane %v4309, 4
      %v4311 = vrot.slane %v4190, 5
      %v4312 = vsel %vm907, %v4310, %v4311
      %v4313 = vrot.slane %v4311, 4
      %v4314 = vrot.slane %v4191, 5
      %v4315 = vsel %vm907, %v4313, %v4314
      %v4316 = vrot.slane %v4192, 5
      %v4317 = vrot.slane %v4316, 4
      %v4318 = vrot.slane %v4193, 5
      %v4319 = vsel %vm907, %v4317, %v4318
      %v4320 = vrot.slane %v4318, 4
      %v4321 = vrot.slane %v4194, 5
      %v4322 = vsel %vm907, %v4320, %v4321
      %v4323 = vrot.slane %v4195, 5
      %v4324 = vrot.slane %v4323, 4
      %v4325 = vrot.slane %v4196, 5
      %v4326 = vsel %vm907, %v4324, %v4325
      %v4327 = vrot.slane %v4325, 4
      %v4328 = vrot.slane %v4197, 5
      %v4329 = vsel %vm907, %v4327, %v4328
      %v4330 = vrot.slane %v4198, 5
      %v4331 = vrot.slane %v4330, 4
      %v4332 = vrot.slane %v4199, 5
      %v4333 = vsel %vm907, %v4331, %v4332
      %v4334 = vrot.slane %v4332, 4
      %v4335 = vrot.slane %v4200, 5
      %v4336 = vsel %vm907, %v4334, %v4335
      %v4337 = vrot.slane %v4201, 5
      %v4338 = vrot.slane %v4337, 4
      %v4339 = vrot.slane %v4202, 5
      %v4340 = vsel %vm907, %v4338, %v4339
      %v4341 = vrot.slane %v4339, 4
      %v4342 = vrot.slane %v4203, 5
      %v4343 = vsel %vm907, %v4341, %v4342
      %v4344 = vrot.slane %v4204, 5
      %v4345 = vrot.slane %v4344, 4
      %v4346 = vrot.slane %v4205, 5
      %v4347 = vsel %vm907, %v4345, %v4346
      %v4348 = vrot.slane %v4346, 4
      %v4349 = vrot.slane %v4206, 5
      %v4350 = vsel %vm907, %v4348, %v4349
      %v4351 = vrot.slane %v4207, 5
      %v4352 = vrot.slane %v4351, 4
      %v4353 = vrot.slane %v4208, 5
      %v4354 = vsel %vm907, %v4352, %v4353
      %v4355 = vrot.slane %v4353, 4
      %v4356 = vrot.slane %v4209, 5
      %v4357 = vsel %vm907, %v4355, %v4356
      %v4358 = vrot.slane %v4210, 5
      %v4359 = vrot.slane %v4358, 4
      %v4360 = vrot.slane %v4211, 5
      %v4361 = vsel %vm907, %v4359, %v4360
      %v4362 = vrot.slane %v4360, 4
      %v4363 = vrot.slane %v4212, 5
      %v4364 = vsel %vm907, %v4362, %v4363
      %v4365 = vrot.slane %v4213, 5
      %v4366 = vrot.slane %v4365, 4
      %v4367 = vrot.slane %v4214, 5
      %v4368 = vsel %vm907, %v4366, %v4367
      %v4369 = vrot.slane %v4367, 4
      %v4370 = vrot.slane %v4215, 5
      %v4371 = vsel %vm907, %v4369, %v4370
      %v4372 = vrot.slane %v4216, 5
      %v4373 = vrot.slane %v4372, 4
      %v4374 = vrot.slane %v4217, 5
      %v4375 = vsel %vm907, %v4373, %v4374
      %v4376 = vrot.slane %v4374, 4
      %v4377 = vrot.slane %v4218, 5
      %v4378 = vsel %vm907, %v4376, %v4377
      %4411 = vst [vmem:[#allocation3 + $0x8] sm:$0xf] %v4270
      %4412 = vst [vmem:[#allocation3 + $0x14] sm:$0xf] %v4273
      %4413 = vst [vmem:[#allocation3 + $0x20] sm:$0xf] %v4277
      %4414 = vst [vmem:[#allocation3 + $0x2c] sm:$0xf] %v4280
      %4415 = vst [vmem:[#allocation3 + $0x38] sm:$0xf] %v4284
      %4416 = vst [vmem:[#allocation3 + $0x44] sm:$0xf] %v4287
      %4417 = vst [vmem:[#allocation3 + $0x50] sm:$0xf] %v4291
      %4418 = vst [vmem:[#allocation3 + $0x5c] sm:$0xf] %v4294
      %4419 = vst [vmem:[#allocation3 + $0x68] sm:$0xf] %v4298
      %4420 = vst [vmem:[#allocation3 + $0x74] sm:$0xf] %v4301
      %4421 = vst [vmem:[#allocation3 + $0x80] sm:$0xf] %v4305
      %4422 = vst [vmem:[#allocation3 + $0x8c] sm:$0xf] %v4308
      %4423 = vst [vmem:[#allocation3 + $0x98] sm:$0xf] %v4312
      %4424 = vst [vmem:[#allocation3 + $0xa4] sm:$0xf] %v4315
      %4425 = vst [vmem:[#allocation3 + $0xb0] sm:$0xf] %v4319
      %4426 = vst [vmem:[#allocation3 + $0xbc] sm:$0xf] %v4322
      %4427 = vst [vmem:[#allocation3 + $0xc8] sm:$0xf] %v4326
      %4428 = vst [vmem:[#allocation3 + $0xd4] sm:$0xf] %v4329
      %4429 = vst [vmem:[#allocation3 + $0xe0] sm:$0xf] %v4333
      %4430 = vst [vmem:[#allocation3 + $0xec] sm:$0xf] %v4336
      %4431 = vst [vmem:[#allocation3 + $0xf8] sm:$0xf] %v4340
      %4432 = vst [vmem:[#allocation3 + $0x104] sm:$0xf] %v4343
      %4433 = vst [vmem:[#allocation3 + $0x110] sm:$0xf] %v4347
      %4434 = vst [vmem:[#allocation3 + $0x11c] sm:$0xf] %v4350
      %4435 = vst [vmem:[#allocation3 + $0x128] sm:$0xf] %v4354
      %4436 = vst [vmem:[#allocation3 + $0x134] sm:$0xf] %v4357
      %4437 = vst [vmem:[#allocation3 + $0x140] sm:$0xf] %v4361
      %4438 = vst [vmem:[#allocation3 + $0x14c] sm:$0xf] %v4364
      %4439 = vst [vmem:[#allocation3 + $0x158] sm:$0xf] %v4368
      %4440 = vst [vmem:[#allocation3 + $0x164] sm:$0xf] %v4371
      %4441 = vst [vmem:[#allocation3 + $0x170] sm:$0xf] %v4375
      %4442 = vst [vmem:[#allocation3 + $0x17c] sm:$0xf] %v4378
      %v4443 = vld [vmem:[#allocation3] sm:$0xff]
      %v4444 = vld [vmem:[#allocation3 + $0x8] sm:$0xf]
      %v4445 = vld [vmem:[#allocation3 + $0xc] sm:$0xff]
      %v4446 = vld [vmem:[#allocation3 + $0x14] sm:$0xf]
      %v4447 = vld [vmem:[#allocation3 + $0x18] sm:$0xff]
      %v4448 = vld [vmem:[#allocation3 + $0x20] sm:$0xf]
      %v4449 = vld [vmem:[#allocation3 + $0x24] sm:$0xff]
      %v4450 = vld [vmem:[#allocation3 + $0x2c] sm:$0xf]
      %v4451 = vld [vmem:[#allocation3 + $0x30] sm:$0xff]
      %v4452 = vld [vmem:[#allocation3 + $0x38] sm:$0xf]
      %v4453 = vld [vmem:[#allocation3 + $0x3c] sm:$0xff]
      %v4454 = vld [vmem:[#allocation3 + $0x44] sm:$0xf]
      %v4455 = vld [vmem:[#allocation3 + $0x48] sm:$0xff]
      %v4456 = vld [vmem:[#allocation3 + $0x50] sm:$0xf]
      %v4457 = vld [vmem:[#allocation3 + $0x54] sm:$0xff]
      %v4458 = vld [vmem:[#allocation3 + $0x5c] sm:$0xf]
      %v4459 = vld [vmem:[#allocation3 + $0x60] sm:$0xff]
      %v4460 = vld [vmem:[#allocation3 + $0x68] sm:$0xf]
      %v4461 = vld [vmem:[#allocation3 + $0x6c] sm:$0xff]
      %v4462 = vld [vmem:[#allocation3 + $0x74] sm:$0xf]
      %v4463 = vld [vmem:[#allocation3 + $0x78] sm:$0xff]
      %v4464 = vld [vmem:[#allocation3 + $0x80] sm:$0xf]
      %v4465 = vld [vmem:[#allocation3 + $0x84] sm:$0xff]
      %v4466 = vld [vmem:[#allocation3 + $0x8c] sm:$0xf]
      %v4467 = vld [vmem:[#allocation3 + $0x90] sm:$0xff]
      %v4468 = vld [vmem:[#allocation3 + $0x98] sm:$0xf]
      %v4469 = vld [vmem:[#allocation3 + $0x9c] sm:$0xff]
      %v4470 = vld [vmem:[#allocation3 + $0xa4] sm:$0xf]
      %v4471 = vld [vmem:[#allocation3 + $0xa8] sm:$0xff]
      %v4472 = vld [vmem:[#allocation3 + $0xb0] sm:$0xf]
      %v4473 = vld [vmem:[#allocation3 + $0xb4] sm:$0xff]
      %v4474 = vld [vmem:[#allocation3 + $0xbc] sm:$0xf]
      %v4475 = vld [vmem:[#allocation3 + $0xc0] sm:$0xff]
      %v4476 = vld [vmem:[#allocation3 + $0xc8] sm:$0xf]
      %v4477 = vld [vmem:[#allocation3 + $0xcc] sm:$0xff]
      %v4478 = vld [vmem:[#allocation3 + $0xd4] sm:$0xf]
      %v4479 = vld [vmem:[#allocation3 + $0xd8] sm:$0xff]
      %v4480 = vld [vmem:[#allocation3 + $0xe0] sm:$0xf]
      %v4481 = vld [vmem:[#allocation3 + $0xe4] sm:$0xff]
      %v4482 = vld [vmem:[#allocation3 + $0xec] sm:$0xf]
      %v4483 = vld [vmem:[#allocation3 + $0xf0] sm:$0xff]
      %v4484 = vld [vmem:[#allocation3 + $0xf8] sm:$0xf]
      %v4485 = vld [vmem:[#allocation3 + $0xfc] sm:$0xff]
      %v4486 = vld [vmem:[#allocation3 + $0x104] sm:$0xf]
      %v4487 = vld [vmem:[#allocation3 + $0x108] sm:$0xff]
      %v4488 = vld [vmem:[#allocation3 + $0x110] sm:$0xf]
      %v4489 = vld [vmem:[#allocation3 + $0x114] sm:$0xff]
      %v4490 = vld [vmem:[#allocation3 + $0x11c] sm:$0xf]
      %v4491 = vld [vmem:[#allocation3 + $0x120] sm:$0xff]
      %v4492 = vld [vmem:[#allocation3 + $0x128] sm:$0xf]
      %v4493 = vld [vmem:[#allocation3 + $0x12c] sm:$0xff]
      %v4494 = vld [vmem:[#allocation3 + $0x134] sm:$0xf]
      %v4495 = vld [vmem:[#allocation3 + $0x138] sm:$0xff]
      %v4496 = vld [vmem:[#allocation3 + $0x140] sm:$0xf]
      %v4497 = vld [vmem:[#allocation3 + $0x144] sm:$0xff]
      %v4498 = vld [vmem:[#allocation3 + $0x14c] sm:$0xf]
      %v4499 = vld [vmem:[#allocation3 + $0x150] sm:$0xff]
      %v4500 = vld [vmem:[#allocation3 + $0x158] sm:$0xf]
      %v4501 = vld [vmem:[#allocation3 + $0x15c] sm:$0xff]
      %v4502 = vld [vmem:[#allocation3 + $0x164] sm:$0xf]
      %v4503 = vld [vmem:[#allocation3 + $0x168] sm:$0xff]
      %v4504 = vld [vmem:[#allocation3 + $0x170] sm:$0xf]
      %v4505 = vld [vmem:[#allocation3 + $0x174] sm:$0xff]
      %v4506 = vld [vmem:[#allocation3 + $0x17c] sm:$0xf]
      %s4507 = scalar_lea.vmem %s224, 384
      %v4508 = vld [vmem:[%s4507] sm:$0xf]
      %v4509 = vld [vmem:[%s4507 + $0x4] sm:$0xf]
      %v4510 = vld [vmem:[%s4507 + $0x8] sm:$0xf]
      %v4511 = vld [vmem:[%s4507 + $0xc] sm:$0xf]
      %v4512 = vld [vmem:[%s4507 + $0x10] sm:$0xf]
      %v4513 = vld [vmem:[%s4507 + $0x14] sm:$0xf]
      %v4514 = vld [vmem:[%s4507 + $0x18] sm:$0xf]
      %v4515 = vld [vmem:[%s4507 + $0x1c] sm:$0xf]
      %v4516 = vld [vmem:[%s4507 + $0x20] sm:$0xf]
      %v4517 = vld [vmem:[%s4507 + $0x24] sm:$0xf]
      %v4518 = vld [vmem:[%s4507 + $0x28] sm:$0xf]
      %v4519 = vld [vmem:[%s4507 + $0x2c] sm:$0xf]
      %v4520 = vld [vmem:[%s4507 + $0x30] sm:$0xf]
      %v4521 = vld [vmem:[%s4507 + $0x34] sm:$0xf]
      %v4522 = vld [vmem:[%s4507 + $0x38] sm:$0xf]
      %v4523 = vld [vmem:[%s4507 + $0x3c] sm:$0xf]
      %v4524 = vld [vmem:[%s4507 + $0x40] sm:$0xf]
      %v4525 = vld [vmem:[%s4507 + $0x44] sm:$0xf]
      %v4526 = vld [vmem:[%s4507 + $0x48] sm:$0xf]
      %v4527 = vld [vmem:[%s4507 + $0x4c] sm:$0xf]
      %v4528 = vld [vmem:[%s4507 + $0x50] sm:$0xf]
      %v4529 = vld [vmem:[%s4507 + $0x54] sm:$0xf]
      %v4530 = vld [vmem:[%s4507 + $0x58] sm:$0xf]
      %v4531 = vld [vmem:[%s4507 + $0x5c] sm:$0xf]
      %v4532 = vld [vmem:[%s4507 + $0x60] sm:$0xf]
      %v4533 = vld [vmem:[%s4507 + $0x64] sm:$0xf]
      %v4534 = vld [vmem:[%s4507 + $0x68] sm:$0xf]
      %v4535 = vld [vmem:[%s4507 + $0x6c] sm:$0xf]
      %v4536 = vld [vmem:[%s4507 + $0x70] sm:$0xf]
      %v4537 = vld [vmem:[%s4507 + $0x74] sm:$0xf]
      %v4538 = vld [vmem:[%s4507 + $0x78] sm:$0xf]
      %v4539 = vld [vmem:[%s4507 + $0x7c] sm:$0xf]
      %v4540 = vld [vmem:[%s4507 + $0x80] sm:$0xf]
      %v4541 = vld [vmem:[%s4507 + $0x84] sm:$0xf]
      %v4542 = vld [vmem:[%s4507 + $0x88] sm:$0xf]
      %v4543 = vld [vmem:[%s4507 + $0x8c] sm:$0xf]
      %v4544 = vld [vmem:[%s4507 + $0x90] sm:$0xf]
      %v4545 = vld [vmem:[%s4507 + $0x94] sm:$0xf]
      %v4546 = vld [vmem:[%s4507 + $0x98] sm:$0xf]
      %v4547 = vld [vmem:[%s4507 + $0x9c] sm:$0xf]
      %v4548 = vld [vmem:[%s4507 + $0xa0] sm:$0xf]
      %v4549 = vld [vmem:[%s4507 + $0xa4] sm:$0xf]
      %v4550 = vld [vmem:[%s4507 + $0xa8] sm:$0xf]
      %v4551 = vld [vmem:[%s4507 + $0xac] sm:$0xf]
      %v4552 = vld [vmem:[%s4507 + $0xb0] sm:$0xf]
      %v4553 = vld [vmem:[%s4507 + $0xb4] sm:$0xf]
      %v4554 = vld [vmem:[%s4507 + $0xb8] sm:$0xf]
      %v4555 = vld [vmem:[%s4507 + $0xbc] sm:$0xf]
      %v4620 = vunpack.c.l.b16 %v4443
      %v4621 = vunpack.c.h.b16 %v4443
      %v4622 = vunpack.c.l.b16 %v4444
      %v4623 = vunpack.c.l.b16 %v4445
      %v4624 = vunpack.c.h.b16 %v4445
      %v4625 = vunpack.c.l.b16 %v4446
      %v4626 = vunpack.c.l.b16 %v4447
      %v4627 = vunpack.c.h.b16 %v4447
      %v4628 = vunpack.c.l.b16 %v4448
      %v4629 = vunpack.c.l.b16 %v4449
      %v4630 = vunpack.c.h.b16 %v4449
      %v4631 = vunpack.c.l.b16 %v4450
      %v4632 = vunpack.c.l.b16 %v4451
      %v4633 = vunpack.c.h.b16 %v4451
      %v4634 = vunpack.c.l.b16 %v4452
      %v4635 = vunpack.c.l.b16 %v4453
      %v4636 = vunpack.c.h.b16 %v4453
      %v4637 = vunpack.c.l.b16 %v4454
      %v4638 = vunpack.c.l.b16 %v4455
      %v4639 = vunpack.c.h.b16 %v4455
      %v4640 = vunpack.c.l.b16 %v4456
      %v4641 = vunpack.c.l.b16 %v4457
      %v4642 = vunpack.c.h.b16 %v4457
      %v4643 = vunpack.c.l.b16 %v4458
      %v4644 = vunpack.c.l.b16 %v4459
      %v4645 = vunpack.c.h.b16 %v4459
      %v4646 = vunpack.c.l.b16 %v4460
      %v4647 = vunpack.c.l.b16 %v4461
      %v4648 = vunpack.c.h.b16 %v4461
      %v4649 = vunpack.c.l.b16 %v4462
      %v4650 = vunpack.c.l.b16 %v4463
      %v4651 = vunpack.c.h.b16 %v4463
      %v4652 = vunpack.c.l.b16 %v4464
      %v4653 = vunpack.c.l.b16 %v4465
      %v4654 = vunpack.c.h.b16 %v4465
      %v4655 = vunpack.c.l.b16 %v4466
      %v4656 = vunpack.c.l.b16 %v4467
      %v4657 = vunpack.c.h.b16 %v4467
      %v4658 = vunpack.c.l.b16 %v4468
      %v4659 = vunpack.c.l.b16 %v4469
      %v4660 = vunpack.c.h.b16 %v4469
      %v4661 = vunpack.c.l.b16 %v4470
      %v4662 = vunpack.c.l.b16 %v4471
      %v4663 = vunpack.c.h.b16 %v4471
      %v4664 = vunpack.c.l.b16 %v4472
      %v4665 = vunpack.c.l.b16 %v4473
      %v4666 = vunpack.c.h.b16 %v4473
      %v4667 = vunpack.c.l.b16 %v4474
      %v4668 = vunpack.c.l.b16 %v4475
      %v4669 = vunpack.c.h.b16 %v4475
      %v4670 = vunpack.c.l.b16 %v4476
      %v4671 = vunpack.c.l.b16 %v4477
      %v4672 = vunpack.c.h.b16 %v4477
      %v4673 = vunpack.c.l.b16 %v4478
      %v4674 = vunpack.c.l.b16 %v4479
      %v4675 = vunpack.c.h.b16 %v4479
      %v4676 = vunpack.c.l.b16 %v4480
      %v4677 = vunpack.c.l.b16 %v4481
      %v4678 = vunpack.c.h.b16 %v4481
      %v4679 = vunpack.c.l.b16 %v4482
      %v4680 = vunpack.c.l.b16 %v4483
      %v4681 = vunpack.c.h.b16 %v4483
      %v4682 = vunpack.c.l.b16 %v4484
      %v4683 = vunpack.c.l.b16 %v4485
      %v4684 = vunpack.c.h.b16 %v4485
      %v4685 = vunpack.c.l.b16 %v4486
      %v4686 = vunpack.c.l.b16 %v4487
      %v4687 = vunpack.c.h.b16 %v4487
      %v4688 = vunpack.c.l.b16 %v4488
      %v4689 = vunpack.c.l.b16 %v4489
      %v4690 = vunpack.c.h.b16 %v4489
      %v4691 = vunpack.c.l.b16 %v4490
      %v4692 = vunpack.c.l.b16 %v4491
      %v4693 = vunpack.c.h.b16 %v4491
      %v4694 = vunpack.c.l.b16 %v4492
      %v4695 = vunpack.c.l.b16 %v4493
      %v4696 = vunpack.c.h.b16 %v4493
      %v4697 = vunpack.c.l.b16 %v4494
      %v4698 = vunpack.c.l.b16 %v4495
      %v4699 = vunpack.c.h.b16 %v4495
      %v4700 = vunpack.c.l.b16 %v4496
      %v4701 = vunpack.c.l.b16 %v4497
      %v4702 = vunpack.c.h.b16 %v4497
      %v4703 = vunpack.c.l.b16 %v4498
      %v4704 = vunpack.c.l.b16 %v4499
      %v4705 = vunpack.c.h.b16 %v4499
      %v4706 = vunpack.c.l.b16 %v4500
      %v4707 = vunpack.c.l.b16 %v4501
      %v4708 = vunpack.c.h.b16 %v4501
      %v4709 = vunpack.c.l.b16 %v4502
      %v4710 = vunpack.c.l.b16 %v4503
      %v4711 = vunpack.c.h.b16 %v4503
      %v4712 = vunpack.c.l.b16 %v4504
      %v4713 = vunpack.c.l.b16 %v4505
      %v4714 = vunpack.c.h.b16 %v4505
      %v4715 = vunpack.c.l.b16 %v4506
      %v4716 = vpack.c.b16 %v4623, %v4620
      %v4717 = vpack.c.b16 %v4624, %v4621
      %v4718 = vpack.c.b16 %v4625, %v4622
      %v4719 = vpack.c.b16 %v4629, %v4626
      %v4720 = vpack.c.b16 %v4630, %v4627
      %v4721 = vpack.c.b16 %v4631, %v4628
      %v4722 = vpack.c.b16 %v4635, %v4632
      %v4723 = vpack.c.b16 %v4636, %v4633
      %v4724 = vpack.c.b16 %v4637, %v4634
      %v4725 = vpack.c.b16 %v4641, %v4638
      %v4726 = vpack.c.b16 %v4642, %v4639
      %v4727 = vpack.c.b16 %v4643, %v4640
      %v4728 = vpack.c.b16 %v4647, %v4644
      %v4729 = vpack.c.b16 %v4648, %v4645
      %v4730 = vpack.c.b16 %v4649, %v4646
      %v4731 = vpack.c.b16 %v4653, %v4650
      %v4732 = vpack.c.b16 %v4654, %v4651
      %v4733 = vpack.c.b16 %v4655, %v4652
      %v4734 = vpack.c.b16 %v4659, %v4656
      %v4735 = vpack.c.b16 %v4660, %v4657
      %v4736 = vpack.c.b16 %v4661, %v4658
      %v4737 = vpack.c.b16 %v4665, %v4662
      %v4738 = vpack.c.b16 %v4666, %v4663
      %v4739 = vpack.c.b16 %v4667, %v4664
      %v4740 = vpack.c.b16 %v4671, %v4668
      %v4741 = vpack.c.b16 %v4672, %v4669
      %v4742 = vpack.c.b16 %v4673, %v4670
      %v4743 = vpack.c.b16 %v4677, %v4674
      %v4744 = vpack.c.b16 %v4678, %v4675
      %v4745 = vpack.c.b16 %v4679, %v4676
      %v4746 = vpack.c.b16 %v4683, %v4680
      %v4747 = vpack.c.b16 %v4684, %v4681
      %v4748 = vpack.c.b16 %v4685, %v4682
      %v4749 = vpack.c.b16 %v4689, %v4686
      %v4750 = vpack.c.b16 %v4690, %v4687
      %v4751 = vpack.c.b16 %v4691, %v4688
      %v4752 = vpack.c.b16 %v4695, %v4692
      %v4753 = vpack.c.b16 %v4696, %v4693
      %v4754 = vpack.c.b16 %v4697, %v4694
      %v4755 = vpack.c.b16 %v4701, %v4698
      %v4756 = vpack.c.b16 %v4702, %v4699
      %v4757 = vpack.c.b16 %v4703, %v4700
      %v4758 = vpack.c.b16 %v4707, %v4704
      %v4759 = vpack.c.b16 %v4708, %v4705
      %v4760 = vpack.c.b16 %v4709, %v4706
      %v4761 = vpack.c.b16 %v4713, %v4710
      %v4762 = vpack.c.b16 %v4714, %v4711
      %v4763 = vpack.c.b16 %v4715, %v4712
      %v4860 = vunpack.c.l.b16 %v4508
      %v4861 = vunpack.c.l.b16 %v4509
      %v4862 = vunpack.c.l.b16 %v4510
      %v4863 = vunpack.c.l.b16 %v4511
      %v4864 = vunpack.c.l.b16 %v4512
      %v4865 = vunpack.c.l.b16 %v4513
      %v4866 = vunpack.c.l.b16 %v4514
      %v4867 = vunpack.c.l.b16 %v4515
      %v4868 = vunpack.c.l.b16 %v4516
      %v4869 = vunpack.c.l.b16 %v4517
      %v4870 = vunpack.c.l.b16 %v4518
      %v4871 = vunpack.c.l.b16 %v4519
      %v4872 = vunpack.c.l.b16 %v4520
      %v4873 = vunpack.c.l.b16 %v4521
      %v4874 = vunpack.c.l.b16 %v4522
      %v4875 = vunpack.c.l.b16 %v4523
      %v4876 = vunpack.c.l.b16 %v4524
      %v4877 = vunpack.c.l.b16 %v4525
      %v4878 = vunpack.c.l.b16 %v4526
      %v4879 = vunpack.c.l.b16 %v4527
      %v4880 = vunpack.c.l.b16 %v4528
      %v4881 = vunpack.c.l.b16 %v4529
      %v4882 = vunpack.c.l.b16 %v4530
      %v4883 = vunpack.c.l.b16 %v4531
      %v4884 = vunpack.c.l.b16 %v4532
      %v4885 = vunpack.c.l.b16 %v4533
      %v4886 = vunpack.c.l.b16 %v4534
      %v4887 = vunpack.c.l.b16 %v4535
      %v4888 = vunpack.c.l.b16 %v4536
      %v4889 = vunpack.c.l.b16 %v4537
      %v4890 = vunpack.c.l.b16 %v4538
      %v4891 = vunpack.c.l.b16 %v4539
      %v4892 = vunpack.c.l.b16 %v4540
      %v4893 = vunpack.c.l.b16 %v4541
      %v4894 = vunpack.c.l.b16 %v4542
      %v4895 = vunpack.c.l.b16 %v4543
      %v4896 = vunpack.c.l.b16 %v4544
      %v4897 = vunpack.c.l.b16 %v4545
      %v4898 = vunpack.c.l.b16 %v4546
      %v4899 = vunpack.c.l.b16 %v4547
      %v4900 = vunpack.c.l.b16 %v4548
      %v4901 = vunpack.c.l.b16 %v4549
      %v4902 = vunpack.c.l.b16 %v4550
      %v4903 = vunpack.c.l.b16 %v4551
      %v4904 = vunpack.c.l.b16 %v4552
      %v4905 = vunpack.c.l.b16 %v4553
      %v4906 = vunpack.c.l.b16 %v4554
      %v4907 = vunpack.c.l.b16 %v4555
      %v4908 = vpack.c.b16 %v4861, %v4860
      %v4909 = vpack.c.b16 %v4863, %v4862
      %v4910 = vpack.c.b16 %v4865, %v4864
      %v4911 = vpack.c.b16 %v4867, %v4866
      %v4912 = vpack.c.b16 %v4869, %v4868
      %v4913 = vpack.c.b16 %v4871, %v4870
      %v4914 = vpack.c.b16 %v4873, %v4872
      %v4915 = vpack.c.b16 %v4875, %v4874
      %v4916 = vpack.c.b16 %v4877, %v4876
      %v4917 = vpack.c.b16 %v4879, %v4878
      %v4918 = vpack.c.b16 %v4881, %v4880
      %v4919 = vpack.c.b16 %v4883, %v4882
      %v4920 = vpack.c.b16 %v4885, %v4884
      %v4921 = vpack.c.b16 %v4887, %v4886
      %v4922 = vpack.c.b16 %v4889, %v4888
      %v4923 = vpack.c.b16 %v4891, %v4890
      %v4924 = vpack.c.b16 %v4893, %v4892
      %v4925 = vpack.c.b16 %v4895, %v4894
      %v4926 = vpack.c.b16 %v4897, %v4896
      %v4927 = vpack.c.b16 %v4899, %v4898
      %v4928 = vpack.c.b16 %v4901, %v4900
      %v4929 = vpack.c.b16 %v4903, %v4902
      %v4930 = vpack.c.b16 %v4905, %v4904
      %v4931 = vpack.c.b16 %v4907, %v4906
      %4956 = vmatpush.bf16.msra.mxu0 %v4915
      %4957 = vmatpush.bf16.msra.mxu0 %v4914
      %4958 = vmatpush.bf16.msra.mxu0 %v4913
      %4959 = vmatpush.bf16.msra.mxu0 %v4912
      %4960 = vmatpush.bf16.msra.mxu0 %v4911
      %4961 = vmatpush.bf16.msra.mxu0 %v4910
      %4962 = vmatpush.bf16.msra.mxu0 %v4909
      %4963 = vmatpush.bf16.msra.mxu0 %v4908
      %4964 = vmatmul.bf16.gmra.mxu0 %v4716
      %v4965 = vpop.f32.mrf.mxu0
      %v4966 = vadd.f32 0.0, %v4965
      %v4967 = vpop.f32.mrf.mxu0
      %v4968 = vadd.f32 0.0, %v4967
      %4969 = vmatmul.bf16.gmra.mxu0 %v4719
      %v4970 = vpop.f32.mrf.mxu0
      %v4971 = vadd.f32 0.0, %v4970
      %v4972 = vpop.f32.mrf.mxu0
      %v4973 = vadd.f32 0.0, %v4972
      %4974 = vmatmul.bf16.gmra.mxu0 %v4722
      %v4975 = vpop.f32.mrf.mxu0
      %v4976 = vadd.f32 0.0, %v4975
      %v4977 = vpop.f32.mrf.mxu0
      %v4978 = vadd.f32 0.0, %v4977
      %4979 = vmatmul.bf16.gmra.mxu0 %v4725
      %v4980 = vpop.f32.mrf.mxu0
      %v4981 = vadd.f32 0.0, %v4980
      %v4982 = vpop.f32.mrf.mxu0
      %v4983 = vadd.f32 0.0, %v4982
      %4984 = vmatmul.bf16.gmra.mxu0 %v4728
      %v4985 = vpop.f32.mrf.mxu0
      %v4986 = vadd.f32 0.0, %v4985
      %v4987 = vpop.f32.mrf.mxu0
      %v4988 = vadd.f32 0.0, %v4987
      %4989 = vmatmul.bf16.gmra.mxu0 %v4731
      %v4990 = vpop.f32.mrf.mxu0
      %v4991 = vadd.f32 0.0, %v4990
      %v4992 = vpop.f32.mrf.mxu0
      %v4993 = vadd.f32 0.0, %v4992
      %4994 = vmatmul.bf16.gmra.mxu0 %v4734
      %v4995 = vpop.f32.mrf.mxu0
      %v4996 = vadd.f32 0.0, %v4995
      %v4997 = vpop.f32.mrf.mxu0
      %v4998 = vadd.f32 0.0, %v4997
      %4999 = vmatmul.bf16.gmra.mxu0 %v4737
      %v5000 = vpop.f32.mrf.mxu0
      %v5001 = vadd.f32 0.0, %v5000
      %v5002 = vpop.f32.mrf.mxu0
      %v5003 = vadd.f32 0.0, %v5002
      %5004 = vmatmul.bf16.gmra.mxu0 %v4740
      %v5005 = vpop.f32.mrf.mxu0
      %v5006 = vadd.f32 0.0, %v5005
      %v5007 = vpop.f32.mrf.mxu0
      %v5008 = vadd.f32 0.0, %v5007
      %5009 = vmatmul.bf16.gmra.mxu0 %v4743
      %v5010 = vpop.f32.mrf.mxu0
      %v5011 = vadd.f32 0.0, %v5010
      %v5012 = vpop.f32.mrf.mxu0
      %v5013 = vadd.f32 0.0, %v5012
      %5014 = vmatmul.bf16.gmra.mxu0 %v4746
      %v5015 = vpop.f32.mrf.mxu0
      %v5016 = vadd.f32 0.0, %v5015
      %v5017 = vpop.f32.mrf.mxu0
      %v5018 = vadd.f32 0.0, %v5017
      %5019 = vmatmul.bf16.gmra.mxu0 %v4749
      %v5020 = vpop.f32.mrf.mxu0
      %v5021 = vadd.f32 0.0, %v5020
      %v5022 = vpop.f32.mrf.mxu0
      %v5023 = vadd.f32 0.0, %v5022
      %5024 = vmatmul.bf16.gmra.mxu0 %v4752
      %v5025 = vpop.f32.mrf.mxu0
      %v5026 = vadd.f32 0.0, %v5025
      %v5027 = vpop.f32.mrf.mxu0
      %v5028 = vadd.f32 0.0, %v5027
      %5029 = vmatmul.bf16.gmra.mxu0 %v4755
      %v5030 = vpop.f32.mrf.mxu0
      %v5031 = vadd.f32 0.0, %v5030
      %v5032 = vpop.f32.mrf.mxu0
      %v5033 = vadd.f32 0.0, %v5032
      %5034 = vmatmul.bf16.gmra.mxu0 %v4758
      %v5035 = vpop.f32.mrf.mxu0
      %v5036 = vadd.f32 0.0, %v5035
      %v5037 = vpop.f32.mrf.mxu0
      %v5038 = vadd.f32 0.0, %v5037
      %5039 = vmatmul.bf16.gmra.mxu0 %v4761
      %v5040 = vpop.f32.mrf.mxu0
      %v5041 = vadd.f32 0.0, %v5040
      %v5042 = vpop.f32.mrf.mxu0
      %v5043 = vadd.f32 0.0, %v5042
      %5044 = vdwg.mxu0
      %5045 = vmatpush.bf16.msra.mxu0 %v4923
      %5046 = vmatpush.bf16.msra.mxu0 %v4922
      %5047 = vmatpush.bf16.msra.mxu0 %v4921
      %5048 = vmatpush.bf16.msra.mxu0 %v4920
      %5049 = vmatpush.bf16.msra.mxu0 %v4919
      %5050 = vmatpush.bf16.msra.mxu0 %v4918
      %5051 = vmatpush.bf16.msra.mxu0 %v4917
      %5052 = vmatpush.bf16.msra.mxu0 %v4916
      %5053 = vmatmul.bf16.gmra.mxu0 %v4717
      %v5054 = vpop.f32.mrf.mxu0
      %v5055 = vadd.f32 %v4966, %v5054
      %v5056 = vpop.f32.mrf.mxu0
      %v5057 = vadd.f32 %v4968, %v5056
      %5058 = vmatmul.bf16.gmra.mxu0 %v4720
      %v5059 = vpop.f32.mrf.mxu0
      %v5060 = vadd.f32 %v4971, %v5059
      %v5061 = vpop.f32.mrf.mxu0
      %v5062 = vadd.f32 %v4973, %v5061
      %5063 = vmatmul.bf16.gmra.mxu0 %v4723
      %v5064 = vpop.f32.mrf.mxu0
      %v5065 = vadd.f32 %v4976, %v5064
      %v5066 = vpop.f32.mrf.mxu0
      %v5067 = vadd.f32 %v4978, %v5066
      %5068 = vmatmul.bf16.gmra.mxu0 %v4726
      %v5069 = vpop.f32.mrf.mxu0
      %v5070 = vadd.f32 %v4981, %v5069
      %v5071 = vpop.f32.mrf.mxu0
      %v5072 = vadd.f32 %v4983, %v5071
      %5073 = vmatmul.bf16.gmra.mxu0 %v4729
      %v5074 = vpop.f32.mrf.mxu0
      %v5075 = vadd.f32 %v4986, %v5074
      %v5076 = vpop.f32.mrf.mxu0
      %v5077 = vadd.f32 %v4988, %v5076
      %5078 = vmatmul.bf16.gmra.mxu0 %v4732
      %v5079 = vpop.f32.mrf.mxu0
      %v5080 = vadd.f32 %v4991, %v5079
      %v5081 = vpop.f32.mrf.mxu0
      %v5082 = vadd.f32 %v4993, %v5081
      %5083 = vmatmul.bf16.gmra.mxu0 %v4735
      %v5084 = vpop.f32.mrf.mxu0
      %v5085 = vadd.f32 %v4996, %v5084
      %v5086 = vpop.f32.mrf.mxu0
      %v5087 = vadd.f32 %v4998, %v5086
      %5088 = vmatmul.bf16.gmra.mxu0 %v4738
      %v5089 = vpop.f32.mrf.mxu0
      %v5090 = vadd.f32 %v5001, %v5089
      %v5091 = vpop.f32.mrf.mxu0
      %v5092 = vadd.f32 %v5003, %v5091
      %5093 = vmatmul.bf16.gmra.mxu0 %v4741
      %v5094 = vpop.f32.mrf.mxu0
      %v5095 = vadd.f32 %v5006, %v5094
      %v5096 = vpop.f32.mrf.mxu0
      %v5097 = vadd.f32 %v5008, %v5096
      %5098 = vmatmul.bf16.gmra.mxu0 %v4744
      %v5099 = vpop.f32.mrf.mxu0
      %v5100 = vadd.f32 %v5011, %v5099
      %v5101 = vpop.f32.mrf.mxu0
      %v5102 = vadd.f32 %v5013, %v5101
      %5103 = vmatmul.bf16.gmra.mxu0 %v4747
      %v5104 = vpop.f32.mrf.mxu0
      %v5105 = vadd.f32 %v5016, %v5104
      %v5106 = vpop.f32.mrf.mxu0
      %v5107 = vadd.f32 %v5018, %v5106
      %5108 = vmatmul.bf16.gmra.mxu0 %v4750
      %v5109 = vpop.f32.mrf.mxu0
      %v5110 = vadd.f32 %v5021, %v5109
      %v5111 = vpop.f32.mrf.mxu0
      %v5112 = vadd.f32 %v5023, %v5111
      %5113 = vmatmul.bf16.gmra.mxu0 %v4753
      %v5114 = vpop.f32.mrf.mxu0
      %v5115 = vadd.f32 %v5026, %v5114
      %v5116 = vpop.f32.mrf.mxu0
      %v5117 = vadd.f32 %v5028, %v5116
      %5118 = vmatmul.bf16.gmra.mxu0 %v4756
      %v5119 = vpop.f32.mrf.mxu0
      %v5120 = vadd.f32 %v5031, %v5119
      %v5121 = vpop.f32.mrf.mxu0
      %v5122 = vadd.f32 %v5033, %v5121
      %5123 = vmatmul.bf16.gmra.mxu0 %v4759
      %v5124 = vpop.f32.mrf.mxu0
      %v5125 = vadd.f32 %v5036, %v5124
      %v5126 = vpop.f32.mrf.mxu0
      %v5127 = vadd.f32 %v5038, %v5126
      %5128 = vmatmul.bf16.gmra.mxu0 %v4762
      %v5129 = vpop.f32.mrf.mxu0
      %v5130 = vadd.f32 %v5041, %v5129
      %v5131 = vpop.f32.mrf.mxu0
      %v5132 = vadd.f32 %v5043, %v5131
      %5133 = vdwg.mxu0
      %5134 = vmatpush.bf16.msra.mxu0 %v4931
      %5135 = vmatpush.bf16.msra.mxu0 %v4930
      %5136 = vmatpush.bf16.msra.mxu0 %v4929
      %5137 = vmatpush.bf16.msra.mxu0 %v4928
      %5138 = vmatpush.bf16.msra.mxu0 %v4927
      %5139 = vmatpush.bf16.msra.mxu0 %v4926
      %5140 = vmatpush.bf16.msra.mxu0 %v4925
      %5141 = vmatpush.bf16.msra.mxu0 %v4924
      %5142 = vmatmul.bf16.gmra.mxu0 %v4718
      %v5143 = vpop.f32.mrf.mxu0
      %v5144 = vadd.f32 %v5055, %v5143
      %v5145 = vpop.f32.mrf.mxu0
      %v5146 = vadd.f32 %v5057, %v5145
      %5147 = vmatmul.bf16.gmra.mxu0 %v4721
      %v5148 = vpop.f32.mrf.mxu0
      %v5149 = vadd.f32 %v5060, %v5148
      %v5150 = vpop.f32.mrf.mxu0
      %v5151 = vadd.f32 %v5062, %v5150
      %5152 = vmatmul.bf16.gmra.mxu0 %v4724
      %v5153 = vpop.f32.mrf.mxu0
      %v5154 = vadd.f32 %v5065, %v5153
      %v5155 = vpop.f32.mrf.mxu0
      %v5156 = vadd.f32 %v5067, %v5155
      %5157 = vmatmul.bf16.gmra.mxu0 %v4727
      %v5158 = vpop.f32.mrf.mxu0
      %v5159 = vadd.f32 %v5070, %v5158
      %v5160 = vpop.f32.mrf.mxu0
      %v5161 = vadd.f32 %v5072, %v5160
      %5162 = vmatmul.bf16.gmra.mxu0 %v4730
      %v5163 = vpop.f32.mrf.mxu0
      %v5164 = vadd.f32 %v5075, %v5163
      %v5165 = vpop.f32.mrf.mxu0
      %v5166 = vadd.f32 %v5077, %v5165
      %5167 = vmatmul.bf16.gmra.mxu0 %v4733
      %v5168 = vpop.f32.mrf.mxu0
      %v5169 = vadd.f32 %v5080, %v5168
      %v5170 = vpop.f32.mrf.mxu0
      %v5171 = vadd.f32 %v5082, %v5170
      %5172 = vmatmul.bf16.gmra.mxu0 %v4736
      %v5173 = vpop.f32.mrf.mxu0
      %v5174 = vadd.f32 %v5085, %v5173
      %v5175 = vpop.f32.mrf.mxu0
      %v5176 = vadd.f32 %v5087, %v5175
      %5177 = vmatmul.bf16.gmra.mxu0 %v4739
      %v5178 = vpop.f32.mrf.mxu0
      %v5179 = vadd.f32 %v5090, %v5178
      %v5180 = vpop.f32.mrf.mxu0
      %v5181 = vadd.f32 %v5092, %v5180
      %5182 = vmatmul.bf16.gmra.mxu0 %v4742
      %v5183 = vpop.f32.mrf.mxu0
      %v5184 = vadd.f32 %v5095, %v5183
      %v5185 = vpop.f32.mrf.mxu0
      %v5186 = vadd.f32 %v5097, %v5185
      %5187 = vmatmul.bf16.gmra.mxu0 %v4745
      %v5188 = vpop.f32.mrf.mxu0
      %v5189 = vadd.f32 %v5100, %v5188
      %v5190 = vpop.f32.mrf.mxu0
      %v5191 = vadd.f32 %v5102, %v5190
      %5192 = vmatmul.bf16.gmra.mxu0 %v4748
      %v5193 = vpop.f32.mrf.mxu0
      %v5194 = vadd.f32 %v5105, %v5193
      %v5195 = vpop.f32.mrf.mxu0
      %v5196 = vadd.f32 %v5107, %v5195
      %5197 = vmatmul.bf16.gmra.mxu0 %v4751
      %v5198 = vpop.f32.mrf.mxu0
      %v5199 = vadd.f32 %v5110, %v5198
      %v5200 = vpop.f32.mrf.mxu0
      %v5201 = vadd.f32 %v5112, %v5200
      %5202 = vmatmul.bf16.gmra.mxu0 %v4754
      %v5203 = vpop.f32.mrf.mxu0
      %v5204 = vadd.f32 %v5115, %v5203
      %v5205 = vpop.f32.mrf.mxu0
      %v5206 = vadd.f32 %v5117, %v5205
      %5207 = vmatmul.bf16.gmra.mxu0 %v4757
      %v5208 = vpop.f32.mrf.mxu0
      %v5209 = vadd.f32 %v5120, %v5208
      %v5210 = vpop.f32.mrf.mxu0
      %v5211 = vadd.f32 %v5122, %v5210
      %5212 = vmatmul.bf16.gmra.mxu0 %v4760
      %v5213 = vpop.f32.mrf.mxu0
      %v5214 = vadd.f32 %v5125, %v5213
      %v5215 = vpop.f32.mrf.mxu0
      %v5216 = vadd.f32 %v5127, %v5215
      %5217 = vmatmul.bf16.gmra.mxu0 %v4763
      %v5218 = vpop.f32.mrf.mxu0
      %v5219 = vadd.f32 %v5130, %v5218
      %v5220 = vpop.f32.mrf.mxu0
      %v5221 = vadd.f32 %v5132, %v5220
      %5222 = vdwg.mxu0
      %v5223 = vld [vmem:[#allocation2] sm:$0xff]
      %v5224 = vld [vmem:[#allocation2 + $0x8] sm:$0xff]
      %v5225 = vld [vmem:[#allocation2 + $0x10] sm:$0xff]
      %v5226 = vld [vmem:[#allocation2 + $0x18] sm:$0xff]
      %v5227 = vld [vmem:[#allocation2 + $0x20] sm:$0xff]
      %v5228 = vld [vmem:[#allocation2 + $0x28] sm:$0xff]
      %v5229 = vld [vmem:[#allocation2 + $0x30] sm:$0xff]
      %v5230 = vld [vmem:[#allocation2 + $0x38] sm:$0xff]
      %v5231 = vld [vmem:[#allocation2 + $0x40] sm:$0xff]
      %v5232 = vld [vmem:[#allocation2 + $0x48] sm:$0xff]
      %v5233 = vld [vmem:[#allocation2 + $0x50] sm:$0xff]
      %v5234 = vld [vmem:[#allocation2 + $0x58] sm:$0xff]
      %v5235 = vld [vmem:[#allocation2 + $0x60] sm:$0xff]
      %v5236 = vld [vmem:[#allocation2 + $0x68] sm:$0xff]
      %v5237 = vld [vmem:[#allocation2 + $0x70] sm:$0xff]
      %v5238 = vld [vmem:[#allocation2 + $0x78] sm:$0xff]
      %v5239 = vld [vmem:[#allocation2 + $0x80] sm:$0xff]
      %v5240 = vld [vmem:[#allocation2 + $0x88] sm:$0xff]
      %v5241 = vld [vmem:[#allocation2 + $0x90] sm:$0xff]
      %v5242 = vld [vmem:[#allocation2 + $0x98] sm:$0xff]
      %v5243 = vld [vmem:[#allocation2 + $0xa0] sm:$0xff]
      %v5244 = vld [vmem:[#allocation2 + $0xa8] sm:$0xff]
      %v5245 = vld [vmem:[#allocation2 + $0xb0] sm:$0xff]
      %v5246 = vld [vmem:[#allocation2 + $0xb8] sm:$0xff]
      %v5247 = vld [vmem:[#allocation2 + $0xc0] sm:$0xff]
      %v5248 = vld [vmem:[#allocation2 + $0xc8] sm:$0xff]
      %v5249 = vld [vmem:[#allocation2 + $0xd0] sm:$0xff]
      %v5250 = vld [vmem:[#allocation2 + $0xd8] sm:$0xff]
      %v5251 = vld [vmem:[#allocation2 + $0xe0] sm:$0xff]
      %v5252 = vld [vmem:[#allocation2 + $0xe8] sm:$0xff]
      %v5253 = vld [vmem:[#allocation2 + $0xf0] sm:$0xff]
      %v5254 = vld [vmem:[#allocation2 + $0xf8] sm:$0xff]
      %v5255 = vadd.f32 %v5223, %v5144
      %v5256 = vadd.f32 %v5224, %v5146
      %v5257 = vadd.f32 %v5225, %v5149
      %v5258 = vadd.f32 %v5226, %v5151
      %v5259 = vadd.f32 %v5227, %v5154
      %v5260 = vadd.f32 %v5228, %v5156
      %v5261 = vadd.f32 %v5229, %v5159
      %v5262 = vadd.f32 %v5230, %v5161
      %v5263 = vadd.f32 %v5231, %v5164
      %v5264 = vadd.f32 %v5232, %v5166
      %v5265 = vadd.f32 %v5233, %v5169
      %v5266 = vadd.f32 %v5234, %v5171
      %v5267 = vadd.f32 %v5235, %v5174
      %v5268 = vadd.f32 %v5236, %v5176
      %v5269 = vadd.f32 %v5237, %v5179
      %v5270 = vadd.f32 %v5238, %v5181
      %v5271 = vadd.f32 %v5239, %v5184
      %v5272 = vadd.f32 %v5240, %v5186
      %v5273 = vadd.f32 %v5241, %v5189
      %v5274 = vadd.f32 %v5242, %v5191
      %v5275 = vadd.f32 %v5243, %v5194
      %v5276 = vadd.f32 %v5244, %v5196
      %v5277 = vadd.f32 %v5245, %v5199
      %v5278 = vadd.f32 %v5246, %v5201
      %v5279 = vadd.f32 %v5247, %v5204
      %v5280 = vadd.f32 %v5248, %v5206
      %v5281 = vadd.f32 %v5249, %v5209
      %v5282 = vadd.f32 %v5250, %v5211
      %v5283 = vadd.f32 %v5251, %v5214
      %v5284 = vadd.f32 %v5252, %v5216
      %v5285 = vadd.f32 %v5253, %v5219
      %v5286 = vadd.f32 %v5254, %v5221
      %5287 = vst [vmem:[#allocation2] sm:$0xff] %v5255
      %5288 = vst [vmem:[#allocation2 + $0x8] sm:$0xff] %v5256
      %5289 = vst [vmem:[#allocation2 + $0x10] sm:$0xff] %v5257
      %5290 = vst [vmem:[#allocation2 + $0x18] sm:$0xff] %v5258
      %5291 = vst [vmem:[#allocation2 + $0x20] sm:$0xff] %v5259
      %5292 = vst [vmem:[#allocation2 + $0x28] sm:$0xff] %v5260
      %5293 = vst [vmem:[#allocation2 + $0x30] sm:$0xff] %v5261
      %5294 = vst [vmem:[#allocation2 + $0x38] sm:$0xff] %v5262
      %5295 = vst [vmem:[#allocation2 + $0x40] sm:$0xff] %v5263
      %5296 = vst [vmem:[#allocation2 + $0x48] sm:$0xff] %v5264
      %5297 = vst [vmem:[#allocation2 + $0x50] sm:$0xff] %v5265
      %5298 = vst [vmem:[#allocation2 + $0x58] sm:$0xff] %v5266
      %5299 = vst [vmem:[#allocation2 + $0x60] sm:$0xff] %v5267
      %5300 = vst [vmem:[#allocation2 + $0x68] sm:$0xff] %v5268
      %5301 = vst [vmem:[#allocation2 + $0x70] sm:$0xff] %v5269
      %5302 = vst [vmem:[#allocation2 + $0x78] sm:$0xff] %v5270
      %5303 = vst [vmem:[#allocation2 + $0x80] sm:$0xff] %v5271
      %5304 = vst [vmem:[#allocation2 + $0x88] sm:$0xff] %v5272
      %5305 = vst [vmem:[#allocation2 + $0x90] sm:$0xff] %v5273
      %5306 = vst [vmem:[#allocation2 + $0x98] sm:$0xff] %v5274
      %5307 = vst [vmem:[#allocation2 + $0xa0] sm:$0xff] %v5275
      %5308 = vst [vmem:[#allocation2 + $0xa8] sm:$0xff] %v5276
      %5309 = vst [vmem:[#allocation2 + $0xb0] sm:$0xff] %v5277
      %5310 = vst [vmem:[#allocation2 + $0xb8] sm:$0xff] %v5278
      %5311 = vst [vmem:[#allocation2 + $0xc0] sm:$0xff] %v5279
      %5312 = vst [vmem:[#allocation2 + $0xc8] sm:$0xff] %v5280
      %5313 = vst [vmem:[#allocation2 + $0xd0] sm:$0xff] %v5281
      %5314 = vst [vmem:[#allocation2 + $0xd8] sm:$0xff] %v5282
      %5315 = vst [vmem:[#allocation2 + $0xe0] sm:$0xff] %v5283
      %5316 = vst [vmem:[#allocation2 + $0xe8] sm:$0xff] %v5284
      %5317 = vst [vmem:[#allocation2 + $0xf0] sm:$0xff] %v5285
      %5318 = vst [vmem:[#allocation2 + $0xf8] sm:$0xff] %v5286
      %v5319 = vld [vmem:[#allocation2] sm:$0xff]
      %v5320 = vld [vmem:[#allocation2 + $0x8] sm:$0xff]
      %v5321 = vld [vmem:[#allocation2 + $0x10] sm:$0xff]
      %v5322 = vld [vmem:[#allocation2 + $0x18] sm:$0xff]
      %v5323 = vld [vmem:[#allocation2 + $0x20] sm:$0xff]
      %v5324 = vld [vmem:[#allocation2 + $0x28] sm:$0xff]
      %v5325 = vld [vmem:[#allocation2 + $0x30] sm:$0xff]
      %v5326 = vld [vmem:[#allocation2 + $0x38] sm:$0xff]
      %v5327 = vld [vmem:[#allocation2 + $0x40] sm:$0xff]
      %v5328 = vld [vmem:[#allocation2 + $0x48] sm:$0xff]
      %v5329 = vld [vmem:[#allocation2 + $0x50] sm:$0xff]
      %v5330 = vld [vmem:[#allocation2 + $0x58] sm:$0xff]
      %v5331 = vld [vmem:[#allocation2 + $0x60] sm:$0xff]
      %v5332 = vld [vmem:[#allocation2 + $0x68] sm:$0xff]
      %v5333 = vld [vmem:[#allocation2 + $0x70] sm:$0xff]
      %v5334 = vld [vmem:[#allocation2 + $0x78] sm:$0xff]
      %v5335 = vld [vmem:[#allocation2 + $0x80] sm:$0xff]
      %v5336 = vld [vmem:[#allocation2 + $0x88] sm:$0xff]
      %v5337 = vld [vmem:[#allocation2 + $0x90] sm:$0xff]
      %v5338 = vld [vmem:[#allocation2 + $0x98] sm:$0xff]
      %v5339 = vld [vmem:[#allocation2 + $0xa0] sm:$0xff]
      %v5340 = vld [vmem:[#allocation2 + $0xa8] sm:$0xff]
      %v5341 = vld [vmem:[#allocation2 + $0xb0] sm:$0xff]
      %v5342 = vld [vmem:[#allocation2 + $0xb8] sm:$0xff]
      %v5343 = vld [vmem:[#allocation2 + $0xc0] sm:$0xff]
      %v5344 = vld [vmem:[#allocation2 + $0xc8] sm:$0xff]
      %v5345 = vld [vmem:[#allocation2 + $0xd0] sm:$0xff]
      %v5346 = vld [vmem:[#allocation2 + $0xd8] sm:$0xff]
      %v5347 = vld [vmem:[#allocation2 + $0xe0] sm:$0xff]
      %v5348 = vld [vmem:[#allocation2 + $0xe8] sm:$0xff]
      %v5349 = vld [vmem:[#allocation2 + $0xf0] sm:$0xff]
      %v5350 = vld [vmem:[#allocation2 + $0xf8] sm:$0xff]
      %v5351 = vld [vmem:[%s227] sm:$0x1]
      %v5353 = vperm.slane %v5351, 0
      %v5355 = vadd.f32 %v5319, %v5353
      %v5356 = vadd.f32 %v5320, %v5353
      %v5357 = vadd.f32 %v5321, %v5353
      %v5358 = vadd.f32 %v5322, %v5353
      %v5359 = vadd.f32 %v5323, %v5353
      %v5360 = vadd.f32 %v5324, %v5353
      %v5361 = vadd.f32 %v5325, %v5353
      %v5362 = vadd.f32 %v5326, %v5353
      %v5363 = vadd.f32 %v5327, %v5353
      %v5364 = vadd.f32 %v5328, %v5353
      %v5365 = vadd.f32 %v5329, %v5353
      %v5366 = vadd.f32 %v5330, %v5353
      %v5367 = vadd.f32 %v5331, %v5353
      %v5368 = vadd.f32 %v5332, %v5353
      %v5369 = vadd.f32 %v5333, %v5353
      %v5370 = vadd.f32 %v5334, %v5353
      %v5371 = vadd.f32 %v5335, %v5353
      %v5372 = vadd.f32 %v5336, %v5353
      %v5373 = vadd.f32 %v5337, %v5353
      %v5374 = vadd.f32 %v5338, %v5353
      %v5375 = vadd.f32 %v5339, %v5353
      %v5376 = vadd.f32 %v5340, %v5353
      %v5377 = vadd.f32 %v5341, %v5353
      %v5378 = vadd.f32 %v5342, %v5353
      %v5379 = vadd.f32 %v5343, %v5353
      %v5380 = vadd.f32 %v5344, %v5353
      %v5381 = vadd.f32 %v5345, %v5353
      %v5382 = vadd.f32 %v5346, %v5353
      %v5383 = vadd.f32 %v5347, %v5353
      %v5384 = vadd.f32 %v5348, %v5353
      %v5385 = vadd.f32 %v5349, %v5353
      %v5386 = vadd.f32 %v5350, %v5353
      %v5387 = vmax.f32 %v5355, 0.0
      %v5388 = vmax.f32 %v5356, 0.0
      %v5389 = vmax.f32 %v5357, 0.0
      %v5390 = vmax.f32 %v5358, 0.0
      %v5391 = vmax.f32 %v5359, 0.0
      %v5392 = vmax.f32 %v5360, 0.0
      %v5393 = vmax.f32 %v5361, 0.0
      %v5394 = vmax.f32 %v5362, 0.0
      %v5395 = vmax.f32 %v5363, 0.0
      %v5396 = vmax.f32 %v5364, 0.0
      %v5397 = vmax.f32 %v5365, 0.0
      %v5398 = vmax.f32 %v5366, 0.0
      %v5399 = vmax.f32 %v5367, 0.0
      %v5400 = vmax.f32 %v5368, 0.0
      %v5401 = vmax.f32 %v5369, 0.0
      %v5402 = vmax.f32 %v5370, 0.0
      %v5403 = vmax.f32 %v5371, 0.0
      %v5404 = vmax.f32 %v5372, 0.0
      %v5405 = vmax.f32 %v5373, 0.0
      %v5406 = vmax.f32 %v5374, 0.0
      %v5407 = vmax.f32 %v5375, 0.0
      %v5408 = vmax.f32 %v5376, 0.0
      %v5409 = vmax.f32 %v5377, 0.0
      %v5410 = vmax.f32 %v5378, 0.0
      %v5411 = vmax.f32 %v5379, 0.0
      %v5412 = vmax.f32 %v5380, 0.0
      %v5413 = vmax.f32 %v5381, 0.0
      %v5414 = vmax.f32 %v5382, 0.0
      %v5415 = vmax.f32 %v5383, 0.0
      %v5416 = vmax.f32 %v5384, 0.0
      %v5417 = vmax.f32 %v5385, 0.0
      %v5418 = vmax.f32 %v5386, 0.0
      %v5419 = vpack.c.bf16 %v5387, %v5387
      %v5420 = vpack.c.bf16 %v5388, %v5388
      %v5421 = vpack.c.bf16 %v5389, %v5389
      %v5422 = vpack.c.bf16 %v5390, %v5390
      %v5423 = vpack.c.bf16 %v5391, %v5391
      %v5424 = vpack.c.bf16 %v5392, %v5392
      %v5425 = vpack.c.bf16 %v5393, %v5393
      %v5426 = vpack.c.bf16 %v5394, %v5394
      %v5427 = vpack.c.bf16 %v5395, %v5395
      %v5428 = vpack.c.bf16 %v5396, %v5396
      %v5429 = vpack.c.bf16 %v5397, %v5397
      %v5430 = vpack.c.bf16 %v5398, %v5398
      %v5431 = vpack.c.bf16 %v5399, %v5399
      %v5432 = vpack.c.bf16 %v5400, %v5400
      %v5433 = vpack.c.bf16 %v5401, %v5401
      %v5434 = vpack.c.bf16 %v5402, %v5402
      %v5435 = vpack.c.bf16 %v5403, %v5403
      %v5436 = vpack.c.bf16 %v5404, %v5404
      %v5437 = vpack.c.bf16 %v5405, %v5405
      %v5438 = vpack.c.bf16 %v5406, %v5406
      %v5439 = vpack.c.bf16 %v5407, %v5407
      %v5440 = vpack.c.bf16 %v5408, %v5408
      %v5441 = vpack.c.bf16 %v5409, %v5409
      %v5442 = vpack.c.bf16 %v5410, %v5410
      %v5443 = vpack.c.bf16 %v5411, %v5411
      %v5444 = vpack.c.bf16 %v5412, %v5412
      %v5445 = vpack.c.bf16 %v5413, %v5413
      %v5446 = vpack.c.bf16 %v5414, %v5414
      %v5447 = vpack.c.bf16 %v5415, %v5415
      %v5448 = vpack.c.bf16 %v5416, %v5416
      %v5449 = vpack.c.bf16 %v5417, %v5417
      %v5450 = vpack.c.bf16 %v5418, %v5418
      %5451 = vst [vmem:[%s240] sm:$0xf] %v5419
      %5452 = vst [vmem:[%s240 + $0x4] sm:$0xf] %v5420
      %5453 = vst [vmem:[%s240 + $0x8] sm:$0xf] %v5421
      %5454 = vst [vmem:[%s240 + $0xc] sm:$0xf] %v5422
      %5455 = vst [vmem:[%s240 + $0x10] sm:$0xf] %v5423
      %5456 = vst [vmem:[%s240 + $0x14] sm:$0xf] %v5424
      %5457 = vst [vmem:[%s240 + $0x18] sm:$0xf] %v5425
      %5458 = vst [vmem:[%s240 + $0x1c] sm:$0xf] %v5426
      %5459 = vst [vmem:[%s240 + $0x20] sm:$0xf] %v5427
      %5460 = vst [vmem:[%s240 + $0x24] sm:$0xf] %v5428
      %5461 = vst [vmem:[%s240 + $0x28] sm:$0xf] %v5429
      %5462 = vst [vmem:[%s240 + $0x2c] sm:$0xf] %v5430
      %5463 = vst [vmem:[%s240 + $0x30] sm:$0xf] %v5431
      %5464 = vst [vmem:[%s240 + $0x34] sm:$0xf] %v5432
      %5465 = vst [vmem:[%s240 + $0x38] sm:$0xf] %v5433
      %5466 = vst [vmem:[%s240 + $0x3c] sm:$0xf] %v5434
      %5467 = vst [vmem:[%s240 + $0x40] sm:$0xf] %v5435
      %5468 = vst [vmem:[%s240 + $0x44] sm:$0xf] %v5436
      %5469 = vst [vmem:[%s240 + $0x48] sm:$0xf] %v5437
      %5470 = vst [vmem:[%s240 + $0x4c] sm:$0xf] %v5438
      %5471 = vst [vmem:[%s240 + $0x50] sm:$0xf] %v5439
      %5472 = vst [vmem:[%s240 + $0x54] sm:$0xf] %v5440
      %5473 = vst [vmem:[%s240 + $0x58] sm:$0xf] %v5441
      %5474 = vst [vmem:[%s240 + $0x5c] sm:$0xf] %v5442
      %5475 = vst [vmem:[%s240 + $0x60] sm:$0xf] %v5443
      %5476 = vst [vmem:[%s240 + $0x64] sm:$0xf] %v5444
      %5477 = vst [vmem:[%s240 + $0x68] sm:$0xf] %v5445
      %5478 = vst [vmem:[%s240 + $0x6c] sm:$0xf] %v5446
      %5479 = vst [vmem:[%s240 + $0x70] sm:$0xf] %v5447
      %5480 = vst [vmem:[%s240 + $0x74] sm:$0xf] %v5448
      %5481 = vst [vmem:[%s240 + $0x78] sm:$0xf] %v5449
      %5482 = vst [vmem:[%s240 + $0x7c] sm:$0xf] %v5450
      %s5483 = smul.u32 16, %s20
      %p5484 = scmp.lt.s32.totalorder %s19, 1
      %s5485 = scalar_select %p5484, %s19, 1
      %p5486 = scmp.lt.s32.totalorder %s5483, 15
      %s5487 = scalar_select %p5486, %s5483, 15
      %p5488 = scmp.lt.s32.totalorder %s21, 0
      %s5489 = scalar_select %p5488, %s21, 0
      %s5490 = smul.addr %s5487, 2
      %s5491 = sadd.s32 %s5489, %s5490
      %s5492 = smul.addr %s5485, 32
      %s5493 = sadd.s32 %s5491, %s5492
      %s5494 = smul.addr %s5493, 4
      %s5495 = scalar_lea.vmem %s3, %s5494
      // Predicated region
      $region33: #{conv_block_forward.4} parent=31 // pred_check
        %p5496 = pneg %p133
      $region34: #{conv_block_forward.4} parent=31 // pred_check_branch
        %5498 = sbr.rel (%p5496) target = $region36
      $region35: #{conv_block_forward.4} parent=31 // pred_region
        %s5499 = smul.u32 16, %s20
      $region36: #{conv_block_forward.4} parent=31 // pred_fallthru
        _
    $region32: #{conv_block_forward.4} parent=5 // pred_fallthru
      _
    %p5500 = scmp.le.s32.totalorder 2, %s9
    // Predicated region
    $region37: #{conv_block_forward.4} parent=5 // pred_check
      %p5501 = pneg %p5500
    $region38: #{conv_block_forward.4} parent=5 // pred_check_branch
      %5503 = sbr.rel (%p5501) target = $region40
    $region39: #{conv_block_forward.4} parent=5 // pred_region
      %s5504 = ssub.s32 %s9, 2
      // Predicated region
      $region41: #{conv_block_forward.4} parent=39 // pred_check
        %p5505 = pneg %p139
      $region42: #{conv_block_forward.4} parent=39 // pred_check_branch
        %5507 = sbr.rel (%p5505) target = $region44
      $region43: #{conv_block_forward.4} parent=39 // pred_region
        %s5508 = smul.u32 16, %s23
        %p5509 = scmp.lt.s32.totalorder %s22, 1
        %s5510 = scalar_select %p5509, %s22, 1
        %p5511 = scmp.lt.s32.totalorder %s5508, 15
        %s5512 = scalar_select %p5511, %s5508, 15
        %p5513 = scmp.lt.s32.totalorder %s24, 0
        %s5514 = scalar_select %p5513, %s24, 0
        %s5515 = smul.addr %s5512, 2
        %s5516 = sadd.s32 %s5514, %s5515
        %s5517 = smul.addr %s5510, 32
        %s5518 = sadd.s32 %s5516, %s5517
        %s5519 = smul.addr %s5518, 4
        %s5520 = scalar_lea.vmem %s3, %s5519
      $region44: #{conv_block_forward.4} parent=39 // pred_fallthru
        _
    $region40: #{conv_block_forward.4} parent=5 // pred_fallthru
      _
  $region6: #{conv_block_forward.4} parent=0 // loop_footer
    %s13 = sadd.s32 1, %s9
  $region7: #{conv_block_forward.4} parent=0 // loop_footer_branch
    %8 = sbr.rel target = $region3
  $region8: #{conv_block_forward.4} parent=0 // loop_exit
    _

</llo_original>
